<compile_context>
chip_gen: v7x
topology: tpu7x:2x2x1
jax: 0.10.0
libtpu: 0.0.40
codegen_flags: <defaults>
</compile_context>

<pallas_src>
import functools
import math

import numpy as np
import jax
import jax.numpy as jnp
from jax.experimental import pallas as pl
from jax.experimental.pallas import tpu as pltpu


# ----------------------- small synthetic hyper-parameters -----------------------
class hp:
    vocab_size = 40
    max_seq_len = 256                  # positional-encoding table length
    encoder_hidden = 32
    encoder_layer = 2
    encoder_head = 2
    decoder_hidden = 32
    decoder_layer = 2
    decoder_head = 2
    fft_conv1d_filter_size = 64
    fft_conv1d_kernel_size = (9, 1)
    n_mel_channels = 16
    variance_predictor_filter_size = 32
    variance_predictor_kernel_size = 3
    n_bins = 16
    f0_min, f0_max = -1.0, 1.0
    energy_min, energy_max = -1.0, 1.0
    log_offset = 1.0
    postnet_embedding_dim = 32
    postnet_kernel_size = 5
    postnet_n_convolutions = 5


# Static decoder-length bucket.
# TODO(synk): the PyTorch LengthRegulator produces a data-dependent mel length;
# here it is bucketed to a static DEC_LEN (padded rows are masked) so no host
# sync / dynamic shapes are needed and the whole forward jits as one program.
DEC_LEN = 64


# ----------------------------- in-kernel helpers ---------------------------------
def _layer_norm_f32(y, g, b, eps=1e-5):
    mu = jnp.mean(y, axis=-1, keepdims=True)
    yc = y - mu
    var = jnp.mean(yc * yc, axis=-1, keepdims=True)
    return yc * jax.lax.rsqrt(var + eps) * g + b


def _shift_rows(x, off):
    """y[t] = x[t + off], zero outside [0, T).  Static shift, all in VMEM."""
    if off == 0:
        return x
    n = abs(off)
    z = jnp.zeros((n, x.shape[1]), x.dtype)
    if off > 0:
        return jnp.concatenate([x[off:], z], axis=0)
    return jnp.concatenate([z, x[: x.shape[0] - n]], axis=0)


def _im2col(x, ksz):
    """'same'-padded conv1d im2col over the T axis, built in VMEM (no HBM copy)."""
    if ksz == 1:
        return x
    pad = (ksz - 1) // 2
    return jnp.concatenate([_shift_rows(x, j - pad) for j in range(ksz)], axis=1)


def _bf16(x):
    return x.astype(jnp.bfloat16)


# ------------------------------ fused FFT block -----------------------------------
def _fft_block_kernel(lens_ref, x_ref,
                      wqkv_ref, bqkv_ref, wo_ref, bo_ref,
                      ln1g_ref, ln1b_ref,
                      w1_ref, b1_ref, w2_ref, b2_ref,
                      ln2g_ref, ln2b_ref,
                      o_ref, *, n_head, k1, k2):
    b = pl.program_id(0)
    L = lens_ref[b]
    x = x_ref[0].astype(jnp.float32)                    # (T, D)
    T, D = x.shape
    d_k = D // n_head
    scale = 1.0 / math.sqrt(d_k)

    row = jax.lax.broadcasted_iota(jnp.int32, (T, 1), 0)
    pad_row = row >= L                                   # (T, 1) query/pad rows

    # ---- fused QKV projection ----
    qkv = jnp.dot(_bf16(x), wqkv_ref[...],
                  preferred_element_type=jnp.float32) + bqkv_ref[...]
    q, k, v = qkv[:, :D], qkv[:, D:2 * D], qkv[:, 2 * D:]

    # key padding mask generated in-kernel (no (B*H,T,T) HBM mask)
    key_idx = jax.lax.broadcasted_iota(jnp.int32, (T, T), 1)
    key_pad = (key_idx >= L).astype(jnp.float32)

    heads = []
    for h in range(n_head):
        qh = _bf16(q[:, h * d_k:(h + 1) * d_k])
        kh = _bf16(k[:, h * d_k:(h + 1) * d_k])
        vh = _bf16(v[:, h * d_k:(h + 1) * d_k])
        s = jax.lax.dot_general(qh, kh, (((1,), (1,)), ((), ())),
                                preferred_element_type=jnp.float32) * scale
        s = s - key_pad * 1e9
        s = s - jnp.max(s, axis=-1, keepdims=True)
        e = jnp.exp(s)
        p = e * pl.reciprocal(jnp.sum(e, axis=-1, keepdims=True), approx=True)
        heads.append(jnp.dot(_bf16(p), vh, preferred_element_type=jnp.float32))
    attn = jnp.concatenate(heads, axis=1)                # (T, D)

    proj = jnp.dot(_bf16(attn), wo_ref[...],
                   preferred_element_type=jnp.float32) + bo_ref[...]

    a = _layer_norm_f32(proj + x, ln1g_ref[...], ln1b_ref[...])
    a = jnp.where(pad_row, 0.0, a)                       # mask fused into LN epilogue

    # ---- position-wise FFN: conv(k1) -> ReLU -> conv(k2) ----
    h1 = jnp.dot(_bf16(_im2col(a, k1)), w1_ref[...],
                 preferred_element_type=jnp.float32) + b1_ref[...]
    h1 = jnp.maximum(h1, 0.0)
    h2 = jnp.dot(_bf16(_im2col(h1, k2)), w2_ref[...],
                 preferred_element_type=jnp.float32) + b2_ref[...]

    out = _layer_norm_f32(h2 + a, ln2g_ref[...], ln2b_ref[...])
    out = jnp.where(pad_row, 0.0, out)
    o_ref[0] = out.astype(o_ref.dtype)


def _full_spec(shape, n_prefetch_grid_args):
    zeros = (0,) * len(shape)
    return pl.BlockSpec(shape, lambda *_: zeros)


def fft_block(x, lens, p, n_head):
    """x: (B, T, D) f32, lens: (B,) int32. One fused pallas_call per layer."""
    B, T, D = x.shape
    k1, k2 = hp.fft_conv1d_kernel_size
    Fd = p['w1'].shape[1]

    grid_spec = pltpu.PrefetchScalarGridSpec(
        num_scalar_prefetch=1,
        grid=(B,),
        in_specs=[
            pl.BlockSpec((1, T, D), lambda b, lens: (b, 0, 0)),
            _full_spec(p['wqkv'].shape, 1), _full_spec((1, 3 * D), 1),
            _full_spec(p['wo'].shape, 1), _full_spec((1, D), 1),
            _full_spec((1, D), 1), _full_spec((1, D), 1),
            _full_spec(p['w1'].shape, 1), _full_spec((1, Fd), 1),
            _full_spec(p['w2'].shape, 1), _full_spec((1, D), 1),
            _full_spec((1, D), 1), _full_spec((1, D), 1),
        ],
        out_specs=pl.BlockSpec((1, T, D), lambda b, lens: (b, 0, 0)),
    )
    return pl.pallas_call(
        functools.partial(_fft_block_kernel, n_head=n_head, k1=k1, k2=k2),
        out_shape=jax.ShapeDtypeStruct((B, T, D), jnp.float32),
        grid_spec=grid_spec,
        compiler_params=pltpu.CompilerParams(dimension_semantics=("parallel",)),
    )(lens, x, p['wqkv'], p['bqkv'], p['wo'], p['bo'],
      p['ln1_g'], p['ln1_b'], p['w1'], p['b1'], p['w2'], p['b2'],
      p['ln2_g'], p['ln2_b'])


# --------------------------- fused variance predictor -----------------------------
def _var_pred_kernel(lens_ref, x_ref,
                     w1_ref, b1_ref, g1_ref, be1_ref,
                     w2_ref, b2_ref, g2_ref, be2_ref,
                     wl_ref, bl_ref, o_ref, *, ksz):
    b = pl.program_id(1)
    L = lens_ref[b]
    x = x_ref[0].astype(jnp.float32)                     # (T, D)
    T = x.shape[0]

    h = jnp.dot(_bf16(_im2col(x, ksz)), w1_ref[0],
                preferred_element_type=jnp.float32) + b1_ref[0]
    h = jnp.maximum(h, 0.0)
    h = _layer_norm_f32(h, g1_ref[0], be1_ref[0])
    h = jnp.dot(_bf16(_im2col(h, ksz)), w2_ref[0],
                preferred_element_type=jnp.float32) + b2_ref[0]
    h = jnp.maximum(h, 0.0)
    h = _layer_norm_f32(h, g2_ref[0], be2_ref[0])

    out = jnp.dot(_bf16(h), wl_ref[0],
                  preferred_element_type=jnp.float32) + bl_ref[0]   # (T, 1)
    row = jax.lax.broadcasted_iota(jnp.int32, (T, 1), 0)
    out = jnp.where(row >= L, 0.0, out)
    o_ref[0, 0] = out.astype(o_ref.dtype)


def variance_predictors(x, lens, vp):
    """Run the stack of P predictor towers (stacked weights) in one pallas_call.

    x: (B, T, D);  returns (P, B, T)."""
    B, T, D = x.shape
    P = vp['w1'].shape[0]
    ksz = hp.variance_predictor_kernel_size

    def stk(arr):
        blk = (1,) + arr.shape[1:]
        zeros = (0,) * (len(blk) - 1)
        return pl.BlockSpec(blk, lambda pi, b, lens, z=zeros: (pi,) + z)

    grid_spec = pltpu.PrefetchScalarGridSpec(
        num_scalar_prefetch=1,
        grid=(P, B),
        in_specs=[
            pl.BlockSpec((1, T, D), lambda pi, b, lens: (b, 0, 0)),
            stk(vp['w1']), stk(vp['b1']), stk(vp['g1']), stk(vp['be1']),
            stk(vp['w2']), stk(vp['b2']), stk(vp['g2']), stk(vp['be2']),
            stk(vp['wl']), stk(vp['bl']),
        ],
        out_specs=pl.BlockSpec((1, 1, T, 1), lambda pi, b, lens: (pi, b, 0, 0)),
    )
    out = pl.pallas_call(
        functools.partial(_var_pred_kernel, ksz=ksz),
        out_shape=jax.ShapeDtypeStruct((P, B, T, 1), jnp.float32),
        grid_spec=grid_spec,
        compiler_params=pltpu.CompilerParams(
            dimension_semantics=("parallel", "parallel")),
    )(lens, x, vp['w1'], vp['b1'], vp['g1'], vp['be1'],
      vp['w2'], vp['b2'], vp['g2'], vp['be2'], vp['wl'], vp['bl'])
    return out[..., 0]


# -------------------------- fused mel linear + PostNet -----------------------------
def _mel_postnet_kernel(d_ref, mw_ref, mb_ref, *rest, ksz, n_conv):
    o_ref = rest[-1]
    wbs = rest[:-1]
    d = d_ref[0].astype(jnp.float32)                     # (T, Dd)

    mel = jnp.dot(_bf16(d), mw_ref[...],
                  preferred_element_type=jnp.float32) + mb_ref[...]
    h = mel
    for i in range(n_conv):
        w = wbs[2 * i][...]
        bb = wbs[2 * i + 1][...]
        h = jnp.dot(_bf16(_im2col(h, ksz)), w,
                    preferred_element_type=jnp.float32) + bb
        if i < n_conv - 1:
            h = jnp.tanh(h)
    o_ref[0] = (h + mel).astype(o_ref.dtype)


def mel_linear_postnet(d, params):
    B, T, D = d.shape
    n_mel = hp.n_mel_channels
    ksz = hp.postnet_kernel_size
    post = params['postnet']

    def fullspec(a):
        z = (0,) * a.ndim
        return pl.BlockSpec(a.shape, lambda b, z=z: z)

    weight_args, weight_specs = [], []
    for w, bb in post:
        weight_args += [w, bb]
        weight_specs += [fullspec(w), fullspec(bb)]

    return pl.pallas_call(
        functools.partial(_mel_postnet_kernel, ksz=ksz, n_conv=len(post)),
        out_shape=jax.ShapeDtypeStruct((B, T, n_mel), jnp.float32),
        grid=(B,),
        in_specs=[pl.BlockSpec((1, T, D), lambda b: (b, 0, 0)),
                  fullspec(params['mel_w']), fullspec(params['mel_b'])] + weight_specs,
        out_specs=pl.BlockSpec((1, T, n_mel), lambda b: (b, 0, 0)),
        compiler_params=pltpu.CompilerParams(dimension_semantics=("parallel",)),
    )(d, params['mel_w'], params['mel_b'], *weight_args)


# ------------------------------ plain-JAX glue -------------------------------------
def get_mask_from_lengths(lengths, max_len):
    ids = jnp.arange(max_len)
    return ids[None, :] >= lengths[:, None]              # True = padding


def sinusoid_table(n_position, d_hid):
    pos = np.arange(n_position)[:, None].astype(np.float64)
    i = np.arange(d_hid)[None, :]
    angle = pos / np.power(10000.0, 2 * (i // 2) / d_hid)
    table = np.zeros((n_position, d_hid), dtype=np.float32)
    table[:, 0::2] = np.sin(angle[:, 0::2])
    table[:, 1::2] = np.cos(angle[:, 1::2])
    return table


# ------------------------------ full forward pass ----------------------------------
@jax.jit
def fastspeech2_forward(params, src_seq, src_len):
    B, T = src_seq.shape
    src_mask = get_mask_from_lengths(src_len, T)

    # ---------------- Encoder ----------------
    x = params['word_emb'][src_seq] + params['enc_pos'][:T][None]
    for p in params['enc_layers']:
        x = fft_block(x, src_len, p, hp.encoder_head)

    # ---------------- Variance adaptor (inference path) ----------------
    log_d = variance_predictors(x, src_len, params['dur_pred'])[0]        # (B, T)
    dur = jnp.maximum(jnp.round(jnp.exp(log_d) - hp.log_offset), 0.0).astype(jnp.int32)
    dur = jnp.where(src_mask, 0, dur)
    mel_len = jnp.minimum(jnp.sum(dur, axis=1), DEC_LEN).astype(jnp.int32)

    # Length regulator to static DEC_LEN frames (gather by cumulative durations).
    cum = jnp.cumsum(dur, axis=1)
    frames = jnp.arange(DEC_LEN)
    src_idx = jax.vmap(lambda c: jnp.searchsorted(c, frames, side='right'))(cum)
    src_idx = jnp.clip(src_idx, 0, T - 1)
    x_lr = jnp.take_along_axis(x, src_idx[..., None], axis=1)             # (B, DEC_LEN, D)
    mel_mask = frames[None, :] >= mel_len[:, None]
    x_lr = jnp.where(mel_mask[..., None], 0.0, x_lr)

    pe = variance_predictors(x_lr, mel_len, params['pe_pred'])            # (2, B, DEC_LEN)
    pitch, energy = pe[0], pe[1]
    p_idx = jnp.searchsorted(params['pitch_bins'], pitch, side='left')
    e_idx = jnp.searchsorted(params['energy_bins'], energy, side='left')
    va_out = x_lr + params['pitch_emb'][p_idx] + params['energy_emb'][e_idx]

    # ---------------- Decoder ----------------
    d = va_out + params['dec_pos'][:DEC_LEN][None]
    for p in params['dec_layers']:
        d = fft_block(d, mel_len, p, hp.decoder_head)

    # ---------------- mel linear + PostNet (one fused kernel) ----------------
    return mel_linear_postnet(d, params)


# ------------------------------- parameter init ------------------------------------
def init_params():
    keys = iter(jax.random.split(jax.random.PRNGKey(0), 256))

    def nk():
        return next(keys)

    def lin(din, dout, scale=0.1, bias=0.0):
        w = jax.random.normal(nk(), (din, dout), jnp.float32) * scale
        b = jnp.full((dout,), bias, jnp.float32)
        return w, b

    def ln(d):
        return jnp.ones((d,), jnp.float32), jnp.zeros((d,), jnp.float32)

    def fft_block_params(d_model, n_head, d_ff, ksz):
        d_k = d_model // n_head
        wq, bq = lin(d_model, n_head * d_k)
        wk, bk = lin(d_model, n_head * d_k)
        wv, bv = lin(d_model, n_head * d_k)
        wo, bo = lin(n_head * d_k, d_model)
        g1, bg1 = ln(d_model)
        k1, k2 = ksz
        w1, b1 = lin(k1 * d_model, d_ff)
        w2, b2 = lin(k2 * d_ff, d_model)
        g2, bg2 = ln(d_model)
        return {
            'wqkv': jnp.concatenate([wq, wk, wv], axis=1).astype(jnp.bfloat16),
            'bqkv': jnp.concatenate([bq, bk, bv]).reshape(1, -1),
            'wo': wo.astype(jnp.bfloat16), 'bo': bo.reshape(1, -1),
            'ln1_g': g1.reshape(1, -1), 'ln1_b': bg1.reshape(1, -1),
            'w1': w1.astype(jnp.bfloat16), 'b1': b1.reshape(1, -1),
            'w2': w2.astype(jnp.bfloat16), 'b2': b2.reshape(1, -1),
            'ln2_g': g2.reshape(1, -1), 'ln2_b': bg2.reshape(1, -1),
        }

    def var_pred_params_stacked(final_biases, d_in, d_f, k):
        towers = []
        for fb in final_biases:
            w1, b1 = lin(k * d_in, d_f)
            g1, be1 = ln(d_f)
            w2, b2 = lin(k * d_f, d_f)
            g2, be2 = ln(d_f)
            wl, bl = lin(d_f, 1, bias=fb)
            towers.append(dict(
                w1=w1, b1=b1.reshape(1, -1), g1=g1.reshape(1, -1), be1=be1.reshape(1, -1),
                w2=w2, b2=b2.reshape(1, -1), g2=g2.reshape(1, -1), be2=be2.reshape(1, -1),
                wl=wl, bl=bl.reshape(1, 1)))
        stacked = {kk: jnp.stack([t[kk] for t in towers]) for kk in towers[0]}
        for kk in ('w1', 'w2', 'wl'):
            stacked[kk] = stacked[kk].astype(jnp.bfloat16)
        return stacked

    params = {}
    emb = jax.random.normal(nk(), (hp.vocab_size, hp.encoder_hidden), jnp.float32) * 0.1
    params['word_emb'] = emb.at[0].set(0.0)              # padding_idx = 0
    params['enc_pos'] = jnp.asarray(sinusoid_table(hp.max_seq_len, hp.encoder_hidden))
    params['dec_pos'] = jnp.asarray(sinusoid_table(hp.max_seq_len, hp.decoder_hidden))
    params['enc_layers'] = [fft_block_params(hp.encoder_hidden, hp.encoder_head,
                                             hp.fft_conv1d_filter_size,
                                             hp.fft_conv1d_kernel_size)
                            for _ in range(hp.encoder_layer)]
    params['dec_layers'] = [fft_block_params(hp.decoder_hidden, hp.decoder_head,
                                             hp.fft_conv1d_filter_size,
                                             hp.fft_conv1d_kernel_size)
                            for _ in range(hp.decoder_layer)]
    params['dur_pred'] = var_pred_params_stacked(
        [1.0], hp.encoder_hidden, hp.variance_predictor_filter_size,
        hp.variance_predictor_kernel_size)
    params['pe_pred'] = var_pred_params_stacked(
        [0.0, 0.0], hp.encoder_hidden, hp.variance_predictor_filter_size,
        hp.variance_predictor_kernel_size)
    params['pitch_bins'] = jnp.linspace(hp.f0_min, hp.f0_max, hp.n_bins - 1)
    params['energy_bins'] = jnp.linspace(hp.energy_min, hp.energy_max, hp.n_bins - 1)
    params['pitch_emb'] = jax.random.normal(nk(), (hp.n_bins, hp.encoder_hidden), jnp.float32) * 0.1
    params['energy_emb'] = jax.random.normal(nk(), (hp.n_bins, hp.encoder_hidden), jnp.float32) * 0.1
    mel_w, mel_b = lin(hp.decoder_hidden, hp.n_mel_channels)
    params['mel_w'] = mel_w.astype(jnp.bfloat16)
    params['mel_b'] = mel_b.reshape(1, -1)

    # PostNet: Conv1d + BatchNorm1d (inference running stats 0/1, affine 1/0 → folded)
    bn_scale = 1.0 / math.sqrt(1.0 + 1e-5)
    post = []
    for i in range(hp.postnet_n_convolutions):
        cin = hp.n_mel_channels if i == 0 else hp.postnet_embedding_dim
        cout = (hp.n_mel_channels if i == hp.postnet_n_convolutions - 1
                else hp.postnet_embedding_dim)
        w, b = lin(hp.postnet_kernel_size * cin, cout)
        post.append(((w * bn_scale).astype(jnp.bfloat16),
                     (b * bn_scale).reshape(1, -1)))
    params['postnet'] = post
    return params


# ------------------------------------ main ------------------------------------------
if __name__ == "__main__":
    key = jax.random.PRNGKey(0)
    B, T = 2, 16
    k_seq, _ = jax.random.split(key)
    src_seq = jax.random.randint(k_seq, (B, T), 1, hp.vocab_size)
    src_len = jnp.array([16, 12], dtype=jnp.int32)
    src_seq = jnp.where(jnp.arange(T)[None, :] < src_len[:, None], src_seq, 0)

    params = init_params()
    mel_out = fastspeech2_forward(params, src_seq, src_len)
    mel_out = jax.block_until_ready(mel_out)

    assert mel_out.shape == (B, DEC_LEN, hp.n_mel_channels)
    assert bool(jnp.all(jnp.isfinite(mel_out)))
    print("KERNEL_OK")
</pallas_src>

<mosaic_0001>
module attributes {stable_mosaic.version = 11 : i64} {
  func.func @_fft_block_kernel(%arg0: i32, %arg1: memref<2xi32, #tpu.memory_space<smem>>, %arg2: memref<1x16x32xf32, #tpu.memory_space<vmem>>, %arg3: memref<32x96xbf16, #tpu.memory_space<vmem>>, %arg4: memref<1x96xf32, #tpu.memory_space<vmem>>, %arg5: memref<32x32xbf16, #tpu.memory_space<vmem>>, %arg6: memref<1x32xf32, #tpu.memory_space<vmem>>, %arg7: memref<1x32xf32, #tpu.memory_space<vmem>>, %arg8: memref<1x32xf32, #tpu.memory_space<vmem>>, %arg9: memref<288x64xbf16, #tpu.memory_space<vmem>>, %arg10: memref<1x64xf32, #tpu.memory_space<vmem>>, %arg11: memref<64x32xbf16, #tpu.memory_space<vmem>>, %arg12: memref<1x32xf32, #tpu.memory_space<vmem>>, %arg13: memref<1x32xf32, #tpu.memory_space<vmem>>, %arg14: memref<1x32xf32, #tpu.memory_space<vmem>>, %arg15: memref<1x16x32xf32, #tpu.memory_space<vmem>>) attributes {dimension_semantics = [#tpu.dimension_semantics<parallel>], iteration_bounds = array<i64: 2>, scalar_prefetch = 1 : i64, scratch_operands = 0 : i64, tpu.core_type = #tpu.core_type<tc>, window_params = [{transform_indices = @transform_0, window_bounds = array<i64: 1, 16, 32>}, {pipeline_mode = #tpu.pipeline_mode<synchronous>, transform_indices = @transform_1, window_bounds = array<i64: 32, 96>}, {pipeline_mode = #tpu.pipeline_mode<synchronous>, transform_indices = @transform_2, window_bounds = array<i64: 1, 96>}, {pipeline_mode = #tpu.pipeline_mode<synchronous>, transform_indices = @transform_3, window_bounds = array<i64: 32, 32>}, {pipeline_mode = #tpu.pipeline_mode<synchronous>, transform_indices = @transform_4, window_bounds = array<i64: 1, 32>}, {pipeline_mode = #tpu.pipeline_mode<synchronous>, transform_indices = @transform_5, window_bounds = array<i64: 1, 32>}, {pipeline_mode = #tpu.pipeline_mode<synchronous>, transform_indices = @transform_6, window_bounds = array<i64: 1, 32>}, {pipeline_mode = #tpu.pipeline_mode<synchronous>, transform_indices = @transform_7, window_bounds = array<i64: 288, 64>}, {pipeline_mode = #tpu.pipeline_mode<synchronous>, transform_indices = @transform_8, window_bounds = array<i64: 1, 64>}, {pipeline_mode = #tpu.pipeline_mode<synchronous>, transform_indices = @transform_9, window_bounds = array<i64: 64, 32>}, {pipeline_mode = #tpu.pipeline_mode<synchronous>, transform_indices = @transform_10, window_bounds = array<i64: 1, 32>}, {pipeline_mode = #tpu.pipeline_mode<synchronous>, transform_indices = @transform_11, window_bounds = array<i64: 1, 32>}, {pipeline_mode = #tpu.pipeline_mode<synchronous>, transform_indices = @transform_12, window_bounds = array<i64: 1, 32>}, {transform_indices = @transform_13, window_bounds = array<i64: 1, 16, 32>}]} {
    %0 = arith.index_cast %arg0 : i32 to index
    %1 = memref.load %arg1[%0] : memref<2xi32, #tpu.memory_space<smem>>
    %c0 = arith.constant 0 : index
    %c0_0 = arith.constant 0 : index
    %c0_1 = arith.constant 0 : index
    %2 = vector.load %arg2[%c0, %c0_0, %c0_1] : memref<1x16x32xf32, #tpu.memory_space<vmem>>, vector<1x16x32xf32>
    %3 = vector.shape_cast %2 : vector<1x16x32xf32> to vector<16x32xf32>
    %4 = tpu.iota {dimensions = array<i32: 0>} : vector<16x1xi32>
    %5 = vector.broadcast %1 : i32 to vector<16x1xi32>
    %6 = arith.cmpi sge, %4, %5 : vector<16x1xi32>
    %7 = arith.truncf %3 : vector<16x32xf32> to vector<16x32xbf16>
    %c0_2 = arith.constant 0 : index
    %c0_3 = arith.constant 0 : index
    %8 = vector.load %arg3[%c0_2, %c0_3] : memref<32x96xbf16, #tpu.memory_space<vmem>>, vector<32x96xbf16>
    %cst = arith.constant dense<0.000000e+00> : vector<16x96xf32>
    %9 = tpu.matmul %7, %8, %cst {dimension_numbers = #tpu.dot_dimension_numbers<[1], [0], [0], [1], [0, 0, 1, 1], [], []>} : vector<16x32xbf16>, vector<32x96xbf16>, vector<16x96xf32> -> vector<16x96xf32>
    %c0_4 = arith.constant 0 : index
    %c0_5 = arith.constant 0 : index
    %10 = vector.load %arg4[%c0_4, %c0_5] : memref<1x96xf32, #tpu.memory_space<vmem>>, vector<1x96xf32>
    %11 = vector.broadcast %10 : vector<1x96xf32> to vector<16x96xf32>
    %12 = arith.addf %9, %11 : vector<16x96xf32>
    %13 = vector.extract_strided_slice %12 {offsets = [0, 0], sizes = [16, 32], strides = [1, 1]} : vector<16x96xf32> to vector<16x32xf32>
    %14 = vector.extract_strided_slice %12 {offsets = [0, 32], sizes = [16, 32], strides = [1, 1]} : vector<16x96xf32> to vector<16x32xf32>
    %15 = vector.extract_strided_slice %12 {offsets = [0, 64], sizes = [16, 32], strides = [1, 1]} : vector<16x96xf32> to vector<16x32xf32>
    %16 = tpu.iota {dimensions = array<i32: 1>} : vector<16x16xi32>
    %17 = vector.broadcast %1 : i32 to vector<16x16xi32>
    %18 = arith.cmpi sge, %16, %17 : vector<16x16xi32>
    %19 = arith.extui %18 : vector<16x16xi1> to vector<16x16xi32>
    %20 = arith.sitofp %19 : vector<16x16xi32> to vector<16x16xf32>
    %21 = vector.extract_strided_slice %13 {offsets = [0, 0], sizes = [16, 16], strides = [1, 1]} : vector<16x32xf32> to vector<16x16xf32>
    %22 = arith.truncf %21 : vector<16x16xf32> to vector<16x16xbf16>
    %23 = vector.extract_strided_slice %14 {offsets = [0, 0], sizes = [16, 16], strides = [1, 1]} : vector<16x32xf32> to vector<16x16xf32>
    %24 = arith.truncf %23 : vector<16x16xf32> to vector<16x16xbf16>
    %25 = vector.extract_strided_slice %15 {offsets = [0, 0], sizes = [16, 16], strides = [1, 1]} : vector<16x32xf32> to vector<16x16xf32>
    %26 = arith.truncf %25 : vector<16x16xf32> to vector<16x16xbf16>
    %cst_6 = arith.constant dense<0.000000e+00> : vector<16x16xf32>
    %27 = tpu.matmul %22, %24, %cst_6 {dimension_numbers = #tpu.dot_dimension_numbers<[1], [1], [0], [0], [0, 0, 1, 0], [], []>} : vector<16x16xbf16>, vector<16x16xbf16>, vector<16x16xf32> -> vector<16x16xf32>
    %cst_7 = arith.constant 2.500000e-01 : f32
    %28 = vector.broadcast %cst_7 : f32 to vector<16x16xf32>
    %29 = arith.mulf %27, %28 : vector<16x16xf32>
    %cst_8 = arith.constant 1.000000e+09 : f32
    %30 = vector.broadcast %cst_8 : f32 to vector<16x16xf32>
    %31 = arith.mulf %20, %30 : vector<16x16xf32>
    %32 = arith.subf %29, %31 : vector<16x16xf32>
    %cst_9 = arith.constant dense<0xFF800000> : vector<16xf32>
    %33 = vector.multi_reduction <maximumf>, %32, %cst_9 [1] : vector<16x16xf32> to vector<16xf32>
    %34 = vector.shape_cast %33 : vector<16xf32> to vector<16x1xf32>
    %35 = vector.broadcast %34 : vector<16x1xf32> to vector<16x16xf32>
    %36 = arith.subf %32, %35 : vector<16x16xf32>
    %37 = math.exp %36 : vector<16x16xf32>
    %cst_10 = arith.constant dense<0.000000e+00> : vector<16xf32>
    %38 = vector.multi_reduction <add>, %37, %cst_10 [1] : vector<16x16xf32> to vector<16xf32>
    %39 = vector.shape_cast %38 : vector<16xf32> to vector<16x1xf32>
    %40 = tpu.reciprocal %39 {approx = true} : vector<16x1xf32> -> vector<16x1xf32>
    %41 = vector.broadcast %40 : vector<16x1xf32> to vector<16x16xf32>
    %42 = arith.mulf %37, %41 : vector<16x16xf32>
    %43 = arith.truncf %42 : vector<16x16xf32> to vector<16x16xbf16>
    %cst_11 = arith.constant dense<0.000000e+00> : vector<16x16xf32>
    %44 = tpu.matmul %43, %26, %cst_11 {dimension_numbers = #tpu.dot_dimension_numbers<[1], [0], [0], [1], [0, 0, 1, 1], [], []>} : vector<16x16xbf16>, vector<16x16xbf16>, vector<16x16xf32> -> vector<16x16xf32>
    %45 = vector.extract_strided_slice %13 {offsets = [0, 16], sizes = [16, 16], strides = [1, 1]} : vector<16x32xf32> to vector<16x16xf32>
    %46 = arith.truncf %45 : vector<16x16xf32> to vector<16x16xbf16>
    %47 = vector.extract_strided_slice %14 {offsets = [0, 16], sizes = [16, 16], strides = [1, 1]} : vector<16x32xf32> to vector<16x16xf32>
    %48 = arith.truncf %47 : vector<16x16xf32> to vector<16x16xbf16>
    %49 = vector.extract_strided_slice %15 {offsets = [0, 16], sizes = [16, 16], strides = [1, 1]} : vector<16x32xf32> to vector<16x16xf32>
    %50 = arith.truncf %49 : vector<16x16xf32> to vector<16x16xbf16>
    %cst_12 = arith.constant dense<0.000000e+00> : vector<16x16xf32>
    %51 = tpu.matmul %46, %48, %cst_12 {dimension_numbers = #tpu.dot_dimension_numbers<[1], [1], [0], [0], [0, 0, 1, 0], [], []>} : vector<16x16xbf16>, vector<16x16xbf16>, vector<16x16xf32> -> vector<16x16xf32>
    %cst_13 = arith.constant 2.500000e-01 : f32
    %52 = vector.broadcast %cst_13 : f32 to vector<16x16xf32>
    %53 = arith.mulf %51, %52 : vector<16x16xf32>
    %cst_14 = arith.constant 1.000000e+09 : f32
    %54 = vector.broadcast %cst_14 : f32 to vector<16x16xf32>
    %55 = arith.mulf %20, %54 : vector<16x16xf32>
    %56 = arith.subf %53, %55 : vector<16x16xf32>
    %cst_15 = arith.constant dense<0xFF800000> : vector<16xf32>
    %57 = vector.multi_reduction <maximumf>, %56, %cst_15 [1] : vector<16x16xf32> to vector<16xf32>
    %58 = vector.shape_cast %57 : vector<16xf32> to vector<16x1xf32>
    %59 = vector.broadcast %58 : vector<16x1xf32> to vector<16x16xf32>
    %60 = arith.subf %56, %59 : vector<16x16xf32>
    %61 = math.exp %60 : vector<16x16xf32>
    %cst_16 = arith.constant dense<0.000000e+00> : vector<16xf32>
    %62 = vector.multi_reduction <add>, %61, %cst_16 [1] : vector<16x16xf32> to vector<16xf32>
    %63 = vector.shape_cast %62 : vector<16xf32> to vector<16x1xf32>
    %64 = tpu.reciprocal %63 {approx = true} : vector<16x1xf32> -> vector<16x1xf32>
    %65 = vector.broadcast %64 : vector<16x1xf32> to vector<16x16xf32>
    %66 = arith.mulf %61, %65 : vector<16x16xf32>
    %67 = arith.truncf %66 : vector<16x16xf32> to vector<16x16xbf16>
    %cst_17 = arith.constant dense<0.000000e+00> : vector<16x16xf32>
    %68 = tpu.matmul %67, %50, %cst_17 {dimension_numbers = #tpu.dot_dimension_numbers<[1], [0], [0], [1], [0, 0, 1, 1], [], []>} : vector<16x16xbf16>, vector<16x16xbf16>, vector<16x16xf32> -> vector<16x16xf32>
    %69 = tpu.concatenate %44, %68 in 1 : vector<16x16xf32>, vector<16x16xf32> -> vector<16x32xf32>
    %70 = arith.truncf %69 : vector<16x32xf32> to vector<16x32xbf16>
    %c0_18 = arith.constant 0 : index
    %c0_19 = arith.constant 0 : index
    %71 = vector.load %arg5[%c0_18, %c0_19] : memref<32x32xbf16, #tpu.memory_space<vmem>>, vector<32x32xbf16>
    %cst_20 = arith.constant dense<0.000000e+00> : vector<16x32xf32>
    %72 = tpu.matmul %70, %71, %cst_20 {dimension_numbers = #tpu.dot_dimension_numbers<[1], [0], [0], [1], [0, 0, 1, 1], [], []>} : vector<16x32xbf16>, vector<32x32xbf16>, vector<16x32xf32> -> vector<16x32xf32>
    %c0_21 = arith.constant 0 : index
    %c0_22 = arith.constant 0 : index
    %73 = vector.load %arg6[%c0_21, %c0_22] : memref<1x32xf32, #tpu.memory_space<vmem>>, vector<1x32xf32>
    %74 = vector.broadcast %73 : vector<1x32xf32> to vector<16x32xf32>
    %75 = arith.addf %72, %74 : vector<16x32xf32>
    %76 = arith.addf %75, %3 : vector<16x32xf32>
    %c0_23 = arith.constant 0 : index
    %c0_24 = arith.constant 0 : index
    %77 = vector.load %arg7[%c0_23, %c0_24] : memref<1x32xf32, #tpu.memory_space<vmem>>, vector<1x32xf32>
    %c0_25 = arith.constant 0 : index
    %c0_26 = arith.constant 0 : index
    %78 = vector.load %arg8[%c0_25, %c0_26] : memref<1x32xf32, #tpu.memory_space<vmem>>, vector<1x32xf32>
    %cst_27 = arith.constant dense<0.000000e+00> : vector<16xf32>
    %79 = vector.multi_reduction <add>, %76, %cst_27 [1] : vector<16x32xf32> to vector<16xf32>
    %80 = vector.shape_cast %79 : vector<16xf32> to vector<16x1xf32>
    %cst_28 = arith.constant 3.200000e+01 : f32
    %81 = vector.broadcast %cst_28 : f32 to vector<16x1xf32>
    %82 = arith.divf %80, %81 : vector<16x1xf32>
    %83 = vector.broadcast %82 : vector<16x1xf32> to vector<16x32xf32>
    %84 = arith.subf %76, %83 : vector<16x32xf32>
    %85 = arith.mulf %84, %84 : vector<16x32xf32>
    %cst_29 = arith.constant dense<0.000000e+00> : vector<16xf32>
    %86 = vector.multi_reduction <add>, %85, %cst_29 [1] : vector<16x32xf32> to vector<16xf32>
    %87 = vector.shape_cast %86 : vector<16xf32> to vector<16x1xf32>
    %cst_30 = arith.constant 3.200000e+01 : f32
    %88 = vector.broadcast %cst_30 : f32 to vector<16x1xf32>
    %89 = arith.divf %87, %88 : vector<16x1xf32>
    %cst_31 = arith.constant 9.99999974E-6 : f32
    %90 = vector.broadcast %cst_31 : f32 to vector<16x1xf32>
    %91 = arith.addf %89, %90 : vector<16x1xf32>
    %92 = math.rsqrt %91 : vector<16x1xf32>
    %93 = vector.broadcast %92 : vector<16x1xf32> to vector<16x32xf32>
    %94 = arith.mulf %84, %93 : vector<16x32xf32>
    %95 = vector.broadcast %77 : vector<1x32xf32> to vector<16x32xf32>
    %96 = arith.mulf %94, %95 : vector<16x32xf32>
    %97 = vector.broadcast %78 : vector<1x32xf32> to vector<16x32xf32>
    %98 = arith.addf %96, %97 : vector<16x32xf32>
    %cst_32 = arith.constant 0.000000e+00 : f32
    %99 = vector.shape_cast %6 : vector<16x1xi1> to vector<16x1xi1>
    %100 = vector.broadcast %99 : vector<16x1xi1> to vector<16x32xi1>
    %101 = vector.broadcast %cst_32 : f32 to vector<16x32xf32>
    %102 = arith.select %100, %101, %98 : vector<16x32xi1>, vector<16x32xf32>
    %cst_33 = arith.constant 0.000000e+00 : f32
    %103 = vector.broadcast %cst_33 : f32 to vector<4x32xf32>
    %104 = vector.extract_strided_slice %102 {offsets = [0, 0], sizes = [12, 32], strides = [1, 1]} : vector<16x32xf32> to vector<12x32xf32>
    %105 = tpu.concatenate %103, %104 in 0 : vector<4x32xf32>, vector<12x32xf32> -> vector<16x32xf32>
    %cst_34 = arith.constant 0.000000e+00 : f32
    %106 = vector.broadcast %cst_34 : f32 to vector<3x32xf32>
    %107 = vector.extract_strided_slice %102 {offsets = [0, 0], sizes = [13, 32], strides = [1, 1]} : vector<16x32xf32> to vector<13x32xf32>
    %108 = tpu.concatenate %106, %107 in 0 : vector<3x32xf32>, vector<13x32xf32> -> vector<16x32xf32>
    %cst_35 = arith.constant 0.000000e+00 : f32
    %109 = vector.broadcast %cst_35 : f32 to vector<2x32xf32>
    %110 = vector.extract_strided_slice %102 {offsets = [0, 0], sizes = [14, 32], strides = [1, 1]} : vector<16x32xf32> to vector<14x32xf32>
    %111 = tpu.concatenate %109, %110 in 0 : vector<2x32xf32>, vector<14x32xf32> -> vector<16x32xf32>
    %cst_36 = arith.constant 0.000000e+00 : f32
    %112 = vector.broadcast %cst_36 : f32 to vector<1x32xf32>
    %113 = vector.extract_strided_slice %102 {offsets = [0, 0], sizes = [15, 32], strides = [1, 1]} : vector<16x32xf32> to vector<15x32xf32>
    %114 = tpu.concatenate %112, %113 in 0 : vector<1x32xf32>, vector<15x32xf32> -> vector<16x32xf32>
    %cst_37 = arith.constant 0.000000e+00 : f32
    %115 = vector.broadcast %cst_37 : f32 to vector<1x32xf32>
    %116 = vector.extract_strided_slice %102 {offsets = [1, 0], sizes = [15, 32], strides = [1, 1]} : vector<16x32xf32> to vector<15x32xf32>
    %117 = tpu.concatenate %116, %115 in 0 : vector<15x32xf32>, vector<1x32xf32> -> vector<16x32xf32>
    %cst_38 = arith.constant 0.000000e+00 : f32
    %118 = vector.broadcast %cst_38 : f32 to vector<2x32xf32>
    %119 = vector.extract_strided_slice %102 {offsets = [2, 0], sizes = [14, 32], strides = [1, 1]} : vector<16x32xf32> to vector<14x32xf32>
    %120 = tpu.concatenate %119, %118 in 0 : vector<14x32xf32>, vector<2x32xf32> -> vector<16x32xf32>
    %cst_39 = arith.constant 0.000000e+00 : f32
    %121 = vector.broadcast %cst_39 : f32 to vector<3x32xf32>
    %122 = vector.extract_strided_slice %102 {offsets = [3, 0], sizes = [13, 32], strides = [1, 1]} : vector<16x32xf32> to vector<13x32xf32>
    %123 = tpu.concatenate %122, %121 in 0 : vector<13x32xf32>, vector<3x32xf32> -> vector<16x32xf32>
    %cst_40 = arith.constant 0.000000e+00 : f32
    %124 = vector.broadcast %cst_40 : f32 to vector<4x32xf32>
    %125 = vector.extract_strided_slice %102 {offsets = [4, 0], sizes = [12, 32], strides = [1, 1]} : vector<16x32xf32> to vector<12x32xf32>
    %126 = tpu.concatenate %125, %124 in 0 : vector<12x32xf32>, vector<4x32xf32> -> vector<16x32xf32>
    %127 = tpu.concatenate %105, %108, %111, %114, %102, %117, %120, %123, %126 in 1 : vector<16x32xf32>, vector<16x32xf32>, vector<16x32xf32>, vector<16x32xf32>, vector<16x32xf32>, vector<16x32xf32>, vector<16x32xf32>, vector<16x32xf32>, vector<16x32xf32> -> vector<16x288xf32>
    %128 = arith.truncf %127 : vector<16x288xf32> to vector<16x288xbf16>
    %c0_41 = arith.constant 0 : index
    %c0_42 = arith.constant 0 : index
    %129 = vector.load %arg9[%c0_41, %c0_42] : memref<288x64xbf16, #tpu.memory_space<vmem>>, vector<288x64xbf16>
    %cst_43 = arith.constant dense<0.000000e+00> : vector<16x64xf32>
    %130 = tpu.matmul %128, %129, %cst_43 {dimension_numbers = #tpu.dot_dimension_numbers<[1], [0], [0], [1], [0, 0, 1, 1], [], []>} : vector<16x288xbf16>, vector<288x64xbf16>, vector<16x64xf32> -> vector<16x64xf32>
    %c0_44 = arith.constant 0 : index
    %c0_45 = arith.constant 0 : index
    %131 = vector.load %arg10[%c0_44, %c0_45] : memref<1x64xf32, #tpu.memory_space<vmem>>, vector<1x64xf32>
    %132 = vector.broadcast %131 : vector<1x64xf32> to vector<16x64xf32>
    %133 = arith.addf %130, %132 : vector<16x64xf32>
    %cst_46 = arith.constant 0.000000e+00 : f32
    %134 = vector.broadcast %cst_46 : f32 to vector<16x64xf32>
    %135 = arith.maximumf %133, %134 : vector<16x64xf32>
    %136 = arith.truncf %135 : vector<16x64xf32> to vector<16x64xbf16>
    %c0_47 = arith.constant 0 : index
    %c0_48 = arith.constant 0 : index
    %137 = vector.load %arg11[%c0_47, %c0_48] : memref<64x32xbf16, #tpu.memory_space<vmem>>, vector<64x32xbf16>
    %cst_49 = arith.constant dense<0.000000e+00> : vector<16x32xf32>
    %138 = tpu.matmul %136, %137, %cst_49 {dimension_numbers = #tpu.dot_dimension_numbers<[1], [0], [0], [1], [0, 0, 1, 1], [], []>} : vector<16x64xbf16>, vector<64x32xbf16>, vector<16x32xf32> -> vector<16x32xf32>
    %c0_50 = arith.constant 0 : index
    %c0_51 = arith.constant 0 : index
    %139 = vector.load %arg12[%c0_50, %c0_51] : memref<1x32xf32, #tpu.memory_space<vmem>>, vector<1x32xf32>
    %140 = vector.broadcast %139 : vector<1x32xf32> to vector<16x32xf32>
    %141 = arith.addf %138, %140 : vector<16x32xf32>
    %142 = arith.addf %141, %102 : vector<16x32xf32>
    %c0_52 = arith.constant 0 : index
    %c0_53 = arith.constant 0 : index
    %143 = vector.load %arg13[%c0_52, %c0_53] : memref<1x32xf32, #tpu.memory_space<vmem>>, vector<1x32xf32>
    %c0_54 = arith.constant 0 : index
    %c0_55 = arith.constant 0 : index
    %144 = vector.load %arg14[%c0_54, %c0_55] : memref<1x32xf32, #tpu.memory_space<vmem>>, vector<1x32xf32>
    %cst_56 = arith.constant dense<0.000000e+00> : vector<16xf32>
    %145 = vector.multi_reduction <add>, %142, %cst_56 [1] : vector<16x32xf32> to vector<16xf32>
    %146 = vector.shape_cast %145 : vector<16xf32> to vector<16x1xf32>
    %cst_57 = arith.constant 3.200000e+01 : f32
    %147 = vector.broadcast %cst_57 : f32 to vector<16x1xf32>
    %148 = arith.divf %146, %147 : vector<16x1xf32>
    %149 = vector.broadcast %148 : vector<16x1xf32> to vector<16x32xf32>
    %150 = arith.subf %142, %149 : vector<16x32xf32>
    %151 = arith.mulf %150, %150 : vector<16x32xf32>
    %cst_58 = arith.constant dense<0.000000e+00> : vector<16xf32>
    %152 = vector.multi_reduction <add>, %151, %cst_58 [1] : vector<16x32xf32> to vector<16xf32>
    %153 = vector.shape_cast %152 : vector<16xf32> to vector<16x1xf32>
    %cst_59 = arith.constant 3.200000e+01 : f32
    %154 = vector.broadcast %cst_59 : f32 to vector<16x1xf32>
    %155 = arith.divf %153, %154 : vector<16x1xf32>
    %cst_60 = arith.constant 9.99999974E-6 : f32
    %156 = vector.broadcast %cst_60 : f32 to vector<16x1xf32>
    %157 = arith.addf %155, %156 : vector<16x1xf32>
    %158 = math.rsqrt %157 : vector<16x1xf32>
    %159 = vector.broadcast %158 : vector<16x1xf32> to vector<16x32xf32>
    %160 = arith.mulf %150, %159 : vector<16x32xf32>
    %161 = vector.broadcast %143 : vector<1x32xf32> to vector<16x32xf32>
    %162 = arith.mulf %160, %161 : vector<16x32xf32>
    %163 = vector.broadcast %144 : vector<1x32xf32> to vector<16x32xf32>
    %164 = arith.addf %162, %163 : vector<16x32xf32>
    %cst_61 = arith.constant 0.000000e+00 : f32
    %165 = vector.shape_cast %6 : vector<16x1xi1> to vector<16x1xi1>
    %166 = vector.broadcast %165 : vector<16x1xi1> to vector<16x32xi1>
    %167 = vector.broadcast %cst_61 : f32 to vector<16x32xf32>
    %168 = arith.select %166, %167, %164 : vector<16x32xi1>, vector<16x32xf32>
    %c0_62 = arith.constant 0 : index
    %c0_63 = arith.constant 0 : index
    %c0_64 = arith.constant 0 : index
    %169 = vector.load %arg15[%c0_62, %c0_63, %c0_64] : memref<1x16x32xf32, #tpu.memory_space<vmem>>, vector<1x16x32xf32>
    %170 = vector.shape_cast %169 : vector<1x16x32xf32> to vector<16x32xf32>
    %171 = vector.shape_cast %168 : vector<16x32xf32> to vector<1x16x32xf32>
    tpu.vector_store %arg15[%c0_62, %c0_63, %c0_64], %171 {strides = array<i32>} : memref<1x16x32xf32, #tpu.memory_space<vmem>>, vector<1x16x32xf32>,
    return
  }
  func.func @transform_0(%arg0: i32, %arg1: memref<2xi32, #tpu.memory_space<smem>>) -> (i32, i32, i32) {
    %c0_i32 = arith.constant 0 : i32
    %c0_i32_0 = arith.constant 0 : i32
    %c0_i32_1 = arith.constant 0 : i32
    return %arg0, %c0_i32, %c0_i32_0 : i32, i32, i32
  }
  func.func @transform_1(%arg0: i32, %arg1: memref<2xi32, #tpu.memory_space<smem>>) -> (i32, i32) {
    %c0_i32 = arith.constant 0 : i32
    %c0_i32_0 = arith.constant 0 : i32
    %c0_i32_1 = arith.constant 0 : i32
    return %c0_i32, %c0_i32_0 : i32, i32
  }
  func.func @transform_2(%arg0: i32, %arg1: memref<2xi32, #tpu.memory_space<smem>>) -> (i32, i32) {
    %c0_i32 = arith.constant 0 : i32
    %c0_i32_0 = arith.constant 0 : i32
    %c0_i32_1 = arith.constant 0 : i32
    return %c0_i32, %c0_i32_0 : i32, i32
  }
  func.func @transform_3(%arg0: i32, %arg1: memref<2xi32, #tpu.memory_space<smem>>) -> (i32, i32) {
    %c0_i32 = arith.constant 0 : i32
    %c0_i32_0 = arith.constant 0 : i32
    %c0_i32_1 = arith.constant 0 : i32
    return %c0_i32, %c0_i32_0 : i32, i32
  }
  func.func @transform_4(%arg0: i32, %arg1: memref<2xi32, #tpu.memory_space<smem>>) -> (i32, i32) {
    %c0_i32 = arith.constant 0 : i32
    %c0_i32_0 = arith.constant 0 : i32
    %c0_i32_1 = arith.constant 0 : i32
    return %c0_i32, %c0_i32_0 : i32, i32
  }
  func.func @transform_5(%arg0: i32, %arg1: memref<2xi32, #tpu.memory_space<smem>>) -> (i32, i32) {
    %c0_i32 = arith.constant 0 : i32
    %c0_i32_0 = arith.constant 0 : i32
    %c0_i32_1 = arith.constant 0 : i32
    return %c0_i32, %c0_i32_0 : i32, i32
  }
  func.func @transform_6(%arg0: i32, %arg1: memref<2xi32, #tpu.memory_space<smem>>) -> (i32, i32) {
    %c0_i32 = arith.constant 0 : i32
    %c0_i32_0 = arith.constant 0 : i32
    %c0_i32_1 = arith.constant 0 : i32
    return %c0_i32, %c0_i32_0 : i32, i32
  }
  func.func @transform_7(%arg0: i32, %arg1: memref<2xi32, #tpu.memory_space<smem>>) -> (i32, i32) {
    %c0_i32 = arith.constant 0 : i32
    %c0_i32_0 = arith.constant 0 : i32
    %c0_i32_1 = arith.constant 0 : i32
    return %c0_i32, %c0_i32_0 : i32, i32
  }
  func.func @transform_8(%arg0: i32, %arg1: memref<2xi32, #tpu.memory_space<smem>>) -> (i32, i32) {
    %c0_i32 = arith.constant 0 : i32
    %c0_i32_0 = arith.constant 0 : i32
    %c0_i32_1 = arith.constant 0 : i32
    return %c0_i32, %c0_i32_0 : i32, i32
  }
  func.func @transform_9(%arg0: i32, %arg1: memref<2xi32, #tpu.memory_space<smem>>) -> (i32, i32) {
    %c0_i32 = arith.constant 0 : i32
    %c0_i32_0 = arith.constant 0 : i32
    %c0_i32_1 = arith.constant 0 : i32
    return %c0_i32, %c0_i32_0 : i32, i32
  }
  func.func @transform_10(%arg0: i32, %arg1: memref<2xi32, #tpu.memory_space<smem>>) -> (i32, i32) {
    %c0_i32 = arith.constant 0 : i32
    %c0_i32_0 = arith.constant 0 : i32
    %c0_i32_1 = arith.constant 0 : i32
    return %c0_i32, %c0_i32_0 : i32, i32
  }
  func.func @transform_11(%arg0: i32, %arg1: memref<2xi32, #tpu.memory_space<smem>>) -> (i32, i32) {
    %c0_i32 = arith.constant 0 : i32
    %c0_i32_0 = arith.constant 0 : i32
    %c0_i32_1 = arith.constant 0 : i32
    return %c0_i32, %c0_i32_0 : i32, i32
  }
  func.func @transform_12(%arg0: i32, %arg1: memref<2xi32, #tpu.memory_space<smem>>) -> (i32, i32) {
    %c0_i32 = arith.constant 0 : i32
    %c0_i32_0 = arith.constant 0 : i32
    %c0_i32_1 = arith.constant 0 : i32
    return %c0_i32, %c0_i32_0 : i32, i32
  }
  func.func @transform_13(%arg0: i32, %arg1: memref<2xi32, #tpu.memory_space<smem>>) -> (i32, i32, i32) {
    %c0_i32 = arith.constant 0 : i32
    %c0_i32_0 = arith.constant 0 : i32
    %c0_i32_1 = arith.constant 0 : i32
    return %arg0, %c0_i32, %c0_i32_0 : i32, i32, i32
  }
}

module attributes {stable_mosaic.version = 11 : i64} {
  func.func @_var_pred_kernel(%arg0: i32, %arg1: i32, %arg2: memref<2xi32, #tpu.memory_space<smem>>, %arg3: memref<1x16x32xf32, #tpu.memory_space<vmem>>, %arg4: memref<1x96x32xbf16, #tpu.memory_space<vmem>>, %arg5: memref<1x1x32xf32, #tpu.memory_space<vmem>>, %arg6: memref<1x1x32xf32, #tpu.memory_space<vmem>>, %arg7: memref<1x1x32xf32, #tpu.memory_space<vmem>>, %arg8: memref<1x96x32xbf16, #tpu.memory_space<vmem>>, %arg9: memref<1x1x32xf32, #tpu.memory_space<vmem>>, %arg10: memref<1x1x32xf32, #tpu.memory_space<vmem>>, %arg11: memref<1x1x32xf32, #tpu.memory_space<vmem>>, %arg12: memref<1x32x1xbf16, #tpu.memory_space<vmem>>, %arg13: memref<1x1x1xf32, #tpu.memory_space<vmem>>, %arg14: memref<1x1x16x1xf32, #tpu.memory_space<vmem>>) attributes {dimension_semantics = [#tpu.dimension_semantics<parallel>, #tpu.dimension_semantics<parallel>], iteration_bounds = array<i64: 1, 2>, scalar_prefetch = 1 : i64, scratch_operands = 0 : i64, tpu.core_type = #tpu.core_type<tc>, window_params = [{transform_indices = @transform_0, window_bounds = array<i64: 1, 16, 32>}, {transform_indices = @transform_1, window_bounds = array<i64: 1, 96, 32>}, {transform_indices = @transform_2, window_bounds = array<i64: 1, 1, 32>}, {transform_indices = @transform_3, window_bounds = array<i64: 1, 1, 32>}, {transform_indices = @transform_4, window_bounds = array<i64: 1, 1, 32>}, {transform_indices = @transform_5, window_bounds = array<i64: 1, 96, 32>}, {transform_indices = @transform_6, window_bounds = array<i64: 1, 1, 32>}, {transform_indices = @transform_7, window_bounds = array<i64: 1, 1, 32>}, {transform_indices = @transform_8, window_bounds = array<i64: 1, 1, 32>}, {transform_indices = @transform_9, window_bounds = array<i64: 1, 32, 1>}, {transform_indices = @transform_10, window_bounds = array<i64: 1, 1, 1>}, {transform_indices = @transform_11, window_bounds = array<i64: 1, 1, 16, 1>}]} {
    %0 = arith.index_cast %arg1 : i32 to index
    %1 = memref.load %arg2[%0] : memref<2xi32, #tpu.memory_space<smem>>
    %c0 = arith.constant 0 : index
    %c0_0 = arith.constant 0 : index
    %c0_1 = arith.constant 0 : index
    %2 = vector.load %arg3[%c0, %c0_0, %c0_1] : memref<1x16x32xf32, #tpu.memory_space<vmem>>, vector<1x16x32xf32>
    %3 = vector.shape_cast %2 : vector<1x16x32xf32> to vector<16x32xf32>
    %cst = arith.constant 0.000000e+00 : f32
    %4 = vector.broadcast %cst : f32 to vector<1x32xf32>
    %5 = vector.extract_strided_slice %3 {offsets = [0, 0], sizes = [15, 32], strides = [1, 1]} : vector<16x32xf32> to vector<15x32xf32>
    %6 = tpu.concatenate %4, %5 in 0 : vector<1x32xf32>, vector<15x32xf32> -> vector<16x32xf32>
    %cst_2 = arith.constant 0.000000e+00 : f32
    %7 = vector.broadcast %cst_2 : f32 to vector<1x32xf32>
    %8 = vector.extract_strided_slice %3 {offsets = [1, 0], sizes = [15, 32], strides = [1, 1]} : vector<16x32xf32> to vector<15x32xf32>
    %9 = tpu.concatenate %8, %7 in 0 : vector<15x32xf32>, vector<1x32xf32> -> vector<16x32xf32>
    %10 = tpu.concatenate %6, %3, %9 in 1 : vector<16x32xf32>, vector<16x32xf32>, vector<16x32xf32> -> vector<16x96xf32>
    %11 = arith.truncf %10 : vector<16x96xf32> to vector<16x96xbf16>
    %c0_3 = arith.constant 0 : index
    %c0_4 = arith.constant 0 : index
    %c0_5 = arith.constant 0 : index
    %12 = vector.load %arg4[%c0_3, %c0_4, %c0_5] : memref<1x96x32xbf16, #tpu.memory_space<vmem>>, vector<1x96x32xbf16>
    %13 = vector.shape_cast %12 : vector<1x96x32xbf16> to vector<96x32xbf16>
    %cst_6 = arith.constant dense<0.000000e+00> : vector<16x32xf32>
    %14 = tpu.matmul %11, %13, %cst_6 {dimension_numbers = #tpu.dot_dimension_numbers<[1], [0], [0], [1], [0, 0, 1, 1], [], []>} : vector<16x96xbf16>, vector<96x32xbf16>, vector<16x32xf32> -> vector<16x32xf32>
    %c0_7 = arith.constant 0 : index
    %c0_8 = arith.constant 0 : index
    %c0_9 = arith.constant 0 : index
    %15 = vector.load %arg5[%c0_7, %c0_8, %c0_9] : memref<1x1x32xf32, #tpu.memory_space<vmem>>, vector<1x1x32xf32>
    %16 = vector.shape_cast %15 : vector<1x1x32xf32> to vector<1x32xf32>
    %17 = vector.broadcast %16 : vector<1x32xf32> to vector<16x32xf32>
    %18 = arith.addf %14, %17 : vector<16x32xf32>
    %cst_10 = arith.constant 0.000000e+00 : f32
    %19 = vector.broadcast %cst_10 : f32 to vector<16x32xf32>
    %20 = arith.maximumf %18, %19 : vector<16x32xf32>
    %c0_11 = arith.constant 0 : index
    %c0_12 = arith.constant 0 : index
    %c0_13 = arith.constant 0 : index
    %21 = vector.load %arg6[%c0_11, %c0_12, %c0_13] : memref<1x1x32xf32, #tpu.memory_space<vmem>>, vector<1x1x32xf32>
    %22 = vector.shape_cast %21 : vector<1x1x32xf32> to vector<1x32xf32>
    %c0_14 = arith.constant 0 : index
    %c0_15 = arith.constant 0 : index
    %c0_16 = arith.constant 0 : index
    %23 = vector.load %arg7[%c0_14, %c0_15, %c0_16] : memref<1x1x32xf32, #tpu.memory_space<vmem>>, vector<1x1x32xf32>
    %24 = vector.shape_cast %23 : vector<1x1x32xf32> to vector<1x32xf32>
    %cst_17 = arith.constant dense<0.000000e+00> : vector<16xf32>
    %25 = vector.multi_reduction <add>, %20, %cst_17 [1] : vector<16x32xf32> to vector<16xf32>
    %26 = vector.shape_cast %25 : vector<16xf32> to vector<16x1xf32>
    %cst_18 = arith.constant 3.200000e+01 : f32
    %27 = vector.broadcast %cst_18 : f32 to vector<16x1xf32>
    %28 = arith.divf %26, %27 : vector<16x1xf32>
    %29 = vector.broadcast %28 : vector<16x1xf32> to vector<16x32xf32>
    %30 = arith.subf %20, %29 : vector<16x32xf32>
    %31 = arith.mulf %30, %30 : vector<16x32xf32>
    %cst_19 = arith.constant dense<0.000000e+00> : vector<16xf32>
    %32 = vector.multi_reduction <add>, %31, %cst_19 [1] : vector<16x32xf32> to vector<16xf32>
    %33 = vector.shape_cast %32 : vector<16xf32> to vector<16x1xf32>
    %cst_20 = arith.constant 3.200000e+01 : f32
    %34 = vector.broadcast %cst_20 : f32 to vector<16x1xf32>
    %35 = arith.divf %33, %34 : vector<16x1xf32>
    %cst_21 = arith.constant 9.99999974E-6 : f32
    %36 = vector.broadcast %cst_21 : f32 to vector<16x1xf32>
    %37 = arith.addf %35, %36 : vector<16x1xf32>
    %38 = math.rsqrt %37 : vector<16x1xf32>
    %39 = vector.broadcast %38 : vector<16x1xf32> to vector<16x32xf32>
    %40 = arith.mulf %30, %39 : vector<16x32xf32>
    %41 = vector.broadcast %22 : vector<1x32xf32> to vector<16x32xf32>
    %42 = arith.mulf %40, %41 : vector<16x32xf32>
    %43 = vector.broadcast %24 : vector<1x32xf32> to vector<16x32xf32>
    %44 = arith.addf %42, %43 : vector<16x32xf32>
    %cst_22 = arith.constant 0.000000e+00 : f32
    %45 = vector.broadcast %cst_22 : f32 to vector<1x32xf32>
    %46 = vector.extract_strided_slice %44 {offsets = [0, 0], sizes = [15, 32], strides = [1, 1]} : vector<16x32xf32> to vector<15x32xf32>
    %47 = tpu.concatenate %45, %46 in 0 : vector<1x32xf32>, vector<15x32xf32> -> vector<16x32xf32>
    %cst_23 = arith.constant 0.000000e+00 : f32
    %48 = vector.broadcast %cst_23 : f32 to vector<1x32xf32>
    %49 = vector.extract_strided_slice %44 {offsets = [1, 0], sizes = [15, 32], strides = [1, 1]} : vector<16x32xf32> to vector<15x32xf32>
    %50 = tpu.concatenate %49, %48 in 0 : vector<15x32xf32>, vector<1x32xf32> -> vector<16x32xf32>
    %51 = tpu.concatenate %47, %44, %50 in 1 : vector<16x32xf32>, vector<16x32xf32>, vector<16x32xf32> -> vector<16x96xf32>
    %52 = arith.truncf %51 : vector<16x96xf32> to vector<16x96xbf16>
    %c0_24 = arith.constant 0 : index
    %c0_25 = arith.constant 0 : index
    %c0_26 = arith.constant 0 : index
    %53 = vector.load %arg8[%c0_24, %c0_25, %c0_26] : memref<1x96x32xbf16, #tpu.memory_space<vmem>>, vector<1x96x32xbf16>
    %54 = vector.shape_cast %53 : vector<1x96x32xbf16> to vector<96x32xbf16>
    %cst_27 = arith.constant dense<0.000000e+00> : vector<16x32xf32>
    %55 = tpu.matmul %52, %54, %cst_27 {dimension_numbers = #tpu.dot_dimension_numbers<[1], [0], [0], [1], [0, 0, 1, 1], [], []>} : vector<16x96xbf16>, vector<96x32xbf16>, vector<16x32xf32> -> vector<16x32xf32>
    %c0_28 = arith.constant 0 : index
    %c0_29 = arith.constant 0 : index
    %c0_30 = arith.constant 0 : index
    %56 = vector.load %arg9[%c0_28, %c0_29, %c0_30] : memref<1x1x32xf32, #tpu.memory_space<vmem>>, vector<1x1x32xf32>
    %57 = vector.shape_cast %56 : vector<1x1x32xf32> to vector<1x32xf32>
    %58 = vector.broadcast %57 : vector<1x32xf32> to vector<16x32xf32>
    %59 = arith.addf %55, %58 : vector<16x32xf32>
    %cst_31 = arith.constant 0.000000e+00 : f32
    %60 = vector.broadcast %cst_31 : f32 to vector<16x32xf32>
    %61 = arith.maximumf %59, %60 : vector<16x32xf32>
    %c0_32 = arith.constant 0 : index
    %c0_33 = arith.constant 0 : index
    %c0_34 = arith.constant 0 : index
    %62 = vector.load %arg10[%c0_32, %c0_33, %c0_34] : memref<1x1x32xf32, #tpu.memory_space<vmem>>, vector<1x1x32xf32>
    %63 = vector.shape_cast %62 : vector<1x1x32xf32> to vector<1x32xf32>
    %c0_35 = arith.constant 0 : index
    %c0_36 = arith.constant 0 : index
    %c0_37 = arith.constant 0 : index
    %64 = vector.load %arg11[%c0_35, %c0_36, %c0_37] : memref<1x1x32xf32, #tpu.memory_space<vmem>>, vector<1x1x32xf32>
    %65 = vector.shape_cast %64 : vector<1x1x32xf32> to vector<1x32xf32>
    %cst_38 = arith.constant dense<0.000000e+00> : vector<16xf32>
    %66 = vector.multi_reduction <add>, %61, %cst_38 [1] : vector<16x32xf32> to vector<16xf32>
    %67 = vector.shape_cast %66 : vector<16xf32> to vector<16x1xf32>
    %cst_39 = arith.constant 3.200000e+01 : f32
    %68 = vector.broadcast %cst_39 : f32 to vector<16x1xf32>
    %69 = arith.divf %67, %68 : vector<16x1xf32>
    %70 = vector.broadcast %69 : vector<16x1xf32> to vector<16x32xf32>
    %71 = arith.subf %61, %70 : vector<16x32xf32>
    %72 = arith.mulf %71, %71 : vector<16x32xf32>
    %cst_40 = arith.constant dense<0.000000e+00> : vector<16xf32>
    %73 = vector.multi_reduction <add>, %72, %cst_40 [1] : vector<16x32xf32> to vector<16xf32>
    %74 = vector.shape_cast %73 : vector<16xf32> to vector<16x1xf32>
    %cst_41 = arith.constant 3.200000e+01 : f32
    %75 = vector.broadcast %cst_41 : f32 to vector<16x1xf32>
    %76 = arith.divf %74, %75 : vector<16x1xf32>
    %cst_42 = arith.constant 9.99999974E-6 : f32
    %77 = vector.broadcast %cst_42 : f32 to vector<16x1xf32>
    %78 = arith.addf %76, %77 : vector<16x1xf32>
    %79 = math.rsqrt %78 : vector<16x1xf32>
    %80 = vector.broadcast %79 : vector<16x1xf32> to vector<16x32xf32>
    %81 = arith.mulf %71, %80 : vector<16x32xf32>
    %82 = vector.broadcast %63 : vector<1x32xf32> to vector<16x32xf32>
    %83 = arith.mulf %81, %82 : vector<16x32xf32>
    %84 = vector.broadcast %65 : vector<1x32xf32> to vector<16x32xf32>
    %85 = arith.addf %83, %84 : vector<16x32xf32>
    %86 = arith.truncf %85 : vector<16x32xf32> to vector<16x32xbf16>
    %c0_43 = arith.constant 0 : index
    %c0_44 = arith.constant 0 : index
    %c0_45 = arith.constant 0 : index
    %87 = vector.load %arg12[%c0_43, %c0_44, %c0_45] : memref<1x32x1xbf16, #tpu.memory_space<vmem>>, vector<1x32x1xbf16>
    %88 = vector.shape_cast %87 : vector<1x32x1xbf16> to vector<32x1xbf16>
    %cst_46 = arith.constant dense<0.000000e+00> : vector<16x1xf32>
    %89 = tpu.matmul %86, %88, %cst_46 {dimension_numbers = #tpu.dot_dimension_numbers<[1], [0], [0], [1], [0, 0, 1, 1], [], []>} : vector<16x32xbf16>, vector<32x1xbf16>, vector<16x1xf32> -> vector<16x1xf32>
    %c0_47 = arith.constant 0 : index
    %c0_48 = arith.constant 0 : index
    %c0_49 = arith.constant 0 : index
    %90 = vector.load %arg13[%c0_47, %c0_48, %c0_49] : memref<1x1x1xf32, #tpu.memory_space<vmem>>, vector<1x1x1xf32>
    %91 = vector.shape_cast %90 : vector<1x1x1xf32> to vector<1x1xf32>
    %92 = vector.broadcast %91 : vector<1x1xf32> to vector<16x1xf32>
    %93 = arith.addf %89, %92 : vector<16x1xf32>
    %94 = tpu.iota {dimensions = array<i32: 0>} : vector<16x1xi32>
    %95 = vector.broadcast %1 : i32 to vector<16x1xi32>
    %96 = arith.cmpi sge, %94, %95 : vector<16x1xi32>
    %cst_50 = arith.constant 0.000000e+00 : f32
    %97 = vector.broadcast %cst_50 : f32 to vector<16x1xf32>
    %98 = arith.select %96, %97, %93 : vector<16x1xi1>, vector<16x1xf32>
    %c0_51 = arith.constant 0 : index
    %c0_52 = arith.constant 0 : index
    %c0_53 = arith.constant 0 : index
    %c0_54 = arith.constant 0 : index
    %99 = vector.load %arg14[%c0_51, %c0_52, %c0_53, %c0_54] : memref<1x1x16x1xf32, #tpu.memory_space<vmem>>, vector<1x1x16x1xf32>
    %100 = vector.shape_cast %99 : vector<1x1x16x1xf32> to vector<16x1xf32>
    %101 = vector.shape_cast %98 : vector<16x1xf32> to vector<1x1x16x1xf32>
    tpu.vector_store %arg14[%c0_51, %c0_52, %c0_53, %c0_54], %101 {strides = array<i32>} : memref<1x1x16x1xf32, #tpu.memory_space<vmem>>, vector<1x1x16x1xf32>,
    return
  }
  func.func @transform_0(%arg0: i32, %arg1: i32, %arg2: memref<2xi32, #tpu.memory_space<smem>>) -> (i32, i32, i32) {
    %c0_i32 = arith.constant 0 : i32
    %c0_i32_0 = arith.constant 0 : i32
    %c0_i32_1 = arith.constant 0 : i32
    return %arg1, %c0_i32, %c0_i32_0 : i32, i32, i32
  }
  func.func @transform_1(%arg0: i32, %arg1: i32, %arg2: memref<2xi32, #tpu.memory_space<smem>>) -> (i32, i32, i32) {
    %c0_i32 = arith.constant 0 : i32
    %c0_i32_0 = arith.constant 0 : i32
    %c0_i32_1 = arith.constant 0 : i32
    return %arg0, %c0_i32, %c0_i32_0 : i32, i32, i32
  }
  func.func @transform_2(%arg0: i32, %arg1: i32, %arg2: memref<2xi32, #tpu.memory_space<smem>>) -> (i32, i32, i32) {
    %c0_i32 = arith.constant 0 : i32
    %c0_i32_0 = arith.constant 0 : i32
    %c0_i32_1 = arith.constant 0 : i32
    return %arg0, %c0_i32, %c0_i32_0 : i32, i32, i32
  }
  func.func @transform_3(%arg0: i32, %arg1: i32, %arg2: memref<2xi32, #tpu.memory_space<smem>>) -> (i32, i32, i32) {
    %c0_i32 = arith.constant 0 : i32
    %c0_i32_0 = arith.constant 0 : i32
    %c0_i32_1 = arith.constant 0 : i32
    return %arg0, %c0_i32, %c0_i32_0 : i32, i32, i32
  }
  func.func @transform_4(%arg0: i32, %arg1: i32, %arg2: memref<2xi32, #tpu.memory_space<smem>>) -> (i32, i32, i32) {
    %c0_i32 = arith.constant 0 : i32
    %c0_i32_0 = arith.constant 0 : i32
    %c0_i32_1 = arith.constant 0 : i32
    return %arg0, %c0_i32, %c0_i32_0 : i32, i32, i32
  }
  func.func @transform_5(%arg0: i32, %arg1: i32, %arg2: memref<2xi32, #tpu.memory_space<smem>>) -> (i32, i32, i32) {
    %c0_i32 = arith.constant 0 : i32
    %c0_i32_0 = arith.constant 0 : i32
    %c0_i32_1 = arith.constant 0 : i32
    return %arg0, %c0_i32, %c0_i32_0 : i32, i32, i32
  }
  func.func @transform_6(%arg0: i32, %arg1: i32, %arg2: memref<2xi32, #tpu.memory_space<smem>>) -> (i32, i32, i32) {
    %c0_i32 = arith.constant 0 : i32
    %c0_i32_0 = arith.constant 0 : i32
    %c0_i32_1 = arith.constant 0 : i32
    return %arg0, %c0_i32, %c0_i32_0 : i32, i32, i32
  }
  func.func @transform_7(%arg0: i32, %arg1: i32, %arg2: memref<2xi32, #tpu.memory_space<smem>>) -> (i32, i32, i32) {
    %c0_i32 = arith.constant 0 : i32
    %c0_i32_0 = arith.constant 0 : i32
    %c0_i32_1 = arith.constant 0 : i32
    return %arg0, %c0_i32, %c0_i32_0 : i32, i32, i32
  }
  func.func @transform_8(%arg0: i32, %arg1: i32, %arg2: memref<2xi32, #tpu.memory_space<smem>>) -> (i32, i32, i32) {
    %c0_i32 = arith.constant 0 : i32
    %c0_i32_0 = arith.constant 0 : i32
    %c0_i32_1 = arith.constant 0 : i32
    return %arg0, %c0_i32, %c0_i32_0 : i32, i32, i32
  }
  func.func @transform_9(%arg0: i32, %arg1: i32, %arg2: memref<2xi32, #tpu.memory_space<smem>>) -> (i32, i32, i32) {
    %c0_i32 = arith.constant 0 : i32
    %c0_i32_0 = arith.constant 0 : i32
    %c0_i32_1 = arith.constant 0 : i32
    return %arg0, %c0_i32, %c0_i32_0 : i32, i32, i32
  }
  func.func @transform_10(%arg0: i32, %arg1: i32, %arg2: memref<2xi32, #tpu.memory_space<smem>>) -> (i32, i32, i32) {
    %c0_i32 = arith.constant 0 : i32
    %c0_i32_0 = arith.constant 0 : i32
    %c0_i32_1 = arith.constant 0 : i32
    return %arg0, %c0_i32, %c0_i32_0 : i32, i32, i32
  }
  func.func @transform_11(%arg0: i32, %arg1: i32, %arg2: memref<2xi32, #tpu.memory_space<smem>>) -> (i32, i32, i32, i32) {
    %c0_i32 = arith.constant 0 : i32
    %c0_i32_0 = arith.constant 0 : i32
    %c0_i32_1 = arith.constant 0 : i32
    return %arg0, %arg1, %c0_i32, %c0_i32_0 : i32, i32, i32, i32
  }
}

module attributes {stable_mosaic.version = 11 : i64} {
  func.func @_var_pred_kernel(%arg0: i32, %arg1: i32, %arg2: memref<2xi32, #tpu.memory_space<smem>>, %arg3: memref<1x64x32xf32, #tpu.memory_space<vmem>>, %arg4: memref<1x96x32xbf16, #tpu.memory_space<vmem>>, %arg5: memref<1x1x32xf32, #tpu.memory_space<vmem>>, %arg6: memref<1x1x32xf32, #tpu.memory_space<vmem>>, %arg7: memref<1x1x32xf32, #tpu.memory_space<vmem>>, %arg8: memref<1x96x32xbf16, #tpu.memory_space<vmem>>, %arg9: memref<1x1x32xf32, #tpu.memory_space<vmem>>, %arg10: memref<1x1x32xf32, #tpu.memory_space<vmem>>, %arg11: memref<1x1x32xf32, #tpu.memory_space<vmem>>, %arg12: memref<1x32x1xbf16, #tpu.memory_space<vmem>>, %arg13: memref<1x1x1xf32, #tpu.memory_space<vmem>>, %arg14: memref<1x1x64x1xf32, #tpu.memory_space<vmem>>) attributes {dimension_semantics = [#tpu.dimension_semantics<parallel>, #tpu.dimension_semantics<parallel>], iteration_bounds = array<i64: 2, 2>, scalar_prefetch = 1 : i64, scratch_operands = 0 : i64, tpu.core_type = #tpu.core_type<tc>, window_params = [{transform_indices = @transform_0, window_bounds = array<i64: 1, 64, 32>}, {transform_indices = @transform_1, window_bounds = array<i64: 1, 96, 32>}, {transform_indices = @transform_2, window_bounds = array<i64: 1, 1, 32>}, {transform_indices = @transform_3, window_bounds = array<i64: 1, 1, 32>}, {transform_indices = @transform_4, window_bounds = array<i64: 1, 1, 32>}, {transform_indices = @transform_5, window_bounds = array<i64: 1, 96, 32>}, {transform_indices = @transform_6, window_bounds = array<i64: 1, 1, 32>}, {transform_indices = @transform_7, window_bounds = array<i64: 1, 1, 32>}, {transform_indices = @transform_8, window_bounds = array<i64: 1, 1, 32>}, {transform_indices = @transform_9, window_bounds = array<i64: 1, 32, 1>}, {transform_indices = @transform_10, window_bounds = array<i64: 1, 1, 1>}, {transform_indices = @transform_11, window_bounds = array<i64: 1, 1, 64, 1>}]} {
    %0 = arith.index_cast %arg1 : i32 to index
    %1 = memref.load %arg2[%0] : memref<2xi32, #tpu.memory_space<smem>>
    %c0 = arith.constant 0 : index
    %c0_0 = arith.constant 0 : index
    %c0_1 = arith.constant 0 : index
    %2 = vector.load %arg3[%c0, %c0_0, %c0_1] : memref<1x64x32xf32, #tpu.memory_space<vmem>>, vector<1x64x32xf32>
    %3 = vector.shape_cast %2 : vector<1x64x32xf32> to vector<64x32xf32>
    %cst = arith.constant 0.000000e+00 : f32
    %4 = vector.broadcast %cst : f32 to vector<1x32xf32>
    %5 = vector.extract_strided_slice %3 {offsets = [0, 0], sizes = [63, 32], strides = [1, 1]} : vector<64x32xf32> to vector<63x32xf32>
    %6 = tpu.concatenate %4, %5 in 0 : vector<1x32xf32>, vector<63x32xf32> -> vector<64x32xf32>
    %cst_2 = arith.constant 0.000000e+00 : f32
    %7 = vector.broadcast %cst_2 : f32 to vector<1x32xf32>
    %8 = vector.extract_strided_slice %3 {offsets = [1, 0], sizes = [63, 32], strides = [1, 1]} : vector<64x32xf32> to vector<63x32xf32>
    %9 = tpu.concatenate %8, %7 in 0 : vector<63x32xf32>, vector<1x32xf32> -> vector<64x32xf32>
    %10 = tpu.concatenate %6, %3, %9 in 1 : vector<64x32xf32>, vector<64x32xf32>, vector<64x32xf32> -> vector<64x96xf32>
    %11 = arith.truncf %10 : vector<64x96xf32> to vector<64x96xbf16>
    %c0_3 = arith.constant 0 : index
    %c0_4 = arith.constant 0 : index
    %c0_5 = arith.constant 0 : index
    %12 = vector.load %arg4[%c0_3, %c0_4, %c0_5] : memref<1x96x32xbf16, #tpu.memory_space<vmem>>, vector<1x96x32xbf16>
    %13 = vector.shape_cast %12 : vector<1x96x32xbf16> to vector<96x32xbf16>
    %cst_6 = arith.constant dense<0.000000e+00> : vector<64x32xf32>
    %14 = tpu.matmul %11, %13, %cst_6 {dimension_numbers = #tpu.dot_dimension_numbers<[1], [0], [0], [1], [0, 0, 1, 1], [], []>} : vector<64x96xbf16>, vector<96x32xbf16>, vector<64x32xf32> -> vector<64x32xf32>
    %c0_7 = arith.constant 0 : index
    %c0_8 = arith.constant 0 : index
    %c0_9 = arith.constant 0 : index
    %15 = vector.load %arg5[%c0_7, %c0_8, %c0_9] : memref<1x1x32xf32, #tpu.memory_space<vmem>>, vector<1x1x32xf32>
    %16 = vector.shape_cast %15 : vector<1x1x32xf32> to vector<1x32xf32>
    %17 = vector.broadcast %16 : vector<1x32xf32> to vector<64x32xf32>
    %18 = arith.addf %14, %17 : vector<64x32xf32>
    %cst_10 = arith.constant 0.000000e+00 : f32
    %19 = vector.broadcast %cst_10 : f32 to vector<64x32xf32>
    %20 = arith.maximumf %18, %19 : vector<64x32xf32>
    %c0_11 = arith.constant 0 : index
    %c0_12 = arith.constant 0 : index
    %c0_13 = arith.constant 0 : index
    %21 = vector.load %arg6[%c0_11, %c0_12, %c0_13] : memref<1x1x32xf32, #tpu.memory_space<vmem>>, vector<1x1x32xf32>
    %22 = vector.shape_cast %21 : vector<1x1x32xf32> to vector<1x32xf32>
    %c0_14 = arith.constant 0 : index
    %c0_15 = arith.constant 0 : index
    %c0_16 = arith.constant 0 : index
    %23 = vector.load %arg7[%c0_14, %c0_15, %c0_16] : memref<1x1x32xf32, #tpu.memory_space<vmem>>, vector<1x1x32xf32>
    %24 = vector.shape_cast %23 : vector<1x1x32xf32> to vector<1x32xf32>
    %cst_17 = arith.constant dense<0.000000e+00> : vector<64xf32>
    %25 = vector.multi_reduction <add>, %20, %cst_17 [1] : vector<64x32xf32> to vector<64xf32>
    %26 = vector.shape_cast %25 : vector<64xf32> to vector<64x1xf32>
    %cst_18 = arith.constant 3.200000e+01 : f32
    %27 = vector.broadcast %cst_18 : f32 to vector<64x1xf32>
    %28 = arith.divf %26, %27 : vector<64x1xf32>
    %29 = vector.broadcast %28 : vector<64x1xf32> to vector<64x32xf32>
    %30 = arith.subf %20, %29 : vector<64x32xf32>
    %31 = arith.mulf %30, %30 : vector<64x32xf32>
    %cst_19 = arith.constant dense<0.000000e+00> : vector<64xf32>
    %32 = vector.multi_reduction <add>, %31, %cst_19 [1] : vector<64x32xf32> to vector<64xf32>
    %33 = vector.shape_cast %32 : vector<64xf32> to vector<64x1xf32>
    %cst_20 = arith.constant 3.200000e+01 : f32
    %34 = vector.broadcast %cst_20 : f32 to vector<64x1xf32>
    %35 = arith.divf %33, %34 : vector<64x1xf32>
    %cst_21 = arith.constant 9.99999974E-6 : f32
    %36 = vector.broadcast %cst_21 : f32 to vector<64x1xf32>
    %37 = arith.addf %35, %36 : vector<64x1xf32>
    %38 = math.rsqrt %37 : vector<64x1xf32>
    %39 = vector.broadcast %38 : vector<64x1xf32> to vector<64x32xf32>
    %40 = arith.mulf %30, %39 : vector<64x32xf32>
    %41 = vector.broadcast %22 : vector<1x32xf32> to vector<64x32xf32>
    %42 = arith.mulf %40, %41 : vector<64x32xf32>
    %43 = vector.broadcast %24 : vector<1x32xf32> to vector<64x32xf32>
    %44 = arith.addf %42, %43 : vector<64x32xf32>
    %cst_22 = arith.constant 0.000000e+00 : f32
    %45 = vector.broadcast %cst_22 : f32 to vector<1x32xf32>
    %46 = vector.extract_strided_slice %44 {offsets = [0, 0], sizes = [63, 32], strides = [1, 1]} : vector<64x32xf32> to vector<63x32xf32>
    %47 = tpu.concatenate %45, %46 in 0 : vector<1x32xf32>, vector<63x32xf32> -> vector<64x32xf32>
    %cst_23 = arith.constant 0.000000e+00 : f32
    %48 = vector.broadcast %cst_23 : f32 to vector<1x32xf32>
    %49 = vector.extract_strided_slice %44 {offsets = [1, 0], sizes = [63, 32], strides = [1, 1]} : vector<64x32xf32> to vector<63x32xf32>
    %50 = tpu.concatenate %49, %48 in 0 : vector<63x32xf32>, vector<1x32xf32> -> vector<64x32xf32>
    %51 = tpu.concatenate %47, %44, %50 in 1 : vector<64x32xf32>, vector<64x32xf32>, vector<64x32xf32> -> vector<64x96xf32>
    %52 = arith.truncf %51 : vector<64x96xf32> to vector<64x96xbf16>
    %c0_24 = arith.constant 0 : index
    %c0_25 = arith.constant 0 : index
    %c0_26 = arith.constant 0 : index
    %53 = vector.load %arg8[%c0_24, %c0_25, %c0_26] : memref<1x96x32xbf16, #tpu.memory_space<vmem>>, vector<1x96x32xbf16>
    %54 = vector.shape_cast %53 : vector<1x96x32xbf16> to vector<96x32xbf16>
    %cst_27 = arith.constant dense<0.000000e+00> : vector<64x32xf32>
    %55 = tpu.matmul %52, %54, %cst_27 {dimension_numbers = #tpu.dot_dimension_numbers<[1], [0], [0], [1], [0, 0, 1, 1], [], []>} : vector<64x96xbf16>, vector<96x32xbf16>, vector<64x32xf32> -> vector<64x32xf32>
    %c0_28 = arith.constant 0 : index
    %c0_29 = arith.constant 0 : index
    %c0_30 = arith.constant 0 : index
    %56 = vector.load %arg9[%c0_28, %c0_29, %c0_30] : memref<1x1x32xf32, #tpu.memory_space<vmem>>, vector<1x1x32xf32>
    %57 = vector.shape_cast %56 : vector<1x1x32xf32> to vector<1x32xf32>
    %58 = vector.broadcast %57 : vector<1x32xf32> to vector<64x32xf32>
    %59 = arith.addf %55, %58 : vector<64x32xf32>
    %cst_31 = arith.constant 0.000000e+00 : f32
    %60 = vector.broadcast %cst_31 : f32 to vector<64x32xf32>
    %61 = arith.maximumf %59, %60 : vector<64x32xf32>
    %c0_32 = arith.constant 0 : index
    %c0_33 = arith.constant 0 : index
    %c0_34 = arith.constant 0 : index
    %62 = vector.load %arg10[%c0_32, %c0_33, %c0_34] : memref<1x1x32xf32, #tpu.memory_space<vmem>>, vector<1x1x32xf32>
    %63 = vector.shape_cast %62 : vector<1x1x32xf32> to vector<1x32xf32>
    %c0_35 = arith.constant 0 : index
    %c0_36 = arith.constant 0 : index
    %c0_37 = arith.constant 0 : index
    %64 = vector.load %arg11[%c0_35, %c0_36, %c0_37] : memref<1x1x32xf32, #tpu.memory_space<vmem>>, vector<1x1x32xf32>
    %65 = vector.shape_cast %64 : vector<1x1x32xf32> to vector<1x32xf32>
    %cst_38 = arith.constant dense<0.000000e+00> : vector<64xf32>
    %66 = vector.multi_reduction <add>, %61, %cst_38 [1] : vector<64x32xf32> to vector<64xf32>
    %67 = vector.shape_cast %66 : vector<64xf32> to vector<64x1xf32>
    %cst_39 = arith.constant 3.200000e+01 : f32
    %68 = vector.broadcast %cst_39 : f32 to vector<64x1xf32>
    %69 = arith.divf %67, %68 : vector<64x1xf32>
    %70 = vector.broadcast %69 : vector<64x1xf32> to vector<64x32xf32>
    %71 = arith.subf %61, %70 : vector<64x32xf32>
    %72 = arith.mulf %71, %71 : vector<64x32xf32>
    %cst_40 = arith.constant dense<0.000000e+00> : vector<64xf32>
    %73 = vector.multi_reduction <add>, %72, %cst_40 [1] : vector<64x32xf32> to vector<64xf32>
    %74 = vector.shape_cast %73 : vector<64xf32> to vector<64x1xf32>
    %cst_41 = arith.constant 3.200000e+01 : f32
    %75 = vector.broadcast %cst_41 : f32 to vector<64x1xf32>
    %76 = arith.divf %74, %75 : vector<64x1xf32>
    %cst_42 = arith.constant 9.99999974E-6 : f32
    %77 = vector.broadcast %cst_42 : f32 to vector<64x1xf32>
    %78 = arith.addf %76, %77 : vector<64x1xf32>
    %79 = math.rsqrt %78 : vector<64x1xf32>
    %80 = vector.broadcast %79 : vector<64x1xf32> to vector<64x32xf32>
    %81 = arith.mulf %71, %80 : vector<64x32xf32>
    %82 = vector.broadcast %63 : vector<1x32xf32> to vector<64x32xf32>
    %83 = arith.mulf %81, %82 : vector<64x32xf32>
    %84 = vector.broadcast %65 : vector<1x32xf32> to vector<64x32xf32>
    %85 = arith.addf %83, %84 : vector<64x32xf32>
    %86 = arith.truncf %85 : vector<64x32xf32> to vector<64x32xbf16>
    %c0_43 = arith.constant 0 : index
    %c0_44 = arith.constant 0 : index
    %c0_45 = arith.constant 0 : index
    %87 = vector.load %arg12[%c0_43, %c0_44, %c0_45] : memref<1x32x1xbf16, #tpu.memory_space<vmem>>, vector<1x32x1xbf16>
    %88 = vector.shape_cast %87 : vector<1x32x1xbf16> to vector<32x1xbf16>
    %cst_46 = arith.constant dense<0.000000e+00> : vector<64x1xf32>
    %89 = tpu.matmul %86, %88, %cst_46 {dimension_numbers = #tpu.dot_dimension_numbers<[1], [0], [0], [1], [0, 0, 1, 1], [], []>} : vector<64x32xbf16>, vector<32x1xbf16>, vector<64x1xf32> -> vector<64x1xf32>
    %c0_47 = arith.constant 0 : index
    %c0_48 = arith.constant 0 : index
    %c0_49 = arith.constant 0 : index
    %90 = vector.load %arg13[%c0_47, %c0_48, %c0_49] : memref<1x1x1xf32, #tpu.memory_space<vmem>>, vector<1x1x1xf32>
    %91 = vector.shape_cast %90 : vector<1x1x1xf32> to vector<1x1xf32>
    %92 = vector.broadcast %91 : vector<1x1xf32> to vector<64x1xf32>
    %93 = arith.addf %89, %92 : vector<64x1xf32>
    %94 = tpu.iota {dimensions = array<i32: 0>} : vector<64x1xi32>
    %95 = vector.broadcast %1 : i32 to vector<64x1xi32>
    %96 = arith.cmpi sge, %94, %95 : vector<64x1xi32>
    %cst_50 = arith.constant 0.000000e+00 : f32
    %97 = vector.broadcast %cst_50 : f32 to vector<64x1xf32>
    %98 = arith.select %96, %97, %93 : vector<64x1xi1>, vector<64x1xf32>
    %c0_51 = arith.constant 0 : index
    %c0_52 = arith.constant 0 : index
    %c0_53 = arith.constant 0 : index
    %c0_54 = arith.constant 0 : index
    %99 = vector.load %arg14[%c0_51, %c0_52, %c0_53, %c0_54] : memref<1x1x64x1xf32, #tpu.memory_space<vmem>>, vector<1x1x64x1xf32>
    %100 = vector.shape_cast %99 : vector<1x1x64x1xf32> to vector<64x1xf32>
    %101 = vector.shape_cast %98 : vector<64x1xf32> to vector<1x1x64x1xf32>
    tpu.vector_store %arg14[%c0_51, %c0_52, %c0_53, %c0_54], %101 {strides = array<i32>} : memref<1x1x64x1xf32, #tpu.memory_space<vmem>>, vector<1x1x64x1xf32>,
    return
  }
  func.func @transform_0(%arg0: i32, %arg1: i32, %arg2: memref<2xi32, #tpu.memory_space<smem>>) -> (i32, i32, i32) {
    %c0_i32 = arith.constant 0 : i32
    %c0_i32_0 = arith.constant 0 : i32
    %c0_i32_1 = arith.constant 0 : i32
    return %arg1, %c0_i32, %c0_i32_0 : i32, i32, i32
  }
  func.func @transform_1(%arg0: i32, %arg1: i32, %arg2: memref<2xi32, #tpu.memory_space<smem>>) -> (i32, i32, i32) {
    %c0_i32 = arith.constant 0 : i32
    %c0_i32_0 = arith.constant 0 : i32
    %c0_i32_1 = arith.constant 0 : i32
    return %arg0, %c0_i32, %c0_i32_0 : i32, i32, i32
  }
  func.func @transform_2(%arg0: i32, %arg1: i32, %arg2: memref<2xi32, #tpu.memory_space<smem>>) -> (i32, i32, i32) {
    %c0_i32 = arith.constant 0 : i32
    %c0_i32_0 = arith.constant 0 : i32
    %c0_i32_1 = arith.constant 0 : i32
    return %arg0, %c0_i32, %c0_i32_0 : i32, i32, i32
  }
  func.func @transform_3(%arg0: i32, %arg1: i32, %arg2: memref<2xi32, #tpu.memory_space<smem>>) -> (i32, i32, i32) {
    %c0_i32 = arith.constant 0 : i32
    %c0_i32_0 = arith.constant 0 : i32
    %c0_i32_1 = arith.constant 0 : i32
    return %arg0, %c0_i32, %c0_i32_0 : i32, i32, i32
  }
  func.func @transform_4(%arg0: i32, %arg1: i32, %arg2: memref<2xi32, #tpu.memory_space<smem>>) -> (i32, i32, i32) {
    %c0_i32 = arith.constant 0 : i32
    %c0_i32_0 = arith.constant 0 : i32
    %c0_i32_1 = arith.constant 0 : i32
    return %arg0, %c0_i32, %c0_i32_0 : i32, i32, i32
  }
  func.func @transform_5(%arg0: i32, %arg1: i32, %arg2: memref<2xi32, #tpu.memory_space<smem>>) -> (i32, i32, i32) {
    %c0_i32 = arith.constant 0 : i32
    %c0_i32_0 = arith.constant 0 : i32
    %c0_i32_1 = arith.constant 0 : i32
    return %arg0, %c0_i32, %c0_i32_0 : i32, i32, i32
  }
  func.func @transform_6(%arg0: i32, %arg1: i32, %arg2: memref<2xi32, #tpu.memory_space<smem>>) -> (i32, i32, i32) {
    %c0_i32 = arith.constant 0 : i32
    %c0_i32_0 = arith.constant 0 : i32
    %c0_i32_1 = arith.constant 0 : i32
    return %arg0, %c0_i32, %c0_i32_0 : i32, i32, i32
  }
  func.func @transform_7(%arg0: i32, %arg1: i32, %arg2: memref<2xi32, #tpu.memory_space<smem>>) -> (i32, i32, i32) {
    %c0_i32 = arith.constant 0 : i32
    %c0_i32_0 = arith.constant 0 : i32
    %c0_i32_1 = arith.constant 0 : i32
    return %arg0, %c0_i32, %c0_i32_0 : i32, i32, i32
  }
  func.func @transform_8(%arg0: i32, %arg1: i32, %arg2: memref<2xi32, #tpu.memory_space<smem>>) -> (i32, i32, i32) {
    %c0_i32 = arith.constant 0 : i32
    %c0_i32_0 = arith.constant 0 : i32
    %c0_i32_1 = arith.constant 0 : i32
    return %arg0, %c0_i32, %c0_i32_0 : i32, i32, i32
  }
  func.func @transform_9(%arg0: i32, %arg1: i32, %arg2: memref<2xi32, #tpu.memory_space<smem>>) -> (i32, i32, i32) {
    %c0_i32 = arith.constant 0 : i32
    %c0_i32_0 = arith.constant 0 : i32
    %c0_i32_1 = arith.constant 0 : i32
    return %arg0, %c0_i32, %c0_i32_0 : i32, i32, i32
  }
  func.func @transform_10(%arg0: i32, %arg1: i32, %arg2: memref<2xi32, #tpu.memory_space<smem>>) -> (i32, i32, i32) {
    %c0_i32 = arith.constant 0 : i32
    %c0_i32_0 = arith.constant 0 : i32
    %c0_i32_1 = arith.constant 0 : i32
    return %arg0, %c0_i32, %c0_i32_0 : i32, i32, i32
  }
  func.func @transform_11(%arg0: i32, %arg1: i32, %arg2: memref<2xi32, #tpu.memory_space<smem>>) -> (i32, i32, i32, i32) {
    %c0_i32 = arith.constant 0 : i32
    %c0_i32_0 = arith.constant 0 : i32
    %c0_i32_1 = arith.constant 0 : i32
    return %arg0, %arg1, %c0_i32, %c0_i32_0 : i32, i32, i32, i32
  }
}

module attributes {stable_mosaic.version = 11 : i64} {
  func.func @_mel_postnet_kernel(%arg0: i32, %arg1: memref<1x64x32xf32, #tpu.memory_space<vmem>>, %arg2: memref<32x16xbf16, #tpu.memory_space<vmem>>, %arg3: memref<1x16xf32, #tpu.memory_space<vmem>>, %arg4: memref<80x32xbf16, #tpu.memory_space<vmem>>, %arg5: memref<1x32xf32, #tpu.memory_space<vmem>>, %arg6: memref<160x32xbf16, #tpu.memory_space<vmem>>, %arg7: memref<1x32xf32, #tpu.memory_space<vmem>>, %arg8: memref<160x32xbf16, #tpu.memory_space<vmem>>, %arg9: memref<1x32xf32, #tpu.memory_space<vmem>>, %arg10: memref<160x32xbf16, #tpu.memory_space<vmem>>, %arg11: memref<1x32xf32, #tpu.memory_space<vmem>>, %arg12: memref<160x16xbf16, #tpu.memory_space<vmem>>, %arg13: memref<1x16xf32, #tpu.memory_space<vmem>>, %arg14: memref<1x64x16xf32, #tpu.memory_space<vmem>>) attributes {dimension_semantics = [#tpu.dimension_semantics<parallel>], iteration_bounds = array<i64: 2>, scalar_prefetch = 0 : i64, scratch_operands = 0 : i64, tpu.core_type = #tpu.core_type<tc>, window_params = [{transform_indices = @transform_0, window_bounds = array<i64: 1, 64, 32>}, {pipeline_mode = #tpu.pipeline_mode<synchronous>, transform_indices = @transform_1, window_bounds = array<i64: 32, 16>}, {pipeline_mode = #tpu.pipeline_mode<synchronous>, transform_indices = @transform_2, window_bounds = array<i64: 1, 16>}, {pipeline_mode = #tpu.pipeline_mode<synchronous>, transform_indices = @transform_3, window_bounds = array<i64: 80, 32>}, {pipeline_mode = #tpu.pipeline_mode<synchronous>, transform_indices = @transform_4, window_bounds = array<i64: 1, 32>}, {pipeline_mode = #tpu.pipeline_mode<synchronous>, transform_indices = @transform_5, window_bounds = array<i64: 160, 32>}, {pipeline_mode = #tpu.pipeline_mode<synchronous>, transform_indices = @transform_6, window_bounds = array<i64: 1, 32>}, {pipeline_mode = #tpu.pipeline_mode<synchronous>, transform_indices = @transform_7, window_bounds = array<i64: 160, 32>}, {pipeline_mode = #tpu.pipeline_mode<synchronous>, transform_indices = @transform_8, window_bounds = array<i64: 1, 32>}, {pipeline_mode = #tpu.pipeline_mode<synchronous>, transform_indices = @transform_9, window_bounds = array<i64: 160, 32>}, {pipeline_mode = #tpu.pipeline_mode<synchronous>, transform_indices = @transform_10, window_bounds = array<i64: 1, 32>}, {pipeline_mode = #tpu.pipeline_mode<synchronous>, transform_indices = @transform_11, window_bounds = array<i64: 160, 16>}, {pipeline_mode = #tpu.pipeline_mode<synchronous>, transform_indices = @transform_12, window_bounds = array<i64: 1, 16>}, {transform_indices = @transform_13, window_bounds = array<i64: 1, 64, 16>}]} {
    %c0 = arith.constant 0 : index
    %c0_0 = arith.constant 0 : index
    %c0_1 = arith.constant 0 : index
    %0 = vector.load %arg1[%c0, %c0_0, %c0_1] : memref<1x64x32xf32, #tpu.memory_space<vmem>>, vector<1x64x32xf32>
    %1 = vector.shape_cast %0 : vector<1x64x32xf32> to vector<64x32xf32>
    %2 = arith.truncf %1 : vector<64x32xf32> to vector<64x32xbf16>
    %c0_2 = arith.constant 0 : index
    %c0_3 = arith.constant 0 : index
    %3 = vector.load %arg2[%c0_2, %c0_3] : memref<32x16xbf16, #tpu.memory_space<vmem>>, vector<32x16xbf16>
    %cst = arith.constant dense<0.000000e+00> : vector<64x16xf32>
    %4 = tpu.matmul %2, %3, %cst {dimension_numbers = #tpu.dot_dimension_numbers<[1], [0], [0], [1], [0, 0, 1, 1], [], []>} : vector<64x32xbf16>, vector<32x16xbf16>, vector<64x16xf32> -> vector<64x16xf32>
    %c0_4 = arith.constant 0 : index
    %c0_5 = arith.constant 0 : index
    %5 = vector.load %arg3[%c0_4, %c0_5] : memref<1x16xf32, #tpu.memory_space<vmem>>, vector<1x16xf32>
    %6 = vector.broadcast %5 : vector<1x16xf32> to vector<64x16xf32>
    %7 = arith.addf %4, %6 : vector<64x16xf32>
    %c0_6 = arith.constant 0 : index
    %c0_7 = arith.constant 0 : index
    %8 = vector.load %arg4[%c0_6, %c0_7] : memref<80x32xbf16, #tpu.memory_space<vmem>>, vector<80x32xbf16>
    %c0_8 = arith.constant 0 : index
    %c0_9 = arith.constant 0 : index
    %9 = vector.load %arg5[%c0_8, %c0_9] : memref<1x32xf32, #tpu.memory_space<vmem>>, vector<1x32xf32>
    %cst_10 = arith.constant 0.000000e+00 : f32
    %10 = vector.broadcast %cst_10 : f32 to vector<2x16xf32>
    %11 = vector.extract_strided_slice %7 {offsets = [0, 0], sizes = [62, 16], strides = [1, 1]} : vector<64x16xf32> to vector<62x16xf32>
    %12 = tpu.concatenate %10, %11 in 0 : vector<2x16xf32>, vector<62x16xf32> -> vector<64x16xf32>
    %cst_11 = arith.constant 0.000000e+00 : f32
    %13 = vector.broadcast %cst_11 : f32 to vector<1x16xf32>
    %14 = vector.extract_strided_slice %7 {offsets = [0, 0], sizes = [63, 16], strides = [1, 1]} : vector<64x16xf32> to vector<63x16xf32>
    %15 = tpu.concatenate %13, %14 in 0 : vector<1x16xf32>, vector<63x16xf32> -> vector<64x16xf32>
    %cst_12 = arith.constant 0.000000e+00 : f32
    %16 = vector.broadcast %cst_12 : f32 to vector<1x16xf32>
    %17 = vector.extract_strided_slice %7 {offsets = [1, 0], sizes = [63, 16], strides = [1, 1]} : vector<64x16xf32> to vector<63x16xf32>
    %18 = tpu.concatenate %17, %16 in 0 : vector<63x16xf32>, vector<1x16xf32> -> vector<64x16xf32>
    %cst_13 = arith.constant 0.000000e+00 : f32
    %19 = vector.broadcast %cst_13 : f32 to vector<2x16xf32>
    %20 = vector.extract_strided_slice %7 {offsets = [2, 0], sizes = [62, 16], strides = [1, 1]} : vector<64x16xf32> to vector<62x16xf32>
    %21 = tpu.concatenate %20, %19 in 0 : vector<62x16xf32>, vector<2x16xf32> -> vector<64x16xf32>
    %22 = tpu.concatenate %12, %15, %7, %18, %21 in 1 : vector<64x16xf32>, vector<64x16xf32>, vector<64x16xf32>, vector<64x16xf32>, vector<64x16xf32> -> vector<64x80xf32>
    %23 = arith.truncf %22 : vector<64x80xf32> to vector<64x80xbf16>
    %cst_14 = arith.constant dense<0.000000e+00> : vector<64x32xf32>
    %24 = tpu.matmul %23, %8, %cst_14 {dimension_numbers = #tpu.dot_dimension_numbers<[1], [0], [0], [1], [0, 0, 1, 1], [], []>} : vector<64x80xbf16>, vector<80x32xbf16>, vector<64x32xf32> -> vector<64x32xf32>
    %25 = vector.broadcast %9 : vector<1x32xf32> to vector<64x32xf32>
    %26 = arith.addf %24, %25 : vector<64x32xf32>
    %27 = math.tanh %26 : vector<64x32xf32>
    %c0_15 = arith.constant 0 : index
    %c0_16 = arith.constant 0 : index
    %28 = vector.load %arg6[%c0_15, %c0_16] : memref<160x32xbf16, #tpu.memory_space<vmem>>, vector<160x32xbf16>
    %c0_17 = arith.constant 0 : index
    %c0_18 = arith.constant 0 : index
    %29 = vector.load %arg7[%c0_17, %c0_18] : memref<1x32xf32, #tpu.memory_space<vmem>>, vector<1x32xf32>
    %cst_19 = arith.constant 0.000000e+00 : f32
    %30 = vector.broadcast %cst_19 : f32 to vector<2x32xf32>
    %31 = vector.extract_strided_slice %27 {offsets = [0, 0], sizes = [62, 32], strides = [1, 1]} : vector<64x32xf32> to vector<62x32xf32>
    %32 = tpu.concatenate %30, %31 in 0 : vector<2x32xf32>, vector<62x32xf32> -> vector<64x32xf32>
    %cst_20 = arith.constant 0.000000e+00 : f32
    %33 = vector.broadcast %cst_20 : f32 to vector<1x32xf32>
    %34 = vector.extract_strided_slice %27 {offsets = [0, 0], sizes = [63, 32], strides = [1, 1]} : vector<64x32xf32> to vector<63x32xf32>
    %35 = tpu.concatenate %33, %34 in 0 : vector<1x32xf32>, vector<63x32xf32> -> vector<64x32xf32>
    %cst_21 = arith.constant 0.000000e+00 : f32
    %36 = vector.broadcast %cst_21 : f32 to vector<1x32xf32>
    %37 = vector.extract_strided_slice %27 {offsets = [1, 0], sizes = [63, 32], strides = [1, 1]} : vector<64x32xf32> to vector<63x32xf32>
    %38 = tpu.concatenate %37, %36 in 0 : vector<63x32xf32>, vector<1x32xf32> -> vector<64x32xf32>
    %cst_22 = arith.constant 0.000000e+00 : f32
    %39 = vector.broadcast %cst_22 : f32 to vector<2x32xf32>
    %40 = vector.extract_strided_slice %27 {offsets = [2, 0], sizes = [62, 32], strides = [1, 1]} : vector<64x32xf32> to vector<62x32xf32>
    %41 = tpu.concatenate %40, %39 in 0 : vector<62x32xf32>, vector<2x32xf32> -> vector<64x32xf32>
    %42 = tpu.concatenate %32, %35, %27, %38, %41 in 1 : vector<64x32xf32>, vector<64x32xf32>, vector<64x32xf32>, vector<64x32xf32>, vector<64x32xf32> -> vector<64x160xf32>
    %43 = arith.truncf %42 : vector<64x160xf32> to vector<64x160xbf16>
    %cst_23 = arith.constant dense<0.000000e+00> : vector<64x32xf32>
    %44 = tpu.matmul %43, %28, %cst_23 {dimension_numbers = #tpu.dot_dimension_numbers<[1], [0], [0], [1], [0, 0, 1, 1], [], []>} : vector<64x160xbf16>, vector<160x32xbf16>, vector<64x32xf32> -> vector<64x32xf32>
    %45 = vector.broadcast %29 : vector<1x32xf32> to vector<64x32xf32>
    %46 = arith.addf %44, %45 : vector<64x32xf32>
    %47 = math.tanh %46 : vector<64x32xf32>
    %c0_24 = arith.constant 0 : index
    %c0_25 = arith.constant 0 : index
    %48 = vector.load %arg8[%c0_24, %c0_25] : memref<160x32xbf16, #tpu.memory_space<vmem>>, vector<160x32xbf16>
    %c0_26 = arith.constant 0 : index
    %c0_27 = arith.constant 0 : index
    %49 = vector.load %arg9[%c0_26, %c0_27] : memref<1x32xf32, #tpu.memory_space<vmem>>, vector<1x32xf32>
    %cst_28 = arith.constant 0.000000e+00 : f32
    %50 = vector.broadcast %cst_28 : f32 to vector<2x32xf32>
    %51 = vector.extract_strided_slice %47 {offsets = [0, 0], sizes = [62, 32], strides = [1, 1]} : vector<64x32xf32> to vector<62x32xf32>
    %52 = tpu.concatenate %50, %51 in 0 : vector<2x32xf32>, vector<62x32xf32> -> vector<64x32xf32>
    %cst_29 = arith.constant 0.000000e+00 : f32
    %53 = vector.broadcast %cst_29 : f32 to vector<1x32xf32>
    %54 = vector.extract_strided_slice %47 {offsets = [0, 0], sizes = [63, 32], strides = [1, 1]} : vector<64x32xf32> to vector<63x32xf32>
    %55 = tpu.concatenate %53, %54 in 0 : vector<1x32xf32>, vector<63x32xf32> -> vector<64x32xf32>
    %cst_30 = arith.constant 0.000000e+00 : f32
    %56 = vector.broadcast %cst_30 : f32 to vector<1x32xf32>
    %57 = vector.extract_strided_slice %47 {offsets = [1, 0], sizes = [63, 32], strides = [1, 1]} : vector<64x32xf32> to vector<63x32xf32>
    %58 = tpu.concatenate %57, %56 in 0 : vector<63x32xf32>, vector<1x32xf32> -> vector<64x32xf32>
    %cst_31 = arith.constant 0.000000e+00 : f32
    %59 = vector.broadcast %cst_31 : f32 to vector<2x32xf32>
    %60 = vector.extract_strided_slice %47 {offsets = [2, 0], sizes = [62, 32], strides = [1, 1]} : vector<64x32xf32> to vector<62x32xf32>
    %61 = tpu.concatenate %60, %59 in 0 : vector<62x32xf32>, vector<2x32xf32> -> vector<64x32xf32>
    %62 = tpu.concatenate %52, %55, %47, %58, %61 in 1 : vector<64x32xf32>, vector<64x32xf32>, vector<64x32xf32>, vector<64x32xf32>, vector<64x32xf32> -> vector<64x160xf32>
    %63 = arith.truncf %62 : vector<64x160xf32> to vector<64x160xbf16>
    %cst_32 = arith.constant dense<0.000000e+00> : vector<64x32xf32>
    %64 = tpu.matmul %63, %48, %cst_32 {dimension_numbers = #tpu.dot_dimension_numbers<[1], [0], [0], [1], [0, 0, 1, 1], [], []>} : vector<64x160xbf16>, vector<160x32xbf16>, vector<64x32xf32> -> vector<64x32xf32>
    %65 = vector.broadcast %49 : vector<1x32xf32> to vector<64x32xf32>
    %66 = arith.addf %64, %65 : vector<64x32xf32>
    %67 = math.tanh %66 : vector<64x32xf32>
    %c0_33 = arith.constant 0 : index
    %c0_34 = arith.constant 0 : index
    %68 = vector.load %arg10[%c0_33, %c0_34] : memref<160x32xbf16, #tpu.memory_space<vmem>>, vector<160x32xbf16>
    %c0_35 = arith.constant 0 : index
    %c0_36 = arith.constant 0 : index
    %69 = vector.load %arg11[%c0_35, %c0_36] : memref<1x32xf32, #tpu.memory_space<vmem>>, vector<1x32xf32>
    %cst_37 = arith.constant 0.000000e+00 : f32
    %70 = vector.broadcast %cst_37 : f32 to vector<2x32xf32>
    %71 = vector.extract_strided_slice %67 {offsets = [0, 0], sizes = [62, 32], strides = [1, 1]} : vector<64x32xf32> to vector<62x32xf32>
    %72 = tpu.concatenate %70, %71 in 0 : vector<2x32xf32>, vector<62x32xf32> -> vector<64x32xf32>
    %cst_38 = arith.constant 0.000000e+00 : f32
    %73 = vector.broadcast %cst_38 : f32 to vector<1x32xf32>
    %74 = vector.extract_strided_slice %67 {offsets = [0, 0], sizes = [63, 32], strides = [1, 1]} : vector<64x32xf32> to vector<63x32xf32>
    %75 = tpu.concatenate %73, %74 in 0 : vector<1x32xf32>, vector<63x32xf32> -> vector<64x32xf32>
    %cst_39 = arith.constant 0.000000e+00 : f32
    %76 = vector.broadcast %cst_39 : f32 to vector<1x32xf32>
    %77 = vector.extract_strided_slice %67 {offsets = [1, 0], sizes = [63, 32], strides = [1, 1]} : vector<64x32xf32> to vector<63x32xf32>
    %78 = tpu.concatenate %77, %76 in 0 : vector<63x32xf32>, vector<1x32xf32> -> vector<64x32xf32>
    %cst_40 = arith.constant 0.000000e+00 : f32
    %79 = vector.broadcast %cst_40 : f32 to vector<2x32xf32>
    %80 = vector.extract_strided_slice %67 {offsets = [2, 0], sizes = [62, 32], strides = [1, 1]} : vector<64x32xf32> to vector<62x32xf32>
    %81 = tpu.concatenate %80, %79 in 0 : vector<62x32xf32>, vector<2x32xf32> -> vector<64x32xf32>
    %82 = tpu.concatenate %72, %75, %67, %78, %81 in 1 : vector<64x32xf32>, vector<64x32xf32>, vector<64x32xf32>, vector<64x32xf32>, vector<64x32xf32> -> vector<64x160xf32>
    %83 = arith.truncf %82 : vector<64x160xf32> to vector<64x160xbf16>
    %cst_41 = arith.constant dense<0.000000e+00> : vector<64x32xf32>
    %84 = tpu.matmul %83, %68, %cst_41 {dimension_numbers = #tpu.dot_dimension_numbers<[1], [0], [0], [1], [0, 0, 1, 1], [], []>} : vector<64x160xbf16>, vector<160x32xbf16>, vector<64x32xf32> -> vector<64x32xf32>
    %85 = vector.broadcast %69 : vector<1x32xf32> to vector<64x32xf32>
    %86 = arith.addf %84, %85 : vector<64x32xf32>
    %87 = math.tanh %86 : vector<64x32xf32>
    %c0_42 = arith.constant 0 : index
    %c0_43 = arith.constant 0 : index
    %88 = vector.load %arg12[%c0_42, %c0_43] : memref<160x16xbf16, #tpu.memory_space<vmem>>, vector<160x16xbf16>
    %c0_44 = arith.constant 0 : index
    %c0_45 = arith.constant 0 : index
    %89 = vector.load %arg13[%c0_44, %c0_45] : memref<1x16xf32, #tpu.memory_space<vmem>>, vector<1x16xf32>
    %cst_46 = arith.constant 0.000000e+00 : f32
    %90 = vector.broadcast %cst_46 : f32 to vector<2x32xf32>
    %91 = vector.extract_strided_slice %87 {offsets = [0, 0], sizes = [62, 32], strides = [1, 1]} : vector<64x32xf32> to vector<62x32xf32>
    %92 = tpu.concatenate %90, %91 in 0 : vector<2x32xf32>, vector<62x32xf32> -> vector<64x32xf32>
    %cst_47 = arith.constant 0.000000e+00 : f32
    %93 = vector.broadcast %cst_47 : f32 to vector<1x32xf32>
    %94 = vector.extract_strided_slice %87 {offsets = [0, 0], sizes = [63, 32], strides = [1, 1]} : vector<64x32xf32> to vector<63x32xf32>
    %95 = tpu.concatenate %93, %94 in 0 : vector<1x32xf32>, vector<63x32xf32> -> vector<64x32xf32>
    %cst_48 = arith.constant 0.000000e+00 : f32
    %96 = vector.broadcast %cst_48 : f32 to vector<1x32xf32>
    %97 = vector.extract_strided_slice %87 {offsets = [1, 0], sizes = [63, 32], strides = [1, 1]} : vector<64x32xf32> to vector<63x32xf32>
    %98 = tpu.concatenate %97, %96 in 0 : vector<63x32xf32>, vector<1x32xf32> -> vector<64x32xf32>
    %cst_49 = arith.constant 0.000000e+00 : f32
    %99 = vector.broadcast %cst_49 : f32 to vector<2x32xf32>
    %100 = vector.extract_strided_slice %87 {offsets = [2, 0], sizes = [62, 32], strides = [1, 1]} : vector<64x32xf32> to vector<62x32xf32>
    %101 = tpu.concatenate %100, %99 in 0 : vector<62x32xf32>, vector<2x32xf32> -> vector<64x32xf32>
    %102 = tpu.concatenate %92, %95, %87, %98, %101 in 1 : vector<64x32xf32>, vector<64x32xf32>, vector<64x32xf32>, vector<64x32xf32>, vector<64x32xf32> -> vector<64x160xf32>
    %103 = arith.truncf %102 : vector<64x160xf32> to vector<64x160xbf16>
    %cst_50 = arith.constant dense<0.000000e+00> : vector<64x16xf32>
    %104 = tpu.matmul %103, %88, %cst_50 {dimension_numbers = #tpu.dot_dimension_numbers<[1], [0], [0], [1], [0, 0, 1, 1], [], []>} : vector<64x160xbf16>, vector<160x16xbf16>, vector<64x16xf32> -> vector<64x16xf32>
    %105 = vector.broadcast %89 : vector<1x16xf32> to vector<64x16xf32>
    %106 = arith.addf %104, %105 : vector<64x16xf32>
    %107 = arith.addf %106, %7 : vector<64x16xf32>
    %c0_51 = arith.constant 0 : index
    %c0_52 = arith.constant 0 : index
    %c0_53 = arith.constant 0 : index
    %108 = vector.load %arg14[%c0_51, %c0_52, %c0_53] : memref<1x64x16xf32, #tpu.memory_space<vmem>>, vector<1x64x16xf32>
    %109 = vector.shape_cast %108 : vector<1x64x16xf32> to vector<64x16xf32>
    %110 = vector.shape_cast %107 : vector<64x16xf32> to vector<1x64x16xf32>
    tpu.vector_store %arg14[%c0_51, %c0_52, %c0_53], %110 {strides = array<i32>} : memref<1x64x16xf32, #tpu.memory_space<vmem>>, vector<1x64x16xf32>,
    return
  }
  func.func @transform_0(%arg0: i32) -> (i32, i32, i32) {
    %c0_i32 = arith.constant 0 : i32
    %c0_i32_0 = arith.constant 0 : i32
    %c0_i32_1 = arith.constant 0 : i32
    return %arg0, %c0_i32, %c0_i32_0 : i32, i32, i32
  }
  func.func @transform_1(%arg0: i32) -> (i32, i32) {
    %c0_i32 = arith.constant 0 : i32
    %c0_i32_0 = arith.constant 0 : i32
    %c0_i32_1 = arith.constant 0 : i32
    return %c0_i32, %c0_i32_0 : i32, i32
  }
  func.func @transform_2(%arg0: i32) -> (i32, i32) {
    %c0_i32 = arith.constant 0 : i32
    %c0_i32_0 = arith.constant 0 : i32
    %c0_i32_1 = arith.constant 0 : i32
    return %c0_i32, %c0_i32_0 : i32, i32
  }
  func.func @transform_3(%arg0: i32) -> (i32, i32) {
    %c0_i32 = arith.constant 0 : i32
    %c0_i32_0 = arith.constant 0 : i32
    %c0_i32_1 = arith.constant 0 : i32
    return %c0_i32, %c0_i32_0 : i32, i32
  }
  func.func @transform_4(%arg0: i32) -> (i32, i32) {
    %c0_i32 = arith.constant 0 : i32
    %c0_i32_0 = arith.constant 0 : i32
    %c0_i32_1 = arith.constant 0 : i32
    return %c0_i32, %c0_i32_0 : i32, i32
  }
  func.func @transform_5(%arg0: i32) -> (i32, i32) {
    %c0_i32 = arith.constant 0 : i32
    %c0_i32_0 = arith.constant 0 : i32
    %c0_i32_1 = arith.constant 0 : i32
    return %c0_i32, %c0_i32_0 : i32, i32
  }
  func.func @transform_6(%arg0: i32) -> (i32, i32) {
    %c0_i32 = arith.constant 0 : i32
    %c0_i32_0 = arith.constant 0 : i32
    %c0_i32_1 = arith.constant 0 : i32
    return %c0_i32, %c0_i32_0 : i32, i32
  }
  func.func @transform_7(%arg0: i32) -> (i32, i32) {
    %c0_i32 = arith.constant 0 : i32
    %c0_i32_0 = arith.constant 0 : i32
    %c0_i32_1 = arith.constant 0 : i32
    return %c0_i32, %c0_i32_0 : i32, i32
  }
  func.func @transform_8(%arg0: i32) -> (i32, i32) {
    %c0_i32 = arith.constant 0 : i32
    %c0_i32_0 = arith.constant 0 : i32
    %c0_i32_1 = arith.constant 0 : i32
    return %c0_i32, %c0_i32_0 : i32, i32
  }
  func.func @transform_9(%arg0: i32) -> (i32, i32) {
    %c0_i32 = arith.constant 0 : i32
    %c0_i32_0 = arith.constant 0 : i32
    %c0_i32_1 = arith.constant 0 : i32
    return %c0_i32, %c0_i32_0 : i32, i32
  }
  func.func @transform_10(%arg0: i32) -> (i32, i32) {
    %c0_i32 = arith.constant 0 : i32
    %c0_i32_0 = arith.constant 0 : i32
    %c0_i32_1 = arith.constant 0 : i32
    return %c0_i32, %c0_i32_0 : i32, i32
  }
  func.func @transform_11(%arg0: i32) -> (i32, i32) {
    %c0_i32 = arith.constant 0 : i32
    %c0_i32_0 = arith.constant 0 : i32
    %c0_i32_1 = arith.constant 0 : i32
    return %c0_i32, %c0_i32_0 : i32, i32
  }
  func.func @transform_12(%arg0: i32) -> (i32, i32) {
    %c0_i32 = arith.constant 0 : i32
    %c0_i32_0 = arith.constant 0 : i32
    %c0_i32_1 = arith.constant 0 : i32
    return %c0_i32, %c0_i32_0 : i32, i32
  }
  func.func @transform_13(%arg0: i32) -> (i32, i32, i32) {
    %c0_i32 = arith.constant 0 : i32
    %c0_i32_0 = arith.constant 0 : i32
    %c0_i32_1 = arith.constant 0 : i32
    return %arg0, %c0_i32, %c0_i32_0 : i32, i32, i32
  }
}

module attributes {stable_mosaic.version = 11 : i64} {
  func.func @_fft_block_kernel(%arg0: i32, %arg1: memref<2xi32, #tpu.memory_space<smem>>, %arg2: memref<1x64x32xf32, #tpu.memory_space<vmem>>, %arg3: memref<32x96xbf16, #tpu.memory_space<vmem>>, %arg4: memref<1x96xf32, #tpu.memory_space<vmem>>, %arg5: memref<32x32xbf16, #tpu.memory_space<vmem>>, %arg6: memref<1x32xf32, #tpu.memory_space<vmem>>, %arg7: memref<1x32xf32, #tpu.memory_space<vmem>>, %arg8: memref<1x32xf32, #tpu.memory_space<vmem>>, %arg9: memref<288x64xbf16, #tpu.memory_space<vmem>>, %arg10: memref<1x64xf32, #tpu.memory_space<vmem>>, %arg11: memref<64x32xbf16, #tpu.memory_space<vmem>>, %arg12: memref<1x32xf32, #tpu.memory_space<vmem>>, %arg13: memref<1x32xf32, #tpu.memory_space<vmem>>, %arg14: memref<1x32xf32, #tpu.memory_space<vmem>>, %arg15: memref<1x64x32xf32, #tpu.memory_space<vmem>>) attributes {dimension_semantics = [#tpu.dimension_semantics<parallel>], iteration_bounds = array<i64: 2>, scalar_prefetch = 1 : i64, scratch_operands = 0 : i64, tpu.core_type = #tpu.core_type<tc>, window_params = [{transform_indices = @transform_0, window_bounds = array<i64: 1, 64, 32>}, {pipeline_mode = #tpu.pipeline_mode<synchronous>, transform_indices = @transform_1, window_bounds = array<i64: 32, 96>}, {pipeline_mode = #tpu.pipeline_mode<synchronous>, transform_indices = @transform_2, window_bounds = array<i64: 1, 96>}, {pipeline_mode = #tpu.pipeline_mode<synchronous>, transform_indices = @transform_3, window_bounds = array<i64: 32, 32>}, {pipeline_mode = #tpu.pipeline_mode<synchronous>, transform_indices = @transform_4, window_bounds = array<i64: 1, 32>}, {pipeline_mode = #tpu.pipeline_mode<synchronous>, transform_indices = @transform_5, window_bounds = array<i64: 1, 32>}, {pipeline_mode = #tpu.pipeline_mode<synchronous>, transform_indices = @transform_6, window_bounds = array<i64: 1, 32>}, {pipeline_mode = #tpu.pipeline_mode<synchronous>, transform_indices = @transform_7, window_bounds = array<i64: 288, 64>}, {pipeline_mode = #tpu.pipeline_mode<synchronous>, transform_indices = @transform_8, window_bounds = array<i64: 1, 64>}, {pipeline_mode = #tpu.pipeline_mode<synchronous>, transform_indices = @transform_9, window_bounds = array<i64: 64, 32>}, {pipeline_mode = #tpu.pipeline_mode<synchronous>, transform_indices = @transform_10, window_bounds = array<i64: 1, 32>}, {pipeline_mode = #tpu.pipeline_mode<synchronous>, transform_indices = @transform_11, window_bounds = array<i64: 1, 32>}, {pipeline_mode = #tpu.pipeline_mode<synchronous>, transform_indices = @transform_12, window_bounds = array<i64: 1, 32>}, {transform_indices = @transform_13, window_bounds = array<i64: 1, 64, 32>}]} {
    %0 = arith.index_cast %arg0 : i32 to index
    %1 = memref.load %arg1[%0] : memref<2xi32, #tpu.memory_space<smem>>
    %c0 = arith.constant 0 : index
    %c0_0 = arith.constant 0 : index
    %c0_1 = arith.constant 0 : index
    %2 = vector.load %arg2[%c0, %c0_0, %c0_1] : memref<1x64x32xf32, #tpu.memory_space<vmem>>, vector<1x64x32xf32>
    %3 = vector.shape_cast %2 : vector<1x64x32xf32> to vector<64x32xf32>
    %4 = tpu.iota {dimensions = array<i32: 0>} : vector<64x1xi32>
    %5 = vector.broadcast %1 : i32 to vector<64x1xi32>
    %6 = arith.cmpi sge, %4, %5 : vector<64x1xi32>
    %7 = arith.truncf %3 : vector<64x32xf32> to vector<64x32xbf16>
    %c0_2 = arith.constant 0 : index
    %c0_3 = arith.constant 0 : index
    %8 = vector.load %arg3[%c0_2, %c0_3] : memref<32x96xbf16, #tpu.memory_space<vmem>>, vector<32x96xbf16>
    %cst = arith.constant dense<0.000000e+00> : vector<64x96xf32>
    %9 = tpu.matmul %7, %8, %cst {dimension_numbers = #tpu.dot_dimension_numbers<[1], [0], [0], [1], [0, 0, 1, 1], [], []>} : vector<64x32xbf16>, vector<32x96xbf16>, vector<64x96xf32> -> vector<64x96xf32>
    %c0_4 = arith.constant 0 : index
    %c0_5 = arith.constant 0 : index
    %10 = vector.load %arg4[%c0_4, %c0_5] : memref<1x96xf32, #tpu.memory_space<vmem>>, vector<1x96xf32>
    %11 = vector.broadcast %10 : vector<1x96xf32> to vector<64x96xf32>
    %12 = arith.addf %9, %11 : vector<64x96xf32>
    %13 = vector.extract_strided_slice %12 {offsets = [0, 0], sizes = [64, 32], strides = [1, 1]} : vector<64x96xf32> to vector<64x32xf32>
    %14 = vector.extract_strided_slice %12 {offsets = [0, 32], sizes = [64, 32], strides = [1, 1]} : vector<64x96xf32> to vector<64x32xf32>
    %15 = vector.extract_strided_slice %12 {offsets = [0, 64], sizes = [64, 32], strides = [1, 1]} : vector<64x96xf32> to vector<64x32xf32>
    %16 = tpu.iota {dimensions = array<i32: 1>} : vector<64x64xi32>
    %17 = vector.broadcast %1 : i32 to vector<64x64xi32>
    %18 = arith.cmpi sge, %16, %17 : vector<64x64xi32>
    %19 = arith.extui %18 : vector<64x64xi1> to vector<64x64xi32>
    %20 = arith.sitofp %19 : vector<64x64xi32> to vector<64x64xf32>
    %21 = vector.extract_strided_slice %13 {offsets = [0, 0], sizes = [64, 16], strides = [1, 1]} : vector<64x32xf32> to vector<64x16xf32>
    %22 = arith.truncf %21 : vector<64x16xf32> to vector<64x16xbf16>
    %23 = vector.extract_strided_slice %14 {offsets = [0, 0], sizes = [64, 16], strides = [1, 1]} : vector<64x32xf32> to vector<64x16xf32>
    %24 = arith.truncf %23 : vector<64x16xf32> to vector<64x16xbf16>
    %25 = vector.extract_strided_slice %15 {offsets = [0, 0], sizes = [64, 16], strides = [1, 1]} : vector<64x32xf32> to vector<64x16xf32>
    %26 = arith.truncf %25 : vector<64x16xf32> to vector<64x16xbf16>
    %cst_6 = arith.constant dense<0.000000e+00> : vector<64x64xf32>
    %27 = tpu.matmul %22, %24, %cst_6 {dimension_numbers = #tpu.dot_dimension_numbers<[1], [1], [0], [0], [0, 0, 1, 0], [], []>} : vector<64x16xbf16>, vector<64x16xbf16>, vector<64x64xf32> -> vector<64x64xf32>
    %cst_7 = arith.constant 2.500000e-01 : f32
    %28 = vector.broadcast %cst_7 : f32 to vector<64x64xf32>
    %29 = arith.mulf %27, %28 : vector<64x64xf32>
    %cst_8 = arith.constant 1.000000e+09 : f32
    %30 = vector.broadcast %cst_8 : f32 to vector<64x64xf32>
    %31 = arith.mulf %20, %30 : vector<64x64xf32>
    %32 = arith.subf %29, %31 : vector<64x64xf32>
    %cst_9 = arith.constant dense<0xFF800000> : vector<64xf32>
    %33 = vector.multi_reduction <maximumf>, %32, %cst_9 [1] : vector<64x64xf32> to vector<64xf32>
    %34 = vector.shape_cast %33 : vector<64xf32> to vector<64x1xf32>
    %35 = vector.broadcast %34 : vector<64x1xf32> to vector<64x64xf32>
    %36 = arith.subf %32, %35 : vector<64x64xf32>
    %37 = math.exp %36 : vector<64x64xf32>
    %cst_10 = arith.constant dense<0.000000e+00> : vector<64xf32>
    %38 = vector.multi_reduction <add>, %37, %cst_10 [1] : vector<64x64xf32> to vector<64xf32>
    %39 = vector.shape_cast %38 : vector<64xf32> to vector<64x1xf32>
    %40 = tpu.reciprocal %39 {approx = true} : vector<64x1xf32> -> vector<64x1xf32>
    %41 = vector.broadcast %40 : vector<64x1xf32> to vector<64x64xf32>
    %42 = arith.mulf %37, %41 : vector<64x64xf32>
    %43 = arith.truncf %42 : vector<64x64xf32> to vector<64x64xbf16>
    %cst_11 = arith.constant dense<0.000000e+00> : vector<64x16xf32>
    %44 = tpu.matmul %43, %26, %cst_11 {dimension_numbers = #tpu.dot_dimension_numbers<[1], [0], [0], [1], [0, 0, 1, 1], [], []>} : vector<64x64xbf16>, vector<64x16xbf16>, vector<64x16xf32> -> vector<64x16xf32>
    %45 = vector.extract_strided_slice %13 {offsets = [0, 16], sizes = [64, 16], strides = [1, 1]} : vector<64x32xf32> to vector<64x16xf32>
    %46 = arith.truncf %45 : vector<64x16xf32> to vector<64x16xbf16>
    %47 = vector.extract_strided_slice %14 {offsets = [0, 16], sizes = [64, 16], strides = [1, 1]} : vector<64x32xf32> to vector<64x16xf32>
    %48 = arith.truncf %47 : vector<64x16xf32> to vector<64x16xbf16>
    %49 = vector.extract_strided_slice %15 {offsets = [0, 16], sizes = [64, 16], strides = [1, 1]} : vector<64x32xf32> to vector<64x16xf32>
    %50 = arith.truncf %49 : vector<64x16xf32> to vector<64x16xbf16>
    %cst_12 = arith.constant dense<0.000000e+00> : vector<64x64xf32>
    %51 = tpu.matmul %46, %48, %cst_12 {dimension_numbers = #tpu.dot_dimension_numbers<[1], [1], [0], [0], [0, 0, 1, 0], [], []>} : vector<64x16xbf16>, vector<64x16xbf16>, vector<64x64xf32> -> vector<64x64xf32>
    %cst_13 = arith.constant 2.500000e-01 : f32
    %52 = vector.broadcast %cst_13 : f32 to vector<64x64xf32>
    %53 = arith.mulf %51, %52 : vector<64x64xf32>
    %cst_14 = arith.constant 1.000000e+09 : f32
    %54 = vector.broadcast %cst_14 : f32 to vector<64x64xf32>
    %55 = arith.mulf %20, %54 : vector<64x64xf32>
    %56 = arith.subf %53, %55 : vector<64x64xf32>
    %cst_15 = arith.constant dense<0xFF800000> : vector<64xf32>
    %57 = vector.multi_reduction <maximumf>, %56, %cst_15 [1] : vector<64x64xf32> to vector<64xf32>
    %58 = vector.shape_cast %57 : vector<64xf32> to vector<64x1xf32>
    %59 = vector.broadcast %58 : vector<64x1xf32> to vector<64x64xf32>
    %60 = arith.subf %56, %59 : vector<64x64xf32>
    %61 = math.exp %60 : vector<64x64xf32>
    %cst_16 = arith.constant dense<0.000000e+00> : vector<64xf32>
    %62 = vector.multi_reduction <add>, %61, %cst_16 [1] : vector<64x64xf32> to vector<64xf32>
    %63 = vector.shape_cast %62 : vector<64xf32> to vector<64x1xf32>
    %64 = tpu.reciprocal %63 {approx = true} : vector<64x1xf32> -> vector<64x1xf32>
    %65 = vector.broadcast %64 : vector<64x1xf32> to vector<64x64xf32>
    %66 = arith.mulf %61, %65 : vector<64x64xf32>
    %67 = arith.truncf %66 : vector<64x64xf32> to vector<64x64xbf16>
    %cst_17 = arith.constant dense<0.000000e+00> : vector<64x16xf32>
    %68 = tpu.matmul %67, %50, %cst_17 {dimension_numbers = #tpu.dot_dimension_numbers<[1], [0], [0], [1], [0, 0, 1, 1], [], []>} : vector<64x64xbf16>, vector<64x16xbf16>, vector<64x16xf32> -> vector<64x16xf32>
    %69 = tpu.concatenate %44, %68 in 1 : vector<64x16xf32>, vector<64x16xf32> -> vector<64x32xf32>
    %70 = arith.truncf %69 : vector<64x32xf32> to vector<64x32xbf16>
    %c0_18 = arith.constant 0 : index
    %c0_19 = arith.constant 0 : index
    %71 = vector.load %arg5[%c0_18, %c0_19] : memref<32x32xbf16, #tpu.memory_space<vmem>>, vector<32x32xbf16>
    %cst_20 = arith.constant dense<0.000000e+00> : vector<64x32xf32>
    %72 = tpu.matmul %70, %71, %cst_20 {dimension_numbers = #tpu.dot_dimension_numbers<[1], [0], [0], [1], [0, 0, 1, 1], [], []>} : vector<64x32xbf16>, vector<32x32xbf16>, vector<64x32xf32> -> vector<64x32xf32>
    %c0_21 = arith.constant 0 : index
    %c0_22 = arith.constant 0 : index
    %73 = vector.load %arg6[%c0_21, %c0_22] : memref<1x32xf32, #tpu.memory_space<vmem>>, vector<1x32xf32>
    %74 = vector.broadcast %73 : vector<1x32xf32> to vector<64x32xf32>
    %75 = arith.addf %72, %74 : vector<64x32xf32>
    %76 = arith.addf %75, %3 : vector<64x32xf32>
    %c0_23 = arith.constant 0 : index
    %c0_24 = arith.constant 0 : index
    %77 = vector.load %arg7[%c0_23, %c0_24] : memref<1x32xf32, #tpu.memory_space<vmem>>, vector<1x32xf32>
    %c0_25 = arith.constant 0 : index
    %c0_26 = arith.constant 0 : index
    %78 = vector.load %arg8[%c0_25, %c0_26] : memref<1x32xf32, #tpu.memory_space<vmem>>, vector<1x32xf32>
    %cst_27 = arith.constant dense<0.000000e+00> : vector<64xf32>
    %79 = vector.multi_reduction <add>, %76, %cst_27 [1] : vector<64x32xf32> to vector<64xf32>
    %80 = vector.shape_cast %79 : vector<64xf32> to vector<64x1xf32>
    %cst_28 = arith.constant 3.200000e+01 : f32
    %81 = vector.broadcast %cst_28 : f32 to vector<64x1xf32>
    %82 = arith.divf %80, %81 : vector<64x1xf32>
    %83 = vector.broadcast %82 : vector<64x1xf32> to vector<64x32xf32>
    %84 = arith.subf %76, %83 : vector<64x32xf32>
    %85 = arith.mulf %84, %84 : vector<64x32xf32>
    %cst_29 = arith.constant dense<0.000000e+00> : vector<64xf32>
    %86 = vector.multi_reduction <add>, %85, %cst_29 [1] : vector<64x32xf32> to vector<64xf32>
    %87 = vector.shape_cast %86 : vector<64xf32> to vector<64x1xf32>
    %cst_30 = arith.constant 3.200000e+01 : f32
    %88 = vector.broadcast %cst_30 : f32 to vector<64x1xf32>
    %89 = arith.divf %87, %88 : vector<64x1xf32>
    %cst_31 = arith.constant 9.99999974E-6 : f32
    %90 = vector.broadcast %cst_31 : f32 to vector<64x1xf32>
    %91 = arith.addf %89, %90 : vector<64x1xf32>
    %92 = math.rsqrt %91 : vector<64x1xf32>
    %93 = vector.broadcast %92 : vector<64x1xf32> to vector<64x32xf32>
    %94 = arith.mulf %84, %93 : vector<64x32xf32>
    %95 = vector.broadcast %77 : vector<1x32xf32> to vector<64x32xf32>
    %96 = arith.mulf %94, %95 : vector<64x32xf32>
    %97 = vector.broadcast %78 : vector<1x32xf32> to vector<64x32xf32>
    %98 = arith.addf %96, %97 : vector<64x32xf32>
    %cst_32 = arith.constant 0.000000e+00 : f32
    %99 = vector.shape_cast %6 : vector<64x1xi1> to vector<64x1xi1>
    %100 = vector.broadcast %99 : vector<64x1xi1> to vector<64x32xi1>
    %101 = vector.broadcast %cst_32 : f32 to vector<64x32xf32>
    %102 = arith.select %100, %101, %98 : vector<64x32xi1>, vector<64x32xf32>
    %cst_33 = arith.constant 0.000000e+00 : f32
    %103 = vector.broadcast %cst_33 : f32 to vector<4x32xf32>
    %104 = vector.extract_strided_slice %102 {offsets = [0, 0], sizes = [60, 32], strides = [1, 1]} : vector<64x32xf32> to vector<60x32xf32>
    %105 = tpu.concatenate %103, %104 in 0 : vector<4x32xf32>, vector<60x32xf32> -> vector<64x32xf32>
    %cst_34 = arith.constant 0.000000e+00 : f32
    %106 = vector.broadcast %cst_34 : f32 to vector<3x32xf32>
    %107 = vector.extract_strided_slice %102 {offsets = [0, 0], sizes = [61, 32], strides = [1, 1]} : vector<64x32xf32> to vector<61x32xf32>
    %108 = tpu.concatenate %106, %107 in 0 : vector<3x32xf32>, vector<61x32xf32> -> vector<64x32xf32>
    %cst_35 = arith.constant 0.000000e+00 : f32
    %109 = vector.broadcast %cst_35 : f32 to vector<2x32xf32>
    %110 = vector.extract_strided_slice %102 {offsets = [0, 0], sizes = [62, 32], strides = [1, 1]} : vector<64x32xf32> to vector<62x32xf32>
    %111 = tpu.concatenate %109, %110 in 0 : vector<2x32xf32>, vector<62x32xf32> -> vector<64x32xf32>
    %cst_36 = arith.constant 0.000000e+00 : f32
    %112 = vector.broadcast %cst_36 : f32 to vector<1x32xf32>
    %113 = vector.extract_strided_slice %102 {offsets = [0, 0], sizes = [63, 32], strides = [1, 1]} : vector<64x32xf32> to vector<63x32xf32>
    %114 = tpu.concatenate %112, %113 in 0 : vector<1x32xf32>, vector<63x32xf32> -> vector<64x32xf32>
    %cst_37 = arith.constant 0.000000e+00 : f32
    %115 = vector.broadcast %cst_37 : f32 to vector<1x32xf32>
    %116 = vector.extract_strided_slice %102 {offsets = [1, 0], sizes = [63, 32], strides = [1, 1]} : vector<64x32xf32> to vector<63x32xf32>
    %117 = tpu.concatenate %116, %115 in 0 : vector<63x32xf32>, vector<1x32xf32> -> vector<64x32xf32>
    %cst_38 = arith.constant 0.000000e+00 : f32
    %118 = vector.broadcast %cst_38 : f32 to vector<2x32xf32>
    %119 = vector.extract_strided_slice %102 {offsets = [2, 0], sizes = [62, 32], strides = [1, 1]} : vector<64x32xf32> to vector<62x32xf32>
    %120 = tpu.concatenate %119, %118 in 0 : vector<62x32xf32>, vector<2x32xf32> -> vector<64x32xf32>
    %cst_39 = arith.constant 0.000000e+00 : f32
    %121 = vector.broadcast %cst_39 : f32 to vector<3x32xf32>
    %122 = vector.extract_strided_slice %102 {offsets = [3, 0], sizes = [61, 32], strides = [1, 1]} : vector<64x32xf32> to vector<61x32xf32>
    %123 = tpu.concatenate %122, %121 in 0 : vector<61x32xf32>, vector<3x32xf32> -> vector<64x32xf32>
    %cst_40 = arith.constant 0.000000e+00 : f32
    %124 = vector.broadcast %cst_40 : f32 to vector<4x32xf32>
    %125 = vector.extract_strided_slice %102 {offsets = [4, 0], sizes = [60, 32], strides = [1, 1]} : vector<64x32xf32> to vector<60x32xf32>
    %126 = tpu.concatenate %125, %124 in 0 : vector<60x32xf32>, vector<4x32xf32> -> vector<64x32xf32>
    %127 = tpu.concatenate %105, %108, %111, %114, %102, %117, %120, %123, %126 in 1 : vector<64x32xf32>, vector<64x32xf32>, vector<64x32xf32>, vector<64x32xf32>, vector<64x32xf32>, vector<64x32xf32>, vector<64x32xf32>, vector<64x32xf32>, vector<64x32xf32> -> vector<64x288xf32>
    %128 = arith.truncf %127 : vector<64x288xf32> to vector<64x288xbf16>
    %c0_41 = arith.constant 0 : index
    %c0_42 = arith.constant 0 : index
    %129 = vector.load %arg9[%c0_41, %c0_42] : memref<288x64xbf16, #tpu.memory_space<vmem>>, vector<288x64xbf16>
    %cst_43 = arith.constant dense<0.000000e+00> : vector<64x64xf32>
    %130 = tpu.matmul %128, %129, %cst_43 {dimension_numbers = #tpu.dot_dimension_numbers<[1], [0], [0], [1], [0, 0, 1, 1], [], []>} : vector<64x288xbf16>, vector<288x64xbf16>, vector<64x64xf32> -> vector<64x64xf32>
    %c0_44 = arith.constant 0 : index
    %c0_45 = arith.constant 0 : index
    %131 = vector.load %arg10[%c0_44, %c0_45] : memref<1x64xf32, #tpu.memory_space<vmem>>, vector<1x64xf32>
    %132 = vector.broadcast %131 : vector<1x64xf32> to vector<64x64xf32>
    %133 = arith.addf %130, %132 : vector<64x64xf32>
    %cst_46 = arith.constant 0.000000e+00 : f32
    %134 = vector.broadcast %cst_46 : f32 to vector<64x64xf32>
    %135 = arith.maximumf %133, %134 : vector<64x64xf32>
    %136 = arith.truncf %135 : vector<64x64xf32> to vector<64x64xbf16>
    %c0_47 = arith.constant 0 : index
    %c0_48 = arith.constant 0 : index
    %137 = vector.load %arg11[%c0_47, %c0_48] : memref<64x32xbf16, #tpu.memory_space<vmem>>, vector<64x32xbf16>
    %cst_49 = arith.constant dense<0.000000e+00> : vector<64x32xf32>
    %138 = tpu.matmul %136, %137, %cst_49 {dimension_numbers = #tpu.dot_dimension_numbers<[1], [0], [0], [1], [0, 0, 1, 1], [], []>} : vector<64x64xbf16>, vector<64x32xbf16>, vector<64x32xf32> -> vector<64x32xf32>
    %c0_50 = arith.constant 0 : index
    %c0_51 = arith.constant 0 : index
    %139 = vector.load %arg12[%c0_50, %c0_51] : memref<1x32xf32, #tpu.memory_space<vmem>>, vector<1x32xf32>
    %140 = vector.broadcast %139 : vector<1x32xf32> to vector<64x32xf32>
    %141 = arith.addf %138, %140 : vector<64x32xf32>
    %142 = arith.addf %141, %102 : vector<64x32xf32>
    %c0_52 = arith.constant 0 : index
    %c0_53 = arith.constant 0 : index
    %143 = vector.load %arg13[%c0_52, %c0_53] : memref<1x32xf32, #tpu.memory_space<vmem>>, vector<1x32xf32>
    %c0_54 = arith.constant 0 : index
    %c0_55 = arith.constant 0 : index
    %144 = vector.load %arg14[%c0_54, %c0_55] : memref<1x32xf32, #tpu.memory_space<vmem>>, vector<1x32xf32>
    %cst_56 = arith.constant dense<0.000000e+00> : vector<64xf32>
    %145 = vector.multi_reduction <add>, %142, %cst_56 [1] : vector<64x32xf32> to vector<64xf32>
    %146 = vector.shape_cast %145 : vector<64xf32> to vector<64x1xf32>
    %cst_57 = arith.constant 3.200000e+01 : f32
    %147 = vector.broadcast %cst_57 : f32 to vector<64x1xf32>
    %148 = arith.divf %146, %147 : vector<64x1xf32>
    %149 = vector.broadcast %148 : vector<64x1xf32> to vector<64x32xf32>
    %150 = arith.subf %142, %149 : vector<64x32xf32>
    %151 = arith.mulf %150, %150 : vector<64x32xf32>
    %cst_58 = arith.constant dense<0.000000e+00> : vector<64xf32>
    %152 = vector.multi_reduction <add>, %151, %cst_58 [1] : vector<64x32xf32> to vector<64xf32>
    %153 = vector.shape_cast %152 : vector<64xf32> to vector<64x1xf32>
    %cst_59 = arith.constant 3.200000e+01 : f32
    %154 = vector.broadcast %cst_59 : f32 to vector<64x1xf32>
    %155 = arith.divf %153, %154 : vector<64x1xf32>
    %cst_60 = arith.constant 9.99999974E-6 : f32
    %156 = vector.broadcast %cst_60 : f32 to vector<64x1xf32>
    %157 = arith.addf %155, %156 : vector<64x1xf32>
    %158 = math.rsqrt %157 : vector<64x1xf32>
    %159 = vector.broadcast %158 : vector<64x1xf32> to vector<64x32xf32>
    %160 = arith.mulf %150, %159 : vector<64x32xf32>
    %161 = vector.broadcast %143 : vector<1x32xf32> to vector<64x32xf32>
    %162 = arith.mulf %160, %161 : vector<64x32xf32>
    %163 = vector.broadcast %144 : vector<1x32xf32> to vector<64x32xf32>
    %164 = arith.addf %162, %163 : vector<64x32xf32>
    %cst_61 = arith.constant 0.000000e+00 : f32
    %165 = vector.shape_cast %6 : vector<64x1xi1> to vector<64x1xi1>
    %166 = vector.broadcast %165 : vector<64x1xi1> to vector<64x32xi1>
    %167 = vector.broadcast %cst_61 : f32 to vector<64x32xf32>
    %168 = arith.select %166, %167, %164 : vector<64x32xi1>, vector<64x32xf32>
    %c0_62 = arith.constant 0 : index
    %c0_63 = arith.constant 0 : index
    %c0_64 = arith.constant 0 : index
    %169 = vector.load %arg15[%c0_62, %c0_63, %c0_64] : memref<1x64x32xf32, #tpu.memory_space<vmem>>, vector<1x64x32xf32>
    %170 = vector.shape_cast %169 : vector<1x64x32xf32> to vector<64x32xf32>
    %171 = vector.shape_cast %168 : vector<64x32xf32> to vector<1x64x32xf32>
    tpu.vector_store %arg15[%c0_62, %c0_63, %c0_64], %171 {strides = array<i32>} : memref<1x64x32xf32, #tpu.memory_space<vmem>>, vector<1x64x32xf32>,
    return
  }
  func.func @transform_0(%arg0: i32, %arg1: memref<2xi32, #tpu.memory_space<smem>>) -> (i32, i32, i32) {
    %c0_i32 = arith.constant 0 : i32
    %c0_i32_0 = arith.constant 0 : i32
    %c0_i32_1 = arith.constant 0 : i32
    return %arg0, %c0_i32, %c0_i32_0 : i32, i32, i32
  }
  func.func @transform_1(%arg0: i32, %arg1: memref<2xi32, #tpu.memory_space<smem>>) -> (i32, i32) {
    %c0_i32 = arith.constant 0 : i32
    %c0_i32_0 = arith.constant 0 : i32
    %c0_i32_1 = arith.constant 0 : i32
    return %c0_i32, %c0_i32_0 : i32, i32
  }
  func.func @transform_2(%arg0: i32, %arg1: memref<2xi32, #tpu.memory_space<smem>>) -> (i32, i32) {
    %c0_i32 = arith.constant 0 : i32
    %c0_i32_0 = arith.constant 0 : i32
    %c0_i32_1 = arith.constant 0 : i32
    return %c0_i32, %c0_i32_0 : i32, i32
  }
  func.func @transform_3(%arg0: i32, %arg1: memref<2xi32, #tpu.memory_space<smem>>) -> (i32, i32) {
    %c0_i32 = arith.constant 0 : i32
    %c0_i32_0 = arith.constant 0 : i32
    %c0_i32_1 = arith.constant 0 : i32
    return %c0_i32, %c0_i32_0 : i32, i32
  }
  func.func @transform_4(%arg0: i32, %arg1: memref<2xi32, #tpu.memory_space<smem>>) -> (i32, i32) {
    %c0_i32 = arith.constant 0 : i32
    %c0_i32_0 = arith.constant 0 : i32
    %c0_i32_1 = arith.constant 0 : i32
    return %c0_i32, %c0_i32_0 : i32, i32
  }
  func.func @transform_5(%arg0: i32, %arg1: memref<2xi32, #tpu.memory_space<smem>>) -> (i32, i32) {
    %c0_i32 = arith.constant 0 : i32
    %c0_i32_0 = arith.constant 0 : i32
    %c0_i32_1 = arith.constant 0 : i32
    return %c0_i32, %c0_i32_0 : i32, i32
  }
  func.func @transform_6(%arg0: i32, %arg1: memref<2xi32, #tpu.memory_space<smem>>) -> (i32, i32) {
    %c0_i32 = arith.constant 0 : i32
    %c0_i32_0 = arith.constant 0 : i32
    %c0_i32_1 = arith.constant 0 : i32
    return %c0_i32, %c0_i32_0 : i32, i32
  }
  func.func @transform_7(%arg0: i32, %arg1: memref<2xi32, #tpu.memory_space<smem>>) -> (i32, i32) {
    %c0_i32 = arith.constant 0 : i32
    %c0_i32_0 = arith.constant 0 : i32
    %c0_i32_1 = arith.constant 0 : i32
    return %c0_i32, %c0_i32_0 : i32, i32
  }
  func.func @transform_8(%arg0: i32, %arg1: memref<2xi32, #tpu.memory_space<smem>>) -> (i32, i32) {
    %c0_i32 = arith.constant 0 : i32
    %c0_i32_0 = arith.constant 0 : i32
    %c0_i32_1 = arith.constant 0 : i32
    return %c0_i32, %c0_i32_0 : i32, i32
  }
  func.func @transform_9(%arg0: i32, %arg1: memref<2xi32, #tpu.memory_space<smem>>) -> (i32, i32) {
    %c0_i32 = arith.constant 0 : i32
    %c0_i32_0 = arith.constant 0 : i32
    %c0_i32_1 = arith.constant 0 : i32
    return %c0_i32, %c0_i32_0 : i32, i32
  }
  func.func @transform_10(%arg0: i32, %arg1: memref<2xi32, #tpu.memory_space<smem>>) -> (i32, i32) {
    %c0_i32 = arith.constant 0 : i32
    %c0_i32_0 = arith.constant 0 : i32
    %c0_i32_1 = arith.constant 0 : i32
    return %c0_i32, %c0_i32_0 : i32, i32
  }
  func.func @transform_11(%arg0: i32, %arg1: memref<2xi32, #tpu.memory_space<smem>>) -> (i32, i32) {
    %c0_i32 = arith.constant 0 : i32
    %c0_i32_0 = arith.constant 0 : i32
    %c0_i32_1 = arith.constant 0 : i32
    return %c0_i32, %c0_i32_0 : i32, i32
  }
  func.func @transform_12(%arg0: i32, %arg1: memref<2xi32, #tpu.memory_space<smem>>) -> (i32, i32) {
    %c0_i32 = arith.constant 0 : i32
    %c0_i32_0 = arith.constant 0 : i32
    %c0_i32_1 = arith.constant 0 : i32
    return %c0_i32, %c0_i32_0 : i32, i32
  }
  func.func @transform_13(%arg0: i32, %arg1: memref<2xi32, #tpu.memory_space<smem>>) -> (i32, i32, i32) {
    %c0_i32 = arith.constant 0 : i32
    %c0_i32_0 = arith.constant 0 : i32
    %c0_i32_1 = arith.constant 0 : i32
    return %arg0, %c0_i32, %c0_i32_0 : i32, i32, i32
  }
}

</mosaic_0001>

<llo_original>
// kernel: custom-call.4
$region0: #{custom-call.4}
  %s0 = inlined_call_operand.vmem [shape: u32[2,64], index: 0, kind: output, shape index: {}]

// kernel: squeeze.23
$region0: #{squeeze.23}
  %s0 = inlined_call_operand.vmem [shape: s32[128], index: 0, kind: input, shape index: {}]
  %s1 = inlined_call_operand.vmem [shape: s32[2,64], index: 1, kind: output, shape index: {}]
  $region1: #{squeeze.23} parent=0
    #allocation0 [shape = 'u8[4096]{0}', space=vmem, size = 0x1000, scoped, tag = 'scoped mem for output reshape']
    #allocation1 [shape = 'u8[4096]{0}', space=vmem, size = 0x1000, scoped, tag = 'scoped mem for input reshape']
    %s3 = sshllo.u32 0, 1
    %v4 = vld [vmem:[%s0] sm:%s3]
    %5 = vst [vmem:[#allocation1] sm:%s3] %v4
    %v6 = vld [vmem:[#allocation1] sm:$0x1]
    %vm7 = vcmask 523264
    %8 = vst.msk [vmem:[#allocation0] sm:$0x1] %vm7, %v6
    %v9 = vld [vmem:[#allocation1] sm:$0x1]
    %10 = vrot.lane.b32.xlu0 %v9, 64
    %v11 = vpop.permute.xlu0 %10
    %vm12 = vcmask 523264
    %s13 = scalar_lea.vmem [#allocation0], 1
    %14 = vst.msk [vmem:[%s13] sm:$0x1] %vm12, %v11
    %s16 = sshllo.u32 0, 2
    %v18 = vld [vmem:[#allocation0] sm:%s16]
    %s19 = sshllo.u32 0, 2
    %20 = vst [vmem:[%s1] sm:%s19] %v18

// kernel: fastspeech2_forward.9
$region0: #{fastspeech2_forward.9}
  #allocation0 [shape = 'u32[]', space=smem, size = 0x4, offset = 0x4, fixed_abs, tag = 'smem constant byte address 0x4 - core index']
  #allocation1 [shape = 'u32[144,128]{1,0:T(1,128)}', space=vmem, size = 0x12000, scoped, tag = 'internal scratch']
  #allocation2 [shape = 's32[1]{0}', space=sflag, size = 0x4, scoped, tag = 'scoped memory for fastspeech2_forward.9']
  #allocation3 [shape = 'u8[512]{0}', space=smem, size = 0x200, scoped, tag = 'prefetched SMEM operand 0']
  #allocation4 [shape = 'f32[1,1,1]{2,1,0:T(1,128)S(1)}', space=vmem, size = 0x200, scoped, tag = 'scoped memory for fastspeech2_forward.9']
  %s0 = inlined_call_operand.vmem [shape: s32[2], index: 0, kind: input, shape index: {}]
  %s1 = inlined_call_operand.vmem [shape: f32[2,16,32], index: 1, kind: input, shape index: {}]
  %s2 = inlined_call_operand.vmem [shape: bf16[1,96,32], index: 2, kind: input, shape index: {}]
  %s3 = inlined_call_operand.vmem [shape: f32[1,1,32], index: 3, kind: input, shape index: {}]
  %s4 = inlined_call_operand.vmem [shape: f32[1,1,32], index: 4, kind: input, shape index: {}]
  %s5 = inlined_call_operand.vmem [shape: f32[1,1,32], index: 5, kind: input, shape index: {}]
  %s6 = inlined_call_operand.vmem [shape: bf16[1,96,32], index: 6, kind: input, shape index: {}]
  %s7 = inlined_call_operand.vmem [shape: f32[1,1,32], index: 7, kind: input, shape index: {}]
  %s8 = inlined_call_operand.vmem [shape: f32[1,1,32], index: 8, kind: input, shape index: {}]
  %s9 = inlined_call_operand.vmem [shape: f32[1,1,32], index: 9, kind: input, shape index: {}]
  %s10 = inlined_call_operand.vmem [shape: bf16[1,32,1], index: 10, kind: input, shape index: {}]
  %s11 = inlined_call_operand.<no memory space> [shape: f32[1,1,1], index: 11, kind: input, shape index: {}]
  %s12 = inlined_call_operand.vmem [shape: f32[1,2,16,1], index: 12, kind: output, shape index: {}]
  %s13 = sld [smem:[#allocation0]]
  $region77: #{fastspeech2_forward.9} parent=0
    _
  %s15 = ssub.s32 1, %s13
  %s16 = scalar_select 0, %s15, %s13
  %s17 = sshll.u32 %s0, 4
  %s18 = int_to_ptr.vmem [resolvable:$true] %s17
  %20 = dma.vmem_to_smem %s18, 16, [#allocation3], [#allocation2]
  %v21 = vstv %s11
  %22 = vst [vmem:[#allocation4] sm:$0x1] %v21
  %23 = dma.done [#allocation2], 16
  %24 = sfence
  loop: start=0, step=1, limit=4
  $region2: #{fastspeech2_forward.9} parent=0 // loop_pre_header
    _
  $region3: #{fastspeech2_forward.9} parent=0 // loop_header
    %s26 = sphi 0, %s30
    %p27 = scmp.ge.s32.totalorder %s26, 4
    %s33 = sphi 0, %s45
    %s34 = sphi 0, %s41
    %s35 = sphi 0, %s33
    %s36 = sphi 0, %s34
    %s37 = sphi 0, %s35
    %s38 = sphi 0, %s36
    %s48 = sphi 0, %s50
    %s51 = sphi 0, %s48
    %s52 = sphi 0, %s51
    %s68 = sphi 0, %s52
    %s74 = sphi 0, %s76
    %s77 = sphi 0, %s74
    %s78 = sphi 0, %s77
    %s94 = sphi 0, %s78
    %s100 = sphi 0, %s102
    %s103 = sphi 0, %s100
    %s104 = sphi 0, %s103
    %s120 = sphi 0, %s104
    %s126 = sphi 0, %s128
    %s129 = sphi 0, %s126
    %s130 = sphi 0, %s129
    %s146 = sphi 0, %s130
    %s152 = sphi 0, %s154
    %s155 = sphi 0, %s152
    %s156 = sphi 0, %s155
    %s172 = sphi 0, %s156
    %s178 = sphi 0, %s180
    %s181 = sphi 0, %s178
    %s182 = sphi 0, %s181
    %s198 = sphi 0, %s182
    %s204 = sphi 0, %s206
    %s207 = sphi 0, %s204
    %s208 = sphi 0, %s207
    %s224 = sphi 0, %s208
    %s230 = sphi 0, %s232
    %s233 = sphi 0, %s230
    %s234 = sphi 0, %s233
    %s250 = sphi 0, %s234
    %s256 = sphi 0, %s258
    %s259 = sphi 0, %s256
    %s260 = sphi 0, %s259
    %s276 = sphi 0, %s260
    %s282 = sphi 0, %s284
    %s285 = sphi 0, %s282
    %s286 = sphi 0, %s285
    %s302 = sphi 0, %s286
    %s308 = sphi 0, %s310
    %s311 = sphi 0, %s308
    %s312 = sphi 0, %s311
    %s328 = sphi 0, %s312
    %s336 = sphi 0, %s338
    %s339 = sphi 0, %s336
    %s340 = sphi 0, %s339
    %s356 = sphi 0, %s340
  $region4: #{fastspeech2_forward.9} parent=0 // loop_header_branch
    %29 = sbr.rel (%p27) target = $region8
  $region5: #{fastspeech2_forward.9} parent=0 // loop_body
    %s31 = ssub.s32 %s26, 1
    %s32 = ssub.s32 %s26, 2
    %s39 = sadd.s32 1, %s34
    %p40 = scmp.ge.s32.totalorder %s39, 2
    %s41 = scalar_select %p40, 0, %s39
    %s42 = sadd.s32 1, %s33
    %s43 = scalar_select %p40, %s42, %s33
    %p44 = scmp.ge.s32.totalorder %s43, 1
    %s45 = scalar_select %p44, 0, %s43
    %s46 = ssub.s32 %s34, %s41
    %p47 = scmp.eq.s32.totalorder %s46, 0
    %s49 = sadd.s32 %s48, 1
    %s50 = scalar_select %p47, %s48, %s49
    %p53 = pneg %p47
    %p54 = scmp.eq.s32.totalorder %s26, 1
    %p55 = por %p53, %p54
    %p56 = scmp.ne.s32.totalorder %s48, %s51
    %p57 = scmp.eq.s32.totalorder %s26, 0
    %p58 = por %p56, %p57
    %p59 = scmp.ne.s32.totalorder %s48, %s51
    %p60 = scmp.eq.s32.totalorder %s31, 1
    %p61 = por %p59, %p60
    %p62 = scmp.ne.s32.totalorder %s51, %s52
    %p63 = scmp.eq.s32.totalorder %s31, 0
    %p64 = por %p62, %p63
    %p65 = scmp.ne.s32.totalorder %s51, %s52
    %p66 = scmp.eq.s32.totalorder %s32, 1
    %p67 = por %p65, %p66
    %p69 = scmp.ne.s32.totalorder %s52, %s68
    %p70 = scmp.eq.s32.totalorder %s32, 0
    %p71 = por %p69, %p70
    %s72 = ssub.s32 %s33, %s45
    %p73 = scmp.eq.s32.totalorder %s72, 0
    %s75 = sadd.s32 %s74, 1
    %s76 = scalar_select %p73, %s74, %s75
    %p79 = pneg %p73
    %p80 = scmp.eq.s32.totalorder %s26, 1
    %p81 = por %p79, %p80
    %p82 = scmp.ne.s32.totalorder %s74, %s77
    %p83 = scmp.eq.s32.totalorder %s26, 0
    %p84 = por %p82, %p83
    %p85 = scmp.ne.s32.totalorder %s74, %s77
    %p86 = scmp.eq.s32.totalorder %s31, 1
    %p87 = por %p85, %p86
    %p88 = scmp.ne.s32.totalorder %s77, %s78
    %p89 = scmp.eq.s32.totalorder %s31, 0
    %p90 = por %p88, %p89
    %p91 = scmp.ne.s32.totalorder %s77, %s78
    %p92 = scmp.eq.s32.totalorder %s32, 1
    %p93 = por %p91, %p92
    %p95 = scmp.ne.s32.totalorder %s78, %s94
    %p96 = scmp.eq.s32.totalorder %s32, 0
    %p97 = por %p95, %p96
    %s98 = ssub.s32 %s33, %s45
    %p99 = scmp.eq.s32.totalorder %s98, 0
    %s101 = sadd.s32 %s100, 1
    %s102 = scalar_select %p99, %s100, %s101
    %p105 = pneg %p99
    %p106 = scmp.eq.s32.totalorder %s26, 1
    %p107 = por %p105, %p106
    %p108 = scmp.ne.s32.totalorder %s100, %s103
    %p109 = scmp.eq.s32.totalorder %s26, 0
    %p110 = por %p108, %p109
    %p111 = scmp.ne.s32.totalorder %s100, %s103
    %p112 = scmp.eq.s32.totalorder %s31, 1
    %p113 = por %p111, %p112
    %p114 = scmp.ne.s32.totalorder %s103, %s104
    %p115 = scmp.eq.s32.totalorder %s31, 0
    %p116 = por %p114, %p115
    %p117 = scmp.ne.s32.totalorder %s103, %s104
    %p118 = scmp.eq.s32.totalorder %s32, 1
    %p119 = por %p117, %p118
    %p121 = scmp.ne.s32.totalorder %s104, %s120
    %p122 = scmp.eq.s32.totalorder %s32, 0
    %p123 = por %p121, %p122
    %s124 = ssub.s32 %s33, %s45
    %p125 = scmp.eq.s32.totalorder %s124, 0
    %s127 = sadd.s32 %s126, 1
    %s128 = scalar_select %p125, %s126, %s127
    %p131 = pneg %p125
    %p132 = scmp.eq.s32.totalorder %s26, 1
    %p133 = por %p131, %p132
    %p134 = scmp.ne.s32.totalorder %s126, %s129
    %p135 = scmp.eq.s32.totalorder %s26, 0
    %p136 = por %p134, %p135
    %p137 = scmp.ne.s32.totalorder %s126, %s129
    %p138 = scmp.eq.s32.totalorder %s31, 1
    %p139 = por %p137, %p138
    %p140 = scmp.ne.s32.totalorder %s129, %s130
    %p141 = scmp.eq.s32.totalorder %s31, 0
    %p142 = por %p140, %p141
    %p143 = scmp.ne.s32.totalorder %s129, %s130
    %p144 = scmp.eq.s32.totalorder %s32, 1
    %p145 = por %p143, %p144
    %p147 = scmp.ne.s32.totalorder %s130, %s146
    %p148 = scmp.eq.s32.totalorder %s32, 0
    %p149 = por %p147, %p148
    %s150 = ssub.s32 %s33, %s45
    %p151 = scmp.eq.s32.totalorder %s150, 0
    %s153 = sadd.s32 %s152, 1
    %s154 = scalar_select %p151, %s152, %s153
    %p157 = pneg %p151
    %p158 = scmp.eq.s32.totalorder %s26, 1
    %p159 = por %p157, %p158
    %p160 = scmp.ne.s32.totalorder %s152, %s155
    %p161 = scmp.eq.s32.totalorder %s26, 0
    %p162 = por %p160, %p161
    %p163 = scmp.ne.s32.totalorder %s152, %s155
    %p164 = scmp.eq.s32.totalorder %s31, 1
    %p165 = por %p163, %p164
    %p166 = scmp.ne.s32.totalorder %s155, %s156
    %p167 = scmp.eq.s32.totalorder %s31, 0
    %p168 = por %p166, %p167
    %p169 = scmp.ne.s32.totalorder %s155, %s156
    %p170 = scmp.eq.s32.totalorder %s32, 1
    %p171 = por %p169, %p170
    %p173 = scmp.ne.s32.totalorder %s156, %s172
    %p174 = scmp.eq.s32.totalorder %s32, 0
    %p175 = por %p173, %p174
    %s176 = ssub.s32 %s33, %s45
    %p177 = scmp.eq.s32.totalorder %s176, 0
    %s179 = sadd.s32 %s178, 1
    %s180 = scalar_select %p177, %s178, %s179
    %p183 = pneg %p177
    %p184 = scmp.eq.s32.totalorder %s26, 1
    %p185 = por %p183, %p184
    %p186 = scmp.ne.s32.totalorder %s178, %s181
    %p187 = scmp.eq.s32.totalorder %s26, 0
    %p188 = por %p186, %p187
    %p189 = scmp.ne.s32.totalorder %s178, %s181
    %p190 = scmp.eq.s32.totalorder %s31, 1
    %p191 = por %p189, %p190
    %p192 = scmp.ne.s32.totalorder %s181, %s182
    %p193 = scmp.eq.s32.totalorder %s31, 0
    %p194 = por %p192, %p193
    %p195 = scmp.ne.s32.totalorder %s181, %s182
    %p196 = scmp.eq.s32.totalorder %s32, 1
    %p197 = por %p195, %p196
    %p199 = scmp.ne.s32.totalorder %s182, %s198
    %p200 = scmp.eq.s32.totalorder %s32, 0
    %p201 = por %p199, %p200
    %s202 = ssub.s32 %s33, %s45
    %p203 = scmp.eq.s32.totalorder %s202, 0
    %s205 = sadd.s32 %s204, 1
    %s206 = scalar_select %p203, %s204, %s205
    %p209 = pneg %p203
    %p210 = scmp.eq.s32.totalorder %s26, 1
    %p211 = por %p209, %p210
    %p212 = scmp.ne.s32.totalorder %s204, %s207
    %p213 = scmp.eq.s32.totalorder %s26, 0
    %p214 = por %p212, %p213
    %p215 = scmp.ne.s32.totalorder %s204, %s207
    %p216 = scmp.eq.s32.totalorder %s31, 1
    %p217 = por %p215, %p216
    %p218 = scmp.ne.s32.totalorder %s207, %s208
    %p219 = scmp.eq.s32.totalorder %s31, 0
    %p220 = por %p218, %p219
    %p221 = scmp.ne.s32.totalorder %s207, %s208
    %p222 = scmp.eq.s32.totalorder %s32, 1
    %p223 = por %p221, %p222
    %p225 = scmp.ne.s32.totalorder %s208, %s224
    %p226 = scmp.eq.s32.totalorder %s32, 0
    %p227 = por %p225, %p226
    %s228 = ssub.s32 %s33, %s45
    %p229 = scmp.eq.s32.totalorder %s228, 0
    %s231 = sadd.s32 %s230, 1
    %s232 = scalar_select %p229, %s230, %s231
    %p235 = pneg %p229
    %p236 = scmp.eq.s32.totalorder %s26, 1
    %p237 = por %p235, %p236
    %p238 = scmp.ne.s32.totalorder %s230, %s233
    %p239 = scmp.eq.s32.totalorder %s26, 0
    %p240 = por %p238, %p239
    %p241 = scmp.ne.s32.totalorder %s230, %s233
    %p242 = scmp.eq.s32.totalorder %s31, 1
    %p243 = por %p241, %p242
    %p244 = scmp.ne.s32.totalorder %s233, %s234
    %p245 = scmp.eq.s32.totalorder %s31, 0
    %p246 = por %p244, %p245
    %p247 = scmp.ne.s32.totalorder %s233, %s234
    %p248 = scmp.eq.s32.totalorder %s32, 1
    %p249 = por %p247, %p248
    %p251 = scmp.ne.s32.totalorder %s234, %s250
    %p252 = scmp.eq.s32.totalorder %s32, 0
    %p253 = por %p251, %p252
    %s254 = ssub.s32 %s33, %s45
    %p255 = scmp.eq.s32.totalorder %s254, 0
    %s257 = sadd.s32 %s256, 1
    %s258 = scalar_select %p255, %s256, %s257
    %p261 = pneg %p255
    %p262 = scmp.eq.s32.totalorder %s26, 1
    %p263 = por %p261, %p262
    %p264 = scmp.ne.s32.totalorder %s256, %s259
    %p265 = scmp.eq.s32.totalorder %s26, 0
    %p266 = por %p264, %p265
    %p267 = scmp.ne.s32.totalorder %s256, %s259
    %p268 = scmp.eq.s32.totalorder %s31, 1
    %p269 = por %p267, %p268
    %p270 = scmp.ne.s32.totalorder %s259, %s260
    %p271 = scmp.eq.s32.totalorder %s31, 0
    %p272 = por %p270, %p271
    %p273 = scmp.ne.s32.totalorder %s259, %s260
    %p274 = scmp.eq.s32.totalorder %s32, 1
    %p275 = por %p273, %p274
    %p277 = scmp.ne.s32.totalorder %s260, %s276
    %p278 = scmp.eq.s32.totalorder %s32, 0
    %p279 = por %p277, %p278
    %s280 = ssub.s32 %s33, %s45
    %p281 = scmp.eq.s32.totalorder %s280, 0
    %s283 = sadd.s32 %s282, 1
    %s284 = scalar_select %p281, %s282, %s283
    %p287 = pneg %p281
    %p288 = scmp.eq.s32.totalorder %s26, 1
    %p289 = por %p287, %p288
    %p290 = scmp.ne.s32.totalorder %s282, %s285
    %p291 = scmp.eq.s32.totalorder %s26, 0
    %p292 = por %p290, %p291
    %p293 = scmp.ne.s32.totalorder %s282, %s285
    %p294 = scmp.eq.s32.totalorder %s31, 1
    %p295 = por %p293, %p294
    %p296 = scmp.ne.s32.totalorder %s285, %s286
    %p297 = scmp.eq.s32.totalorder %s31, 0
    %p298 = por %p296, %p297
    %p299 = scmp.ne.s32.totalorder %s285, %s286
    %p300 = scmp.eq.s32.totalorder %s32, 1
    %p301 = por %p299, %p300
    %p303 = scmp.ne.s32.totalorder %s286, %s302
    %p304 = scmp.eq.s32.totalorder %s32, 0
    %p305 = por %p303, %p304
    %s306 = ssub.s32 %s33, %s45
    %p307 = scmp.eq.s32.totalorder %s306, 0
    %s309 = sadd.s32 %s308, 1
    %s310 = scalar_select %p307, %s308, %s309
    %p313 = pneg %p307
    %p314 = scmp.eq.s32.totalorder %s26, 1
    %p315 = por %p313, %p314
    %p316 = scmp.ne.s32.totalorder %s308, %s311
    %p317 = scmp.eq.s32.totalorder %s26, 0
    %p318 = por %p316, %p317
    %p319 = scmp.ne.s32.totalorder %s308, %s311
    %p320 = scmp.eq.s32.totalorder %s31, 1
    %p321 = por %p319, %p320
    %p322 = scmp.ne.s32.totalorder %s311, %s312
    %p323 = scmp.eq.s32.totalorder %s31, 0
    %p324 = por %p322, %p323
    %p325 = scmp.ne.s32.totalorder %s311, %s312
    %p326 = scmp.eq.s32.totalorder %s32, 1
    %p327 = por %p325, %p326
    %p329 = scmp.ne.s32.totalorder %s312, %s328
    %p330 = scmp.eq.s32.totalorder %s32, 0
    %p331 = por %p329, %p330
    %s332 = ssub.s32 %s33, %s45
    %s333 = ssub.s32 %s34, %s41
    %s334 = sor.u32 %s332, %s333
    %p335 = scmp.eq.s32.totalorder %s334, 0
    %s337 = sadd.s32 %s336, 1
    %s338 = scalar_select %p335, %s336, %s337
    %p341 = pneg %p335
    %p342 = scmp.eq.s32.totalorder %s26, 1
    %p343 = por %p341, %p342
    %p344 = scmp.ne.s32.totalorder %s336, %s339
    %p345 = scmp.eq.s32.totalorder %s26, 0
    %p346 = por %p344, %p345
    %p347 = scmp.ne.s32.totalorder %s336, %s339
    %p348 = scmp.eq.s32.totalorder %s31, 1
    %p349 = por %p347, %p348
    %p350 = scmp.ne.s32.totalorder %s339, %s340
    %p351 = scmp.eq.s32.totalorder %s31, 0
    %p352 = por %p350, %p351
    %p353 = scmp.ne.s32.totalorder %s339, %s340
    %p354 = scmp.eq.s32.totalorder %s32, 1
    %p355 = por %p353, %p354
    %p357 = scmp.ne.s32.totalorder %s340, %s356
    %p358 = scmp.eq.s32.totalorder %s32, 0
    %p359 = por %p357, %p358
    %p360 = scmp.le.s32.totalorder 1, %s26
    %p361 = scmp.lt.s32.totalorder %s26, 3
    %p362 = pnand %p360, %p361
    %p363 = pneg %p362
    // Predicated region
    $region9: #{fastspeech2_forward.9} parent=5 // pred_check
      _
    $region10: #{fastspeech2_forward.9} parent=5 // pred_check_branch
      %365 = sbr.rel (%p362) target = $region12
    $region11: #{fastspeech2_forward.9} parent=5 // pred_region
      %s366 = ssub.s32 %s26, 1
      // Predicated region
      $region13: #{fastspeech2_forward.9} parent=11 // pred_check
        %p367 = pneg %p90
      $region14: #{fastspeech2_forward.9} parent=11 // pred_check_branch
        %369 = sbr.rel (%p367) target = $region16
      $region15: #{fastspeech2_forward.9} parent=11 // pred_region
        %p370 = scmp.lt.s32.totalorder %s35, 0
        %s371 = scalar_select %p370, %s35, 0
        %s372 = smul.addr %s371, 12
        %s373 = smul.addr %s372, 4
        %s374 = scalar_lea.vmem %s2, %s373
      $region16: #{fastspeech2_forward.9} parent=11 // pred_fallthru
        _
      // Predicated region
      $region17: #{fastspeech2_forward.9} parent=11 // pred_check
        %p375 = pneg %p116
      $region18: #{fastspeech2_forward.9} parent=11 // pred_check_branch
        %377 = sbr.rel (%p375) target = $region20
      $region19: #{fastspeech2_forward.9} parent=11 // pred_region
        %p378 = scmp.lt.s32.totalorder %s35, 0
        %s379 = scalar_select %p378, %s35, 0
        %s380 = scalar_lea.vmem %s3, %s379
      $region20: #{fastspeech2_forward.9} parent=11 // pred_fallthru
        _
      // Predicated region
      $region21: #{fastspeech2_forward.9} parent=11 // pred_check
        %p381 = pneg %p142
      $region22: #{fastspeech2_forward.9} parent=11 // pred_check_branch
        %383 = sbr.rel (%p381) target = $region24
      $region23: #{fastspeech2_forward.9} parent=11 // pred_region
        %p384 = scmp.lt.s32.totalorder %s35, 0
        %s385 = scalar_select %p384, %s35, 0
        %s386 = scalar_lea.vmem %s4, %s385
      $region24: #{fastspeech2_forward.9} parent=11 // pred_fallthru
        _
      // Predicated region
      $region25: #{fastspeech2_forward.9} parent=11 // pred_check
        %p387 = pneg %p168
      $region26: #{fastspeech2_forward.9} parent=11 // pred_check_branch
        %389 = sbr.rel (%p387) target = $region28
      $region27: #{fastspeech2_forward.9} parent=11 // pred_region
        %p390 = scmp.lt.s32.totalorder %s35, 0
        %s391 = scalar_select %p390, %s35, 0
        %s392 = scalar_lea.vmem %s5, %s391
      $region28: #{fastspeech2_forward.9} parent=11 // pred_fallthru
        _
      // Predicated region
      $region29: #{fastspeech2_forward.9} parent=11 // pred_check
        %p393 = pneg %p194
      $region30: #{fastspeech2_forward.9} parent=11 // pred_check_branch
        %395 = sbr.rel (%p393) target = $region32
      $region31: #{fastspeech2_forward.9} parent=11 // pred_region
        %p396 = scmp.lt.s32.totalorder %s35, 0
        %s397 = scalar_select %p396, %s35, 0
        %s398 = smul.addr %s397, 12
        %s399 = smul.addr %s398, 4
        %s400 = scalar_lea.vmem %s6, %s399
      $region32: #{fastspeech2_forward.9} parent=11 // pred_fallthru
        _
      // Predicated region
      $region33: #{fastspeech2_forward.9} parent=11 // pred_check
        %p401 = pneg %p220
      $region34: #{fastspeech2_forward.9} parent=11 // pred_check_branch
        %403 = sbr.rel (%p401) target = $region36
      $region35: #{fastspeech2_forward.9} parent=11 // pred_region
        %p404 = scmp.lt.s32.totalorder %s35, 0
        %s405 = scalar_select %p404, %s35, 0
        %s406 = scalar_lea.vmem %s7, %s405
      $region36: #{fastspeech2_forward.9} parent=11 // pred_fallthru
        _
      // Predicated region
      $region37: #{fastspeech2_forward.9} parent=11 // pred_check
        %p407 = pneg %p246
      $region38: #{fastspeech2_forward.9} parent=11 // pred_check_branch
        %409 = sbr.rel (%p407) target = $region40
      $region39: #{fastspeech2_forward.9} parent=11 // pred_region
        %p410 = scmp.lt.s32.totalorder %s35, 0
        %s411 = scalar_select %p410, %s35, 0
        %s412 = scalar_lea.vmem %s8, %s411
      $region40: #{fastspeech2_forward.9} parent=11 // pred_fallthru
        _
      // Predicated region
      $region41: #{fastspeech2_forward.9} parent=11 // pred_check
        %p413 = pneg %p272
      $region42: #{fastspeech2_forward.9} parent=11 // pred_check_branch
        %415 = sbr.rel (%p413) target = $region44
      $region43: #{fastspeech2_forward.9} parent=11 // pred_region
        %p416 = scmp.lt.s32.totalorder %s35, 0
        %s417 = scalar_select %p416, %s35, 0
        %s418 = scalar_lea.vmem %s9, %s417
      $region44: #{fastspeech2_forward.9} parent=11 // pred_fallthru
        _
      // Predicated region
      $region45: #{fastspeech2_forward.9} parent=11 // pred_check
        %p419 = pneg %p298
      $region46: #{fastspeech2_forward.9} parent=11 // pred_check_branch
        %421 = sbr.rel (%p419) target = $region48
      $region47: #{fastspeech2_forward.9} parent=11 // pred_region
        %p422 = scmp.lt.s32.totalorder %s35, 0
        %s423 = scalar_select %p422, %s35, 0
        %s424 = smul.addr %s423, 4
        %s425 = smul.addr %s424, 4
        %s426 = scalar_lea.vmem %s10, %s425
      $region48: #{fastspeech2_forward.9} parent=11 // pred_fallthru
        _
      // Predicated region
      $region49: #{fastspeech2_forward.9} parent=11 // pred_check
        %p427 = pneg %p324
      $region50: #{fastspeech2_forward.9} parent=11 // pred_check_branch
        %429 = sbr.rel (%p427) target = $region52
      $region51: #{fastspeech2_forward.9} parent=11 // pred_region
        %p430 = scmp.lt.s32.totalorder %s35, 0
        %s431 = scalar_select %p430, %s35, 0
        %s432 = scalar_lea.vmem [#allocation4], %s431
      $region52: #{fastspeech2_forward.9} parent=11 // pred_fallthru
        _
    $region12: #{fastspeech2_forward.9} parent=5 // pred_fallthru
      _
    %p433 = scmp.lt.s32.totalorder %s26, 2
    // Predicated region
    $region53: #{fastspeech2_forward.9} parent=5 // pred_check
      %p434 = pneg %p433
    $region54: #{fastspeech2_forward.9} parent=5 // pred_check_branch
      %436 = sbr.rel (%p434) target = $region56
    $region55: #{fastspeech2_forward.9} parent=5 // pred_region
      // Predicated region
      $region57: #{fastspeech2_forward.9} parent=55 // pred_check
        %p437 = pneg %p58
      $region58: #{fastspeech2_forward.9} parent=55 // pred_check_branch
        %439 = sbr.rel (%p437) target = $region60
      $region59: #{fastspeech2_forward.9} parent=55 // pred_region
        %p440 = scmp.lt.s32.totalorder %s34, 1
        %s441 = scalar_select %p440, %s34, 1
        %s442 = smul.addr %s441, 2
        %s443 = smul.addr %s442, 8
        %s444 = scalar_lea.vmem %s1, %s443
      $region60: #{fastspeech2_forward.9} parent=55 // pred_fallthru
        _
    $region56: #{fastspeech2_forward.9} parent=5 // pred_fallthru
      _
    %p445 = scmp.le.s32.totalorder 1, %s26
    %p446 = scmp.lt.s32.totalorder %s26, 3
    %p447 = pnand %p445, %p446
    %p448 = pneg %p447
    // Predicated region
    $region61: #{fastspeech2_forward.9} parent=5 // pred_check
      _
    $region62: #{fastspeech2_forward.9} parent=5 // pred_check_branch
      %450 = sbr.rel (%p447) target = $region64
    $region63: #{fastspeech2_forward.9} parent=5 // pred_region
      %s451 = ssub.s32 %s26, 1
      %p452 = scmp.lt.s32.totalorder %s36, 1
      %s453 = scalar_select %p452, %s36, 1
      %s454 = smul.addr %s453, 2
      %s455 = smul.addr %s454, 8
      %s456 = scalar_lea.vmem %s1, %s455
      %p457 = pneg %p64
      %p458 = pneg %p61
      %p459 = scmp.lt.s32.totalorder %s35, 0
      %s460 = scalar_select %p459, %s35, 0
      %s461 = smul.addr %s460, 12
      %s462 = smul.addr %s461, 4
      %s463 = scalar_lea.vmem %s2, %s462
      %p464 = pneg %p90
      %p465 = pneg %p87
      %p466 = scmp.lt.s32.totalorder %s35, 0
      %s467 = scalar_select %p466, %s35, 0
      %s468 = scalar_lea.vmem %s3, %s467
      %p469 = pneg %p116
      %p470 = pneg %p113
      %p471 = scmp.lt.s32.totalorder %s35, 0
      %s472 = scalar_select %p471, %s35, 0
      %s473 = scalar_lea.vmem %s4, %s472
      %p474 = pneg %p142
      %p475 = pneg %p139
      %p476 = scmp.lt.s32.totalorder %s35, 0
      %s477 = scalar_select %p476, %s35, 0
      %s478 = scalar_lea.vmem %s5, %s477
      %p479 = pneg %p168
      %p480 = pneg %p165
      %p481 = scmp.lt.s32.totalorder %s35, 0
      %s482 = scalar_select %p481, %s35, 0
      %s483 = smul.addr %s482, 12
      %s484 = smul.addr %s483, 4
      %s485 = scalar_lea.vmem %s6, %s484
      %p486 = pneg %p194
      %p487 = pneg %p191
      %p488 = scmp.lt.s32.totalorder %s35, 0
      %s489 = scalar_select %p488, %s35, 0
      %s490 = scalar_lea.vmem %s7, %s489
      %p491 = pneg %p220
      %p492 = pneg %p217
      %p493 = scmp.lt.s32.totalorder %s35, 0
      %s494 = scalar_select %p493, %s35, 0
      %s495 = scalar_lea.vmem %s8, %s494
      %p496 = pneg %p246
      %p497 = pneg %p243
      %p498 = scmp.lt.s32.totalorder %s35, 0
      %s499 = scalar_select %p498, %s35, 0
      %s500 = scalar_lea.vmem %s9, %s499
      %p501 = pneg %p272
      %p502 = pneg %p269
      %p503 = scmp.lt.s32.totalorder %s35, 0
      %s504 = scalar_select %p503, %s35, 0
      %s505 = smul.addr %s504, 4
      %s506 = smul.addr %s505, 4
      %s507 = scalar_lea.vmem %s10, %s506
      %p508 = pneg %p298
      %p509 = pneg %p295
      %p510 = scmp.lt.s32.totalorder %s35, 0
      %s511 = scalar_select %p510, %s35, 0
      %s512 = scalar_lea.vmem [#allocation4], %s511
      %p513 = pneg %p324
      %p514 = pneg %p321
      %p515 = pneg %p352
      %p516 = pneg %p349
      %p517 = scmp.lt.s32.totalorder %s35, 0
      %s518 = scalar_select %p517, %s35, 0
      %p519 = scmp.lt.s32.totalorder %s36, 1
      %s520 = scalar_select %p519, %s36, 1
      %s521 = smul.addr %s520, 2
      %s522 = smul.addr %s518, 4
      %s523 = sadd.s32 %s521, %s522
      %s524 = smul.addr %s523, 8
      %s525 = scalar_lea.vmem %s12, %s524
      %p526 = scmp.lt.s32.totalorder %s36, 1
      %s527 = scalar_select %p526, %s36, 1
      %s528 = smul.addr %s527, 2
      %s529 = smul.addr %s528, 8
      %s530 = scalar_lea.vmem %s1, %s529
      %p531 = scmp.lt.s32.totalorder %s35, 0
      %s532 = scalar_select %p531, %s35, 0
      %s533 = smul.addr %s532, 12
      %s534 = smul.addr %s533, 4
      %s535 = scalar_lea.vmem %s2, %s534
      %p536 = scmp.lt.s32.totalorder %s35, 0
      %s537 = scalar_select %p536, %s35, 0
      %s538 = scalar_lea.vmem %s3, %s537
      %p539 = scmp.lt.s32.totalorder %s35, 0
      %s540 = scalar_select %p539, %s35, 0
      %s541 = scalar_lea.vmem %s4, %s540
      %p542 = scmp.lt.s32.totalorder %s35, 0
      %s543 = scalar_select %p542, %s35, 0
      %s544 = scalar_lea.vmem %s5, %s543
      %p545 = scmp.lt.s32.totalorder %s35, 0
      %s546 = scalar_select %p545, %s35, 0
      %s547 = smul.addr %s546, 12
      %s548 = smul.addr %s547, 4
      %s549 = scalar_lea.vmem %s6, %s548
      %p550 = scmp.lt.s32.totalorder %s35, 0
      %s551 = scalar_select %p550, %s35, 0
      %s552 = scalar_lea.vmem %s7, %s551
      %p553 = scmp.lt.s32.totalorder %s35, 0
      %s554 = scalar_select %p553, %s35, 0
      %s555 = scalar_lea.vmem %s8, %s554
      %p556 = scmp.lt.s32.totalorder %s35, 0
      %s557 = scalar_select %p556, %s35, 0
      %s558 = scalar_lea.vmem %s9, %s557
      %p559 = scmp.lt.s32.totalorder %s35, 0
      %s560 = scalar_select %p559, %s35, 0
      %s561 = smul.addr %s560, 4
      %s562 = smul.addr %s561, 4
      %s563 = scalar_lea.vmem %s10, %s562
      %p564 = scmp.lt.s32.totalorder %s35, 0
      %s565 = scalar_select %p564, %s35, 0
      %s566 = scalar_lea.vmem [#allocation4], %s565
      %p567 = scmp.lt.s32.totalorder %s35, 0
      %s568 = scalar_select %p567, %s35, 0
      %p569 = scmp.lt.s32.totalorder %s36, 1
      %s570 = scalar_select %p569, %s36, 1
      %s571 = smul.addr %s570, 2
      %s572 = smul.addr %s568, 4
      %s573 = sadd.s32 %s571, %s572
      %s574 = smul.addr %s573, 8
      %s575 = scalar_lea.vmem %s12, %s574
      %s577 = sld [smem:[#allocation3 + %s36]]
      %v578 = vld [vmem:[%s530] sm:$0xff]
      %v579 = vld [vmem:[%s530 + $0x8] sm:$0xff]
      %vm582 = vcmask 1040384
      %v583 = vrot.slane %v578, 7
      %v584 = vrot.slane %v579, 7
      %v585 = vsel %vm582, %v583, %v584
      %v588 = vsel %vm582, 0.0, %v583
      %vm589 = vcmask 1046528
      %v590 = vrot.slane %v578, 1
      %v591 = vrot.slane %v579, 1
      %v592 = vsel %vm589, %v590, %v591
      %v594 = vsel %vm589, %v591, 0.0
      %595 = vrot.lane.b32.xlu0 %v578, 32
      %v596 = vpop.permute.xlu0 %595
      %597 = vrot.lane.b32.xlu0 %v579, 32
      %v598 = vpop.permute.xlu0 %597
      %602 = vrot.lane.b32.xlu0 %v592, 64
      %v603 = vpop.permute.xlu0 %602
      %604 = vrot.lane.b32.xlu0 %v594, 64
      %v605 = vpop.permute.xlu0 %604
      %vm608 = vcmask 261120
      %v609 = vsel %vm608, %v588, %v596
      %v610 = vsel %vm608, %v585, %v598
      %vm611 = vcmask 523264
      %v612 = vsel %vm611, %v609, %v603
      %v613 = vsel %vm611, %v610, %v605
      %v614 = vpack.c.bf16 %v613, %v612
      %v615 = vld [vmem:[%s535] sm:$0xf]
      %v616 = vld [vmem:[%s535 + $0x4] sm:$0xf]
      %v617 = vld [vmem:[%s535 + $0x8] sm:$0xf]
      %v618 = vld [vmem:[%s535 + $0xc] sm:$0xf]
      %v619 = vld [vmem:[%s535 + $0x10] sm:$0xf]
      %v620 = vld [vmem:[%s535 + $0x14] sm:$0xf]
      %v621 = vld [vmem:[%s535 + $0x18] sm:$0xf]
      %v622 = vld [vmem:[%s535 + $0x1c] sm:$0xf]
      %v623 = vld [vmem:[%s535 + $0x20] sm:$0xf]
      %v624 = vld [vmem:[%s535 + $0x24] sm:$0xf]
      %v625 = vld [vmem:[%s535 + $0x28] sm:$0xf]
      %v626 = vld [vmem:[%s535 + $0x2c] sm:$0xf]
      %v627 = vld [vmem:[%s538] sm:$0x1]
      %v629 = vlaneseq
      %v630 = vshrl.u32 %v629, 7
      %v631 = vsub.s32 0, %v630
      %v632 = vrot.slane %v627, %v631
      %v646 = vunpack.c.l.b16 %v615
      %v647 = vunpack.c.l.b16 %v616
      %v648 = vunpack.c.l.b16 %v617
      %v649 = vunpack.c.l.b16 %v618
      %v650 = vunpack.c.l.b16 %v619
      %v651 = vunpack.c.l.b16 %v620
      %v652 = vunpack.c.l.b16 %v621
      %v653 = vunpack.c.l.b16 %v622
      %v654 = vunpack.c.l.b16 %v623
      %v655 = vunpack.c.l.b16 %v624
      %v656 = vunpack.c.l.b16 %v625
      %v657 = vunpack.c.l.b16 %v626
      %v658 = vpack.c.b16 %v647, %v646
      %v659 = vpack.c.b16 %v649, %v648
      %v660 = vpack.c.b16 %v651, %v650
      %v661 = vpack.c.b16 %v653, %v652
      %v662 = vpack.c.b16 %v655, %v654
      %v663 = vpack.c.b16 %v657, %v656
      %vm670 = vcmask 785408
      %v672 = vsel %vm670, %v614, 0
      %674 = vmatprep.subr.bf16.mxu0 0
      %675 = vmatpush1.bf16.msra.mxu0 %v658
      %676 = vmatprep.subr.bf16.mxu0 0
      %677 = vmatpush1.bf16.msra.mxu0 %v659
      %678 = vmatprep.subr.bf16.mxu0 0
      %679 = vmatpush1.bf16.msra.mxu0 %v660
      %680 = vmatprep.subr.bf16.mxu0 0
      %681 = vmatpush1.bf16.msra.mxu0 %v661
      %682 = vmatprep.subr.bf16.mxu0 0
      %683 = vmatpush1.bf16.msra.mxu0 %v662
      %684 = vmatprep.subr.bf16.mxu0 0
      %685 = vmatpush1.bf16.msra.mxu0 %v663
      %686 = vmatprep.subr.bf16.mxu0 0
      %687 = vmatpush1.bf16.msra.mxu0 0
      %688 = vmatprep.subr.bf16.mxu0 0
      %689 = vmatpush1.bf16.msra.mxu0 0
      %690 = vmatprep.subr.bf16.mxu0 0
      %691 = vmatpush1.bf16.msra.mxu0 0
      %692 = vmatprep.subr.bf16.mxu0 0
      %693 = vmatpush1.bf16.msra.mxu0 0
      %694 = vmatprep.subr.bf16.mxu0 0
      %695 = vmatpush1.bf16.msra.mxu0 0
      %696 = vmatprep.subr.bf16.mxu0 0
      %697 = vmatpush1.bf16.msra.mxu0 0
      %698 = vmatprep.subr.bf16.mxu0 0
      %699 = vmatpush1.bf16.msra.mxu0 0
      %700 = vmatprep.subr.bf16.mxu0 0
      %701 = vmatpush1.bf16.msra.mxu0 0
      %702 = vmatprep.subr.bf16.mxu0 0
      %703 = vmatpush1.bf16.msra.mxu0 0
      %704 = vmatprep.subr.bf16.mxu0 0
      %705 = vmatpush1.bf16.msra.mxu0 0
      %706 = vmatprep.mubr.bf16.mxu0 0
      %707 = vmatmul.mubr.bf16.gmra.mrb[0].mxu0 %v672
      %v708 = vpop.f32.mrb[0].mxu0
      %v709 = vadd.f32 %v632, %v708
      %v710 = vpop.f32.mrb[0].mxu0
      %v711 = vpop.f32.mrb[0].mxu0
      %v712 = vadd.f32 %v632, %v711
      %v713 = vpop.f32.mrb[0].mxu0
      %714 = vdwg.mxu0
      %v715 = vmax.f32 %v709, 0.0
      %v716 = vmax.f32 %v712, 0.0
      %v717 = vld [vmem:[%s541] sm:$0x1]
      %v718 = vld [vmem:[%s544] sm:$0x1]
      %v719 = vsel %vm608, %v715, 0.0
      %720 = vadd.xlane.f32.xlu0 %v719
      %v721 = vpop.xlane.xlu0 %720
      %v722 = vsel %vm608, %v716, 0.0
      %723 = vadd.xlane.f32.xlu0 %v722
      %v724 = vpop.xlane.xlu0 %723
      %v725 = vrcp.pop 32.0
      %v726 = vmul.f32 %v721, %v725
      %v727 = vmul.f32 %v724, %v725
      %v728 = vsub.f32 %v715, %v726
      %v729 = vsub.f32 %v716, %v727
      %v730 = vmul.f32 %v728, %v728
      %v731 = vmul.f32 %v729, %v729
      %v732 = vsel %vm608, %v730, 0.0
      %733 = vadd.xlane.f32.xlu0 %v732
      %v734 = vpop.xlane.xlu0 %733
      %v735 = vsel %vm608, %v731, 0.0
      %736 = vadd.xlane.f32.xlu0 %v735
      %v737 = vpop.xlane.xlu0 %736
      %v738 = vmul.f32 %v734, %v725
      %v739 = vmul.f32 %v737, %v725
      %v740 = vadd.f32 %v738, 1e-05
      %v741 = vadd.f32 %v739, 1e-05
      %v742 = vrsqrt.pop %v740
      %v743 = vrsqrt.pop %v741
      %v744 = vmul.f32 %v728, %v742
      %v745 = vmul.f32 %v729, %v743
      %v747 = vlaneseq
      %v748 = vshrl.u32 %v747, 7
      %v749 = vsub.s32 0, %v748
      %v750 = vrot.slane %v717, %v749
      %v752 = vmul.f32 %v744, %v750
      %v753 = vmul.f32 %v745, %v750
      %v755 = vlaneseq
      %v756 = vshrl.u32 %v755, 7
      %v757 = vsub.s32 0, %v756
      %v758 = vrot.slane %v718, %v757
      %v760 = vadd.f32 %v752, %v758
      %v761 = vadd.f32 %v753, %v758
      %v764 = vrot.slane %v760, 7
      %v765 = vrot.slane %v761, 7
      %v766 = vsel %vm582, %v764, %v765
      %v769 = vsel %vm582, 0.0, %v764
      %v770 = vrot.slane %v760, 1
      %v771 = vrot.slane %v761, 1
      %v772 = vsel %vm589, %v770, %v771
      %v774 = vsel %vm589, %v771, 0.0
      %775 = vrot.lane.b32.xlu0 %v760, 32
      %v776 = vpop.permute.xlu0 %775
      %777 = vrot.lane.b32.xlu0 %v761, 32
      %v778 = vpop.permute.xlu0 %777
      %782 = vrot.lane.b32.xlu0 %v772, 64
      %v783 = vpop.permute.xlu0 %782
      %784 = vrot.lane.b32.xlu0 %v774, 64
      %v785 = vpop.permute.xlu0 %784
      %v788 = vsel %vm608, %v769, %v776
      %v789 = vsel %vm608, %v766, %v778
      %v790 = vsel %vm611, %v788, %v783
      %v791 = vsel %vm611, %v789, %v785
      %v792 = vpack.c.bf16 %v791, %v790
      %v793 = vld [vmem:[%s549] sm:$0xf]
      %v794 = vld [vmem:[%s549 + $0x4] sm:$0xf]
      %v795 = vld [vmem:[%s549 + $0x8] sm:$0xf]
      %v796 = vld [vmem:[%s549 + $0xc] sm:$0xf]
      %v797 = vld [vmem:[%s549 + $0x10] sm:$0xf]
      %v798 = vld [vmem:[%s549 + $0x14] sm:$0xf]
      %v799 = vld [vmem:[%s549 + $0x18] sm:$0xf]
      %v800 = vld [vmem:[%s549 + $0x1c] sm:$0xf]
      %v801 = vld [vmem:[%s549 + $0x20] sm:$0xf]
      %v802 = vld [vmem:[%s549 + $0x24] sm:$0xf]
      %v803 = vld [vmem:[%s549 + $0x28] sm:$0xf]
      %v804 = vld [vmem:[%s549 + $0x2c] sm:$0xf]
      %v805 = vld [vmem:[%s552] sm:$0x1]
      %v807 = vlaneseq
      %v808 = vshrl.u32 %v807, 7
      %v809 = vsub.s32 0, %v808
      %v810 = vrot.slane %v805, %v809
      %v824 = vunpack.c.l.b16 %v793
      %v825 = vunpack.c.l.b16 %v794
      %v826 = vunpack.c.l.b16 %v795
      %v827 = vunpack.c.l.b16 %v796
      %v828 = vunpack.c.l.b16 %v797
      %v829 = vunpack.c.l.b16 %v798
      %v830 = vunpack.c.l.b16 %v799
      %v831 = vunpack.c.l.b16 %v800
      %v832 = vunpack.c.l.b16 %v801
      %v833 = vunpack.c.l.b16 %v802
      %v834 = vunpack.c.l.b16 %v803
      %v835 = vunpack.c.l.b16 %v804
      %v836 = vpack.c.b16 %v825, %v824
      %v837 = vpack.c.b16 %v827, %v826
      %v838 = vpack.c.b16 %v829, %v828
      %v839 = vpack.c.b16 %v831, %v830
      %v840 = vpack.c.b16 %v833, %v832
      %v841 = vpack.c.b16 %v835, %v834
      %v849 = vsel %vm670, %v792, 0
      %851 = vmatprep.subr.bf16.mxu0 0
      %852 = vmatpush1.bf16.msra.mxu0 %v836
      %853 = vmatprep.subr.bf16.mxu0 0
      %854 = vmatpush1.bf16.msra.mxu0 %v837
      %855 = vmatprep.subr.bf16.mxu0 0
      %856 = vmatpush1.bf16.msra.mxu0 %v838
      %857 = vmatprep.subr.bf16.mxu0 0
      %858 = vmatpush1.bf16.msra.mxu0 %v839
      %859 = vmatprep.subr.bf16.mxu0 0
      %860 = vmatpush1.bf16.msra.mxu0 %v840
      %861 = vmatprep.subr.bf16.mxu0 0
      %862 = vmatpush1.bf16.msra.mxu0 %v841
      %863 = vmatprep.subr.bf16.mxu0 0
      %864 = vmatpush1.bf16.msra.mxu0 0
      %865 = vmatprep.subr.bf16.mxu0 0
      %866 = vmatpush1.bf16.msra.mxu0 0
      %867 = vmatprep.subr.bf16.mxu0 0
      %868 = vmatpush1.bf16.msra.mxu0 0
      %869 = vmatprep.subr.bf16.mxu0 0
      %870 = vmatpush1.bf16.msra.mxu0 0
      %871 = vmatprep.subr.bf16.mxu0 0
      %872 = vmatpush1.bf16.msra.mxu0 0
      %873 = vmatprep.subr.bf16.mxu0 0
      %874 = vmatpush1.bf16.msra.mxu0 0
      %875 = vmatprep.subr.bf16.mxu0 0
      %876 = vmatpush1.bf16.msra.mxu0 0
      %877 = vmatprep.subr.bf16.mxu0 0
      %878 = vmatpush1.bf16.msra.mxu0 0
      %879 = vmatprep.subr.bf16.mxu0 0
      %880 = vmatpush1.bf16.msra.mxu0 0
      %881 = vmatprep.subr.bf16.mxu0 0
      %882 = vmatpush1.bf16.msra.mxu0 0
      %883 = vmatprep.mubr.bf16.mxu0 0
      %884 = vmatmul.mubr.bf16.gmra.mrb[0].mxu0 %v849
      %v885 = vpop.f32.mrb[0].mxu0
      %v886 = vadd.f32 %v810, %v885
      %v887 = vpop.f32.mrb[0].mxu0
      %v888 = vpop.f32.mrb[0].mxu0
      %v889 = vadd.f32 %v810, %v888
      %v890 = vpop.f32.mrb[0].mxu0
      %891 = vdwg.mxu0
      %v892 = vmax.f32 %v886, 0.0
      %v893 = vmax.f32 %v889, 0.0
      %v894 = vld [vmem:[%s555] sm:$0x1]
      %v895 = vld [vmem:[%s558] sm:$0x1]
      %v896 = vsel %vm608, %v892, 0.0
      %897 = vadd.xlane.f32.xlu0 %v896
      %v898 = vpop.xlane.xlu0 %897
      %v899 = vsel %vm608, %v893, 0.0
      %900 = vadd.xlane.f32.xlu0 %v899
      %v901 = vpop.xlane.xlu0 %900
      %v902 = vmul.f32 %v898, %v725
      %v903 = vmul.f32 %v901, %v725
      %v904 = vsub.f32 %v892, %v902
      %v905 = vsub.f32 %v893, %v903
      %v906 = vmul.f32 %v904, %v904
      %v907 = vmul.f32 %v905, %v905
      %v908 = vsel %vm608, %v906, 0.0
      %909 = vadd.xlane.f32.xlu0 %v908
      %v910 = vpop.xlane.xlu0 %909
      %v911 = vsel %vm608, %v907, 0.0
      %912 = vadd.xlane.f32.xlu0 %v911
      %v913 = vpop.xlane.xlu0 %912
      %v914 = vmul.f32 %v910, %v725
      %v915 = vmul.f32 %v913, %v725
      %v916 = vadd.f32 %v914, 1e-05
      %v917 = vadd.f32 %v915, 1e-05
      %v918 = vrsqrt.pop %v916
      %v919 = vrsqrt.pop %v917
      %v920 = vmul.f32 %v904, %v918
      %v921 = vmul.f32 %v905, %v919
      %v923 = vlaneseq
      %v924 = vshrl.u32 %v923, 7
      %v925 = vsub.s32 0, %v924
      %v926 = vrot.slane %v894, %v925
      %v928 = vmul.f32 %v920, %v926
      %v929 = vmul.f32 %v921, %v926
      %v931 = vlaneseq
      %v932 = vshrl.u32 %v931, 7
      %v933 = vsub.s32 0, %v932
      %v934 = vrot.slane %v895, %v933
      %v936 = vadd.f32 %v928, %v934
      %v937 = vadd.f32 %v929, %v934
      %v938 = vpack.c.bf16 %v937, %v936
      %v939 = vld [vmem:[%s563] sm:$0xf]
      %v940 = vld [vmem:[%s563 + $0x4] sm:$0xf]
      %v941 = vld [vmem:[%s563 + $0x8] sm:$0xf]
      %v942 = vld [vmem:[%s563 + $0xc] sm:$0xf]
      %v943 = vld [vmem:[%s566] sm:$0x1]
      %v945 = vlaneseq
      %v946 = vshrl.u32 %v945, 7
      %v947 = vsub.s32 0, %v946
      %v948 = vrot.slane %v943, %v947
      %v954 = vunpack.c.l.b16 %v939
      %v955 = vunpack.c.l.b16 %v940
      %v956 = vunpack.c.l.b16 %v941
      %v957 = vunpack.c.l.b16 %v942
      %v958 = vpack.c.b16 %v955, %v954
      %v959 = vpack.c.b16 %v957, %v956
      %v963 = vsel %vm608, %v938, 0
      %965 = vmatprep.subr.bf16.mxu0 0
      %966 = vmatpush1.bf16.msra.mxu0 %v958
      %967 = vmatprep.subr.bf16.mxu0 0
      %968 = vmatpush1.bf16.msra.mxu0 %v959
      %969 = vmatprep.subr.bf16.mxu0 0
      %970 = vmatpush1.bf16.msra.mxu0 0
      %971 = vmatprep.subr.bf16.mxu0 0
      %972 = vmatpush1.bf16.msra.mxu0 0
      %973 = vmatprep.subr.bf16.mxu0 0
      %974 = vmatpush1.bf16.msra.mxu0 0
      %975 = vmatprep.subr.bf16.mxu0 0
      %976 = vmatpush1.bf16.msra.mxu0 0
      %977 = vmatprep.subr.bf16.mxu0 0
      %978 = vmatpush1.bf16.msra.mxu0 0
      %979 = vmatprep.subr.bf16.mxu0 0
      %980 = vmatpush1.bf16.msra.mxu0 0
      %981 = vmatprep.subr.bf16.mxu0 0
      %982 = vmatpush1.bf16.msra.mxu0 0
      %983 = vmatprep.subr.bf16.mxu0 0
      %984 = vmatpush1.bf16.msra.mxu0 0
      %985 = vmatprep.subr.bf16.mxu0 0
      %986 = vmatpush1.bf16.msra.mxu0 0
      %987 = vmatprep.subr.bf16.mxu0 0
      %988 = vmatpush1.bf16.msra.mxu0 0
      %989 = vmatprep.subr.bf16.mxu0 0
      %990 = vmatpush1.bf16.msra.mxu0 0
      %991 = vmatprep.subr.bf16.mxu0 0
      %992 = vmatpush1.bf16.msra.mxu0 0
      %993 = vmatprep.subr.bf16.mxu0 0
      %994 = vmatpush1.bf16.msra.mxu0 0
      %995 = vmatprep.subr.bf16.mxu0 0
      %996 = vmatpush1.bf16.msra.mxu0 0
      %997 = vmatprep.mubr.bf16.mxu0 0
      %998 = vmatmul.mubr.bf16.gmra.mrb[0].mxu0 %v963
      %v999 = vpop.f32.mrb[0].mxu0
      %v1000 = vadd.f32 %v948, %v999
      %v1001 = vpop.f32.mrb[0].mxu0
      %v1002 = vpop.f32.mrb[0].mxu0
      %v1003 = vadd.f32 %v948, %v1002
      %v1004 = vpop.f32.mrb[0].mxu0
      %1005 = vdwg.mxu0
      %v1006 = vlaneseq
      %v1007 = vshrl.u32 %v1006, 7
      %v1008 = vadd.s32 %v1007, 8
      %v1009 = vstv %s577
      %vm1010 = vcmp.ge.s32.totalorder %v1007, %v1009
      %vm1011 = vcmp.ge.s32.totalorder %v1008, %v1009
      %v1012 = vsel %vm1010, 0.0, %v1000
      %v1013 = vsel %vm1011, 0.0, %v1003
      %vm1014 = vcmask 7168
      %1015 = vst.msk [vmem:[%s575] sm:$0xff] %vm1014, %v1012
      %1016 = vst.msk [vmem:[%s575 + $0x8] sm:$0xff] %vm1014, %v1013
      %p1017 = scmp.lt.s32.totalorder %s35, 0
      %s1018 = scalar_select %p1017, %s35, 0
      %p1019 = scmp.lt.s32.totalorder %s36, 1
      %s1020 = scalar_select %p1019, %s36, 1
      %s1021 = smul.addr %s1020, 2
      %s1022 = smul.addr %s1018, 4
      %s1023 = sadd.s32 %s1021, %s1022
      %s1024 = smul.addr %s1023, 8
      %s1025 = scalar_lea.vmem %s12, %s1024
      // Predicated region
      $region65: #{fastspeech2_forward.9} parent=63 // pred_check
        %p1026 = pneg %p349
      $region66: #{fastspeech2_forward.9} parent=63 // pred_check_branch
        %1028 = sbr.rel (%p1026) target = $region68
      $region67: #{fastspeech2_forward.9} parent=63 // pred_region
        _
      $region68: #{fastspeech2_forward.9} parent=63 // pred_fallthru
        _
    $region64: #{fastspeech2_forward.9} parent=5 // pred_fallthru
      _
    %p1029 = scmp.le.s32.totalorder 2, %s26
    // Predicated region
    $region69: #{fastspeech2_forward.9} parent=5 // pred_check
      %p1030 = pneg %p1029
    $region70: #{fastspeech2_forward.9} parent=5 // pred_check_branch
      %1032 = sbr.rel (%p1030) target = $region72
    $region71: #{fastspeech2_forward.9} parent=5 // pred_region
      %s1033 = ssub.s32 %s26, 2
      // Predicated region
      $region73: #{fastspeech2_forward.9} parent=71 // pred_check
        %p1034 = pneg %p355
      $region74: #{fastspeech2_forward.9} parent=71 // pred_check_branch
        %1036 = sbr.rel (%p1034) target = $region76
      $region75: #{fastspeech2_forward.9} parent=71 // pred_region
        %p1037 = scmp.lt.s32.totalorder %s37, 0
        %s1038 = scalar_select %p1037, %s37, 0
        %p1039 = scmp.lt.s32.totalorder %s38, 1
        %s1040 = scalar_select %p1039, %s38, 1
        %s1041 = smul.addr %s1040, 2
        %s1042 = smul.addr %s1038, 4
        %s1043 = sadd.s32 %s1041, %s1042
        %s1044 = smul.addr %s1043, 8
        %s1045 = scalar_lea.vmem %s12, %s1044
      $region76: #{fastspeech2_forward.9} parent=71 // pred_fallthru
        _
    $region72: #{fastspeech2_forward.9} parent=5 // pred_fallthru
      _
  $region6: #{fastspeech2_forward.9} parent=0 // loop_footer
    %s30 = sadd.s32 1, %s26
  $region7: #{fastspeech2_forward.9} parent=0 // loop_footer_branch
    %25 = sbr.rel target = $region3
  $region8: #{fastspeech2_forward.9} parent=0 // loop_exit
    _

// kernel: fastspeech2_forward.7
$region0: #{fastspeech2_forward.7}
  #allocation0 [shape = 'u32[]', space=smem, size = 0x4, offset = 0x4, fixed_abs, tag = 'smem constant byte address 0x4 - core index']
  #allocation1 [shape = 'u32[144,128]{1,0:T(1,128)}', space=vmem, size = 0x12000, scoped, tag = 'internal scratch']
  #allocation2 [shape = 's32[1]{0}', space=sflag, size = 0x4, scoped, tag = 'scoped memory for fastspeech2_forward.7']
  #allocation3 [shape = 'u8[512]{0}', space=smem, size = 0x200, scoped, tag = 'prefetched SMEM operand 0']
  %s0 = inlined_call_operand.vmem [shape: s32[2], index: 0, kind: input, shape index: {}]
  %s1 = inlined_call_operand.vmem [shape: f32[2,16,32], index: 1, kind: input, shape index: {}]
  %s2 = inlined_call_operand.vmem [shape: bf16[32,96], index: 2, kind: input, shape index: {}]
  %s3 = inlined_call_operand.vmem [shape: f32[1,96], index: 3, kind: input, shape index: {}]
  %s4 = inlined_call_operand.vmem [shape: bf16[32,32], index: 4, kind: input, shape index: {}]
  %s5 = inlined_call_operand.vmem [shape: f32[1,32], index: 5, kind: input, shape index: {}]
  %s6 = inlined_call_operand.vmem [shape: f32[1,32], index: 6, kind: input, shape index: {}]
  %s7 = inlined_call_operand.vmem [shape: f32[1,32], index: 7, kind: input, shape index: {}]
  %s8 = inlined_call_operand.vmem [shape: bf16[288,64], index: 8, kind: input, shape index: {}]
  %s9 = inlined_call_operand.vmem [shape: f32[1,64], index: 9, kind: input, shape index: {}]
  %s10 = inlined_call_operand.vmem [shape: bf16[64,32], index: 10, kind: input, shape index: {}]
  %s11 = inlined_call_operand.vmem [shape: f32[1,32], index: 11, kind: input, shape index: {}]
  %s12 = inlined_call_operand.vmem [shape: f32[1,32], index: 12, kind: input, shape index: {}]
  %s13 = inlined_call_operand.vmem [shape: f32[1,32], index: 13, kind: input, shape index: {}]
  %s14 = inlined_call_operand.vmem [shape: f32[2,16,32], index: 14, kind: output, shape index: {}]
  %s15 = sld [smem:[#allocation0]]
  $region85: #{fastspeech2_forward.7} parent=0
    _
  %s17 = ssub.s32 1, %s15
  %s18 = scalar_select 0, %s17, %s15
  %s19 = sshll.u32 %s0, 4
  %s20 = int_to_ptr.vmem [resolvable:$true] %s19
  %22 = dma.vmem_to_smem %s20, 16, [#allocation3], [#allocation2]
  %23 = dma.done [#allocation2], 16
  %24 = sfence
  loop: start=0, step=1, limit=4
  $region2: #{fastspeech2_forward.7} parent=0 // loop_pre_header
    _
  $region3: #{fastspeech2_forward.7} parent=0 // loop_header
    %s26 = sphi 0, %s30
    %p27 = scmp.ge.s32.totalorder %s26, 4
    %s36 = sphi 0, %s38
    %s39 = sphi 0, %s36
    %s40 = sphi 0, %s39
    %s56 = sphi 0, %s40
    %s60 = sphi 0, %s60
    %s62 = sphi 0, %s60
    %s63 = sphi 0, %s62
    %s77 = sphi 0, %s63
    %s81 = sphi 0, %s81
    %s83 = sphi 0, %s81
    %s84 = sphi 0, %s83
    %s98 = sphi 0, %s84
    %s102 = sphi 0, %s102
    %s104 = sphi 0, %s102
    %s105 = sphi 0, %s104
    %s119 = sphi 0, %s105
    %s123 = sphi 0, %s123
    %s125 = sphi 0, %s123
    %s126 = sphi 0, %s125
    %s140 = sphi 0, %s126
    %s144 = sphi 0, %s144
    %s146 = sphi 0, %s144
    %s147 = sphi 0, %s146
    %s161 = sphi 0, %s147
    %s165 = sphi 0, %s165
    %s167 = sphi 0, %s165
    %s168 = sphi 0, %s167
    %s182 = sphi 0, %s168
    %s186 = sphi 0, %s186
    %s188 = sphi 0, %s186
    %s189 = sphi 0, %s188
    %s203 = sphi 0, %s189
    %s207 = sphi 0, %s207
    %s209 = sphi 0, %s207
    %s210 = sphi 0, %s209
    %s224 = sphi 0, %s210
    %s228 = sphi 0, %s228
    %s230 = sphi 0, %s228
    %s231 = sphi 0, %s230
    %s245 = sphi 0, %s231
    %s249 = sphi 0, %s249
    %s251 = sphi 0, %s249
    %s252 = sphi 0, %s251
    %s266 = sphi 0, %s252
    %s270 = sphi 0, %s270
    %s272 = sphi 0, %s270
    %s273 = sphi 0, %s272
    %s287 = sphi 0, %s273
    %s291 = sphi 0, %s291
    %s293 = sphi 0, %s291
    %s294 = sphi 0, %s293
    %s308 = sphi 0, %s294
    %s314 = sphi 0, %s316
    %s317 = sphi 0, %s314
    %s318 = sphi 0, %s317
    %s334 = sphi 0, %s318
  $region4: #{fastspeech2_forward.7} parent=0 // loop_header_branch
    %29 = sbr.rel (%p27) target = $region8
  $region5: #{fastspeech2_forward.7} parent=0 // loop_body
    %s31 = ssub.s32 %s26, 1
    %s32 = ssub.s32 %s26, 2
    %s33 = sadd.s32 %s26, 1
    %s34 = ssub.s32 %s26, %s33
    %p35 = scmp.eq.s32.totalorder %s34, 0
    %s37 = sadd.s32 %s36, 1
    %s38 = scalar_select %p35, %s36, %s37
    %p41 = pneg %p35
    %p42 = scmp.eq.s32.totalorder %s26, 1
    %p43 = por %p41, %p42
    %p44 = scmp.ne.s32.totalorder %s36, %s39
    %p45 = scmp.eq.s32.totalorder %s26, 0
    %p46 = por %p44, %p45
    %p47 = scmp.ne.s32.totalorder %s36, %s39
    %p48 = scmp.eq.s32.totalorder %s31, 1
    %p49 = por %p47, %p48
    %p50 = scmp.ne.s32.totalorder %s39, %s40
    %p51 = scmp.eq.s32.totalorder %s31, 0
    %p52 = por %p50, %p51
    %p53 = scmp.ne.s32.totalorder %s39, %s40
    %p54 = scmp.eq.s32.totalorder %s32, 1
    %p55 = por %p53, %p54
    %p57 = scmp.ne.s32.totalorder %s40, %s56
    %p58 = scmp.eq.s32.totalorder %s32, 0
    %p59 = por %p57, %p58
    %s61 = sadd.s32 %s60, 1
    %p64 = scmp.eq.s32.totalorder %s26, 1
    %p65 = scmp.ne.s32.totalorder %s60, %s62
    %p66 = scmp.eq.s32.totalorder %s26, 0
    %p67 = por %p65, %p66
    %p68 = scmp.ne.s32.totalorder %s60, %s62
    %p69 = scmp.eq.s32.totalorder %s31, 1
    %p70 = por %p68, %p69
    %p71 = scmp.ne.s32.totalorder %s62, %s63
    %p72 = scmp.eq.s32.totalorder %s31, 0
    %p73 = por %p71, %p72
    %p74 = scmp.ne.s32.totalorder %s62, %s63
    %p75 = scmp.eq.s32.totalorder %s32, 1
    %p76 = por %p74, %p75
    %p78 = scmp.ne.s32.totalorder %s63, %s77
    %p79 = scmp.eq.s32.totalorder %s32, 0
    %p80 = por %p78, %p79
    %s82 = sadd.s32 %s81, 1
    %p85 = scmp.eq.s32.totalorder %s26, 1
    %p86 = scmp.ne.s32.totalorder %s81, %s83
    %p87 = scmp.eq.s32.totalorder %s26, 0
    %p88 = por %p86, %p87
    %p89 = scmp.ne.s32.totalorder %s81, %s83
    %p90 = scmp.eq.s32.totalorder %s31, 1
    %p91 = por %p89, %p90
    %p92 = scmp.ne.s32.totalorder %s83, %s84
    %p93 = scmp.eq.s32.totalorder %s31, 0
    %p94 = por %p92, %p93
    %p95 = scmp.ne.s32.totalorder %s83, %s84
    %p96 = scmp.eq.s32.totalorder %s32, 1
    %p97 = por %p95, %p96
    %p99 = scmp.ne.s32.totalorder %s84, %s98
    %p100 = scmp.eq.s32.totalorder %s32, 0
    %p101 = por %p99, %p100
    %s103 = sadd.s32 %s102, 1
    %p106 = scmp.eq.s32.totalorder %s26, 1
    %p107 = scmp.ne.s32.totalorder %s102, %s104
    %p108 = scmp.eq.s32.totalorder %s26, 0
    %p109 = por %p107, %p108
    %p110 = scmp.ne.s32.totalorder %s102, %s104
    %p111 = scmp.eq.s32.totalorder %s31, 1
    %p112 = por %p110, %p111
    %p113 = scmp.ne.s32.totalorder %s104, %s105
    %p114 = scmp.eq.s32.totalorder %s31, 0
    %p115 = por %p113, %p114
    %p116 = scmp.ne.s32.totalorder %s104, %s105
    %p117 = scmp.eq.s32.totalorder %s32, 1
    %p118 = por %p116, %p117
    %p120 = scmp.ne.s32.totalorder %s105, %s119
    %p121 = scmp.eq.s32.totalorder %s32, 0
    %p122 = por %p120, %p121
    %s124 = sadd.s32 %s123, 1
    %p127 = scmp.eq.s32.totalorder %s26, 1
    %p128 = scmp.ne.s32.totalorder %s123, %s125
    %p129 = scmp.eq.s32.totalorder %s26, 0
    %p130 = por %p128, %p129
    %p131 = scmp.ne.s32.totalorder %s123, %s125
    %p132 = scmp.eq.s32.totalorder %s31, 1
    %p133 = por %p131, %p132
    %p134 = scmp.ne.s32.totalorder %s125, %s126
    %p135 = scmp.eq.s32.totalorder %s31, 0
    %p136 = por %p134, %p135
    %p137 = scmp.ne.s32.totalorder %s125, %s126
    %p138 = scmp.eq.s32.totalorder %s32, 1
    %p139 = por %p137, %p138
    %p141 = scmp.ne.s32.totalorder %s126, %s140
    %p142 = scmp.eq.s32.totalorder %s32, 0
    %p143 = por %p141, %p142
    %s145 = sadd.s32 %s144, 1
    %p148 = scmp.eq.s32.totalorder %s26, 1
    %p149 = scmp.ne.s32.totalorder %s144, %s146
    %p150 = scmp.eq.s32.totalorder %s26, 0
    %p151 = por %p149, %p150
    %p152 = scmp.ne.s32.totalorder %s144, %s146
    %p153 = scmp.eq.s32.totalorder %s31, 1
    %p154 = por %p152, %p153
    %p155 = scmp.ne.s32.totalorder %s146, %s147
    %p156 = scmp.eq.s32.totalorder %s31, 0
    %p157 = por %p155, %p156
    %p158 = scmp.ne.s32.totalorder %s146, %s147
    %p159 = scmp.eq.s32.totalorder %s32, 1
    %p160 = por %p158, %p159
    %p162 = scmp.ne.s32.totalorder %s147, %s161
    %p163 = scmp.eq.s32.totalorder %s32, 0
    %p164 = por %p162, %p163
    %s166 = sadd.s32 %s165, 1
    %p169 = scmp.eq.s32.totalorder %s26, 1
    %p170 = scmp.ne.s32.totalorder %s165, %s167
    %p171 = scmp.eq.s32.totalorder %s26, 0
    %p172 = por %p170, %p171
    %p173 = scmp.ne.s32.totalorder %s165, %s167
    %p174 = scmp.eq.s32.totalorder %s31, 1
    %p175 = por %p173, %p174
    %p176 = scmp.ne.s32.totalorder %s167, %s168
    %p177 = scmp.eq.s32.totalorder %s31, 0
    %p178 = por %p176, %p177
    %p179 = scmp.ne.s32.totalorder %s167, %s168
    %p180 = scmp.eq.s32.totalorder %s32, 1
    %p181 = por %p179, %p180
    %p183 = scmp.ne.s32.totalorder %s168, %s182
    %p184 = scmp.eq.s32.totalorder %s32, 0
    %p185 = por %p183, %p184
    %s187 = sadd.s32 %s186, 1
    %p190 = scmp.eq.s32.totalorder %s26, 1
    %p191 = scmp.ne.s32.totalorder %s186, %s188
    %p192 = scmp.eq.s32.totalorder %s26, 0
    %p193 = por %p191, %p192
    %p194 = scmp.ne.s32.totalorder %s186, %s188
    %p195 = scmp.eq.s32.totalorder %s31, 1
    %p196 = por %p194, %p195
    %p197 = scmp.ne.s32.totalorder %s188, %s189
    %p198 = scmp.eq.s32.totalorder %s31, 0
    %p199 = por %p197, %p198
    %p200 = scmp.ne.s32.totalorder %s188, %s189
    %p201 = scmp.eq.s32.totalorder %s32, 1
    %p202 = por %p200, %p201
    %p204 = scmp.ne.s32.totalorder %s189, %s203
    %p205 = scmp.eq.s32.totalorder %s32, 0
    %p206 = por %p204, %p205
    %s208 = sadd.s32 %s207, 1
    %p211 = scmp.eq.s32.totalorder %s26, 1
    %p212 = scmp.ne.s32.totalorder %s207, %s209
    %p213 = scmp.eq.s32.totalorder %s26, 0
    %p214 = por %p212, %p213
    %p215 = scmp.ne.s32.totalorder %s207, %s209
    %p216 = scmp.eq.s32.totalorder %s31, 1
    %p217 = por %p215, %p216
    %p218 = scmp.ne.s32.totalorder %s209, %s210
    %p219 = scmp.eq.s32.totalorder %s31, 0
    %p220 = por %p218, %p219
    %p221 = scmp.ne.s32.totalorder %s209, %s210
    %p222 = scmp.eq.s32.totalorder %s32, 1
    %p223 = por %p221, %p222
    %p225 = scmp.ne.s32.totalorder %s210, %s224
    %p226 = scmp.eq.s32.totalorder %s32, 0
    %p227 = por %p225, %p226
    %s229 = sadd.s32 %s228, 1
    %p232 = scmp.eq.s32.totalorder %s26, 1
    %p233 = scmp.ne.s32.totalorder %s228, %s230
    %p234 = scmp.eq.s32.totalorder %s26, 0
    %p235 = por %p233, %p234
    %p236 = scmp.ne.s32.totalorder %s228, %s230
    %p237 = scmp.eq.s32.totalorder %s31, 1
    %p238 = por %p236, %p237
    %p239 = scmp.ne.s32.totalorder %s230, %s231
    %p240 = scmp.eq.s32.totalorder %s31, 0
    %p241 = por %p239, %p240
    %p242 = scmp.ne.s32.totalorder %s230, %s231
    %p243 = scmp.eq.s32.totalorder %s32, 1
    %p244 = por %p242, %p243
    %p246 = scmp.ne.s32.totalorder %s231, %s245
    %p247 = scmp.eq.s32.totalorder %s32, 0
    %p248 = por %p246, %p247
    %s250 = sadd.s32 %s249, 1
    %p253 = scmp.eq.s32.totalorder %s26, 1
    %p254 = scmp.ne.s32.totalorder %s249, %s251
    %p255 = scmp.eq.s32.totalorder %s26, 0
    %p256 = por %p254, %p255
    %p257 = scmp.ne.s32.totalorder %s249, %s251
    %p258 = scmp.eq.s32.totalorder %s31, 1
    %p259 = por %p257, %p258
    %p260 = scmp.ne.s32.totalorder %s251, %s252
    %p261 = scmp.eq.s32.totalorder %s31, 0
    %p262 = por %p260, %p261
    %p263 = scmp.ne.s32.totalorder %s251, %s252
    %p264 = scmp.eq.s32.totalorder %s32, 1
    %p265 = por %p263, %p264
    %p267 = scmp.ne.s32.totalorder %s252, %s266
    %p268 = scmp.eq.s32.totalorder %s32, 0
    %p269 = por %p267, %p268
    %s271 = sadd.s32 %s270, 1
    %p274 = scmp.eq.s32.totalorder %s26, 1
    %p275 = scmp.ne.s32.totalorder %s270, %s272
    %p276 = scmp.eq.s32.totalorder %s26, 0
    %p277 = por %p275, %p276
    %p278 = scmp.ne.s32.totalorder %s270, %s272
    %p279 = scmp.eq.s32.totalorder %s31, 1
    %p280 = por %p278, %p279
    %p281 = scmp.ne.s32.totalorder %s272, %s273
    %p282 = scmp.eq.s32.totalorder %s31, 0
    %p283 = por %p281, %p282
    %p284 = scmp.ne.s32.totalorder %s272, %s273
    %p285 = scmp.eq.s32.totalorder %s32, 1
    %p286 = por %p284, %p285
    %p288 = scmp.ne.s32.totalorder %s273, %s287
    %p289 = scmp.eq.s32.totalorder %s32, 0
    %p290 = por %p288, %p289
    %s292 = sadd.s32 %s291, 1
    %p295 = scmp.eq.s32.totalorder %s26, 1
    %p296 = scmp.ne.s32.totalorder %s291, %s293
    %p297 = scmp.eq.s32.totalorder %s26, 0
    %p298 = por %p296, %p297
    %p299 = scmp.ne.s32.totalorder %s291, %s293
    %p300 = scmp.eq.s32.totalorder %s31, 1
    %p301 = por %p299, %p300
    %p302 = scmp.ne.s32.totalorder %s293, %s294
    %p303 = scmp.eq.s32.totalorder %s31, 0
    %p304 = por %p302, %p303
    %p305 = scmp.ne.s32.totalorder %s293, %s294
    %p306 = scmp.eq.s32.totalorder %s32, 1
    %p307 = por %p305, %p306
    %p309 = scmp.ne.s32.totalorder %s294, %s308
    %p310 = scmp.eq.s32.totalorder %s32, 0
    %p311 = por %p309, %p310
    %s312 = ssub.s32 %s26, %s33
    %p313 = scmp.eq.s32.totalorder %s312, 0
    %s315 = sadd.s32 %s314, 1
    %s316 = scalar_select %p313, %s314, %s315
    %p319 = pneg %p313
    %p320 = scmp.eq.s32.totalorder %s26, 1
    %p321 = por %p319, %p320
    %p322 = scmp.ne.s32.totalorder %s314, %s317
    %p323 = scmp.eq.s32.totalorder %s26, 0
    %p324 = por %p322, %p323
    %p325 = scmp.ne.s32.totalorder %s314, %s317
    %p326 = scmp.eq.s32.totalorder %s31, 1
    %p327 = por %p325, %p326
    %p328 = scmp.ne.s32.totalorder %s317, %s318
    %p329 = scmp.eq.s32.totalorder %s31, 0
    %p330 = por %p328, %p329
    %p331 = scmp.ne.s32.totalorder %s317, %s318
    %p332 = scmp.eq.s32.totalorder %s32, 1
    %p333 = por %p331, %p332
    %p335 = scmp.ne.s32.totalorder %s318, %s334
    %p336 = scmp.eq.s32.totalorder %s32, 0
    %p337 = por %p335, %p336
    %p338 = scmp.le.s32.totalorder 1, %s26
    %p339 = scmp.lt.s32.totalorder %s26, 3
    %p340 = pnand %p338, %p339
    %p341 = pneg %p340
    // Predicated region
    $region9: #{fastspeech2_forward.7} parent=5 // pred_check
      _
    $region10: #{fastspeech2_forward.7} parent=5 // pred_check_branch
      %343 = sbr.rel (%p340) target = $region12
    $region11: #{fastspeech2_forward.7} parent=5 // pred_region
      %s344 = ssub.s32 %s26, 1
      // Predicated region
      $region13: #{fastspeech2_forward.7} parent=11 // pred_check
        %p345 = pneg %p73
      $region14: #{fastspeech2_forward.7} parent=11 // pred_check_branch
        %347 = sbr.rel (%p345) target = $region16
      $region15: #{fastspeech2_forward.7} parent=11 // pred_region
        _
      $region16: #{fastspeech2_forward.7} parent=11 // pred_fallthru
        _
      // Predicated region
      $region17: #{fastspeech2_forward.7} parent=11 // pred_check
        %p348 = pneg %p94
      $region18: #{fastspeech2_forward.7} parent=11 // pred_check_branch
        %350 = sbr.rel (%p348) target = $region20
      $region19: #{fastspeech2_forward.7} parent=11 // pred_region
        _
      $region20: #{fastspeech2_forward.7} parent=11 // pred_fallthru
        _
      // Predicated region
      $region21: #{fastspeech2_forward.7} parent=11 // pred_check
        %p351 = pneg %p115
      $region22: #{fastspeech2_forward.7} parent=11 // pred_check_branch
        %353 = sbr.rel (%p351) target = $region24
      $region23: #{fastspeech2_forward.7} parent=11 // pred_region
        _
      $region24: #{fastspeech2_forward.7} parent=11 // pred_fallthru
        _
      // Predicated region
      $region25: #{fastspeech2_forward.7} parent=11 // pred_check
        %p354 = pneg %p136
      $region26: #{fastspeech2_forward.7} parent=11 // pred_check_branch
        %356 = sbr.rel (%p354) target = $region28
      $region27: #{fastspeech2_forward.7} parent=11 // pred_region
        _
      $region28: #{fastspeech2_forward.7} parent=11 // pred_fallthru
        _
      // Predicated region
      $region29: #{fastspeech2_forward.7} parent=11 // pred_check
        %p357 = pneg %p157
      $region30: #{fastspeech2_forward.7} parent=11 // pred_check_branch
        %359 = sbr.rel (%p357) target = $region32
      $region31: #{fastspeech2_forward.7} parent=11 // pred_region
        _
      $region32: #{fastspeech2_forward.7} parent=11 // pred_fallthru
        _
      // Predicated region
      $region33: #{fastspeech2_forward.7} parent=11 // pred_check
        %p360 = pneg %p178
      $region34: #{fastspeech2_forward.7} parent=11 // pred_check_branch
        %362 = sbr.rel (%p360) target = $region36
      $region35: #{fastspeech2_forward.7} parent=11 // pred_region
        _
      $region36: #{fastspeech2_forward.7} parent=11 // pred_fallthru
        _
      // Predicated region
      $region37: #{fastspeech2_forward.7} parent=11 // pred_check
        %p363 = pneg %p199
      $region38: #{fastspeech2_forward.7} parent=11 // pred_check_branch
        %365 = sbr.rel (%p363) target = $region40
      $region39: #{fastspeech2_forward.7} parent=11 // pred_region
        _
      $region40: #{fastspeech2_forward.7} parent=11 // pred_fallthru
        _
      // Predicated region
      $region41: #{fastspeech2_forward.7} parent=11 // pred_check
        %p366 = pneg %p220
      $region42: #{fastspeech2_forward.7} parent=11 // pred_check_branch
        %368 = sbr.rel (%p366) target = $region44
      $region43: #{fastspeech2_forward.7} parent=11 // pred_region
        _
      $region44: #{fastspeech2_forward.7} parent=11 // pred_fallthru
        _
      // Predicated region
      $region45: #{fastspeech2_forward.7} parent=11 // pred_check
        %p369 = pneg %p241
      $region46: #{fastspeech2_forward.7} parent=11 // pred_check_branch
        %371 = sbr.rel (%p369) target = $region48
      $region47: #{fastspeech2_forward.7} parent=11 // pred_region
        _
      $region48: #{fastspeech2_forward.7} parent=11 // pred_fallthru
        _
      // Predicated region
      $region49: #{fastspeech2_forward.7} parent=11 // pred_check
        %p372 = pneg %p262
      $region50: #{fastspeech2_forward.7} parent=11 // pred_check_branch
        %374 = sbr.rel (%p372) target = $region52
      $region51: #{fastspeech2_forward.7} parent=11 // pred_region
        _
      $region52: #{fastspeech2_forward.7} parent=11 // pred_fallthru
        _
      // Predicated region
      $region53: #{fastspeech2_forward.7} parent=11 // pred_check
        %p375 = pneg %p283
      $region54: #{fastspeech2_forward.7} parent=11 // pred_check_branch
        %377 = sbr.rel (%p375) target = $region56
      $region55: #{fastspeech2_forward.7} parent=11 // pred_region
        _
      $region56: #{fastspeech2_forward.7} parent=11 // pred_fallthru
        _
      // Predicated region
      $region57: #{fastspeech2_forward.7} parent=11 // pred_check
        %p378 = pneg %p304
      $region58: #{fastspeech2_forward.7} parent=11 // pred_check_branch
        %380 = sbr.rel (%p378) target = $region60
      $region59: #{fastspeech2_forward.7} parent=11 // pred_region
        _
      $region60: #{fastspeech2_forward.7} parent=11 // pred_fallthru
        _
    $region12: #{fastspeech2_forward.7} parent=5 // pred_fallthru
      _
    %p381 = scmp.lt.s32.totalorder %s26, 2
    // Predicated region
    $region61: #{fastspeech2_forward.7} parent=5 // pred_check
      %p382 = pneg %p381
    $region62: #{fastspeech2_forward.7} parent=5 // pred_check_branch
      %384 = sbr.rel (%p382) target = $region64
    $region63: #{fastspeech2_forward.7} parent=5 // pred_region
      // Predicated region
      $region65: #{fastspeech2_forward.7} parent=63 // pred_check
        %p385 = pneg %p46
      $region66: #{fastspeech2_forward.7} parent=63 // pred_check_branch
        %387 = sbr.rel (%p385) target = $region68
      $region67: #{fastspeech2_forward.7} parent=63 // pred_region
        %p388 = scmp.lt.s32.totalorder %s26, 1
        %s389 = scalar_select %p388, %s26, 1
        %s390 = smul.addr %s389, 2
        %s391 = smul.addr %s390, 8
        %s392 = scalar_lea.vmem %s1, %s391
      $region68: #{fastspeech2_forward.7} parent=63 // pred_fallthru
        _
    $region64: #{fastspeech2_forward.7} parent=5 // pred_fallthru
      _
    %p393 = scmp.le.s32.totalorder 1, %s26
    %p394 = scmp.lt.s32.totalorder %s26, 3
    %p395 = pnand %p393, %p394
    %p396 = pneg %p395
    // Predicated region
    $region69: #{fastspeech2_forward.7} parent=5 // pred_check
      _
    $region70: #{fastspeech2_forward.7} parent=5 // pred_check_branch
      %398 = sbr.rel (%p395) target = $region72
    $region71: #{fastspeech2_forward.7} parent=5 // pred_region
      %s399 = ssub.s32 %s26, 1
      %p400 = scmp.lt.s32.totalorder %s31, 1
      %s401 = scalar_select %p400, %s31, 1
      %s402 = smul.addr %s401, 2
      %s403 = smul.addr %s402, 8
      %s404 = scalar_lea.vmem %s1, %s403
      %p405 = pneg %p52
      %p406 = pneg %p49
      %p407 = pneg %p73
      %p408 = pneg %p70
      %p409 = pneg %p94
      %p410 = pneg %p91
      %p411 = pneg %p115
      %p412 = pneg %p112
      %p413 = pneg %p136
      %p414 = pneg %p133
      %p415 = pneg %p157
      %p416 = pneg %p154
      %p417 = pneg %p178
      %p418 = pneg %p175
      %p419 = pneg %p199
      %p420 = pneg %p196
      %p421 = pneg %p220
      %p422 = pneg %p217
      %p423 = pneg %p241
      %p424 = pneg %p238
      %p425 = pneg %p262
      %p426 = pneg %p259
      %p427 = pneg %p283
      %p428 = pneg %p280
      %p429 = pneg %p304
      %p430 = pneg %p301
      %p431 = pneg %p330
      %p432 = pneg %p327
      %p433 = scmp.lt.s32.totalorder %s31, 1
      %s434 = scalar_select %p433, %s31, 1
      %s435 = smul.addr %s434, 2
      %s436 = smul.addr %s435, 8
      %s437 = scalar_lea.vmem %s14, %s436
      %p438 = scmp.lt.s32.totalorder %s31, 1
      %s439 = scalar_select %p438, %s31, 1
      %s440 = smul.addr %s439, 2
      %s441 = smul.addr %s440, 8
      %s442 = scalar_lea.vmem %s1, %s441
      %p443 = scmp.lt.s32.totalorder %s31, 1
      %s444 = scalar_select %p443, %s31, 1
      %s445 = smul.addr %s444, 2
      %s446 = smul.addr %s445, 8
      %s447 = scalar_lea.vmem %s14, %s446
      %s449 = sld [smem:[#allocation3 + %s31]]
      %v450 = vld [vmem:[%s442] sm:$0xff]
      %v451 = vld [vmem:[%s442 + $0x8] sm:$0xff]
      %v452 = vlaneseq
      %v453 = vshrl.u32 %v452, 7
      %v454 = vadd.s32 %v453, 8
      %v455 = vstv %s449
      %vm456 = vcmp.ge.s32.totalorder %v453, %v455
      %vm457 = vcmp.ge.s32.totalorder %v454, %v455
      %v458 = vpack.c.bf16 %v451, %v450
      %v459 = vld [vmem:[%s2] sm:$0xf]
      %v460 = vld [vmem:[%s2 + $0x4] sm:$0xf]
      %v461 = vld [vmem:[%s2 + $0x8] sm:$0xf]
      %v462 = vld [vmem:[%s2 + $0xc] sm:$0xf]
      %v463 = vld [vmem:[%s3] sm:$0x1]
      %v465 = vlaneseq
      %v466 = vshrl.u32 %v465, 7
      %v467 = vsub.s32 0, %v466
      %v468 = vrot.slane %v463, %v467
      %v474 = vunpack.c.l.b16 %v459
      %v475 = vunpack.c.l.b16 %v460
      %v476 = vunpack.c.l.b16 %v461
      %v477 = vunpack.c.l.b16 %v462
      %v478 = vpack.c.b16 %v475, %v474
      %v479 = vpack.c.b16 %v477, %v476
      %vm482 = vcmask 261120
      %v484 = vsel %vm482, %v458, 0
      %486 = vmatprep.subr.bf16.mxu0 0
      %487 = vmatpush1.bf16.msra.mxu0 %v478
      %488 = vmatprep.subr.bf16.mxu0 0
      %489 = vmatpush1.bf16.msra.mxu0 %v479
      %490 = vmatprep.subr.bf16.mxu0 0
      %491 = vmatpush1.bf16.msra.mxu0 0
      %492 = vmatprep.subr.bf16.mxu0 0
      %493 = vmatpush1.bf16.msra.mxu0 0
      %494 = vmatprep.subr.bf16.mxu0 0
      %495 = vmatpush1.bf16.msra.mxu0 0
      %496 = vmatprep.subr.bf16.mxu0 0
      %497 = vmatpush1.bf16.msra.mxu0 0
      %498 = vmatprep.subr.bf16.mxu0 0
      %499 = vmatpush1.bf16.msra.mxu0 0
      %500 = vmatprep.subr.bf16.mxu0 0
      %501 = vmatpush1.bf16.msra.mxu0 0
      %502 = vmatprep.subr.bf16.mxu0 0
      %503 = vmatpush1.bf16.msra.mxu0 0
      %504 = vmatprep.subr.bf16.mxu0 0
      %505 = vmatpush1.bf16.msra.mxu0 0
      %506 = vmatprep.subr.bf16.mxu0 0
      %507 = vmatpush1.bf16.msra.mxu0 0
      %508 = vmatprep.subr.bf16.mxu0 0
      %509 = vmatpush1.bf16.msra.mxu0 0
      %510 = vmatprep.subr.bf16.mxu0 0
      %511 = vmatpush1.bf16.msra.mxu0 0
      %512 = vmatprep.subr.bf16.mxu0 0
      %513 = vmatpush1.bf16.msra.mxu0 0
      %514 = vmatprep.subr.bf16.mxu0 0
      %515 = vmatpush1.bf16.msra.mxu0 0
      %516 = vmatprep.subr.bf16.mxu0 0
      %517 = vmatpush1.bf16.msra.mxu0 0
      %518 = vmatprep.mubr.bf16.mxu0 0
      %519 = vmatmul.mubr.bf16.gmra.mrb[0].mxu0 %v484
      %v520 = vpop.f32.mrb[0].mxu0
      %v521 = vadd.f32 %v468, %v520
      %v522 = vpop.f32.mrb[0].mxu0
      %v523 = vpop.f32.mrb[0].mxu0
      %v524 = vadd.f32 %v468, %v523
      %v525 = vpop.f32.mrb[0].mxu0
      %526 = vdwg.mxu0
      %v527 = vlaneseq
      %v528 = vand.u32 %v527, 127
      %vm529 = vcmp.ge.s32.totalorder %v528, %v455
      %v530 = vsel %vm529, 1, 0
      %v531 = vcvt.s32.f32 %v530
      %v532 = vpack.c.bf16 %v524, %v521
      %534 = vrot.lane.b32.xlu0 %v532, 96
      %v535 = vpop.permute.xlu0 %534
      %vm536 = vcmask 130048
      %v538 = vsel %vm536, %v532, 0
      %v541 = vsel %vm536, %v535, 0
      %543 = vmatprep.subr.bf16.mxu0 0
      %544 = vmatpush1.bf16.xpose.msra.mxu0 %v541
      %545 = vmatprep.subr.bf16.mxu0 0
      %546 = vmatpush1.bf16.xpose.msra.mxu0 0
      %547 = vmatprep.subr.bf16.mxu0 0
      %548 = vmatpush1.bf16.xpose.msra.mxu0 0
      %549 = vmatprep.subr.bf16.mxu0 0
      %550 = vmatpush1.bf16.xpose.msra.mxu0 0
      %551 = vmatprep.subr.bf16.mxu0 0
      %552 = vmatpush1.bf16.xpose.msra.mxu0 0
      %553 = vmatprep.subr.bf16.mxu0 0
      %554 = vmatpush1.bf16.xpose.msra.mxu0 0
      %555 = vmatprep.subr.bf16.mxu0 0
      %556 = vmatpush1.bf16.xpose.msra.mxu0 0
      %557 = vmatprep.subr.bf16.mxu0 0
      %558 = vmatpush1.bf16.xpose.msra.mxu0 0
      %559 = vmatprep.subr.bf16.mxu0 0
      %560 = vmatpush1.bf16.xpose.msra.mxu0 0
      %561 = vmatprep.subr.bf16.mxu0 0
      %562 = vmatpush1.bf16.xpose.msra.mxu0 0
      %563 = vmatprep.subr.bf16.mxu0 0
      %564 = vmatpush1.bf16.xpose.msra.mxu0 0
      %565 = vmatprep.subr.bf16.mxu0 0
      %566 = vmatpush1.bf16.xpose.msra.mxu0 0
      %567 = vmatprep.subr.bf16.mxu0 0
      %568 = vmatpush1.bf16.xpose.msra.mxu0 0
      %569 = vmatprep.subr.bf16.mxu0 0
      %570 = vmatpush1.bf16.xpose.msra.mxu0 0
      %571 = vmatprep.subr.bf16.mxu0 0
      %572 = vmatpush1.bf16.xpose.msra.mxu0 0
      %573 = vmatprep.subr.bf16.mxu0 0
      %574 = vmatpush1.bf16.xpose.msra.mxu0 0
      %575 = vmatprep.mubr.bf16.mxu0 0
      %576 = vmatmul.mubr.bf16.gmra.mrb[0].mxu0 %v538
      %v577 = vpop.f32.mrb[0].mxu0
      %v578 = vadd.f32 0.0, %v577
      %v579 = vpop.f32.mrb[0].mxu0
      %v580 = vpop.f32.mrb[0].mxu0
      %v581 = vadd.f32 0.0, %v580
      %v582 = vpop.f32.mrb[0].mxu0
      %583 = vdwg.mxu0
      %v584 = vmul.f32 %v578, 0.25
      %v585 = vmul.f32 %v581, 0.25
      %v586 = vmul.f32 %v531, 1e+09
      %v587 = vsub.f32 %v584, %v586
      %v588 = vsub.f32 %v585, %v586
      %v589 = vsel %vm536, %v587, -inf
      %590 = vmax.xlane.f32.xlu0 %v589
      %v591 = vpop.xlane.xlu0 %590
      %v592 = vsel %vm536, %v588, -inf
      %593 = vmax.xlane.f32.xlu0 %v592
      %v594 = vpop.xlane.xlu0 %593
      %v595 = vsub.f32 %v587, %v591
      %v596 = vsub.f32 %v588, %v594
      %v597 = vmul.f32 %v595, 1.442695
      %v598 = vpow.pop %v597
      %v599 = vmul.f32 %v596, 1.442695
      %v600 = vpow.pop %v599
      %v601 = vsel %vm536, %v598, 0.0
      %602 = vadd.xlane.f32.xlu0 %v601
      %v603 = vpop.xlane.xlu0 %602
      %v604 = vsel %vm536, %v600, 0.0
      %605 = vadd.xlane.f32.xlu0 %v604
      %v606 = vpop.xlane.xlu0 %605
      %v607 = vrcp.pop %v603
      %v608 = vrcp.pop %v606
      %v609 = vmul.f32 %v598, %v607
      %v610 = vmul.f32 %v600, %v608
      %v611 = vpack.c.bf16 %v610, %v609
      %612 = vrot.lane.b32.xlu0 %v532, 64
      %v613 = vpop.permute.xlu0 %612
      %v616 = vsel %vm536, %v611, 0
      %618 = vmatprep.subr.bf16.mxu0 0
      %619 = vmatpush1.bf16.msra.mxu0 %v613
      %620 = vmatprep.subr.bf16.mxu0 0
      %621 = vmatpush1.bf16.msra.mxu0 0
      %622 = vmatprep.subr.bf16.mxu0 0
      %623 = vmatpush1.bf16.msra.mxu0 0
      %624 = vmatprep.subr.bf16.mxu0 0
      %625 = vmatpush1.bf16.msra.mxu0 0
      %626 = vmatprep.subr.bf16.mxu0 0
      %627 = vmatpush1.bf16.msra.mxu0 0
      %628 = vmatprep.subr.bf16.mxu0 0
      %629 = vmatpush1.bf16.msra.mxu0 0
      %630 = vmatprep.subr.bf16.mxu0 0
      %631 = vmatpush1.bf16.msra.mxu0 0
      %632 = vmatprep.subr.bf16.mxu0 0
      %633 = vmatpush1.bf16.msra.mxu0 0
      %634 = vmatprep.subr.bf16.mxu0 0
      %635 = vmatpush1.bf16.msra.mxu0 0
      %636 = vmatprep.subr.bf16.mxu0 0
      %637 = vmatpush1.bf16.msra.mxu0 0
      %638 = vmatprep.subr.bf16.mxu0 0
      %639 = vmatpush1.bf16.msra.mxu0 0
      %640 = vmatprep.subr.bf16.mxu0 0
      %641 = vmatpush1.bf16.msra.mxu0 0
      %642 = vmatprep.subr.bf16.mxu0 0
      %643 = vmatpush1.bf16.msra.mxu0 0
      %644 = vmatprep.subr.bf16.mxu0 0
      %645 = vmatpush1.bf16.msra.mxu0 0
      %646 = vmatprep.subr.bf16.mxu0 0
      %647 = vmatpush1.bf16.msra.mxu0 0
      %648 = vmatprep.subr.bf16.mxu0 0
      %649 = vmatpush1.bf16.msra.mxu0 0
      %650 = vmatprep.mubr.bf16.mxu0 0
      %651 = vmatmul.mubr.bf16.gmra.mrb[0].mxu0 %v616
      %v652 = vpop.f32.mrb[0].mxu0
      %v653 = vadd.f32 0.0, %v652
      %v654 = vpop.f32.mrb[0].mxu0
      %v655 = vpop.f32.mrb[0].mxu0
      %v656 = vadd.f32 0.0, %v655
      %v657 = vpop.f32.mrb[0].mxu0
      %658 = vdwg.mxu0
      %659 = vrot.lane.b32.xlu0 %v532, 112
      %v660 = vpop.permute.xlu0 %659
      %661 = vrot.lane.b32.xlu0 %v532, 80
      %v662 = vpop.permute.xlu0 %661
      %v664 = vsel %vm536, %v660, 0
      %v667 = vsel %vm536, %v662, 0
      %669 = vmatprep.subr.bf16.mxu0 0
      %670 = vmatpush1.bf16.xpose.msra.mxu0 %v667
      %671 = vmatprep.subr.bf16.mxu0 0
      %672 = vmatpush1.bf16.xpose.msra.mxu0 0
      %673 = vmatprep.subr.bf16.mxu0 0
      %674 = vmatpush1.bf16.xpose.msra.mxu0 0
      %675 = vmatprep.subr.bf16.mxu0 0
      %676 = vmatpush1.bf16.xpose.msra.mxu0 0
      %677 = vmatprep.subr.bf16.mxu0 0
      %678 = vmatpush1.bf16.xpose.msra.mxu0 0
      %679 = vmatprep.subr.bf16.mxu0 0
      %680 = vmatpush1.bf16.xpose.msra.mxu0 0
      %681 = vmatprep.subr.bf16.mxu0 0
      %682 = vmatpush1.bf16.xpose.msra.mxu0 0
      %683 = vmatprep.subr.bf16.mxu0 0
      %684 = vmatpush1.bf16.xpose.msra.mxu0 0
      %685 = vmatprep.subr.bf16.mxu0 0
      %686 = vmatpush1.bf16.xpose.msra.mxu0 0
      %687 = vmatprep.subr.bf16.mxu0 0
      %688 = vmatpush1.bf16.xpose.msra.mxu0 0
      %689 = vmatprep.subr.bf16.mxu0 0
      %690 = vmatpush1.bf16.xpose.msra.mxu0 0
      %691 = vmatprep.subr.bf16.mxu0 0
      %692 = vmatpush1.bf16.xpose.msra.mxu0 0
      %693 = vmatprep.subr.bf16.mxu0 0
      %694 = vmatpush1.bf16.xpose.msra.mxu0 0
      %695 = vmatprep.subr.bf16.mxu0 0
      %696 = vmatpush1.bf16.xpose.msra.mxu0 0
      %697 = vmatprep.subr.bf16.mxu0 0
      %698 = vmatpush1.bf16.xpose.msra.mxu0 0
      %699 = vmatprep.subr.bf16.mxu0 0
      %700 = vmatpush1.bf16.xpose.msra.mxu0 0
      %701 = vmatprep.mubr.bf16.mxu0 0
      %702 = vmatmul.mubr.bf16.gmra.mrb[0].mxu0 %v664
      %v703 = vpop.f32.mrb[0].mxu0
      %v704 = vadd.f32 0.0, %v703
      %v705 = vpop.f32.mrb[0].mxu0
      %v706 = vpop.f32.mrb[0].mxu0
      %v707 = vadd.f32 0.0, %v706
      %v708 = vpop.f32.mrb[0].mxu0
      %709 = vdwg.mxu0
      %v710 = vmul.f32 %v704, 0.25
      %v711 = vmul.f32 %v707, 0.25
      %v712 = vsub.f32 %v710, %v586
      %v713 = vsub.f32 %v711, %v586
      %v714 = vsel %vm536, %v712, -inf
      %715 = vmax.xlane.f32.xlu0 %v714
      %v716 = vpop.xlane.xlu0 %715
      %v717 = vsel %vm536, %v713, -inf
      %718 = vmax.xlane.f32.xlu0 %v717
      %v719 = vpop.xlane.xlu0 %718
      %v720 = vsub.f32 %v712, %v716
      %v721 = vsub.f32 %v713, %v719
      %v722 = vmul.f32 %v720, 1.442695
      %v723 = vpow.pop %v722
      %v724 = vmul.f32 %v721, 1.442695
      %v725 = vpow.pop %v724
      %v726 = vsel %vm536, %v723, 0.0
      %727 = vadd.xlane.f32.xlu0 %v726
      %v728 = vpop.xlane.xlu0 %727
      %v729 = vsel %vm536, %v725, 0.0
      %730 = vadd.xlane.f32.xlu0 %v729
      %v731 = vpop.xlane.xlu0 %730
      %v732 = vrcp.pop %v728
      %v733 = vrcp.pop %v731
      %v734 = vmul.f32 %v723, %v732
      %v735 = vmul.f32 %v725, %v733
      %v736 = vpack.c.bf16 %v735, %v734
      %737 = vrot.lane.b32.xlu0 %v532, 48
      %v738 = vpop.permute.xlu0 %737
      %v741 = vsel %vm536, %v736, 0
      %743 = vmatprep.subr.bf16.mxu0 0
      %744 = vmatpush1.bf16.msra.mxu0 %v738
      %745 = vmatprep.subr.bf16.mxu0 0
      %746 = vmatpush1.bf16.msra.mxu0 0
      %747 = vmatprep.subr.bf16.mxu0 0
      %748 = vmatpush1.bf16.msra.mxu0 0
      %749 = vmatprep.subr.bf16.mxu0 0
      %750 = vmatpush1.bf16.msra.mxu0 0
      %751 = vmatprep.subr.bf16.mxu0 0
      %752 = vmatpush1.bf16.msra.mxu0 0
      %753 = vmatprep.subr.bf16.mxu0 0
      %754 = vmatpush1.bf16.msra.mxu0 0
      %755 = vmatprep.subr.bf16.mxu0 0
      %756 = vmatpush1.bf16.msra.mxu0 0
      %757 = vmatprep.subr.bf16.mxu0 0
      %758 = vmatpush1.bf16.msra.mxu0 0
      %759 = vmatprep.subr.bf16.mxu0 0
      %760 = vmatpush1.bf16.msra.mxu0 0
      %761 = vmatprep.subr.bf16.mxu0 0
      %762 = vmatpush1.bf16.msra.mxu0 0
      %763 = vmatprep.subr.bf16.mxu0 0
      %764 = vmatpush1.bf16.msra.mxu0 0
      %765 = vmatprep.subr.bf16.mxu0 0
      %766 = vmatpush1.bf16.msra.mxu0 0
      %767 = vmatprep.subr.bf16.mxu0 0
      %768 = vmatpush1.bf16.msra.mxu0 0
      %769 = vmatprep.subr.bf16.mxu0 0
      %770 = vmatpush1.bf16.msra.mxu0 0
      %771 = vmatprep.subr.bf16.mxu0 0
      %772 = vmatpush1.bf16.msra.mxu0 0
      %773 = vmatprep.subr.bf16.mxu0 0
      %774 = vmatpush1.bf16.msra.mxu0 0
      %775 = vmatprep.mubr.bf16.mxu0 0
      %776 = vmatmul.mubr.bf16.gmra.mrb[0].mxu0 %v741
      %v777 = vpop.f32.mrb[0].mxu0
      %v778 = vadd.f32 0.0, %v777
      %v779 = vpop.f32.mrb[0].mxu0
      %v780 = vpop.f32.mrb[0].mxu0
      %v781 = vadd.f32 0.0, %v780
      %v782 = vpop.f32.mrb[0].mxu0
      %783 = vdwg.mxu0
      %786 = vrot.lane.b32.xlu0 %v778, 16
      %v787 = vpop.permute.xlu0 %786
      %788 = vrot.lane.b32.xlu0 %v781, 16
      %v789 = vpop.permute.xlu0 %788
      %v792 = vsel %vm536, %v653, %v787
      %v793 = vsel %vm536, %v656, %v789
      %v794 = vpack.c.bf16 %v793, %v792
      %v795 = vld [vmem:[%s4] sm:$0xf]
      %v796 = vld [vmem:[%s4 + $0x4] sm:$0xf]
      %v797 = vld [vmem:[%s4 + $0x8] sm:$0xf]
      %v798 = vld [vmem:[%s4 + $0xc] sm:$0xf]
      %v799 = vld [vmem:[%s5] sm:$0x1]
      %v801 = vlaneseq
      %v802 = vshrl.u32 %v801, 7
      %v803 = vsub.s32 0, %v802
      %v804 = vrot.slane %v799, %v803
      %v810 = vunpack.c.l.b16 %v795
      %v811 = vunpack.c.l.b16 %v796
      %v812 = vunpack.c.l.b16 %v797
      %v813 = vunpack.c.l.b16 %v798
      %v814 = vpack.c.b16 %v811, %v810
      %v815 = vpack.c.b16 %v813, %v812
      %v819 = vsel %vm482, %v794, 0
      %821 = vmatprep.subr.bf16.mxu0 0
      %822 = vmatpush1.bf16.msra.mxu0 %v814
      %823 = vmatprep.subr.bf16.mxu0 0
      %824 = vmatpush1.bf16.msra.mxu0 %v815
      %825 = vmatprep.subr.bf16.mxu0 0
      %826 = vmatpush1.bf16.msra.mxu0 0
      %827 = vmatprep.subr.bf16.mxu0 0
      %828 = vmatpush1.bf16.msra.mxu0 0
      %829 = vmatprep.subr.bf16.mxu0 0
      %830 = vmatpush1.bf16.msra.mxu0 0
      %831 = vmatprep.subr.bf16.mxu0 0
      %832 = vmatpush1.bf16.msra.mxu0 0
      %833 = vmatprep.subr.bf16.mxu0 0
      %834 = vmatpush1.bf16.msra.mxu0 0
      %835 = vmatprep.subr.bf16.mxu0 0
      %836 = vmatpush1.bf16.msra.mxu0 0
      %837 = vmatprep.subr.bf16.mxu0 0
      %838 = vmatpush1.bf16.msra.mxu0 0
      %839 = vmatprep.subr.bf16.mxu0 0
      %840 = vmatpush1.bf16.msra.mxu0 0
      %841 = vmatprep.subr.bf16.mxu0 0
      %842 = vmatpush1.bf16.msra.mxu0 0
      %843 = vmatprep.subr.bf16.mxu0 0
      %844 = vmatpush1.bf16.msra.mxu0 0
      %845 = vmatprep.subr.bf16.mxu0 0
      %846 = vmatpush1.bf16.msra.mxu0 0
      %847 = vmatprep.subr.bf16.mxu0 0
      %848 = vmatpush1.bf16.msra.mxu0 0
      %849 = vmatprep.subr.bf16.mxu0 0
      %850 = vmatpush1.bf16.msra.mxu0 0
      %851 = vmatprep.subr.bf16.mxu0 0
      %852 = vmatpush1.bf16.msra.mxu0 0
      %853 = vmatprep.mubr.bf16.mxu0 0
      %854 = vmatmul.mubr.bf16.gmra.mrb[0].mxu0 %v819
      %v855 = vpop.f32.mrb[0].mxu0
      %v856 = vadd.f32 %v804, %v855
      %v857 = vpop.f32.mrb[0].mxu0
      %v858 = vpop.f32.mrb[0].mxu0
      %v859 = vadd.f32 %v804, %v858
      %v860 = vpop.f32.mrb[0].mxu0
      %861 = vdwg.mxu0
      %v862 = vadd.f32 %v856, %v450
      %v863 = vadd.f32 %v859, %v451
      %v864 = vld [vmem:[%s6] sm:$0x1]
      %v865 = vld [vmem:[%s7] sm:$0x1]
      %v866 = vsel %vm482, %v862, 0.0
      %867 = vadd.xlane.f32.xlu0 %v866
      %v868 = vpop.xlane.xlu0 %867
      %v869 = vsel %vm482, %v863, 0.0
      %870 = vadd.xlane.f32.xlu0 %v869
      %v871 = vpop.xlane.xlu0 %870
      %v872 = vrcp.pop 32.0
      %v873 = vmul.f32 %v868, %v872
      %v874 = vmul.f32 %v871, %v872
      %v875 = vsub.f32 %v862, %v873
      %v876 = vsub.f32 %v863, %v874
      %v877 = vmul.f32 %v875, %v875
      %v878 = vmul.f32 %v876, %v876
      %v879 = vsel %vm482, %v877, 0.0
      %880 = vadd.xlane.f32.xlu0 %v879
      %v881 = vpop.xlane.xlu0 %880
      %v882 = vsel %vm482, %v878, 0.0
      %883 = vadd.xlane.f32.xlu0 %v882
      %v884 = vpop.xlane.xlu0 %883
      %v885 = vmul.f32 %v881, %v872
      %v886 = vmul.f32 %v884, %v872
      %v887 = vadd.f32 %v885, 1e-05
      %v888 = vadd.f32 %v886, 1e-05
      %v889 = vrsqrt.pop %v887
      %v890 = vrsqrt.pop %v888
      %v891 = vmul.f32 %v875, %v889
      %v892 = vmul.f32 %v876, %v890
      %v894 = vlaneseq
      %v895 = vshrl.u32 %v894, 7
      %v896 = vsub.s32 0, %v895
      %v897 = vrot.slane %v864, %v896
      %v899 = vmul.f32 %v891, %v897
      %v900 = vmul.f32 %v892, %v897
      %v902 = vlaneseq
      %v903 = vshrl.u32 %v902, 7
      %v904 = vsub.s32 0, %v903
      %v905 = vrot.slane %v865, %v904
      %v907 = vadd.f32 %v899, %v905
      %v908 = vadd.f32 %v900, %v905
      %v909 = vsel %vm456, 1, 0
      %v910 = vsel %vm457, 1, 0
      %vm911 = vcmp.eq.s32.totalorder %v909, 1
      %vm912 = vcmp.eq.s32.totalorder %v910, 1
      %v913 = vsel %vm911, 0.0, %v907
      %v914 = vsel %vm912, 0.0, %v908
      %vm917 = vcmask 1043456
      %v918 = vrot.slane %v913, 4
      %v919 = vrot.slane %v914, 4
      %v920 = vsel %vm917, %v918, %v919
      %v923 = vsel %vm917, 0.0, %v918
      %vm924 = vcmask 1042432
      %v925 = vrot.slane %v913, 5
      %v926 = vrot.slane %v914, 5
      %v927 = vsel %vm924, %v925, %v926
      %v929 = vsel %vm924, 0.0, %v925
      %vm930 = vcmask 1041408
      %v931 = vrot.slane %v913, 6
      %v932 = vrot.slane %v914, 6
      %v933 = vsel %vm930, %v931, %v932
      %v935 = vsel %vm930, 0.0, %v931
      %vm936 = vcmask 1040384
      %v937 = vrot.slane %v913, 7
      %v938 = vrot.slane %v914, 7
      %v939 = vsel %vm936, %v937, %v938
      %v941 = vsel %vm936, 0.0, %v937
      %vm942 = vcmask 1046528
      %v943 = vrot.slane %v913, 1
      %v944 = vrot.slane %v914, 1
      %v945 = vsel %vm942, %v943, %v944
      %v947 = vsel %vm942, %v944, 0.0
      %vm948 = vcmask 1045504
      %v949 = vrot.slane %v913, 2
      %v950 = vrot.slane %v914, 2
      %v951 = vsel %vm948, %v949, %v950
      %v953 = vsel %vm948, %v950, 0.0
      %vm954 = vcmask 1044480
      %v955 = vrot.slane %v913, 3
      %v956 = vrot.slane %v914, 3
      %v957 = vsel %vm954, %v955, %v956
      %v959 = vsel %vm954, %v956, 0.0
      %v961 = vsel %vm917, %v919, 0.0
      %963 = vrot.lane.b32.xlu0 %v929, 32
      %v964 = vpop.permute.xlu0 %963
      %965 = vrot.lane.b32.xlu0 %v927, 32
      %v966 = vpop.permute.xlu0 %965
      %970 = vrot.lane.b32.xlu0 %v935, 64
      %v971 = vpop.permute.xlu0 %970
      %972 = vrot.lane.b32.xlu0 %v933, 64
      %v973 = vpop.permute.xlu0 %972
      %977 = vrot.lane.b32.xlu0 %v941, 96
      %v978 = vpop.permute.xlu0 %977
      %979 = vrot.lane.b32.xlu0 %v939, 96
      %v980 = vpop.permute.xlu0 %979
      %984 = vrot.lane.b32.xlu0 %v945, 32
      %v985 = vpop.permute.xlu0 %984
      %986 = vrot.lane.b32.xlu0 %v947, 32
      %v987 = vpop.permute.xlu0 %986
      %991 = vrot.lane.b32.xlu0 %v951, 64
      %v992 = vpop.permute.xlu0 %991
      %993 = vrot.lane.b32.xlu0 %v953, 64
      %v994 = vpop.permute.xlu0 %993
      %998 = vrot.lane.b32.xlu0 %v957, 96
      %v999 = vpop.permute.xlu0 %998
      %1000 = vrot.lane.b32.xlu0 %v959, 96
      %v1001 = vpop.permute.xlu0 %1000
      %v1004 = vsel %vm482, %v923, %v964
      %v1005 = vsel %vm482, %v920, %v966
      %vm1006 = vcmask 523264
      %v1007 = vsel %vm1006, %v1004, %v971
      %v1008 = vsel %vm1006, %v1005, %v973
      %vm1009 = vcmask 785408
      %v1010 = vsel %vm1009, %v1007, %v978
      %v1011 = vsel %vm1009, %v1008, %v980
      %v1012 = vsel %vm482, %v913, %v985
      %v1013 = vsel %vm482, %v914, %v987
      %v1014 = vsel %vm1006, %v1012, %v992
      %v1015 = vsel %vm1006, %v1013, %v994
      %v1016 = vsel %vm1009, %v1014, %v999
      %v1017 = vsel %vm1009, %v1015, %v1001
      %v1018 = vpack.c.bf16 %v1011, %v1010
      %v1019 = vpack.c.bf16 %v1017, %v1016
      %v1020 = vpack.c.bf16 %v961, %v920
      %v1021 = vld [vmem:[%s8] sm:$0xf]
      %v1022 = vld [vmem:[%s8 + $0x4] sm:$0xf]
      %v1023 = vld [vmem:[%s8 + $0x8] sm:$0xf]
      %v1024 = vld [vmem:[%s8 + $0xc] sm:$0xf]
      %v1025 = vld [vmem:[%s8 + $0x10] sm:$0xf]
      %v1026 = vld [vmem:[%s8 + $0x14] sm:$0xf]
      %v1027 = vld [vmem:[%s8 + $0x18] sm:$0xf]
      %v1028 = vld [vmem:[%s8 + $0x1c] sm:$0xf]
      %v1029 = vld [vmem:[%s8 + $0x20] sm:$0xf]
      %v1030 = vld [vmem:[%s8 + $0x24] sm:$0xf]
      %v1031 = vld [vmem:[%s8 + $0x28] sm:$0xf]
      %v1032 = vld [vmem:[%s8 + $0x2c] sm:$0xf]
      %v1033 = vld [vmem:[%s8 + $0x30] sm:$0xf]
      %v1034 = vld [vmem:[%s8 + $0x34] sm:$0xf]
      %v1035 = vld [vmem:[%s8 + $0x38] sm:$0xf]
      %v1036 = vld [vmem:[%s8 + $0x3c] sm:$0xf]
      %v1037 = vld [vmem:[%s8 + $0x40] sm:$0xf]
      %v1038 = vld [vmem:[%s8 + $0x44] sm:$0xf]
      %v1039 = vld [vmem:[%s8 + $0x48] sm:$0xf]
      %v1040 = vld [vmem:[%s8 + $0x4c] sm:$0xf]
      %v1041 = vld [vmem:[%s8 + $0x50] sm:$0xf]
      %v1042 = vld [vmem:[%s8 + $0x54] sm:$0xf]
      %v1043 = vld [vmem:[%s8 + $0x58] sm:$0xf]
      %v1044 = vld [vmem:[%s8 + $0x5c] sm:$0xf]
      %v1045 = vld [vmem:[%s8 + $0x60] sm:$0xf]
      %v1046 = vld [vmem:[%s8 + $0x64] sm:$0xf]
      %v1047 = vld [vmem:[%s8 + $0x68] sm:$0xf]
      %v1048 = vld [vmem:[%s8 + $0x6c] sm:$0xf]
      %v1049 = vld [vmem:[%s8 + $0x70] sm:$0xf]
      %v1050 = vld [vmem:[%s8 + $0x74] sm:$0xf]
      %v1051 = vld [vmem:[%s8 + $0x78] sm:$0xf]
      %v1052 = vld [vmem:[%s8 + $0x7c] sm:$0xf]
      %v1053 = vld [vmem:[%s8 + $0x80] sm:$0xf]
      %v1054 = vld [vmem:[%s8 + $0x84] sm:$0xf]
      %v1055 = vld [vmem:[%s8 + $0x88] sm:$0xf]
      %v1056 = vld [vmem:[%s8 + $0x8c] sm:$0xf]
      %v1057 = vld [vmem:[%s9] sm:$0x1]
      %v1059 = vlaneseq
      %v1060 = vshrl.u32 %v1059, 7
      %v1061 = vsub.s32 0, %v1060
      %v1062 = vrot.slane %v1057, %v1061
      %v1100 = vunpack.c.l.b16 %v1021
      %v1101 = vunpack.c.l.b16 %v1022
      %v1102 = vunpack.c.l.b16 %v1023
      %v1103 = vunpack.c.l.b16 %v1024
      %v1104 = vunpack.c.l.b16 %v1025
      %v1105 = vunpack.c.l.b16 %v1026
      %v1106 = vunpack.c.l.b16 %v1027
      %v1107 = vunpack.c.l.b16 %v1028
      %v1108 = vunpack.c.l.b16 %v1029
      %v1109 = vunpack.c.l.b16 %v1030
      %v1110 = vunpack.c.l.b16 %v1031
      %v1111 = vunpack.c.l.b16 %v1032
      %v1112 = vunpack.c.l.b16 %v1033
      %v1113 = vunpack.c.l.b16 %v1034
      %v1114 = vunpack.c.l.b16 %v1035
      %v1115 = vunpack.c.l.b16 %v1036
      %v1116 = vunpack.c.l.b16 %v1037
      %v1117 = vunpack.c.l.b16 %v1038
      %v1118 = vunpack.c.l.b16 %v1039
      %v1119 = vunpack.c.l.b16 %v1040
      %v1120 = vunpack.c.l.b16 %v1041
      %v1121 = vunpack.c.l.b16 %v1042
      %v1122 = vunpack.c.l.b16 %v1043
      %v1123 = vunpack.c.l.b16 %v1044
      %v1124 = vunpack.c.l.b16 %v1045
      %v1125 = vunpack.c.l.b16 %v1046
      %v1126 = vunpack.c.l.b16 %v1047
      %v1127 = vunpack.c.l.b16 %v1048
      %v1128 = vunpack.c.l.b16 %v1049
      %v1129 = vunpack.c.l.b16 %v1050
      %v1130 = vunpack.c.l.b16 %v1051
      %v1131 = vunpack.c.l.b16 %v1052
      %v1132 = vunpack.c.l.b16 %v1053
      %v1133 = vunpack.c.l.b16 %v1054
      %v1134 = vunpack.c.l.b16 %v1055
      %v1135 = vunpack.c.l.b16 %v1056
      %v1136 = vpack.c.b16 %v1101, %v1100
      %v1137 = vpack.c.b16 %v1103, %v1102
      %v1138 = vpack.c.b16 %v1105, %v1104
      %v1139 = vpack.c.b16 %v1107, %v1106
      %v1140 = vpack.c.b16 %v1109, %v1108
      %v1141 = vpack.c.b16 %v1111, %v1110
      %v1142 = vpack.c.b16 %v1113, %v1112
      %v1143 = vpack.c.b16 %v1115, %v1114
      %v1144 = vpack.c.b16 %v1117, %v1116
      %v1145 = vpack.c.b16 %v1119, %v1118
      %v1146 = vpack.c.b16 %v1121, %v1120
      %v1147 = vpack.c.b16 %v1123, %v1122
      %v1148 = vpack.c.b16 %v1125, %v1124
      %v1149 = vpack.c.b16 %v1127, %v1126
      %v1150 = vpack.c.b16 %v1129, %v1128
      %v1151 = vpack.c.b16 %v1131, %v1130
      %v1152 = vpack.c.b16 %v1133, %v1132
      %v1153 = vpack.c.b16 %v1135, %v1134
      %v1173 = vsel %vm482, %v1020, 0
      %1175 = vmatprep.subr.bf16.mxu0 0
      %1176 = vmatpush1.bf16.msra.mxu0 %v1136
      %1177 = vmatprep.subr.bf16.mxu0 0
      %1178 = vmatpush1.bf16.msra.mxu0 %v1137
      %1179 = vmatprep.subr.bf16.mxu0 0
      %1180 = vmatpush1.bf16.msra.mxu0 %v1138
      %1181 = vmatprep.subr.bf16.mxu0 0
      %1182 = vmatpush1.bf16.msra.mxu0 %v1139
      %1183 = vmatprep.subr.bf16.mxu0 0
      %1184 = vmatpush1.bf16.msra.mxu0 %v1140
      %1185 = vmatprep.subr.bf16.mxu0 0
      %1186 = vmatpush1.bf16.msra.mxu0 %v1141
      %1187 = vmatprep.subr.bf16.mxu0 0
      %1188 = vmatpush1.bf16.msra.mxu0 %v1142
      %1189 = vmatprep.subr.bf16.mxu0 0
      %1190 = vmatpush1.bf16.msra.mxu0 %v1143
      %1191 = vmatprep.subr.bf16.mxu0 0
      %1192 = vmatpush1.bf16.msra.mxu0 %v1144
      %1193 = vmatprep.subr.bf16.mxu0 0
      %1194 = vmatpush1.bf16.msra.mxu0 %v1145
      %1195 = vmatprep.subr.bf16.mxu0 0
      %1196 = vmatpush1.bf16.msra.mxu0 %v1146
      %1197 = vmatprep.subr.bf16.mxu0 0
      %1198 = vmatpush1.bf16.msra.mxu0 %v1147
      %1199 = vmatprep.subr.bf16.mxu0 0
      %1200 = vmatpush1.bf16.msra.mxu0 %v1148
      %1201 = vmatprep.subr.bf16.mxu0 0
      %1202 = vmatpush1.bf16.msra.mxu0 %v1149
      %1203 = vmatprep.subr.bf16.mxu0 0
      %1204 = vmatpush1.bf16.msra.mxu0 %v1150
      %1205 = vmatprep.subr.bf16.mxu0 0
      %1206 = vmatpush1.bf16.msra.mxu0 %v1151
      %1207 = vmatprep.mubr.bf16.mxu0 %v1019
      %1208 = vmatmul.mubr.bf16.gmra.mrb[0].mxu0 %v1018
      %v1209 = vpop.f32.mrb[0].mxu0
      %v1210 = vadd.f32 %v1062, %v1209
      %v1211 = vpop.f32.mrb[0].mxu0
      %v1212 = vpop.f32.mrb[0].mxu0
      %v1213 = vadd.f32 %v1062, %v1212
      %v1214 = vpop.f32.mrb[0].mxu0
      %1215 = vdwg.mxu0
      %1216 = vmatprep.subr.bf16.mxu0 0
      %1217 = vmatpush1.bf16.msra.mxu0 %v1152
      %1218 = vmatprep.subr.bf16.mxu0 0
      %1219 = vmatpush1.bf16.msra.mxu0 %v1153
      %1220 = vmatprep.subr.bf16.mxu0 0
      %1221 = vmatpush1.bf16.msra.mxu0 0
      %1222 = vmatprep.subr.bf16.mxu0 0
      %1223 = vmatpush1.bf16.msra.mxu0 0
      %1224 = vmatprep.subr.bf16.mxu0 0
      %1225 = vmatpush1.bf16.msra.mxu0 0
      %1226 = vmatprep.subr.bf16.mxu0 0
      %1227 = vmatpush1.bf16.msra.mxu0 0
      %1228 = vmatprep.subr.bf16.mxu0 0
      %1229 = vmatpush1.bf16.msra.mxu0 0
      %1230 = vmatprep.subr.bf16.mxu0 0
      %1231 = vmatpush1.bf16.msra.mxu0 0
      %1232 = vmatprep.subr.bf16.mxu0 0
      %1233 = vmatpush1.bf16.msra.mxu0 0
      %1234 = vmatprep.subr.bf16.mxu0 0
      %1235 = vmatpush1.bf16.msra.mxu0 0
      %1236 = vmatprep.subr.bf16.mxu0 0
      %1237 = vmatpush1.bf16.msra.mxu0 0
      %1238 = vmatprep.subr.bf16.mxu0 0
      %1239 = vmatpush1.bf16.msra.mxu0 0
      %1240 = vmatprep.subr.bf16.mxu0 0
      %1241 = vmatpush1.bf16.msra.mxu0 0
      %1242 = vmatprep.subr.bf16.mxu0 0
      %1243 = vmatpush1.bf16.msra.mxu0 0
      %1244 = vmatprep.subr.bf16.mxu0 0
      %1245 = vmatpush1.bf16.msra.mxu0 0
      %1246 = vmatprep.subr.bf16.mxu0 0
      %1247 = vmatpush1.bf16.msra.mxu0 0
      %1248 = vmatprep.mubr.bf16.mxu0 0
      %1249 = vmatmul.mubr.bf16.gmra.mrb[0].mxu0 %v1173
      %v1250 = vpop.f32.mrb[0].mxu0
      %v1251 = vadd.f32 %v1210, %v1250
      %v1252 = vpop.f32.mrb[0].mxu0
      %v1253 = vpop.f32.mrb[0].mxu0
      %v1254 = vadd.f32 %v1213, %v1253
      %v1255 = vpop.f32.mrb[0].mxu0
      %1256 = vdwg.mxu0
      %v1257 = vmax.f32 %v1251, 0.0
      %v1258 = vmax.f32 %v1254, 0.0
      %v1259 = vpack.c.bf16 %v1258, %v1257
      %v1260 = vld [vmem:[%s10] sm:$0xf]
      %v1261 = vld [vmem:[%s10 + $0x4] sm:$0xf]
      %v1262 = vld [vmem:[%s10 + $0x8] sm:$0xf]
      %v1263 = vld [vmem:[%s10 + $0xc] sm:$0xf]
      %v1264 = vld [vmem:[%s10 + $0x10] sm:$0xf]
      %v1265 = vld [vmem:[%s10 + $0x14] sm:$0xf]
      %v1266 = vld [vmem:[%s10 + $0x18] sm:$0xf]
      %v1267 = vld [vmem:[%s10 + $0x1c] sm:$0xf]
      %v1268 = vld [vmem:[%s11] sm:$0x1]
      %v1270 = vlaneseq
      %v1271 = vshrl.u32 %v1270, 7
      %v1272 = vsub.s32 0, %v1271
      %v1273 = vrot.slane %v1268, %v1272
      %v1283 = vunpack.c.l.b16 %v1260
      %v1284 = vunpack.c.l.b16 %v1261
      %v1285 = vunpack.c.l.b16 %v1262
      %v1286 = vunpack.c.l.b16 %v1263
      %v1287 = vunpack.c.l.b16 %v1264
      %v1288 = vunpack.c.l.b16 %v1265
      %v1289 = vunpack.c.l.b16 %v1266
      %v1290 = vunpack.c.l.b16 %v1267
      %v1291 = vpack.c.b16 %v1284, %v1283
      %v1292 = vpack.c.b16 %v1286, %v1285
      %v1293 = vpack.c.b16 %v1288, %v1287
      %v1294 = vpack.c.b16 %v1290, %v1289
      %v1300 = vsel %vm1006, %v1259, 0
      %1302 = vmatprep.subr.bf16.mxu0 0
      %1303 = vmatpush1.bf16.msra.mxu0 %v1291
      %1304 = vmatprep.subr.bf16.mxu0 0
      %1305 = vmatpush1.bf16.msra.mxu0 %v1292
      %1306 = vmatprep.subr.bf16.mxu0 0
      %1307 = vmatpush1.bf16.msra.mxu0 %v1293
      %1308 = vmatprep.subr.bf16.mxu0 0
      %1309 = vmatpush1.bf16.msra.mxu0 %v1294
      %1310 = vmatprep.subr.bf16.mxu0 0
      %1311 = vmatpush1.bf16.msra.mxu0 0
      %1312 = vmatprep.subr.bf16.mxu0 0
      %1313 = vmatpush1.bf16.msra.mxu0 0
      %1314 = vmatprep.subr.bf16.mxu0 0
      %1315 = vmatpush1.bf16.msra.mxu0 0
      %1316 = vmatprep.subr.bf16.mxu0 0
      %1317 = vmatpush1.bf16.msra.mxu0 0
      %1318 = vmatprep.subr.bf16.mxu0 0
      %1319 = vmatpush1.bf16.msra.mxu0 0
      %1320 = vmatprep.subr.bf16.mxu0 0
      %1321 = vmatpush1.bf16.msra.mxu0 0
      %1322 = vmatprep.subr.bf16.mxu0 0
      %1323 = vmatpush1.bf16.msra.mxu0 0
      %1324 = vmatprep.subr.bf16.mxu0 0
      %1325 = vmatpush1.bf16.msra.mxu0 0
      %1326 = vmatprep.subr.bf16.mxu0 0
      %1327 = vmatpush1.bf16.msra.mxu0 0
      %1328 = vmatprep.subr.bf16.mxu0 0
      %1329 = vmatpush1.bf16.msra.mxu0 0
      %1330 = vmatprep.subr.bf16.mxu0 0
      %1331 = vmatpush1.bf16.msra.mxu0 0
      %1332 = vmatprep.subr.bf16.mxu0 0
      %1333 = vmatpush1.bf16.msra.mxu0 0
      %1334 = vmatprep.mubr.bf16.mxu0 0
      %1335 = vmatmul.mubr.bf16.gmra.mrb[0].mxu0 %v1300
      %v1336 = vpop.f32.mrb[0].mxu0
      %v1337 = vadd.f32 %v1273, %v1336
      %v1338 = vpop.f32.mrb[0].mxu0
      %v1339 = vpop.f32.mrb[0].mxu0
      %v1340 = vadd.f32 %v1273, %v1339
      %v1341 = vpop.f32.mrb[0].mxu0
      %1342 = vdwg.mxu0
      %v1343 = vadd.f32 %v1337, %v913
      %v1344 = vadd.f32 %v1340, %v914
      %v1345 = vld [vmem:[%s12] sm:$0x1]
      %v1346 = vld [vmem:[%s13] sm:$0x1]
      %v1347 = vsel %vm482, %v1343, 0.0
      %1348 = vadd.xlane.f32.xlu0 %v1347
      %v1349 = vpop.xlane.xlu0 %1348
      %v1350 = vsel %vm482, %v1344, 0.0
      %1351 = vadd.xlane.f32.xlu0 %v1350
      %v1352 = vpop.xlane.xlu0 %1351
      %v1353 = vmul.f32 %v1349, %v872
      %v1354 = vmul.f32 %v1352, %v872
      %v1355 = vsub.f32 %v1343, %v1353
      %v1356 = vsub.f32 %v1344, %v1354
      %v1357 = vmul.f32 %v1355, %v1355
      %v1358 = vmul.f32 %v1356, %v1356
      %v1359 = vsel %vm482, %v1357, 0.0
      %1360 = vadd.xlane.f32.xlu0 %v1359
      %v1361 = vpop.xlane.xlu0 %1360
      %v1362 = vsel %vm482, %v1358, 0.0
      %1363 = vadd.xlane.f32.xlu0 %v1362
      %v1364 = vpop.xlane.xlu0 %1363
      %v1365 = vmul.f32 %v1361, %v872
      %v1366 = vmul.f32 %v1364, %v872
      %v1367 = vadd.f32 %v1365, 1e-05
      %v1368 = vadd.f32 %v1366, 1e-05
      %v1369 = vrsqrt.pop %v1367
      %v1370 = vrsqrt.pop %v1368
      %v1371 = vmul.f32 %v1355, %v1369
      %v1372 = vmul.f32 %v1356, %v1370
      %v1374 = vlaneseq
      %v1375 = vshrl.u32 %v1374, 7
      %v1376 = vsub.s32 0, %v1375
      %v1377 = vrot.slane %v1345, %v1376
      %v1379 = vmul.f32 %v1371, %v1377
      %v1380 = vmul.f32 %v1372, %v1377
      %v1382 = vlaneseq
      %v1383 = vshrl.u32 %v1382, 7
      %v1384 = vsub.s32 0, %v1383
      %v1385 = vrot.slane %v1346, %v1384
      %v1387 = vadd.f32 %v1379, %v1385
      %v1388 = vadd.f32 %v1380, %v1385
      %v1389 = vsel %vm911, 0.0, %v1387
      %v1390 = vsel %vm912, 0.0, %v1388
      %1391 = vst.msk [vmem:[%s447] sm:$0xff] %vm482, %v1389
      %1392 = vst.msk [vmem:[%s447 + $0x8] sm:$0xff] %vm482, %v1390
      %p1393 = scmp.lt.s32.totalorder %s31, 1
      %s1394 = scalar_select %p1393, %s31, 1
      %s1395 = smul.addr %s1394, 2
      %s1396 = smul.addr %s1395, 8
      %s1397 = scalar_lea.vmem %s14, %s1396
      // Predicated region
      $region73: #{fastspeech2_forward.7} parent=71 // pred_check
        %p1398 = pneg %p327
      $region74: #{fastspeech2_forward.7} parent=71 // pred_check_branch
        %1400 = sbr.rel (%p1398) target = $region76
      $region75: #{fastspeech2_forward.7} parent=71 // pred_region
        _
      $region76: #{fastspeech2_forward.7} parent=71 // pred_fallthru
        _
    $region72: #{fastspeech2_forward.7} parent=5 // pred_fallthru
      _
    %p1401 = scmp.le.s32.totalorder 2, %s26
    // Predicated region
    $region77: #{fastspeech2_forward.7} parent=5 // pred_check
      %p1402 = pneg %p1401
    $region78: #{fastspeech2_forward.7} parent=5 // pred_check_branch
      %1404 = sbr.rel (%p1402) target = $region80
    $region79: #{fastspeech2_forward.7} parent=5 // pred_region
      %s1405 = ssub.s32 %s26, 2
      // Predicated region
      $region81: #{fastspeech2_forward.7} parent=79 // pred_check
        %p1406 = pneg %p333
      $region82: #{fastspeech2_forward.7} parent=79 // pred_check_branch
        %1408 = sbr.rel (%p1406) target = $region84
      $region83: #{fastspeech2_forward.7} parent=79 // pred_region
        %p1409 = scmp.lt.s32.totalorder %s32, 1
        %s1410 = scalar_select %p1409, %s32, 1
        %s1411 = smul.addr %s1410, 2
        %s1412 = smul.addr %s1411, 8
        %s1413 = scalar_lea.vmem %s14, %s1412
      $region84: #{fastspeech2_forward.7} parent=79 // pred_fallthru
        _
    $region80: #{fastspeech2_forward.7} parent=5 // pred_fallthru
      _
  $region6: #{fastspeech2_forward.7} parent=0 // loop_footer
    %s30 = sadd.s32 1, %s26
  $region7: #{fastspeech2_forward.7} parent=0 // loop_footer_branch
    %25 = sbr.rel target = $region3
  $region8: #{fastspeech2_forward.7} parent=0 // loop_exit
    _

// kernel: ne.4
$region0: #{ne.4}
  #allocation0 [shape = 's32[1]{0}', space=sflag, size = 0x4, scoped, tag = 'scoped memory for ne.4']
  %s0 = inlined_call_operand.vmem [shape: f32[2,64], index: 0, kind: input, shape index: {}, may-alias: {0,1}]
  %s1 = inlined_call_operand.vmem [shape: f32[2,64], index: 1, kind: input, shape index: {}, may-alias: {0,1}]
  %s2 = inlined_call_operand.vmem [shape: pred[2,64], index: 2, kind: output, shape index: {}]
  %v3 = vld [vmem:[%s0] sm:$0x3]
  %v4 = vld [vmem:[%s1] sm:$0x3]
  %5 = xla_tuple %v3, %v4
  %6 = xla_tuple %5
  %vm7 = vcmp.ne.f32.partialorder %v3, %v4
  %v8 = vsel %vm7, 1, 0
  %9 = xla_tuple %v8
  %v10 = vpack.c.b16 0, %v8
  %v11 = vpack.c.b8 0, %v10
  %13 = vst [vmem:[%s2] sm:$0x1] %v11

// kernel: squeeze.24
$region0: #{squeeze.24}
  %s0 = inlined_call_operand.vmem [shape: f32[128], index: 0, kind: input, shape index: {}]
  %s1 = inlined_call_operand.vmem [shape: f32[2,64], index: 1, kind: output, shape index: {}]
  $region1: #{squeeze.24} parent=0
    #allocation0 [shape = 'u8[4096]{0}', space=vmem, size = 0x1000, scoped, tag = 'scoped mem for output reshape']
    #allocation1 [shape = 'u8[4096]{0}', space=vmem, size = 0x1000, scoped, tag = 'scoped mem for input reshape']
    %s3 = sshllo.u32 0, 1
    %v4 = vld [vmem:[%s0] sm:%s3]
    %5 = vst [vmem:[#allocation1] sm:%s3] %v4
    %v6 = vld [vmem:[#allocation1] sm:$0x1]
    %vm7 = vcmask 523264
    %8 = vst.msk [vmem:[#allocation0] sm:$0x1] %vm7, %v6
    %v9 = vld [vmem:[#allocation1] sm:$0x1]
    %10 = vrot.lane.b32.xlu0 %v9, 64
    %v11 = vpop.permute.xlu0 %10
    %vm12 = vcmask 523264
    %s13 = scalar_lea.vmem [#allocation0], 1
    %14 = vst.msk [vmem:[%s13] sm:$0x1] %vm12, %v11
    %s16 = sshllo.u32 0, 2
    %v18 = vld [vmem:[#allocation0] sm:%s16]
    %s19 = sshllo.u32 0, 2
    %20 = vst [vmem:[%s1] sm:%s19] %v18

// kernel: fastspeech2_forward.10
$region0: #{fastspeech2_forward.10}
  #allocation0 [shape = 'u32[]', space=smem, size = 0x4, offset = 0x4, fixed_abs, tag = 'smem constant byte address 0x4 - core index']
  #allocation1 [shape = 'u32[144,128]{1,0:T(1,128)}', space=vmem, size = 0x12000, scoped, tag = 'internal scratch']
  #allocation2 [shape = 's32[1]{0}', space=sflag, size = 0x4, scoped, tag = 'scoped memory for fastspeech2_forward.10']
  #allocation3 [shape = 'u8[512]{0}', space=smem, size = 0x200, scoped, tag = 'prefetched SMEM operand 0']
  %s0 = inlined_call_operand.vmem [shape: s32[2], index: 0, kind: input, shape index: {}]
  %s1 = inlined_call_operand.vmem [shape: f32[2,64,32], index: 1, kind: input, shape index: {}]
  %s2 = inlined_call_operand.vmem [shape: bf16[2,96,32], index: 2, kind: input, shape index: {}]
  %s3 = inlined_call_operand.vmem [shape: f32[2,1,32], index: 3, kind: input, shape index: {}]
  %s4 = inlined_call_operand.vmem [shape: f32[2,1,32], index: 4, kind: input, shape index: {}]
  %s5 = inlined_call_operand.vmem [shape: f32[2,1,32], index: 5, kind: input, shape index: {}]
  %s6 = inlined_call_operand.vmem [shape: bf16[2,96,32], index: 6, kind: input, shape index: {}]
  %s7 = inlined_call_operand.vmem [shape: f32[2,1,32], index: 7, kind: input, shape index: {}]
  %s8 = inlined_call_operand.vmem [shape: f32[2,1,32], index: 8, kind: input, shape index: {}]
  %s9 = inlined_call_operand.vmem [shape: f32[2,1,32], index: 9, kind: input, shape index: {}]
  %s10 = inlined_call_operand.vmem [shape: bf16[2,32,1], index: 10, kind: input, shape index: {}]
  %s11 = inlined_call_operand.vmem [shape: f32[2,1,1], index: 11, kind: input, shape index: {}]
  %s12 = inlined_call_operand.vmem [shape: f32[2,2,64,1], index: 12, kind: output, shape index: {}]
  %s13 = sld [smem:[#allocation0]]
  $region77: #{fastspeech2_forward.10} parent=0
    _
  %s15 = ssub.s32 1, %s13
  %s16 = scalar_select 0, %s15, %s13
  %s17 = sshll.u32 %s0, 4
  %s18 = int_to_ptr.vmem [resolvable:$true] %s17
  %20 = dma.vmem_to_smem %s18, 16, [#allocation3], [#allocation2]
  %21 = dma.done [#allocation2], 16
  %22 = sfence
  loop: start=0, step=1, limit=6
  $region2: #{fastspeech2_forward.10} parent=0 // loop_pre_header
    _
  $region3: #{fastspeech2_forward.10} parent=0 // loop_header
    %s24 = sphi 0, %s28
    %p25 = scmp.ge.s32.totalorder %s24, 6
    %s31 = sphi 0, %s43
    %s32 = sphi 0, %s39
    %s33 = sphi 0, %s31
    %s34 = sphi 0, %s32
    %s35 = sphi 0, %s33
    %s36 = sphi 0, %s34
    %s46 = sphi 0, %s48
    %s49 = sphi 0, %s46
    %s50 = sphi 0, %s49
    %s66 = sphi 0, %s50
    %s72 = sphi 0, %s74
    %s75 = sphi 0, %s72
    %s76 = sphi 0, %s75
    %s92 = sphi 0, %s76
    %s98 = sphi 0, %s100
    %s101 = sphi 0, %s98
    %s102 = sphi 0, %s101
    %s118 = sphi 0, %s102
    %s124 = sphi 0, %s126
    %s127 = sphi 0, %s124
    %s128 = sphi 0, %s127
    %s144 = sphi 0, %s128
    %s150 = sphi 0, %s152
    %s153 = sphi 0, %s150
    %s154 = sphi 0, %s153
    %s170 = sphi 0, %s154
    %s176 = sphi 0, %s178
    %s179 = sphi 0, %s176
    %s180 = sphi 0, %s179
    %s196 = sphi 0, %s180
    %s202 = sphi 0, %s204
    %s205 = sphi 0, %s202
    %s206 = sphi 0, %s205
    %s222 = sphi 0, %s206
    %s228 = sphi 0, %s230
    %s231 = sphi 0, %s228
    %s232 = sphi 0, %s231
    %s248 = sphi 0, %s232
    %s254 = sphi 0, %s256
    %s257 = sphi 0, %s254
    %s258 = sphi 0, %s257
    %s274 = sphi 0, %s258
    %s280 = sphi 0, %s282
    %s283 = sphi 0, %s280
    %s284 = sphi 0, %s283
    %s300 = sphi 0, %s284
    %s306 = sphi 0, %s308
    %s309 = sphi 0, %s306
    %s310 = sphi 0, %s309
    %s326 = sphi 0, %s310
    %s334 = sphi 0, %s336
    %s337 = sphi 0, %s334
    %s338 = sphi 0, %s337
    %s354 = sphi 0, %s338
  $region4: #{fastspeech2_forward.10} parent=0 // loop_header_branch
    %27 = sbr.rel (%p25) target = $region8
  $region5: #{fastspeech2_forward.10} parent=0 // loop_body
    %s29 = ssub.s32 %s24, 1
    %s30 = ssub.s32 %s24, 2
    %s37 = sadd.s32 1, %s32
    %p38 = scmp.ge.s32.totalorder %s37, 2
    %s39 = scalar_select %p38, 0, %s37
    %s40 = sadd.s32 1, %s31
    %s41 = scalar_select %p38, %s40, %s31
    %p42 = scmp.ge.s32.totalorder %s41, 2
    %s43 = scalar_select %p42, 0, %s41
    %s44 = ssub.s32 %s32, %s39
    %p45 = scmp.eq.s32.totalorder %s44, 0
    %s47 = sadd.s32 %s46, 1
    %s48 = scalar_select %p45, %s46, %s47
    %p51 = pneg %p45
    %p52 = scmp.eq.s32.totalorder %s24, 3
    %p53 = por %p51, %p52
    %p54 = scmp.ne.s32.totalorder %s46, %s49
    %p55 = scmp.eq.s32.totalorder %s24, 0
    %p56 = por %p54, %p55
    %p57 = scmp.ne.s32.totalorder %s46, %s49
    %p58 = scmp.eq.s32.totalorder %s29, 3
    %p59 = por %p57, %p58
    %p60 = scmp.ne.s32.totalorder %s49, %s50
    %p61 = scmp.eq.s32.totalorder %s29, 0
    %p62 = por %p60, %p61
    %p63 = scmp.ne.s32.totalorder %s49, %s50
    %p64 = scmp.eq.s32.totalorder %s30, 3
    %p65 = por %p63, %p64
    %p67 = scmp.ne.s32.totalorder %s50, %s66
    %p68 = scmp.eq.s32.totalorder %s30, 0
    %p69 = por %p67, %p68
    %s70 = ssub.s32 %s31, %s43
    %p71 = scmp.eq.s32.totalorder %s70, 0
    %s73 = sadd.s32 %s72, 1
    %s74 = scalar_select %p71, %s72, %s73
    %p77 = pneg %p71
    %p78 = scmp.eq.s32.totalorder %s24, 3
    %p79 = por %p77, %p78
    %p80 = scmp.ne.s32.totalorder %s72, %s75
    %p81 = scmp.eq.s32.totalorder %s24, 0
    %p82 = por %p80, %p81
    %p83 = scmp.ne.s32.totalorder %s72, %s75
    %p84 = scmp.eq.s32.totalorder %s29, 3
    %p85 = por %p83, %p84
    %p86 = scmp.ne.s32.totalorder %s75, %s76
    %p87 = scmp.eq.s32.totalorder %s29, 0
    %p88 = por %p86, %p87
    %p89 = scmp.ne.s32.totalorder %s75, %s76
    %p90 = scmp.eq.s32.totalorder %s30, 3
    %p91 = por %p89, %p90
    %p93 = scmp.ne.s32.totalorder %s76, %s92
    %p94 = scmp.eq.s32.totalorder %s30, 0
    %p95 = por %p93, %p94
    %s96 = ssub.s32 %s31, %s43
    %p97 = scmp.eq.s32.totalorder %s96, 0
    %s99 = sadd.s32 %s98, 1
    %s100 = scalar_select %p97, %s98, %s99
    %p103 = pneg %p97
    %p104 = scmp.eq.s32.totalorder %s24, 3
    %p105 = por %p103, %p104
    %p106 = scmp.ne.s32.totalorder %s98, %s101
    %p107 = scmp.eq.s32.totalorder %s24, 0
    %p108 = por %p106, %p107
    %p109 = scmp.ne.s32.totalorder %s98, %s101
    %p110 = scmp.eq.s32.totalorder %s29, 3
    %p111 = por %p109, %p110
    %p112 = scmp.ne.s32.totalorder %s101, %s102
    %p113 = scmp.eq.s32.totalorder %s29, 0
    %p114 = por %p112, %p113
    %p115 = scmp.ne.s32.totalorder %s101, %s102
    %p116 = scmp.eq.s32.totalorder %s30, 3
    %p117 = por %p115, %p116
    %p119 = scmp.ne.s32.totalorder %s102, %s118
    %p120 = scmp.eq.s32.totalorder %s30, 0
    %p121 = por %p119, %p120
    %s122 = ssub.s32 %s31, %s43
    %p123 = scmp.eq.s32.totalorder %s122, 0
    %s125 = sadd.s32 %s124, 1
    %s126 = scalar_select %p123, %s124, %s125
    %p129 = pneg %p123
    %p130 = scmp.eq.s32.totalorder %s24, 3
    %p131 = por %p129, %p130
    %p132 = scmp.ne.s32.totalorder %s124, %s127
    %p133 = scmp.eq.s32.totalorder %s24, 0
    %p134 = por %p132, %p133
    %p135 = scmp.ne.s32.totalorder %s124, %s127
    %p136 = scmp.eq.s32.totalorder %s29, 3
    %p137 = por %p135, %p136
    %p138 = scmp.ne.s32.totalorder %s127, %s128
    %p139 = scmp.eq.s32.totalorder %s29, 0
    %p140 = por %p138, %p139
    %p141 = scmp.ne.s32.totalorder %s127, %s128
    %p142 = scmp.eq.s32.totalorder %s30, 3
    %p143 = por %p141, %p142
    %p145 = scmp.ne.s32.totalorder %s128, %s144
    %p146 = scmp.eq.s32.totalorder %s30, 0
    %p147 = por %p145, %p146
    %s148 = ssub.s32 %s31, %s43
    %p149 = scmp.eq.s32.totalorder %s148, 0
    %s151 = sadd.s32 %s150, 1
    %s152 = scalar_select %p149, %s150, %s151
    %p155 = pneg %p149
    %p156 = scmp.eq.s32.totalorder %s24, 3
    %p157 = por %p155, %p156
    %p158 = scmp.ne.s32.totalorder %s150, %s153
    %p159 = scmp.eq.s32.totalorder %s24, 0
    %p160 = por %p158, %p159
    %p161 = scmp.ne.s32.totalorder %s150, %s153
    %p162 = scmp.eq.s32.totalorder %s29, 3
    %p163 = por %p161, %p162
    %p164 = scmp.ne.s32.totalorder %s153, %s154
    %p165 = scmp.eq.s32.totalorder %s29, 0
    %p166 = por %p164, %p165
    %p167 = scmp.ne.s32.totalorder %s153, %s154
    %p168 = scmp.eq.s32.totalorder %s30, 3
    %p169 = por %p167, %p168
    %p171 = scmp.ne.s32.totalorder %s154, %s170
    %p172 = scmp.eq.s32.totalorder %s30, 0
    %p173 = por %p171, %p172
    %s174 = ssub.s32 %s31, %s43
    %p175 = scmp.eq.s32.totalorder %s174, 0
    %s177 = sadd.s32 %s176, 1
    %s178 = scalar_select %p175, %s176, %s177
    %p181 = pneg %p175
    %p182 = scmp.eq.s32.totalorder %s24, 3
    %p183 = por %p181, %p182
    %p184 = scmp.ne.s32.totalorder %s176, %s179
    %p185 = scmp.eq.s32.totalorder %s24, 0
    %p186 = por %p184, %p185
    %p187 = scmp.ne.s32.totalorder %s176, %s179
    %p188 = scmp.eq.s32.totalorder %s29, 3
    %p189 = por %p187, %p188
    %p190 = scmp.ne.s32.totalorder %s179, %s180
    %p191 = scmp.eq.s32.totalorder %s29, 0
    %p192 = por %p190, %p191
    %p193 = scmp.ne.s32.totalorder %s179, %s180
    %p194 = scmp.eq.s32.totalorder %s30, 3
    %p195 = por %p193, %p194
    %p197 = scmp.ne.s32.totalorder %s180, %s196
    %p198 = scmp.eq.s32.totalorder %s30, 0
    %p199 = por %p197, %p198
    %s200 = ssub.s32 %s31, %s43
    %p201 = scmp.eq.s32.totalorder %s200, 0
    %s203 = sadd.s32 %s202, 1
    %s204 = scalar_select %p201, %s202, %s203
    %p207 = pneg %p201
    %p208 = scmp.eq.s32.totalorder %s24, 3
    %p209 = por %p207, %p208
    %p210 = scmp.ne.s32.totalorder %s202, %s205
    %p211 = scmp.eq.s32.totalorder %s24, 0
    %p212 = por %p210, %p211
    %p213 = scmp.ne.s32.totalorder %s202, %s205
    %p214 = scmp.eq.s32.totalorder %s29, 3
    %p215 = por %p213, %p214
    %p216 = scmp.ne.s32.totalorder %s205, %s206
    %p217 = scmp.eq.s32.totalorder %s29, 0
    %p218 = por %p216, %p217
    %p219 = scmp.ne.s32.totalorder %s205, %s206
    %p220 = scmp.eq.s32.totalorder %s30, 3
    %p221 = por %p219, %p220
    %p223 = scmp.ne.s32.totalorder %s206, %s222
    %p224 = scmp.eq.s32.totalorder %s30, 0
    %p225 = por %p223, %p224
    %s226 = ssub.s32 %s31, %s43
    %p227 = scmp.eq.s32.totalorder %s226, 0
    %s229 = sadd.s32 %s228, 1
    %s230 = scalar_select %p227, %s228, %s229
    %p233 = pneg %p227
    %p234 = scmp.eq.s32.totalorder %s24, 3
    %p235 = por %p233, %p234
    %p236 = scmp.ne.s32.totalorder %s228, %s231
    %p237 = scmp.eq.s32.totalorder %s24, 0
    %p238 = por %p236, %p237
    %p239 = scmp.ne.s32.totalorder %s228, %s231
    %p240 = scmp.eq.s32.totalorder %s29, 3
    %p241 = por %p239, %p240
    %p242 = scmp.ne.s32.totalorder %s231, %s232
    %p243 = scmp.eq.s32.totalorder %s29, 0
    %p244 = por %p242, %p243
    %p245 = scmp.ne.s32.totalorder %s231, %s232
    %p246 = scmp.eq.s32.totalorder %s30, 3
    %p247 = por %p245, %p246
    %p249 = scmp.ne.s32.totalorder %s232, %s248
    %p250 = scmp.eq.s32.totalorder %s30, 0
    %p251 = por %p249, %p250
    %s252 = ssub.s32 %s31, %s43
    %p253 = scmp.eq.s32.totalorder %s252, 0
    %s255 = sadd.s32 %s254, 1
    %s256 = scalar_select %p253, %s254, %s255
    %p259 = pneg %p253
    %p260 = scmp.eq.s32.totalorder %s24, 3
    %p261 = por %p259, %p260
    %p262 = scmp.ne.s32.totalorder %s254, %s257
    %p263 = scmp.eq.s32.totalorder %s24, 0
    %p264 = por %p262, %p263
    %p265 = scmp.ne.s32.totalorder %s254, %s257
    %p266 = scmp.eq.s32.totalorder %s29, 3
    %p267 = por %p265, %p266
    %p268 = scmp.ne.s32.totalorder %s257, %s258
    %p269 = scmp.eq.s32.totalorder %s29, 0
    %p270 = por %p268, %p269
    %p271 = scmp.ne.s32.totalorder %s257, %s258
    %p272 = scmp.eq.s32.totalorder %s30, 3
    %p273 = por %p271, %p272
    %p275 = scmp.ne.s32.totalorder %s258, %s274
    %p276 = scmp.eq.s32.totalorder %s30, 0
    %p277 = por %p275, %p276
    %s278 = ssub.s32 %s31, %s43
    %p279 = scmp.eq.s32.totalorder %s278, 0
    %s281 = sadd.s32 %s280, 1
    %s282 = scalar_select %p279, %s280, %s281
    %p285 = pneg %p279
    %p286 = scmp.eq.s32.totalorder %s24, 3
    %p287 = por %p285, %p286
    %p288 = scmp.ne.s32.totalorder %s280, %s283
    %p289 = scmp.eq.s32.totalorder %s24, 0
    %p290 = por %p288, %p289
    %p291 = scmp.ne.s32.totalorder %s280, %s283
    %p292 = scmp.eq.s32.totalorder %s29, 3
    %p293 = por %p291, %p292
    %p294 = scmp.ne.s32.totalorder %s283, %s284
    %p295 = scmp.eq.s32.totalorder %s29, 0
    %p296 = por %p294, %p295
    %p297 = scmp.ne.s32.totalorder %s283, %s284
    %p298 = scmp.eq.s32.totalorder %s30, 3
    %p299 = por %p297, %p298
    %p301 = scmp.ne.s32.totalorder %s284, %s300
    %p302 = scmp.eq.s32.totalorder %s30, 0
    %p303 = por %p301, %p302
    %s304 = ssub.s32 %s31, %s43
    %p305 = scmp.eq.s32.totalorder %s304, 0
    %s307 = sadd.s32 %s306, 1
    %s308 = scalar_select %p305, %s306, %s307
    %p311 = pneg %p305
    %p312 = scmp.eq.s32.totalorder %s24, 3
    %p313 = por %p311, %p312
    %p314 = scmp.ne.s32.totalorder %s306, %s309
    %p315 = scmp.eq.s32.totalorder %s24, 0
    %p316 = por %p314, %p315
    %p317 = scmp.ne.s32.totalorder %s306, %s309
    %p318 = scmp.eq.s32.totalorder %s29, 3
    %p319 = por %p317, %p318
    %p320 = scmp.ne.s32.totalorder %s309, %s310
    %p321 = scmp.eq.s32.totalorder %s29, 0
    %p322 = por %p320, %p321
    %p323 = scmp.ne.s32.totalorder %s309, %s310
    %p324 = scmp.eq.s32.totalorder %s30, 3
    %p325 = por %p323, %p324
    %p327 = scmp.ne.s32.totalorder %s310, %s326
    %p328 = scmp.eq.s32.totalorder %s30, 0
    %p329 = por %p327, %p328
    %s330 = ssub.s32 %s31, %s43
    %s331 = ssub.s32 %s32, %s39
    %s332 = sor.u32 %s330, %s331
    %p333 = scmp.eq.s32.totalorder %s332, 0
    %s335 = sadd.s32 %s334, 1
    %s336 = scalar_select %p333, %s334, %s335
    %p339 = pneg %p333
    %p340 = scmp.eq.s32.totalorder %s24, 3
    %p341 = por %p339, %p340
    %p342 = scmp.ne.s32.totalorder %s334, %s337
    %p343 = scmp.eq.s32.totalorder %s24, 0
    %p344 = por %p342, %p343
    %p345 = scmp.ne.s32.totalorder %s334, %s337
    %p346 = scmp.eq.s32.totalorder %s29, 3
    %p347 = por %p345, %p346
    %p348 = scmp.ne.s32.totalorder %s337, %s338
    %p349 = scmp.eq.s32.totalorder %s29, 0
    %p350 = por %p348, %p349
    %p351 = scmp.ne.s32.totalorder %s337, %s338
    %p352 = scmp.eq.s32.totalorder %s30, 3
    %p353 = por %p351, %p352
    %p355 = scmp.ne.s32.totalorder %s338, %s354
    %p356 = scmp.eq.s32.totalorder %s30, 0
    %p357 = por %p355, %p356
    %p358 = scmp.le.s32.totalorder 1, %s24
    %p359 = scmp.lt.s32.totalorder %s24, 5
    %p360 = pnand %p358, %p359
    %p361 = pneg %p360
    // Predicated region
    $region9: #{fastspeech2_forward.10} parent=5 // pred_check
      _
    $region10: #{fastspeech2_forward.10} parent=5 // pred_check_branch
      %363 = sbr.rel (%p360) target = $region12
    $region11: #{fastspeech2_forward.10} parent=5 // pred_region
      %s364 = ssub.s32 %s24, 1
    $region12: #{fastspeech2_forward.10} parent=5 // pred_fallthru
      _
    %p365 = scmp.lt.s32.totalorder %s24, 4
    // Predicated region
    $region13: #{fastspeech2_forward.10} parent=5 // pred_check
      %p366 = pneg %p365
    $region14: #{fastspeech2_forward.10} parent=5 // pred_check_branch
      %368 = sbr.rel (%p366) target = $region16
    $region15: #{fastspeech2_forward.10} parent=5 // pred_region
      // Predicated region
      $region17: #{fastspeech2_forward.10} parent=15 // pred_check
        %p369 = pneg %p56
      $region18: #{fastspeech2_forward.10} parent=15 // pred_check_branch
        %371 = sbr.rel (%p369) target = $region20
      $region19: #{fastspeech2_forward.10} parent=15 // pred_region
        %p372 = scmp.lt.s32.totalorder %s32, 1
        %s373 = scalar_select %p372, %s32, 1
        %s374 = smul.addr %s373, 8
        %s375 = smul.addr %s374, 8
        %s376 = scalar_lea.vmem %s1, %s375
      $region20: #{fastspeech2_forward.10} parent=15 // pred_fallthru
        _
      // Predicated region
      $region21: #{fastspeech2_forward.10} parent=15 // pred_check
        %p377 = pneg %p82
      $region22: #{fastspeech2_forward.10} parent=15 // pred_check_branch
        %379 = sbr.rel (%p377) target = $region24
      $region23: #{fastspeech2_forward.10} parent=15 // pred_region
        %p380 = scmp.lt.s32.totalorder %s31, 1
        %s381 = scalar_select %p380, %s31, 1
        %s382 = smul.addr %s381, 12
        %s383 = smul.addr %s382, 4
        %s384 = scalar_lea.vmem %s2, %s383
      $region24: #{fastspeech2_forward.10} parent=15 // pred_fallthru
        _
      // Predicated region
      $region25: #{fastspeech2_forward.10} parent=15 // pred_check
        %p385 = pneg %p108
      $region26: #{fastspeech2_forward.10} parent=15 // pred_check_branch
        %387 = sbr.rel (%p385) target = $region28
      $region27: #{fastspeech2_forward.10} parent=15 // pred_region
        %p388 = scmp.lt.s32.totalorder %s31, 1
        %s389 = scalar_select %p388, %s31, 1
        %s390 = scalar_lea.vmem %s3, %s389
      $region28: #{fastspeech2_forward.10} parent=15 // pred_fallthru
        _
      // Predicated region
      $region29: #{fastspeech2_forward.10} parent=15 // pred_check
        %p391 = pneg %p134
      $region30: #{fastspeech2_forward.10} parent=15 // pred_check_branch
        %393 = sbr.rel (%p391) target = $region32
      $region31: #{fastspeech2_forward.10} parent=15 // pred_region
        %p394 = scmp.lt.s32.totalorder %s31, 1
        %s395 = scalar_select %p394, %s31, 1
        %s396 = scalar_lea.vmem %s4, %s395
      $region32: #{fastspeech2_forward.10} parent=15 // pred_fallthru
        _
      // Predicated region
      $region33: #{fastspeech2_forward.10} parent=15 // pred_check
        %p397 = pneg %p160
      $region34: #{fastspeech2_forward.10} parent=15 // pred_check_branch
        %399 = sbr.rel (%p397) target = $region36
      $region35: #{fastspeech2_forward.10} parent=15 // pred_region
        %p400 = scmp.lt.s32.totalorder %s31, 1
        %s401 = scalar_select %p400, %s31, 1
        %s402 = scalar_lea.vmem %s5, %s401
      $region36: #{fastspeech2_forward.10} parent=15 // pred_fallthru
        _
      // Predicated region
      $region37: #{fastspeech2_forward.10} parent=15 // pred_check
        %p403 = pneg %p186
      $region38: #{fastspeech2_forward.10} parent=15 // pred_check_branch
        %405 = sbr.rel (%p403) target = $region40
      $region39: #{fastspeech2_forward.10} parent=15 // pred_region
        %p406 = scmp.lt.s32.totalorder %s31, 1
        %s407 = scalar_select %p406, %s31, 1
        %s408 = smul.addr %s407, 12
        %s409 = smul.addr %s408, 4
        %s410 = scalar_lea.vmem %s6, %s409
      $region40: #{fastspeech2_forward.10} parent=15 // pred_fallthru
        _
      // Predicated region
      $region41: #{fastspeech2_forward.10} parent=15 // pred_check
        %p411 = pneg %p212
      $region42: #{fastspeech2_forward.10} parent=15 // pred_check_branch
        %413 = sbr.rel (%p411) target = $region44
      $region43: #{fastspeech2_forward.10} parent=15 // pred_region
        %p414 = scmp.lt.s32.totalorder %s31, 1
        %s415 = scalar_select %p414, %s31, 1
        %s416 = scalar_lea.vmem %s7, %s415
      $region44: #{fastspeech2_forward.10} parent=15 // pred_fallthru
        _
      // Predicated region
      $region45: #{fastspeech2_forward.10} parent=15 // pred_check
        %p417 = pneg %p238
      $region46: #{fastspeech2_forward.10} parent=15 // pred_check_branch
        %419 = sbr.rel (%p417) target = $region48
      $region47: #{fastspeech2_forward.10} parent=15 // pred_region
        %p420 = scmp.lt.s32.totalorder %s31, 1
        %s421 = scalar_select %p420, %s31, 1
        %s422 = scalar_lea.vmem %s8, %s421
      $region48: #{fastspeech2_forward.10} parent=15 // pred_fallthru
        _
      // Predicated region
      $region49: #{fastspeech2_forward.10} parent=15 // pred_check
        %p423 = pneg %p264
      $region50: #{fastspeech2_forward.10} parent=15 // pred_check_branch
        %425 = sbr.rel (%p423) target = $region52
      $region51: #{fastspeech2_forward.10} parent=15 // pred_region
        %p426 = scmp.lt.s32.totalorder %s31, 1
        %s427 = scalar_select %p426, %s31, 1
        %s428 = scalar_lea.vmem %s9, %s427
      $region52: #{fastspeech2_forward.10} parent=15 // pred_fallthru
        _
      // Predicated region
      $region53: #{fastspeech2_forward.10} parent=15 // pred_check
        %p429 = pneg %p290
      $region54: #{fastspeech2_forward.10} parent=15 // pred_check_branch
        %431 = sbr.rel (%p429) target = $region56
      $region55: #{fastspeech2_forward.10} parent=15 // pred_region
        %p432 = scmp.lt.s32.totalorder %s31, 1
        %s433 = scalar_select %p432, %s31, 1
        %s434 = smul.addr %s433, 4
        %s435 = smul.addr %s434, 4
        %s436 = scalar_lea.vmem %s10, %s435
      $region56: #{fastspeech2_forward.10} parent=15 // pred_fallthru
        _
      // Predicated region
      $region57: #{fastspeech2_forward.10} parent=15 // pred_check
        %p437 = pneg %p316
      $region58: #{fastspeech2_forward.10} parent=15 // pred_check_branch
        %439 = sbr.rel (%p437) target = $region60
      $region59: #{fastspeech2_forward.10} parent=15 // pred_region
        %p440 = scmp.lt.s32.totalorder %s31, 1
        %s441 = scalar_select %p440, %s31, 1
        %s442 = scalar_lea.vmem %s11, %s441
      $region60: #{fastspeech2_forward.10} parent=15 // pred_fallthru
        _
    $region16: #{fastspeech2_forward.10} parent=5 // pred_fallthru
      _
    %p443 = scmp.le.s32.totalorder 1, %s24
    %p444 = scmp.lt.s32.totalorder %s24, 5
    %p445 = pnand %p443, %p444
    %p446 = pneg %p445
    // Predicated region
    $region61: #{fastspeech2_forward.10} parent=5 // pred_check
      _
    $region62: #{fastspeech2_forward.10} parent=5 // pred_check_branch
      %448 = sbr.rel (%p445) target = $region64
    $region63: #{fastspeech2_forward.10} parent=5 // pred_region
      %s449 = ssub.s32 %s24, 1
      %p450 = scmp.lt.s32.totalorder %s34, 1
      %s451 = scalar_select %p450, %s34, 1
      %s452 = smul.addr %s451, 8
      %s453 = smul.addr %s452, 8
      %s454 = scalar_lea.vmem %s1, %s453
      %p455 = pneg %p62
      %p456 = pneg %p59
      %p457 = scmp.lt.s32.totalorder %s33, 1
      %s458 = scalar_select %p457, %s33, 1
      %s459 = smul.addr %s458, 12
      %s460 = smul.addr %s459, 4
      %s461 = scalar_lea.vmem %s2, %s460
      %p462 = pneg %p88
      %p463 = pneg %p85
      %p464 = scmp.lt.s32.totalorder %s33, 1
      %s465 = scalar_select %p464, %s33, 1
      %s466 = scalar_lea.vmem %s3, %s465
      %p467 = pneg %p114
      %p468 = pneg %p111
      %p469 = scmp.lt.s32.totalorder %s33, 1
      %s470 = scalar_select %p469, %s33, 1
      %s471 = scalar_lea.vmem %s4, %s470
      %p472 = pneg %p140
      %p473 = pneg %p137
      %p474 = scmp.lt.s32.totalorder %s33, 1
      %s475 = scalar_select %p474, %s33, 1
      %s476 = scalar_lea.vmem %s5, %s475
      %p477 = pneg %p166
      %p478 = pneg %p163
      %p479 = scmp.lt.s32.totalorder %s33, 1
      %s480 = scalar_select %p479, %s33, 1
      %s481 = smul.addr %s480, 12
      %s482 = smul.addr %s481, 4
      %s483 = scalar_lea.vmem %s6, %s482
      %p484 = pneg %p192
      %p485 = pneg %p189
      %p486 = scmp.lt.s32.totalorder %s33, 1
      %s487 = scalar_select %p486, %s33, 1
      %s488 = scalar_lea.vmem %s7, %s487
      %p489 = pneg %p218
      %p490 = pneg %p215
      %p491 = scmp.lt.s32.totalorder %s33, 1
      %s492 = scalar_select %p491, %s33, 1
      %s493 = scalar_lea.vmem %s8, %s492
      %p494 = pneg %p244
      %p495 = pneg %p241
      %p496 = scmp.lt.s32.totalorder %s33, 1
      %s497 = scalar_select %p496, %s33, 1
      %s498 = scalar_lea.vmem %s9, %s497
      %p499 = pneg %p270
      %p500 = pneg %p267
      %p501 = scmp.lt.s32.totalorder %s33, 1
      %s502 = scalar_select %p501, %s33, 1
      %s503 = smul.addr %s502, 4
      %s504 = smul.addr %s503, 4
      %s505 = scalar_lea.vmem %s10, %s504
      %p506 = pneg %p296
      %p507 = pneg %p293
      %p508 = scmp.lt.s32.totalorder %s33, 1
      %s509 = scalar_select %p508, %s33, 1
      %s510 = scalar_lea.vmem %s11, %s509
      %p511 = pneg %p322
      %p512 = pneg %p319
      %p513 = pneg %p350
      %p514 = pneg %p347
      %p515 = scmp.lt.s32.totalorder %s33, 1
      %s516 = scalar_select %p515, %s33, 1
      %p517 = scmp.lt.s32.totalorder %s34, 1
      %s518 = scalar_select %p517, %s34, 1
      %s519 = smul.addr %s518, 8
      %s520 = smul.addr %s516, 16
      %s521 = sadd.s32 %s519, %s520
      %s522 = smul.addr %s521, 8
      %s523 = scalar_lea.vmem %s12, %s522
      %p524 = scmp.lt.s32.totalorder %s34, 1
      %s525 = scalar_select %p524, %s34, 1
      %s526 = smul.addr %s525, 8
      %s527 = smul.addr %s526, 8
      %s528 = scalar_lea.vmem %s1, %s527
      %p529 = scmp.lt.s32.totalorder %s33, 1
      %s530 = scalar_select %p529, %s33, 1
      %s531 = smul.addr %s530, 12
      %s532 = smul.addr %s531, 4
      %s533 = scalar_lea.vmem %s2, %s532
      %p534 = scmp.lt.s32.totalorder %s33, 1
      %s535 = scalar_select %p534, %s33, 1
      %s536 = scalar_lea.vmem %s3, %s535
      %p537 = scmp.lt.s32.totalorder %s33, 1
      %s538 = scalar_select %p537, %s33, 1
      %s539 = scalar_lea.vmem %s4, %s538
      %p540 = scmp.lt.s32.totalorder %s33, 1
      %s541 = scalar_select %p540, %s33, 1
      %s542 = scalar_lea.vmem %s5, %s541
      %p543 = scmp.lt.s32.totalorder %s33, 1
      %s544 = scalar_select %p543, %s33, 1
      %s545 = smul.addr %s544, 12
      %s546 = smul.addr %s545, 4
      %s547 = scalar_lea.vmem %s6, %s546
      %p548 = scmp.lt.s32.totalorder %s33, 1
      %s549 = scalar_select %p548, %s33, 1
      %s550 = scalar_lea.vmem %s7, %s549
      %p551 = scmp.lt.s32.totalorder %s33, 1
      %s552 = scalar_select %p551, %s33, 1
      %s553 = scalar_lea.vmem %s8, %s552
      %p554 = scmp.lt.s32.totalorder %s33, 1
      %s555 = scalar_select %p554, %s33, 1
      %s556 = scalar_lea.vmem %s9, %s555
      %p557 = scmp.lt.s32.totalorder %s33, 1
      %s558 = scalar_select %p557, %s33, 1
      %s559 = smul.addr %s558, 4
      %s560 = smul.addr %s559, 4
      %s561 = scalar_lea.vmem %s10, %s560
      %p562 = scmp.lt.s32.totalorder %s33, 1
      %s563 = scalar_select %p562, %s33, 1
      %s564 = scalar_lea.vmem %s11, %s563
      %p565 = scmp.lt.s32.totalorder %s33, 1
      %s566 = scalar_select %p565, %s33, 1
      %p567 = scmp.lt.s32.totalorder %s34, 1
      %s568 = scalar_select %p567, %s34, 1
      %s569 = smul.addr %s568, 8
      %s570 = smul.addr %s566, 16
      %s571 = sadd.s32 %s569, %s570
      %s572 = smul.addr %s571, 8
      %s573 = scalar_lea.vmem %s12, %s572
      %s575 = sld [smem:[#allocation3 + %s34]]
      %v576 = vld [vmem:[%s528] sm:$0xff]
      %v577 = vld [vmem:[%s528 + $0x8] sm:$0xff]
      %v578 = vld [vmem:[%s528 + $0x10] sm:$0xff]
      %v579 = vld [vmem:[%s528 + $0x18] sm:$0xff]
      %v580 = vld [vmem:[%s528 + $0x20] sm:$0xff]
      %v581 = vld [vmem:[%s528 + $0x28] sm:$0xff]
      %v582 = vld [vmem:[%s528 + $0x30] sm:$0xff]
      %v583 = vld [vmem:[%s528 + $0x38] sm:$0xff]
      %vm592 = vcmask 1040384
      %v593 = vrot.slane %v576, 7
      %v594 = vrot.slane %v577, 7
      %v595 = vsel %vm592, %v593, %v594
      %v596 = vrot.slane %v578, 7
      %v597 = vsel %vm592, %v594, %v596
      %v598 = vrot.slane %v579, 7
      %v599 = vsel %vm592, %v596, %v598
      %v600 = vrot.slane %v580, 7
      %v601 = vsel %vm592, %v598, %v600
      %v602 = vrot.slane %v581, 7
      %v603 = vsel %vm592, %v600, %v602
      %v604 = vrot.slane %v582, 7
      %v605 = vsel %vm592, %v602, %v604
      %v606 = vrot.slane %v583, 7
      %v607 = vsel %vm592, %v604, %v606
      %v616 = vsel %vm592, 0.0, %v593
      %vm617 = vcmask 1046528
      %v618 = vrot.slane %v576, 1
      %v619 = vrot.slane %v577, 1
      %v620 = vsel %vm617, %v618, %v619
      %v621 = vrot.slane %v578, 1
      %v622 = vsel %vm617, %v619, %v621
      %v623 = vrot.slane %v579, 1
      %v624 = vsel %vm617, %v621, %v623
      %v625 = vrot.slane %v580, 1
      %v626 = vsel %vm617, %v623, %v625
      %v627 = vrot.slane %v581, 1
      %v628 = vsel %vm617, %v625, %v627
      %v629 = vrot.slane %v582, 1
      %v630 = vsel %vm617, %v627, %v629
      %v631 = vrot.slane %v583, 1
      %v632 = vsel %vm617, %v629, %v631
      %v634 = vsel %vm617, %v631, 0.0
      %635 = vrot.lane.b32.xlu0 %v576, 32
      %v636 = vpop.permute.xlu0 %635
      %637 = vrot.lane.b32.xlu0 %v577, 32
      %v638 = vpop.permute.xlu0 %637
      %639 = vrot.lane.b32.xlu0 %v578, 32
      %v640 = vpop.permute.xlu0 %639
      %641 = vrot.lane.b32.xlu0 %v579, 32
      %v642 = vpop.permute.xlu0 %641
      %643 = vrot.lane.b32.xlu0 %v580, 32
      %v644 = vpop.permute.xlu0 %643
      %645 = vrot.lane.b32.xlu0 %v581, 32
      %v646 = vpop.permute.xlu0 %645
      %647 = vrot.lane.b32.xlu0 %v582, 32
      %v648 = vpop.permute.xlu0 %647
      %649 = vrot.lane.b32.xlu0 %v583, 32
      %v650 = vpop.permute.xlu0 %649
      %660 = vrot.lane.b32.xlu0 %v620, 64
      %v661 = vpop.permute.xlu0 %660
      %662 = vrot.lane.b32.xlu0 %v622, 64
      %v663 = vpop.permute.xlu0 %662
      %664 = vrot.lane.b32.xlu0 %v624, 64
      %v665 = vpop.permute.xlu0 %664
      %666 = vrot.lane.b32.xlu0 %v626, 64
      %v667 = vpop.permute.xlu0 %666
      %668 = vrot.lane.b32.xlu0 %v628, 64
      %v669 = vpop.permute.xlu0 %668
      %670 = vrot.lane.b32.xlu0 %v630, 64
      %v671 = vpop.permute.xlu0 %670
      %672 = vrot.lane.b32.xlu0 %v632, 64
      %v673 = vpop.permute.xlu0 %672
      %674 = vrot.lane.b32.xlu0 %v634, 64
      %v675 = vpop.permute.xlu0 %674
      %vm684 = vcmask 261120
      %v685 = vsel %vm684, %v616, %v636
      %v686 = vsel %vm684, %v595, %v638
      %v687 = vsel %vm684, %v597, %v640
      %v688 = vsel %vm684, %v599, %v642
      %v689 = vsel %vm684, %v601, %v644
      %v690 = vsel %vm684, %v603, %v646
      %v691 = vsel %vm684, %v605, %v648
      %v692 = vsel %vm684, %v607, %v650
      %vm693 = vcmask 523264
      %v694 = vsel %vm693, %v685, %v661
      %v695 = vsel %vm693, %v686, %v663
      %v696 = vsel %vm693, %v687, %v665
      %v697 = vsel %vm693, %v688, %v667
      %v698 = vsel %vm693, %v689, %v669
      %v699 = vsel %vm693, %v690, %v671
      %v700 = vsel %vm693, %v691, %v673
      %v701 = vsel %vm693, %v692, %v675
      %v702 = vpack.c.bf16 %v695, %v694
      %v703 = vpack.c.bf16 %v697, %v696
      %v704 = vpack.c.bf16 %v699, %v698
      %v705 = vpack.c.bf16 %v701, %v700
      %v706 = vld [vmem:[%s533] sm:$0xf]
      %v707 = vld [vmem:[%s533 + $0x4] sm:$0xf]
      %v708 = vld [vmem:[%s533 + $0x8] sm:$0xf]
      %v709 = vld [vmem:[%s533 + $0xc] sm:$0xf]
      %v710 = vld [vmem:[%s533 + $0x10] sm:$0xf]
      %v711 = vld [vmem:[%s533 + $0x14] sm:$0xf]
      %v712 = vld [vmem:[%s533 + $0x18] sm:$0xf]
      %v713 = vld [vmem:[%s533 + $0x1c] sm:$0xf]
      %v714 = vld [vmem:[%s533 + $0x20] sm:$0xf]
      %v715 = vld [vmem:[%s533 + $0x24] sm:$0xf]
      %v716 = vld [vmem:[%s533 + $0x28] sm:$0xf]
      %v717 = vld [vmem:[%s533 + $0x2c] sm:$0xf]
      %v718 = vld [vmem:[%s536] sm:$0x1]
      %v720 = vlaneseq
      %v721 = vshrl.u32 %v720, 7
      %v722 = vsub.s32 0, %v721
      %v723 = vrot.slane %v718, %v722
      %v737 = vunpack.c.l.b16 %v706
      %v738 = vunpack.c.l.b16 %v707
      %v739 = vunpack.c.l.b16 %v708
      %v740 = vunpack.c.l.b16 %v709
      %v741 = vunpack.c.l.b16 %v710
      %v742 = vunpack.c.l.b16 %v711
      %v743 = vunpack.c.l.b16 %v712
      %v744 = vunpack.c.l.b16 %v713
      %v745 = vunpack.c.l.b16 %v714
      %v746 = vunpack.c.l.b16 %v715
      %v747 = vunpack.c.l.b16 %v716
      %v748 = vunpack.c.l.b16 %v717
      %v749 = vpack.c.b16 %v738, %v737
      %v750 = vpack.c.b16 %v740, %v739
      %v751 = vpack.c.b16 %v742, %v741
      %v752 = vpack.c.b16 %v744, %v743
      %v753 = vpack.c.b16 %v746, %v745
      %v754 = vpack.c.b16 %v748, %v747
      %vm761 = vcmask 785408
      %v763 = vsel %vm761, %v702, 0
      %v766 = vsel %vm761, %v703, 0
      %v769 = vsel %vm761, %v704, 0
      %v772 = vsel %vm761, %v705, 0
      %774 = vmatprep.subr.bf16.mxu0 0
      %775 = vmatpush1.bf16.msra.mxu0 %v749
      %776 = vmatprep.subr.bf16.mxu0 0
      %777 = vmatpush1.bf16.msra.mxu0 %v750
      %778 = vmatprep.subr.bf16.mxu0 0
      %779 = vmatpush1.bf16.msra.mxu0 %v751
      %780 = vmatprep.subr.bf16.mxu0 0
      %781 = vmatpush1.bf16.msra.mxu0 %v752
      %782 = vmatprep.subr.bf16.mxu0 0
      %783 = vmatpush1.bf16.msra.mxu0 %v753
      %784 = vmatprep.subr.bf16.mxu0 0
      %785 = vmatpush1.bf16.msra.mxu0 %v754
      %786 = vmatprep.subr.bf16.mxu0 0
      %787 = vmatpush1.bf16.msra.mxu0 0
      %788 = vmatprep.subr.bf16.mxu0 0
      %789 = vmatpush1.bf16.msra.mxu0 0
      %790 = vmatprep.subr.bf16.mxu0 0
      %791 = vmatpush1.bf16.msra.mxu0 0
      %792 = vmatprep.subr.bf16.mxu0 0
      %793 = vmatpush1.bf16.msra.mxu0 0
      %794 = vmatprep.subr.bf16.mxu0 0
      %795 = vmatpush1.bf16.msra.mxu0 0
      %796 = vmatprep.subr.bf16.mxu0 0
      %797 = vmatpush1.bf16.msra.mxu0 0
      %798 = vmatprep.subr.bf16.mxu0 0
      %799 = vmatpush1.bf16.msra.mxu0 0
      %800 = vmatprep.subr.bf16.mxu0 0
      %801 = vmatpush1.bf16.msra.mxu0 0
      %802 = vmatprep.subr.bf16.mxu0 0
      %803 = vmatpush1.bf16.msra.mxu0 0
      %804 = vmatprep.subr.bf16.mxu0 0
      %805 = vmatpush1.bf16.msra.mxu0 0
      %806 = vmatprep.mubr.bf16.mxu0 0
      %807 = vmatmul.mubr.bf16.gmra.mrb[0].mxu0 %v763
      %v808 = vpop.f32.mrb[0].mxu0
      %v809 = vadd.f32 %v723, %v808
      %v810 = vpop.f32.mrb[0].mxu0
      %v811 = vpop.f32.mrb[0].mxu0
      %v812 = vadd.f32 %v723, %v811
      %v813 = vpop.f32.mrb[0].mxu0
      %814 = vmatprep.mubr.bf16.mxu0 0
      %815 = vmatmul.mubr.bf16.gmra.mrb[0].mxu0 %v766
      %v816 = vpop.f32.mrb[0].mxu0
      %v817 = vadd.f32 %v723, %v816
      %v818 = vpop.f32.mrb[0].mxu0
      %v819 = vpop.f32.mrb[0].mxu0
      %v820 = vadd.f32 %v723, %v819
      %v821 = vpop.f32.mrb[0].mxu0
      %822 = vmatprep.mubr.bf16.mxu0 0
      %823 = vmatmul.mubr.bf16.gmra.mrb[0].mxu0 %v769
      %v824 = vpop.f32.mrb[0].mxu0
      %v825 = vadd.f32 %v723, %v824
      %v826 = vpop.f32.mrb[0].mxu0
      %v827 = vpop.f32.mrb[0].mxu0
      %v828 = vadd.f32 %v723, %v827
      %v829 = vpop.f32.mrb[0].mxu0
      %830 = vmatprep.mubr.bf16.mxu0 0
      %831 = vmatmul.mubr.bf16.gmra.mrb[0].mxu0 %v772
      %v832 = vpop.f32.mrb[0].mxu0
      %v833 = vadd.f32 %v723, %v832
      %v834 = vpop.f32.mrb[0].mxu0
      %v835 = vpop.f32.mrb[0].mxu0
      %v836 = vadd.f32 %v723, %v835
      %v837 = vpop.f32.mrb[0].mxu0
      %838 = vdwg.mxu0
      %v839 = vmax.f32 %v809, 0.0
      %v840 = vmax.f32 %v812, 0.0
      %v841 = vmax.f32 %v817, 0.0
      %v842 = vmax.f32 %v820, 0.0
      %v843 = vmax.f32 %v825, 0.0
      %v844 = vmax.f32 %v828, 0.0
      %v845 = vmax.f32 %v833, 0.0
      %v846 = vmax.f32 %v836, 0.0
      %v847 = vld [vmem:[%s539] sm:$0x1]
      %v848 = vld [vmem:[%s542] sm:$0x1]
      %v849 = vsel %vm684, %v839, 0.0
      %850 = vadd.xlane.f32.xlu0 %v849
      %v851 = vpop.xlane.xlu0 %850
      %v852 = vsel %vm684, %v840, 0.0
      %853 = vadd.xlane.f32.xlu0 %v852
      %v854 = vpop.xlane.xlu0 %853
      %v855 = vsel %vm684, %v841, 0.0
      %856 = vadd.xlane.f32.xlu0 %v855
      %v857 = vpop.xlane.xlu0 %856
      %v858 = vsel %vm684, %v842, 0.0
      %859 = vadd.xlane.f32.xlu0 %v858
      %v860 = vpop.xlane.xlu0 %859
      %v861 = vsel %vm684, %v843, 0.0
      %862 = vadd.xlane.f32.xlu0 %v861
      %v863 = vpop.xlane.xlu0 %862
      %v864 = vsel %vm684, %v844, 0.0
      %865 = vadd.xlane.f32.xlu0 %v864
      %v866 = vpop.xlane.xlu0 %865
      %v867 = vsel %vm684, %v845, 0.0
      %868 = vadd.xlane.f32.xlu0 %v867
      %v869 = vpop.xlane.xlu0 %868
      %v870 = vsel %vm684, %v846, 0.0
      %871 = vadd.xlane.f32.xlu0 %v870
      %v872 = vpop.xlane.xlu0 %871
      %v873 = vrcp.pop 32.0
      %v874 = vmul.f32 %v851, %v873
      %v875 = vmul.f32 %v854, %v873
      %v876 = vmul.f32 %v857, %v873
      %v877 = vmul.f32 %v860, %v873
      %v878 = vmul.f32 %v863, %v873
      %v879 = vmul.f32 %v866, %v873
      %v880 = vmul.f32 %v869, %v873
      %v881 = vmul.f32 %v872, %v873
      %v882 = vsub.f32 %v839, %v874
      %v883 = vsub.f32 %v840, %v875
      %v884 = vsub.f32 %v841, %v876
      %v885 = vsub.f32 %v842, %v877
      %v886 = vsub.f32 %v843, %v878
      %v887 = vsub.f32 %v844, %v879
      %v888 = vsub.f32 %v845, %v880
      %v889 = vsub.f32 %v846, %v881
      %v890 = vmul.f32 %v882, %v882
      %v891 = vmul.f32 %v883, %v883
      %v892 = vmul.f32 %v884, %v884
      %v893 = vmul.f32 %v885, %v885
      %v894 = vmul.f32 %v886, %v886
      %v895 = vmul.f32 %v887, %v887
      %v896 = vmul.f32 %v888, %v888
      %v897 = vmul.f32 %v889, %v889
      %v898 = vsel %vm684, %v890, 0.0
      %899 = vadd.xlane.f32.xlu0 %v898
      %v900 = vpop.xlane.xlu0 %899
      %v901 = vsel %vm684, %v891, 0.0
      %902 = vadd.xlane.f32.xlu0 %v901
      %v903 = vpop.xlane.xlu0 %902
      %v904 = vsel %vm684, %v892, 0.0
      %905 = vadd.xlane.f32.xlu0 %v904
      %v906 = vpop.xlane.xlu0 %905
      %v907 = vsel %vm684, %v893, 0.0
      %908 = vadd.xlane.f32.xlu0 %v907
      %v909 = vpop.xlane.xlu0 %908
      %v910 = vsel %vm684, %v894, 0.0
      %911 = vadd.xlane.f32.xlu0 %v910
      %v912 = vpop.xlane.xlu0 %911
      %v913 = vsel %vm684, %v895, 0.0
      %914 = vadd.xlane.f32.xlu0 %v913
      %v915 = vpop.xlane.xlu0 %914
      %v916 = vsel %vm684, %v896, 0.0
      %917 = vadd.xlane.f32.xlu0 %v916
      %v918 = vpop.xlane.xlu0 %917
      %v919 = vsel %vm684, %v897, 0.0
      %920 = vadd.xlane.f32.xlu0 %v919
      %v921 = vpop.xlane.xlu0 %920
      %v922 = vmul.f32 %v900, %v873
      %v923 = vmul.f32 %v903, %v873
      %v924 = vmul.f32 %v906, %v873
      %v925 = vmul.f32 %v909, %v873
      %v926 = vmul.f32 %v912, %v873
      %v927 = vmul.f32 %v915, %v873
      %v928 = vmul.f32 %v918, %v873
      %v929 = vmul.f32 %v921, %v873
      %v930 = vadd.f32 %v922, 1e-05
      %v931 = vadd.f32 %v923, 1e-05
      %v932 = vadd.f32 %v924, 1e-05
      %v933 = vadd.f32 %v925, 1e-05
      %v934 = vadd.f32 %v926, 1e-05
      %v935 = vadd.f32 %v927, 1e-05
      %v936 = vadd.f32 %v928, 1e-05
      %v937 = vadd.f32 %v929, 1e-05
      %v938 = vrsqrt.pop %v930
      %v939 = vrsqrt.pop %v931
      %v940 = vrsqrt.pop %v932
      %v941 = vrsqrt.pop %v933
      %v942 = vrsqrt.pop %v934
      %v943 = vrsqrt.pop %v935
      %v944 = vrsqrt.pop %v936
      %v945 = vrsqrt.pop %v937
      %v946 = vmul.f32 %v882, %v938
      %v947 = vmul.f32 %v883, %v939
      %v948 = vmul.f32 %v884, %v940
      %v949 = vmul.f32 %v885, %v941
      %v950 = vmul.f32 %v886, %v942
      %v951 = vmul.f32 %v887, %v943
      %v952 = vmul.f32 %v888, %v944
      %v953 = vmul.f32 %v889, %v945
      %v955 = vlaneseq
      %v956 = vshrl.u32 %v955, 7
      %v957 = vsub.s32 0, %v956
      %v958 = vrot.slane %v847, %v957
      %v960 = vmul.f32 %v946, %v958
      %v961 = vmul.f32 %v947, %v958
      %v962 = vmul.f32 %v948, %v958
      %v963 = vmul.f32 %v949, %v958
      %v964 = vmul.f32 %v950, %v958
      %v965 = vmul.f32 %v951, %v958
      %v966 = vmul.f32 %v952, %v958
      %v967 = vmul.f32 %v953, %v958
      %v969 = vlaneseq
      %v970 = vshrl.u32 %v969, 7
      %v971 = vsub.s32 0, %v970
      %v972 = vrot.slane %v848, %v971
      %v974 = vadd.f32 %v960, %v972
      %v975 = vadd.f32 %v961, %v972
      %v976 = vadd.f32 %v962, %v972
      %v977 = vadd.f32 %v963, %v972
      %v978 = vadd.f32 %v964, %v972
      %v979 = vadd.f32 %v965, %v972
      %v980 = vadd.f32 %v966, %v972
      %v981 = vadd.f32 %v967, %v972
      %v990 = vrot.slane %v974, 7
      %v991 = vrot.slane %v975, 7
      %v992 = vsel %vm592, %v990, %v991
      %v993 = vrot.slane %v976, 7
      %v994 = vsel %vm592, %v991, %v993
      %v995 = vrot.slane %v977, 7
      %v996 = vsel %vm592, %v993, %v995
      %v997 = vrot.slane %v978, 7
      %v998 = vsel %vm592, %v995, %v997
      %v999 = vrot.slane %v979, 7
      %v1000 = vsel %vm592, %v997, %v999
      %v1001 = vrot.slane %v980, 7
      %v1002 = vsel %vm592, %v999, %v1001
      %v1003 = vrot.slane %v981, 7
      %v1004 = vsel %vm592, %v1001, %v1003
      %v1013 = vsel %vm592, 0.0, %v990
      %v1014 = vrot.slane %v974, 1
      %v1015 = vrot.slane %v975, 1
      %v1016 = vsel %vm617, %v1014, %v1015
      %v1017 = vrot.slane %v976, 1
      %v1018 = vsel %vm617, %v1015, %v1017
      %v1019 = vrot.slane %v977, 1
      %v1020 = vsel %vm617, %v1017, %v1019
      %v1021 = vrot.slane %v978, 1
      %v1022 = vsel %vm617, %v1019, %v1021
      %v1023 = vrot.slane %v979, 1
      %v1024 = vsel %vm617, %v1021, %v1023
      %v1025 = vrot.slane %v980, 1
      %v1026 = vsel %vm617, %v1023, %v1025
      %v1027 = vrot.slane %v981, 1
      %v1028 = vsel %vm617, %v1025, %v1027
      %v1030 = vsel %vm617, %v1027, 0.0
      %1031 = vrot.lane.b32.xlu0 %v974, 32
      %v1032 = vpop.permute.xlu0 %1031
      %1033 = vrot.lane.b32.xlu0 %v975, 32
      %v1034 = vpop.permute.xlu0 %1033
      %1035 = vrot.lane.b32.xlu0 %v976, 32
      %v1036 = vpop.permute.xlu0 %1035
      %1037 = vrot.lane.b32.xlu0 %v977, 32
      %v1038 = vpop.permute.xlu0 %1037
      %1039 = vrot.lane.b32.xlu0 %v978, 32
      %v1040 = vpop.permute.xlu0 %1039
      %1041 = vrot.lane.b32.xlu0 %v979, 32
      %v1042 = vpop.permute.xlu0 %1041
      %1043 = vrot.lane.b32.xlu0 %v980, 32
      %v1044 = vpop.permute.xlu0 %1043
      %1045 = vrot.lane.b32.xlu0 %v981, 32
      %v1046 = vpop.permute.xlu0 %1045
      %1056 = vrot.lane.b32.xlu0 %v1016, 64
      %v1057 = vpop.permute.xlu0 %1056
      %1058 = vrot.lane.b32.xlu0 %v1018, 64
      %v1059 = vpop.permute.xlu0 %1058
      %1060 = vrot.lane.b32.xlu0 %v1020, 64
      %v1061 = vpop.permute.xlu0 %1060
      %1062 = vrot.lane.b32.xlu0 %v1022, 64
      %v1063 = vpop.permute.xlu0 %1062
      %1064 = vrot.lane.b32.xlu0 %v1024, 64
      %v1065 = vpop.permute.xlu0 %1064
      %1066 = vrot.lane.b32.xlu0 %v1026, 64
      %v1067 = vpop.permute.xlu0 %1066
      %1068 = vrot.lane.b32.xlu0 %v1028, 64
      %v1069 = vpop.permute.xlu0 %1068
      %1070 = vrot.lane.b32.xlu0 %v1030, 64
      %v1071 = vpop.permute.xlu0 %1070
      %v1080 = vsel %vm684, %v1013, %v1032
      %v1081 = vsel %vm684, %v992, %v1034
      %v1082 = vsel %vm684, %v994, %v1036
      %v1083 = vsel %vm684, %v996, %v1038
      %v1084 = vsel %vm684, %v998, %v1040
      %v1085 = vsel %vm684, %v1000, %v1042
      %v1086 = vsel %vm684, %v1002, %v1044
      %v1087 = vsel %vm684, %v1004, %v1046
      %v1088 = vsel %vm693, %v1080, %v1057
      %v1089 = vsel %vm693, %v1081, %v1059
      %v1090 = vsel %vm693, %v1082, %v1061
      %v1091 = vsel %vm693, %v1083, %v1063
      %v1092 = vsel %vm693, %v1084, %v1065
      %v1093 = vsel %vm693, %v1085, %v1067
      %v1094 = vsel %vm693, %v1086, %v1069
      %v1095 = vsel %vm693, %v1087, %v1071
      %v1096 = vpack.c.bf16 %v1089, %v1088
      %v1097 = vpack.c.bf16 %v1091, %v1090
      %v1098 = vpack.c.bf16 %v1093, %v1092
      %v1099 = vpack.c.bf16 %v1095, %v1094
      %v1100 = vld [vmem:[%s547] sm:$0xf]
      %v1101 = vld [vmem:[%s547 + $0x4] sm:$0xf]
      %v1102 = vld [vmem:[%s547 + $0x8] sm:$0xf]
      %v1103 = vld [vmem:[%s547 + $0xc] sm:$0xf]
      %v1104 = vld [vmem:[%s547 + $0x10] sm:$0xf]
      %v1105 = vld [vmem:[%s547 + $0x14] sm:$0xf]
      %v1106 = vld [vmem:[%s547 + $0x18] sm:$0xf]
      %v1107 = vld [vmem:[%s547 + $0x1c] sm:$0xf]
      %v1108 = vld [vmem:[%s547 + $0x20] sm:$0xf]
      %v1109 = vld [vmem:[%s547 + $0x24] sm:$0xf]
      %v1110 = vld [vmem:[%s547 + $0x28] sm:$0xf]
      %v1111 = vld [vmem:[%s547 + $0x2c] sm:$0xf]
      %v1112 = vld [vmem:[%s550] sm:$0x1]
      %v1114 = vlaneseq
      %v1115 = vshrl.u32 %v1114, 7
      %v1116 = vsub.s32 0, %v1115
      %v1117 = vrot.slane %v1112, %v1116
      %v1131 = vunpack.c.l.b16 %v1100
      %v1132 = vunpack.c.l.b16 %v1101
      %v1133 = vunpack.c.l.b16 %v1102
      %v1134 = vunpack.c.l.b16 %v1103
      %v1135 = vunpack.c.l.b16 %v1104
      %v1136 = vunpack.c.l.b16 %v1105
      %v1137 = vunpack.c.l.b16 %v1106
      %v1138 = vunpack.c.l.b16 %v1107
      %v1139 = vunpack.c.l.b16 %v1108
      %v1140 = vunpack.c.l.b16 %v1109
      %v1141 = vunpack.c.l.b16 %v1110
      %v1142 = vunpack.c.l.b16 %v1111
      %v1143 = vpack.c.b16 %v1132, %v1131
      %v1144 = vpack.c.b16 %v1134, %v1133
      %v1145 = vpack.c.b16 %v1136, %v1135
      %v1146 = vpack.c.b16 %v1138, %v1137
      %v1147 = vpack.c.b16 %v1140, %v1139
      %v1148 = vpack.c.b16 %v1142, %v1141
      %v1156 = vsel %vm761, %v1096, 0
      %v1159 = vsel %vm761, %v1097, 0
      %v1162 = vsel %vm761, %v1098, 0
      %v1165 = vsel %vm761, %v1099, 0
      %1167 = vmatprep.subr.bf16.mxu0 0
      %1168 = vmatpush1.bf16.msra.mxu0 %v1143
      %1169 = vmatprep.subr.bf16.mxu0 0
      %1170 = vmatpush1.bf16.msra.mxu0 %v1144
      %1171 = vmatprep.subr.bf16.mxu0 0
      %1172 = vmatpush1.bf16.msra.mxu0 %v1145
      %1173 = vmatprep.subr.bf16.mxu0 0
      %1174 = vmatpush1.bf16.msra.mxu0 %v1146
      %1175 = vmatprep.subr.bf16.mxu0 0
      %1176 = vmatpush1.bf16.msra.mxu0 %v1147
      %1177 = vmatprep.subr.bf16.mxu0 0
      %1178 = vmatpush1.bf16.msra.mxu0 %v1148
      %1179 = vmatprep.subr.bf16.mxu0 0
      %1180 = vmatpush1.bf16.msra.mxu0 0
      %1181 = vmatprep.subr.bf16.mxu0 0
      %1182 = vmatpush1.bf16.msra.mxu0 0
      %1183 = vmatprep.subr.bf16.mxu0 0
      %1184 = vmatpush1.bf16.msra.mxu0 0
      %1185 = vmatprep.subr.bf16.mxu0 0
      %1186 = vmatpush1.bf16.msra.mxu0 0
      %1187 = vmatprep.subr.bf16.mxu0 0
      %1188 = vmatpush1.bf16.msra.mxu0 0
      %1189 = vmatprep.subr.bf16.mxu0 0
      %1190 = vmatpush1.bf16.msra.mxu0 0
      %1191 = vmatprep.subr.bf16.mxu0 0
      %1192 = vmatpush1.bf16.msra.mxu0 0
      %1193 = vmatprep.subr.bf16.mxu0 0
      %1194 = vmatpush1.bf16.msra.mxu0 0
      %1195 = vmatprep.subr.bf16.mxu0 0
      %1196 = vmatpush1.bf16.msra.mxu0 0
      %1197 = vmatprep.subr.bf16.mxu0 0
      %1198 = vmatpush1.bf16.msra.mxu0 0
      %1199 = vmatprep.mubr.bf16.mxu0 0
      %1200 = vmatmul.mubr.bf16.gmra.mrb[0].mxu0 %v1156
      %v1201 = vpop.f32.mrb[0].mxu0
      %v1202 = vadd.f32 %v1117, %v1201
      %v1203 = vpop.f32.mrb[0].mxu0
      %v1204 = vpop.f32.mrb[0].mxu0
      %v1205 = vadd.f32 %v1117, %v1204
      %v1206 = vpop.f32.mrb[0].mxu0
      %1207 = vmatprep.mubr.bf16.mxu0 0
      %1208 = vmatmul.mubr.bf16.gmra.mrb[0].mxu0 %v1159
      %v1209 = vpop.f32.mrb[0].mxu0
      %v1210 = vadd.f32 %v1117, %v1209
      %v1211 = vpop.f32.mrb[0].mxu0
      %v1212 = vpop.f32.mrb[0].mxu0
      %v1213 = vadd.f32 %v1117, %v1212
      %v1214 = vpop.f32.mrb[0].mxu0
      %1215 = vmatprep.mubr.bf16.mxu0 0
      %1216 = vmatmul.mubr.bf16.gmra.mrb[0].mxu0 %v1162
      %v1217 = vpop.f32.mrb[0].mxu0
      %v1218 = vadd.f32 %v1117, %v1217
      %v1219 = vpop.f32.mrb[0].mxu0
      %v1220 = vpop.f32.mrb[0].mxu0
      %v1221 = vadd.f32 %v1117, %v1220
      %v1222 = vpop.f32.mrb[0].mxu0
      %1223 = vmatprep.mubr.bf16.mxu0 0
      %1224 = vmatmul.mubr.bf16.gmra.mrb[0].mxu0 %v1165
      %v1225 = vpop.f32.mrb[0].mxu0
      %v1226 = vadd.f32 %v1117, %v1225
      %v1227 = vpop.f32.mrb[0].mxu0
      %v1228 = vpop.f32.mrb[0].mxu0
      %v1229 = vadd.f32 %v1117, %v1228
      %v1230 = vpop.f32.mrb[0].mxu0
      %1231 = vdwg.mxu0
      %v1232 = vmax.f32 %v1202, 0.0
      %v1233 = vmax.f32 %v1205, 0.0
      %v1234 = vmax.f32 %v1210, 0.0
      %v1235 = vmax.f32 %v1213, 0.0
      %v1236 = vmax.f32 %v1218, 0.0
      %v1237 = vmax.f32 %v1221, 0.0
      %v1238 = vmax.f32 %v1226, 0.0
      %v1239 = vmax.f32 %v1229, 0.0
      %v1240 = vld [vmem:[%s553] sm:$0x1]
      %v1241 = vld [vmem:[%s556] sm:$0x1]
      %v1242 = vsel %vm684, %v1232, 0.0
      %1243 = vadd.xlane.f32.xlu0 %v1242
      %v1244 = vpop.xlane.xlu0 %1243
      %v1245 = vsel %vm684, %v1233, 0.0
      %1246 = vadd.xlane.f32.xlu0 %v1245
      %v1247 = vpop.xlane.xlu0 %1246
      %v1248 = vsel %vm684, %v1234, 0.0
      %1249 = vadd.xlane.f32.xlu0 %v1248
      %v1250 = vpop.xlane.xlu0 %1249
      %v1251 = vsel %vm684, %v1235, 0.0
      %1252 = vadd.xlane.f32.xlu0 %v1251
      %v1253 = vpop.xlane.xlu0 %1252
      %v1254 = vsel %vm684, %v1236, 0.0
      %1255 = vadd.xlane.f32.xlu0 %v1254
      %v1256 = vpop.xlane.xlu0 %1255
      %v1257 = vsel %vm684, %v1237, 0.0
      %1258 = vadd.xlane.f32.xlu0 %v1257
      %v1259 = vpop.xlane.xlu0 %1258
      %v1260 = vsel %vm684, %v1238, 0.0
      %1261 = vadd.xlane.f32.xlu0 %v1260
      %v1262 = vpop.xlane.xlu0 %1261
      %v1263 = vsel %vm684, %v1239, 0.0
      %1264 = vadd.xlane.f32.xlu0 %v1263
      %v1265 = vpop.xlane.xlu0 %1264
      %v1266 = vmul.f32 %v1244, %v873
      %v1267 = vmul.f32 %v1247, %v873
      %v1268 = vmul.f32 %v1250, %v873
      %v1269 = vmul.f32 %v1253, %v873
      %v1270 = vmul.f32 %v1256, %v873
      %v1271 = vmul.f32 %v1259, %v873
      %v1272 = vmul.f32 %v1262, %v873
      %v1273 = vmul.f32 %v1265, %v873
      %v1274 = vsub.f32 %v1232, %v1266
      %v1275 = vsub.f32 %v1233, %v1267
      %v1276 = vsub.f32 %v1234, %v1268
      %v1277 = vsub.f32 %v1235, %v1269
      %v1278 = vsub.f32 %v1236, %v1270
      %v1279 = vsub.f32 %v1237, %v1271
      %v1280 = vsub.f32 %v1238, %v1272
      %v1281 = vsub.f32 %v1239, %v1273
      %v1282 = vmul.f32 %v1274, %v1274
      %v1283 = vmul.f32 %v1275, %v1275
      %v1284 = vmul.f32 %v1276, %v1276
      %v1285 = vmul.f32 %v1277, %v1277
      %v1286 = vmul.f32 %v1278, %v1278
      %v1287 = vmul.f32 %v1279, %v1279
      %v1288 = vmul.f32 %v1280, %v1280
      %v1289 = vmul.f32 %v1281, %v1281
      %v1290 = vsel %vm684, %v1282, 0.0
      %1291 = vadd.xlane.f32.xlu0 %v1290
      %v1292 = vpop.xlane.xlu0 %1291
      %v1293 = vsel %vm684, %v1283, 0.0
      %1294 = vadd.xlane.f32.xlu0 %v1293
      %v1295 = vpop.xlane.xlu0 %1294
      %v1296 = vsel %vm684, %v1284, 0.0
      %1297 = vadd.xlane.f32.xlu0 %v1296
      %v1298 = vpop.xlane.xlu0 %1297
      %v1299 = vsel %vm684, %v1285, 0.0
      %1300 = vadd.xlane.f32.xlu0 %v1299
      %v1301 = vpop.xlane.xlu0 %1300
      %v1302 = vsel %vm684, %v1286, 0.0
      %1303 = vadd.xlane.f32.xlu0 %v1302
      %v1304 = vpop.xlane.xlu0 %1303
      %v1305 = vsel %vm684, %v1287, 0.0
      %1306 = vadd.xlane.f32.xlu0 %v1305
      %v1307 = vpop.xlane.xlu0 %1306
      %v1308 = vsel %vm684, %v1288, 0.0
      %1309 = vadd.xlane.f32.xlu0 %v1308
      %v1310 = vpop.xlane.xlu0 %1309
      %v1311 = vsel %vm684, %v1289, 0.0
      %1312 = vadd.xlane.f32.xlu0 %v1311
      %v1313 = vpop.xlane.xlu0 %1312
      %v1314 = vmul.f32 %v1292, %v873
      %v1315 = vmul.f32 %v1295, %v873
      %v1316 = vmul.f32 %v1298, %v873
      %v1317 = vmul.f32 %v1301, %v873
      %v1318 = vmul.f32 %v1304, %v873
      %v1319 = vmul.f32 %v1307, %v873
      %v1320 = vmul.f32 %v1310, %v873
      %v1321 = vmul.f32 %v1313, %v873
      %v1322 = vadd.f32 %v1314, 1e-05
      %v1323 = vadd.f32 %v1315, 1e-05
      %v1324 = vadd.f32 %v1316, 1e-05
      %v1325 = vadd.f32 %v1317, 1e-05
      %v1326 = vadd.f32 %v1318, 1e-05
      %v1327 = vadd.f32 %v1319, 1e-05
      %v1328 = vadd.f32 %v1320, 1e-05
      %v1329 = vadd.f32 %v1321, 1e-05
      %v1330 = vrsqrt.pop %v1322
      %v1331 = vrsqrt.pop %v1323
      %v1332 = vrsqrt.pop %v1324
      %v1333 = vrsqrt.pop %v1325
      %v1334 = vrsqrt.pop %v1326
      %v1335 = vrsqrt.pop %v1327
      %v1336 = vrsqrt.pop %v1328
      %v1337 = vrsqrt.pop %v1329
      %v1338 = vmul.f32 %v1274, %v1330
      %v1339 = vmul.f32 %v1275, %v1331
      %v1340 = vmul.f32 %v1276, %v1332
      %v1341 = vmul.f32 %v1277, %v1333
      %v1342 = vmul.f32 %v1278, %v1334
      %v1343 = vmul.f32 %v1279, %v1335
      %v1344 = vmul.f32 %v1280, %v1336
      %v1345 = vmul.f32 %v1281, %v1337
      %v1347 = vlaneseq
      %v1348 = vshrl.u32 %v1347, 7
      %v1349 = vsub.s32 0, %v1348
      %v1350 = vrot.slane %v1240, %v1349
      %v1352 = vmul.f32 %v1338, %v1350
      %v1353 = vmul.f32 %v1339, %v1350
      %v1354 = vmul.f32 %v1340, %v1350
      %v1355 = vmul.f32 %v1341, %v1350
      %v1356 = vmul.f32 %v1342, %v1350
      %v1357 = vmul.f32 %v1343, %v1350
      %v1358 = vmul.f32 %v1344, %v1350
      %v1359 = vmul.f32 %v1345, %v1350
      %v1361 = vlaneseq
      %v1362 = vshrl.u32 %v1361, 7
      %v1363 = vsub.s32 0, %v1362
      %v1364 = vrot.slane %v1241, %v1363
      %v1366 = vadd.f32 %v1352, %v1364
      %v1367 = vadd.f32 %v1353, %v1364
      %v1368 = vadd.f32 %v1354, %v1364
      %v1369 = vadd.f32 %v1355, %v1364
      %v1370 = vadd.f32 %v1356, %v1364
      %v1371 = vadd.f32 %v1357, %v1364
      %v1372 = vadd.f32 %v1358, %v1364
      %v1373 = vadd.f32 %v1359, %v1364
      %v1374 = vpack.c.bf16 %v1367, %v1366
      %v1375 = vpack.c.bf16 %v1369, %v1368
      %v1376 = vpack.c.bf16 %v1371, %v1370
      %v1377 = vpack.c.bf16 %v1373, %v1372
      %v1378 = vld [vmem:[%s561] sm:$0xf]
      %v1379 = vld [vmem:[%s561 + $0x4] sm:$0xf]
      %v1380 = vld [vmem:[%s561 + $0x8] sm:$0xf]
      %v1381 = vld [vmem:[%s561 + $0xc] sm:$0xf]
      %v1382 = vld [vmem:[%s564] sm:$0x1]
      %v1384 = vlaneseq
      %v1385 = vshrl.u32 %v1384, 7
      %v1386 = vsub.s32 0, %v1385
      %v1387 = vrot.slane %v1382, %v1386
      %v1393 = vunpack.c.l.b16 %v1378
      %v1394 = vunpack.c.l.b16 %v1379
      %v1395 = vunpack.c.l.b16 %v1380
      %v1396 = vunpack.c.l.b16 %v1381
      %v1397 = vpack.c.b16 %v1394, %v1393
      %v1398 = vpack.c.b16 %v1396, %v1395
      %v1402 = vsel %vm684, %v1374, 0
      %v1405 = vsel %vm684, %v1375, 0
      %v1408 = vsel %vm684, %v1376, 0
      %v1411 = vsel %vm684, %v1377, 0
      %1413 = vmatprep.subr.bf16.mxu0 0
      %1414 = vmatpush1.bf16.msra.mxu0 %v1397
      %1415 = vmatprep.subr.bf16.mxu0 0
      %1416 = vmatpush1.bf16.msra.mxu0 %v1398
      %1417 = vmatprep.subr.bf16.mxu0 0
      %1418 = vmatpush1.bf16.msra.mxu0 0
      %1419 = vmatprep.subr.bf16.mxu0 0
      %1420 = vmatpush1.bf16.msra.mxu0 0
      %1421 = vmatprep.subr.bf16.mxu0 0
      %1422 = vmatpush1.bf16.msra.mxu0 0
      %1423 = vmatprep.subr.bf16.mxu0 0
      %1424 = vmatpush1.bf16.msra.mxu0 0
      %1425 = vmatprep.subr.bf16.mxu0 0
      %1426 = vmatpush1.bf16.msra.mxu0 0
      %1427 = vmatprep.subr.bf16.mxu0 0
      %1428 = vmatpush1.bf16.msra.mxu0 0
      %1429 = vmatprep.subr.bf16.mxu0 0
      %1430 = vmatpush1.bf16.msra.mxu0 0
      %1431 = vmatprep.subr.bf16.mxu0 0
      %1432 = vmatpush1.bf16.msra.mxu0 0
      %1433 = vmatprep.subr.bf16.mxu0 0
      %1434 = vmatpush1.bf16.msra.mxu0 0
      %1435 = vmatprep.subr.bf16.mxu0 0
      %1436 = vmatpush1.bf16.msra.mxu0 0
      %1437 = vmatprep.subr.bf16.mxu0 0
      %1438 = vmatpush1.bf16.msra.mxu0 0
      %1439 = vmatprep.subr.bf16.mxu0 0
      %1440 = vmatpush1.bf16.msra.mxu0 0
      %1441 = vmatprep.subr.bf16.mxu0 0
      %1442 = vmatpush1.bf16.msra.mxu0 0
      %1443 = vmatprep.subr.bf16.mxu0 0
      %1444 = vmatpush1.bf16.msra.mxu0 0
      %1445 = vmatprep.mubr.bf16.mxu0 0
      %1446 = vmatmul.mubr.bf16.gmra.mrb[0].mxu0 %v1402
      %v1447 = vpop.f32.mrb[0].mxu0
      %v1448 = vadd.f32 %v1387, %v1447
      %v1449 = vpop.f32.mrb[0].mxu0
      %v1450 = vpop.f32.mrb[0].mxu0
      %v1451 = vadd.f32 %v1387, %v1450
      %v1452 = vpop.f32.mrb[0].mxu0
      %1453 = vmatprep.mubr.bf16.mxu0 0
      %1454 = vmatmul.mubr.bf16.gmra.mrb[0].mxu0 %v1405
      %v1455 = vpop.f32.mrb[0].mxu0
      %v1456 = vadd.f32 %v1387, %v1455
      %v1457 = vpop.f32.mrb[0].mxu0
      %v1458 = vpop.f32.mrb[0].mxu0
      %v1459 = vadd.f32 %v1387, %v1458
      %v1460 = vpop.f32.mrb[0].mxu0
      %1461 = vmatprep.mubr.bf16.mxu0 0
      %1462 = vmatmul.mubr.bf16.gmra.mrb[0].mxu0 %v1408
      %v1463 = vpop.f32.mrb[0].mxu0
      %v1464 = vadd.f32 %v1387, %v1463
      %v1465 = vpop.f32.mrb[0].mxu0
      %v1466 = vpop.f32.mrb[0].mxu0
      %v1467 = vadd.f32 %v1387, %v1466
      %v1468 = vpop.f32.mrb[0].mxu0
      %1469 = vmatprep.mubr.bf16.mxu0 0
      %1470 = vmatmul.mubr.bf16.gmra.mrb[0].mxu0 %v1411
      %v1471 = vpop.f32.mrb[0].mxu0
      %v1472 = vadd.f32 %v1387, %v1471
      %v1473 = vpop.f32.mrb[0].mxu0
      %v1474 = vpop.f32.mrb[0].mxu0
      %v1475 = vadd.f32 %v1387, %v1474
      %v1476 = vpop.f32.mrb[0].mxu0
      %1477 = vdwg.mxu0
      %v1478 = vlaneseq
      %v1479 = vshrl.u32 %v1478, 7
      %v1480 = vadd.s32 %v1479, 8
      %v1481 = vadd.s32 %v1479, 16
      %v1482 = vadd.s32 %v1479, 24
      %v1483 = vadd.s32 %v1479, 32
      %v1484 = vadd.s32 %v1479, 40
      %v1485 = vadd.s32 %v1479, 48
      %v1486 = vadd.s32 %v1479, 56
      %v1487 = vstv %s575
      %vm1488 = vcmp.ge.s32.totalorder %v1479, %v1487
      %vm1489 = vcmp.ge.s32.totalorder %v1480, %v1487
      %vm1490 = vcmp.ge.s32.totalorder %v1481, %v1487
      %vm1491 = vcmp.ge.s32.totalorder %v1482, %v1487
      %vm1492 = vcmp.ge.s32.totalorder %v1483, %v1487
      %vm1493 = vcmp.ge.s32.totalorder %v1484, %v1487
      %vm1494 = vcmp.ge.s32.totalorder %v1485, %v1487
      %vm1495 = vcmp.ge.s32.totalorder %v1486, %v1487
      %v1496 = vsel %vm1488, 0.0, %v1448
      %v1497 = vsel %vm1489, 0.0, %v1451
      %v1498 = vsel %vm1490, 0.0, %v1456
      %v1499 = vsel %vm1491, 0.0, %v1459
      %v1500 = vsel %vm1492, 0.0, %v1464
      %v1501 = vsel %vm1493, 0.0, %v1467
      %v1502 = vsel %vm1494, 0.0, %v1472
      %v1503 = vsel %vm1495, 0.0, %v1475
      %vm1504 = vcmask 7168
      %1505 = vst.msk [vmem:[%s573] sm:$0xff] %vm1504, %v1496
      %1506 = vst.msk [vmem:[%s573 + $0x8] sm:$0xff] %vm1504, %v1497
      %1507 = vst.msk [vmem:[%s573 + $0x10] sm:$0xff] %vm1504, %v1498
      %1508 = vst.msk [vmem:[%s573 + $0x18] sm:$0xff] %vm1504, %v1499
      %1509 = vst.msk [vmem:[%s573 + $0x20] sm:$0xff] %vm1504, %v1500
      %1510 = vst.msk [vmem:[%s573 + $0x28] sm:$0xff] %vm1504, %v1501
      %1511 = vst.msk [vmem:[%s573 + $0x30] sm:$0xff] %vm1504, %v1502
      %1512 = vst.msk [vmem:[%s573 + $0x38] sm:$0xff] %vm1504, %v1503
      %p1513 = scmp.lt.s32.totalorder %s33, 1
      %s1514 = scalar_select %p1513, %s33, 1
      %p1515 = scmp.lt.s32.totalorder %s34, 1
      %s1516 = scalar_select %p1515, %s34, 1
      %s1517 = smul.addr %s1516, 8
      %s1518 = smul.addr %s1514, 16
      %s1519 = sadd.s32 %s1517, %s1518
      %s1520 = smul.addr %s1519, 8
      %s1521 = scalar_lea.vmem %s12, %s1520
      // Predicated region
      $region65: #{fastspeech2_forward.10} parent=63 // pred_check
        %p1522 = pneg %p347
      $region66: #{fastspeech2_forward.10} parent=63 // pred_check_branch
        %1524 = sbr.rel (%p1522) target = $region68
      $region67: #{fastspeech2_forward.10} parent=63 // pred_region
        _
      $region68: #{fastspeech2_forward.10} parent=63 // pred_fallthru
        _
    $region64: #{fastspeech2_forward.10} parent=5 // pred_fallthru
      _
    %p1525 = scmp.le.s32.totalorder 2, %s24
    // Predicated region
    $region69: #{fastspeech2_forward.10} parent=5 // pred_check
      %p1526 = pneg %p1525
    $region70: #{fastspeech2_forward.10} parent=5 // pred_check_branch
      %1528 = sbr.rel (%p1526) target = $region72
    $region71: #{fastspeech2_forward.10} parent=5 // pred_region
      %s1529 = ssub.s32 %s24, 2
      // Predicated region
      $region73: #{fastspeech2_forward.10} parent=71 // pred_check
        %p1530 = pneg %p353
      $region74: #{fastspeech2_forward.10} parent=71 // pred_check_branch
        %1532 = sbr.rel (%p1530) target = $region76
      $region75: #{fastspeech2_forward.10} parent=71 // pred_region
        %p1533 = scmp.lt.s32.totalorder %s35, 1
        %s1534 = scalar_select %p1533, %s35, 1
        %p1535 = scmp.lt.s32.totalorder %s36, 1
        %s1536 = scalar_select %p1535, %s36, 1
        %s1537 = smul.addr %s1536, 8
        %s1538 = smul.addr %s1534, 16
        %s1539 = sadd.s32 %s1537, %s1538
        %s1540 = smul.addr %s1539, 8
        %s1541 = scalar_lea.vmem %s12, %s1540
      $region76: #{fastspeech2_forward.10} parent=71 // pred_fallthru
        _
    $region72: #{fastspeech2_forward.10} parent=5 // pred_fallthru
      _
  $region6: #{fastspeech2_forward.10} parent=0 // loop_footer
    %s28 = sadd.s32 1, %s24
  $region7: #{fastspeech2_forward.10} parent=0 // loop_footer_branch
    %23 = sbr.rel target = $region3
  $region8: #{fastspeech2_forward.10} parent=0 // loop_exit
    _

// kernel: fastspeech2_forward.13
$region0: #{fastspeech2_forward.13}
  #allocation0 [shape = 'u32[]', space=smem, size = 0x4, offset = 0x4, fixed_abs, tag = 'smem constant byte address 0x4 - core index']
  #allocation1 [shape = 'u32[144,128]{1,0:T(1,128)}', space=vmem, size = 0x12000, scoped, tag = 'internal scratch']
  %s0 = inlined_call_operand.vmem [shape: f32[2,64,32], index: 0, kind: input, shape index: {}]
  %s1 = inlined_call_operand.vmem [shape: bf16[32,16], index: 1, kind: input, shape index: {}]
  %s2 = inlined_call_operand.vmem [shape: f32[1,16], index: 2, kind: input, shape index: {}]
  %s3 = inlined_call_operand.vmem [shape: bf16[80,32], index: 3, kind: input, shape index: {}]
  %s4 = inlined_call_operand.vmem [shape: f32[1,32], index: 4, kind: input, shape index: {}]
  %s5 = inlined_call_operand.vmem [shape: bf16[160,32], index: 5, kind: input, shape index: {}]
  %s6 = inlined_call_operand.vmem [shape: f32[1,32], index: 6, kind: input, shape index: {}]
  %s7 = inlined_call_operand.vmem [shape: bf16[160,32], index: 7, kind: input, shape index: {}]
  %s8 = inlined_call_operand.vmem [shape: f32[1,32], index: 8, kind: input, shape index: {}]
  %s9 = inlined_call_operand.vmem [shape: bf16[160,32], index: 9, kind: input, shape index: {}]
  %s10 = inlined_call_operand.vmem [shape: f32[1,32], index: 10, kind: input, shape index: {}]
  %s11 = inlined_call_operand.vmem [shape: bf16[160,16], index: 11, kind: input, shape index: {}]
  %s12 = inlined_call_operand.vmem [shape: f32[1,16], index: 12, kind: input, shape index: {}]
  %s13 = inlined_call_operand.vmem [shape: f32[2,64,16], index: 13, kind: output, shape index: {}]
  %s14 = sld [smem:[#allocation0]]
  $region85: #{fastspeech2_forward.13} parent=0
    _
  %s16 = ssub.s32 1, %s14
  %s17 = scalar_select 0, %s16, %s14
  loop: start=0, step=1, limit=4
  $region2: #{fastspeech2_forward.13} parent=0 // loop_pre_header
    _
  $region3: #{fastspeech2_forward.13} parent=0 // loop_header
    %s19 = sphi 0, %s23
    %p20 = scmp.ge.s32.totalorder %s19, 4
    %s29 = sphi 0, %s31
    %s32 = sphi 0, %s29
    %s33 = sphi 0, %s32
    %s49 = sphi 0, %s33
    %s53 = sphi 0, %s53
    %s55 = sphi 0, %s53
    %s56 = sphi 0, %s55
    %s70 = sphi 0, %s56
    %s74 = sphi 0, %s74
    %s76 = sphi 0, %s74
    %s77 = sphi 0, %s76
    %s91 = sphi 0, %s77
    %s95 = sphi 0, %s95
    %s97 = sphi 0, %s95
    %s98 = sphi 0, %s97
    %s112 = sphi 0, %s98
    %s116 = sphi 0, %s116
    %s118 = sphi 0, %s116
    %s119 = sphi 0, %s118
    %s133 = sphi 0, %s119
    %s137 = sphi 0, %s137
    %s139 = sphi 0, %s137
    %s140 = sphi 0, %s139
    %s154 = sphi 0, %s140
    %s158 = sphi 0, %s158
    %s160 = sphi 0, %s158
    %s161 = sphi 0, %s160
    %s175 = sphi 0, %s161
    %s179 = sphi 0, %s179
    %s181 = sphi 0, %s179
    %s182 = sphi 0, %s181
    %s196 = sphi 0, %s182
    %s200 = sphi 0, %s200
    %s202 = sphi 0, %s200
    %s203 = sphi 0, %s202
    %s217 = sphi 0, %s203
    %s221 = sphi 0, %s221
    %s223 = sphi 0, %s221
    %s224 = sphi 0, %s223
    %s238 = sphi 0, %s224
    %s242 = sphi 0, %s242
    %s244 = sphi 0, %s242
    %s245 = sphi 0, %s244
    %s259 = sphi 0, %s245
    %s263 = sphi 0, %s263
    %s265 = sphi 0, %s263
    %s266 = sphi 0, %s265
    %s280 = sphi 0, %s266
    %s284 = sphi 0, %s284
    %s286 = sphi 0, %s284
    %s287 = sphi 0, %s286
    %s301 = sphi 0, %s287
    %s307 = sphi 0, %s309
    %s310 = sphi 0, %s307
    %s311 = sphi 0, %s310
    %s327 = sphi 0, %s311
  $region4: #{fastspeech2_forward.13} parent=0 // loop_header_branch
    %22 = sbr.rel (%p20) target = $region8
  $region5: #{fastspeech2_forward.13} parent=0 // loop_body
    %s24 = ssub.s32 %s19, 1
    %s25 = ssub.s32 %s19, 2
    %s26 = sadd.s32 %s19, 1
    %s27 = ssub.s32 %s19, %s26
    %p28 = scmp.eq.s32.totalorder %s27, 0
    %s30 = sadd.s32 %s29, 1
    %s31 = scalar_select %p28, %s29, %s30
    %p34 = pneg %p28
    %p35 = scmp.eq.s32.totalorder %s19, 1
    %p36 = por %p34, %p35
    %p37 = scmp.ne.s32.totalorder %s29, %s32
    %p38 = scmp.eq.s32.totalorder %s19, 0
    %p39 = por %p37, %p38
    %p40 = scmp.ne.s32.totalorder %s29, %s32
    %p41 = scmp.eq.s32.totalorder %s24, 1
    %p42 = por %p40, %p41
    %p43 = scmp.ne.s32.totalorder %s32, %s33
    %p44 = scmp.eq.s32.totalorder %s24, 0
    %p45 = por %p43, %p44
    %p46 = scmp.ne.s32.totalorder %s32, %s33
    %p47 = scmp.eq.s32.totalorder %s25, 1
    %p48 = por %p46, %p47
    %p50 = scmp.ne.s32.totalorder %s33, %s49
    %p51 = scmp.eq.s32.totalorder %s25, 0
    %p52 = por %p50, %p51
    %s54 = sadd.s32 %s53, 1
    %p57 = scmp.eq.s32.totalorder %s19, 1
    %p58 = scmp.ne.s32.totalorder %s53, %s55
    %p59 = scmp.eq.s32.totalorder %s19, 0
    %p60 = por %p58, %p59
    %p61 = scmp.ne.s32.totalorder %s53, %s55
    %p62 = scmp.eq.s32.totalorder %s24, 1
    %p63 = por %p61, %p62
    %p64 = scmp.ne.s32.totalorder %s55, %s56
    %p65 = scmp.eq.s32.totalorder %s24, 0
    %p66 = por %p64, %p65
    %p67 = scmp.ne.s32.totalorder %s55, %s56
    %p68 = scmp.eq.s32.totalorder %s25, 1
    %p69 = por %p67, %p68
    %p71 = scmp.ne.s32.totalorder %s56, %s70
    %p72 = scmp.eq.s32.totalorder %s25, 0
    %p73 = por %p71, %p72
    %s75 = sadd.s32 %s74, 1
    %p78 = scmp.eq.s32.totalorder %s19, 1
    %p79 = scmp.ne.s32.totalorder %s74, %s76
    %p80 = scmp.eq.s32.totalorder %s19, 0
    %p81 = por %p79, %p80
    %p82 = scmp.ne.s32.totalorder %s74, %s76
    %p83 = scmp.eq.s32.totalorder %s24, 1
    %p84 = por %p82, %p83
    %p85 = scmp.ne.s32.totalorder %s76, %s77
    %p86 = scmp.eq.s32.totalorder %s24, 0
    %p87 = por %p85, %p86
    %p88 = scmp.ne.s32.totalorder %s76, %s77
    %p89 = scmp.eq.s32.totalorder %s25, 1
    %p90 = por %p88, %p89
    %p92 = scmp.ne.s32.totalorder %s77, %s91
    %p93 = scmp.eq.s32.totalorder %s25, 0
    %p94 = por %p92, %p93
    %s96 = sadd.s32 %s95, 1
    %p99 = scmp.eq.s32.totalorder %s19, 1
    %p100 = scmp.ne.s32.totalorder %s95, %s97
    %p101 = scmp.eq.s32.totalorder %s19, 0
    %p102 = por %p100, %p101
    %p103 = scmp.ne.s32.totalorder %s95, %s97
    %p104 = scmp.eq.s32.totalorder %s24, 1
    %p105 = por %p103, %p104
    %p106 = scmp.ne.s32.totalorder %s97, %s98
    %p107 = scmp.eq.s32.totalorder %s24, 0
    %p108 = por %p106, %p107
    %p109 = scmp.ne.s32.totalorder %s97, %s98
    %p110 = scmp.eq.s32.totalorder %s25, 1
    %p111 = por %p109, %p110
    %p113 = scmp.ne.s32.totalorder %s98, %s112
    %p114 = scmp.eq.s32.totalorder %s25, 0
    %p115 = por %p113, %p114
    %s117 = sadd.s32 %s116, 1
    %p120 = scmp.eq.s32.totalorder %s19, 1
    %p121 = scmp.ne.s32.totalorder %s116, %s118
    %p122 = scmp.eq.s32.totalorder %s19, 0
    %p123 = por %p121, %p122
    %p124 = scmp.ne.s32.totalorder %s116, %s118
    %p125 = scmp.eq.s32.totalorder %s24, 1
    %p126 = por %p124, %p125
    %p127 = scmp.ne.s32.totalorder %s118, %s119
    %p128 = scmp.eq.s32.totalorder %s24, 0
    %p129 = por %p127, %p128
    %p130 = scmp.ne.s32.totalorder %s118, %s119
    %p131 = scmp.eq.s32.totalorder %s25, 1
    %p132 = por %p130, %p131
    %p134 = scmp.ne.s32.totalorder %s119, %s133
    %p135 = scmp.eq.s32.totalorder %s25, 0
    %p136 = por %p134, %p135
    %s138 = sadd.s32 %s137, 1
    %p141 = scmp.eq.s32.totalorder %s19, 1
    %p142 = scmp.ne.s32.totalorder %s137, %s139
    %p143 = scmp.eq.s32.totalorder %s19, 0
    %p144 = por %p142, %p143
    %p145 = scmp.ne.s32.totalorder %s137, %s139
    %p146 = scmp.eq.s32.totalorder %s24, 1
    %p147 = por %p145, %p146
    %p148 = scmp.ne.s32.totalorder %s139, %s140
    %p149 = scmp.eq.s32.totalorder %s24, 0
    %p150 = por %p148, %p149
    %p151 = scmp.ne.s32.totalorder %s139, %s140
    %p152 = scmp.eq.s32.totalorder %s25, 1
    %p153 = por %p151, %p152
    %p155 = scmp.ne.s32.totalorder %s140, %s154
    %p156 = scmp.eq.s32.totalorder %s25, 0
    %p157 = por %p155, %p156
    %s159 = sadd.s32 %s158, 1
    %p162 = scmp.eq.s32.totalorder %s19, 1
    %p163 = scmp.ne.s32.totalorder %s158, %s160
    %p164 = scmp.eq.s32.totalorder %s19, 0
    %p165 = por %p163, %p164
    %p166 = scmp.ne.s32.totalorder %s158, %s160
    %p167 = scmp.eq.s32.totalorder %s24, 1
    %p168 = por %p166, %p167
    %p169 = scmp.ne.s32.totalorder %s160, %s161
    %p170 = scmp.eq.s32.totalorder %s24, 0
    %p171 = por %p169, %p170
    %p172 = scmp.ne.s32.totalorder %s160, %s161
    %p173 = scmp.eq.s32.totalorder %s25, 1
    %p174 = por %p172, %p173
    %p176 = scmp.ne.s32.totalorder %s161, %s175
    %p177 = scmp.eq.s32.totalorder %s25, 0
    %p178 = por %p176, %p177
    %s180 = sadd.s32 %s179, 1
    %p183 = scmp.eq.s32.totalorder %s19, 1
    %p184 = scmp.ne.s32.totalorder %s179, %s181
    %p185 = scmp.eq.s32.totalorder %s19, 0
    %p186 = por %p184, %p185
    %p187 = scmp.ne.s32.totalorder %s179, %s181
    %p188 = scmp.eq.s32.totalorder %s24, 1
    %p189 = por %p187, %p188
    %p190 = scmp.ne.s32.totalorder %s181, %s182
    %p191 = scmp.eq.s32.totalorder %s24, 0
    %p192 = por %p190, %p191
    %p193 = scmp.ne.s32.totalorder %s181, %s182
    %p194 = scmp.eq.s32.totalorder %s25, 1
    %p195 = por %p193, %p194
    %p197 = scmp.ne.s32.totalorder %s182, %s196
    %p198 = scmp.eq.s32.totalorder %s25, 0
    %p199 = por %p197, %p198
    %s201 = sadd.s32 %s200, 1
    %p204 = scmp.eq.s32.totalorder %s19, 1
    %p205 = scmp.ne.s32.totalorder %s200, %s202
    %p206 = scmp.eq.s32.totalorder %s19, 0
    %p207 = por %p205, %p206
    %p208 = scmp.ne.s32.totalorder %s200, %s202
    %p209 = scmp.eq.s32.totalorder %s24, 1
    %p210 = por %p208, %p209
    %p211 = scmp.ne.s32.totalorder %s202, %s203
    %p212 = scmp.eq.s32.totalorder %s24, 0
    %p213 = por %p211, %p212
    %p214 = scmp.ne.s32.totalorder %s202, %s203
    %p215 = scmp.eq.s32.totalorder %s25, 1
    %p216 = por %p214, %p215
    %p218 = scmp.ne.s32.totalorder %s203, %s217
    %p219 = scmp.eq.s32.totalorder %s25, 0
    %p220 = por %p218, %p219
    %s222 = sadd.s32 %s221, 1
    %p225 = scmp.eq.s32.totalorder %s19, 1
    %p226 = scmp.ne.s32.totalorder %s221, %s223
    %p227 = scmp.eq.s32.totalorder %s19, 0
    %p228 = por %p226, %p227
    %p229 = scmp.ne.s32.totalorder %s221, %s223
    %p230 = scmp.eq.s32.totalorder %s24, 1
    %p231 = por %p229, %p230
    %p232 = scmp.ne.s32.totalorder %s223, %s224
    %p233 = scmp.eq.s32.totalorder %s24, 0
    %p234 = por %p232, %p233
    %p235 = scmp.ne.s32.totalorder %s223, %s224
    %p236 = scmp.eq.s32.totalorder %s25, 1
    %p237 = por %p235, %p236
    %p239 = scmp.ne.s32.totalorder %s224, %s238
    %p240 = scmp.eq.s32.totalorder %s25, 0
    %p241 = por %p239, %p240
    %s243 = sadd.s32 %s242, 1
    %p246 = scmp.eq.s32.totalorder %s19, 1
    %p247 = scmp.ne.s32.totalorder %s242, %s244
    %p248 = scmp.eq.s32.totalorder %s19, 0
    %p249 = por %p247, %p248
    %p250 = scmp.ne.s32.totalorder %s242, %s244
    %p251 = scmp.eq.s32.totalorder %s24, 1
    %p252 = por %p250, %p251
    %p253 = scmp.ne.s32.totalorder %s244, %s245
    %p254 = scmp.eq.s32.totalorder %s24, 0
    %p255 = por %p253, %p254
    %p256 = scmp.ne.s32.totalorder %s244, %s245
    %p257 = scmp.eq.s32.totalorder %s25, 1
    %p258 = por %p256, %p257
    %p260 = scmp.ne.s32.totalorder %s245, %s259
    %p261 = scmp.eq.s32.totalorder %s25, 0
    %p262 = por %p260, %p261
    %s264 = sadd.s32 %s263, 1
    %p267 = scmp.eq.s32.totalorder %s19, 1
    %p268 = scmp.ne.s32.totalorder %s263, %s265
    %p269 = scmp.eq.s32.totalorder %s19, 0
    %p270 = por %p268, %p269
    %p271 = scmp.ne.s32.totalorder %s263, %s265
    %p272 = scmp.eq.s32.totalorder %s24, 1
    %p273 = por %p271, %p272
    %p274 = scmp.ne.s32.totalorder %s265, %s266
    %p275 = scmp.eq.s32.totalorder %s24, 0
    %p276 = por %p274, %p275
    %p277 = scmp.ne.s32.totalorder %s265, %s266
    %p278 = scmp.eq.s32.totalorder %s25, 1
    %p279 = por %p277, %p278
    %p281 = scmp.ne.s32.totalorder %s266, %s280
    %p282 = scmp.eq.s32.totalorder %s25, 0
    %p283 = por %p281, %p282
    %s285 = sadd.s32 %s284, 1
    %p288 = scmp.eq.s32.totalorder %s19, 1
    %p289 = scmp.ne.s32.totalorder %s284, %s286
    %p290 = scmp.eq.s32.totalorder %s19, 0
    %p291 = por %p289, %p290
    %p292 = scmp.ne.s32.totalorder %s284, %s286
    %p293 = scmp.eq.s32.totalorder %s24, 1
    %p294 = por %p292, %p293
    %p295 = scmp.ne.s32.totalorder %s286, %s287
    %p296 = scmp.eq.s32.totalorder %s24, 0
    %p297 = por %p295, %p296
    %p298 = scmp.ne.s32.totalorder %s286, %s287
    %p299 = scmp.eq.s32.totalorder %s25, 1
    %p300 = por %p298, %p299
    %p302 = scmp.ne.s32.totalorder %s287, %s301
    %p303 = scmp.eq.s32.totalorder %s25, 0
    %p304 = por %p302, %p303
    %s305 = ssub.s32 %s19, %s26
    %p306 = scmp.eq.s32.totalorder %s305, 0
    %s308 = sadd.s32 %s307, 1
    %s309 = scalar_select %p306, %s307, %s308
    %p312 = pneg %p306
    %p313 = scmp.eq.s32.totalorder %s19, 1
    %p314 = por %p312, %p313
    %p315 = scmp.ne.s32.totalorder %s307, %s310
    %p316 = scmp.eq.s32.totalorder %s19, 0
    %p317 = por %p315, %p316
    %p318 = scmp.ne.s32.totalorder %s307, %s310
    %p319 = scmp.eq.s32.totalorder %s24, 1
    %p320 = por %p318, %p319
    %p321 = scmp.ne.s32.totalorder %s310, %s311
    %p322 = scmp.eq.s32.totalorder %s24, 0
    %p323 = por %p321, %p322
    %p324 = scmp.ne.s32.totalorder %s310, %s311
    %p325 = scmp.eq.s32.totalorder %s25, 1
    %p326 = por %p324, %p325
    %p328 = scmp.ne.s32.totalorder %s311, %s327
    %p329 = scmp.eq.s32.totalorder %s25, 0
    %p330 = por %p328, %p329
    %p331 = scmp.le.s32.totalorder 1, %s19
    %p332 = scmp.lt.s32.totalorder %s19, 3
    %p333 = pnand %p331, %p332
    %p334 = pneg %p333
    // Predicated region
    $region9: #{fastspeech2_forward.13} parent=5 // pred_check
      _
    $region10: #{fastspeech2_forward.13} parent=5 // pred_check_branch
      %336 = sbr.rel (%p333) target = $region12
    $region11: #{fastspeech2_forward.13} parent=5 // pred_region
      %s337 = ssub.s32 %s19, 1
      // Predicated region
      $region13: #{fastspeech2_forward.13} parent=11 // pred_check
        %p338 = pneg %p66
      $region14: #{fastspeech2_forward.13} parent=11 // pred_check_branch
        %340 = sbr.rel (%p338) target = $region16
      $region15: #{fastspeech2_forward.13} parent=11 // pred_region
        _
      $region16: #{fastspeech2_forward.13} parent=11 // pred_fallthru
        _
      // Predicated region
      $region17: #{fastspeech2_forward.13} parent=11 // pred_check
        %p341 = pneg %p87
      $region18: #{fastspeech2_forward.13} parent=11 // pred_check_branch
        %343 = sbr.rel (%p341) target = $region20
      $region19: #{fastspeech2_forward.13} parent=11 // pred_region
        _
      $region20: #{fastspeech2_forward.13} parent=11 // pred_fallthru
        _
      // Predicated region
      $region21: #{fastspeech2_forward.13} parent=11 // pred_check
        %p344 = pneg %p108
      $region22: #{fastspeech2_forward.13} parent=11 // pred_check_branch
        %346 = sbr.rel (%p344) target = $region24
      $region23: #{fastspeech2_forward.13} parent=11 // pred_region
        _
      $region24: #{fastspeech2_forward.13} parent=11 // pred_fallthru
        _
      // Predicated region
      $region25: #{fastspeech2_forward.13} parent=11 // pred_check
        %p347 = pneg %p129
      $region26: #{fastspeech2_forward.13} parent=11 // pred_check_branch
        %349 = sbr.rel (%p347) target = $region28
      $region27: #{fastspeech2_forward.13} parent=11 // pred_region
        _
      $region28: #{fastspeech2_forward.13} parent=11 // pred_fallthru
        _
      // Predicated region
      $region29: #{fastspeech2_forward.13} parent=11 // pred_check
        %p350 = pneg %p150
      $region30: #{fastspeech2_forward.13} parent=11 // pred_check_branch
        %352 = sbr.rel (%p350) target = $region32
      $region31: #{fastspeech2_forward.13} parent=11 // pred_region
        _
      $region32: #{fastspeech2_forward.13} parent=11 // pred_fallthru
        _
      // Predicated region
      $region33: #{fastspeech2_forward.13} parent=11 // pred_check
        %p353 = pneg %p171
      $region34: #{fastspeech2_forward.13} parent=11 // pred_check_branch
        %355 = sbr.rel (%p353) target = $region36
      $region35: #{fastspeech2_forward.13} parent=11 // pred_region
        _
      $region36: #{fastspeech2_forward.13} parent=11 // pred_fallthru
        _
      // Predicated region
      $region37: #{fastspeech2_forward.13} parent=11 // pred_check
        %p356 = pneg %p192
      $region38: #{fastspeech2_forward.13} parent=11 // pred_check_branch
        %358 = sbr.rel (%p356) target = $region40
      $region39: #{fastspeech2_forward.13} parent=11 // pred_region
        _
      $region40: #{fastspeech2_forward.13} parent=11 // pred_fallthru
        _
      // Predicated region
      $region41: #{fastspeech2_forward.13} parent=11 // pred_check
        %p359 = pneg %p213
      $region42: #{fastspeech2_forward.13} parent=11 // pred_check_branch
        %361 = sbr.rel (%p359) target = $region44
      $region43: #{fastspeech2_forward.13} parent=11 // pred_region
        _
      $region44: #{fastspeech2_forward.13} parent=11 // pred_fallthru
        _
      // Predicated region
      $region45: #{fastspeech2_forward.13} parent=11 // pred_check
        %p362 = pneg %p234
      $region46: #{fastspeech2_forward.13} parent=11 // pred_check_branch
        %364 = sbr.rel (%p362) target = $region48
      $region47: #{fastspeech2_forward.13} parent=11 // pred_region
        _
      $region48: #{fastspeech2_forward.13} parent=11 // pred_fallthru
        _
      // Predicated region
      $region49: #{fastspeech2_forward.13} parent=11 // pred_check
        %p365 = pneg %p255
      $region50: #{fastspeech2_forward.13} parent=11 // pred_check_branch
        %367 = sbr.rel (%p365) target = $region52
      $region51: #{fastspeech2_forward.13} parent=11 // pred_region
        _
      $region52: #{fastspeech2_forward.13} parent=11 // pred_fallthru
        _
      // Predicated region
      $region53: #{fastspeech2_forward.13} parent=11 // pred_check
        %p368 = pneg %p276
      $region54: #{fastspeech2_forward.13} parent=11 // pred_check_branch
        %370 = sbr.rel (%p368) target = $region56
      $region55: #{fastspeech2_forward.13} parent=11 // pred_region
        _
      $region56: #{fastspeech2_forward.13} parent=11 // pred_fallthru
        _
      // Predicated region
      $region57: #{fastspeech2_forward.13} parent=11 // pred_check
        %p371 = pneg %p297
      $region58: #{fastspeech2_forward.13} parent=11 // pred_check_branch
        %373 = sbr.rel (%p371) target = $region60
      $region59: #{fastspeech2_forward.13} parent=11 // pred_region
        _
      $region60: #{fastspeech2_forward.13} parent=11 // pred_fallthru
        _
    $region12: #{fastspeech2_forward.13} parent=5 // pred_fallthru
      _
    %p374 = scmp.lt.s32.totalorder %s19, 2
    // Predicated region
    $region61: #{fastspeech2_forward.13} parent=5 // pred_check
      %p375 = pneg %p374
    $region62: #{fastspeech2_forward.13} parent=5 // pred_check_branch
      %377 = sbr.rel (%p375) target = $region64
    $region63: #{fastspeech2_forward.13} parent=5 // pred_region
      // Predicated region
      $region65: #{fastspeech2_forward.13} parent=63 // pred_check
        %p378 = pneg %p39
      $region66: #{fastspeech2_forward.13} parent=63 // pred_check_branch
        %380 = sbr.rel (%p378) target = $region68
      $region67: #{fastspeech2_forward.13} parent=63 // pred_region
        %p381 = scmp.lt.s32.totalorder %s19, 1
        %s382 = scalar_select %p381, %s19, 1
        %s383 = smul.addr %s382, 8
        %s384 = smul.addr %s383, 8
        %s385 = scalar_lea.vmem %s0, %s384
      $region68: #{fastspeech2_forward.13} parent=63 // pred_fallthru
        _
    $region64: #{fastspeech2_forward.13} parent=5 // pred_fallthru
      _
    %p386 = scmp.le.s32.totalorder 1, %s19
    %p387 = scmp.lt.s32.totalorder %s19, 3
    %p388 = pnand %p386, %p387
    %p389 = pneg %p388
    // Predicated region
    $region69: #{fastspeech2_forward.13} parent=5 // pred_check
      _
    $region70: #{fastspeech2_forward.13} parent=5 // pred_check_branch
      %391 = sbr.rel (%p388) target = $region72
    $region71: #{fastspeech2_forward.13} parent=5 // pred_region
      %s392 = ssub.s32 %s19, 1
      %p393 = scmp.lt.s32.totalorder %s24, 1
      %s394 = scalar_select %p393, %s24, 1
      %s395 = smul.addr %s394, 8
      %s396 = smul.addr %s395, 8
      %s397 = scalar_lea.vmem %s0, %s396
      %p398 = pneg %p45
      %p399 = pneg %p42
      %p400 = pneg %p66
      %p401 = pneg %p63
      %p402 = pneg %p87
      %p403 = pneg %p84
      %p404 = pneg %p108
      %p405 = pneg %p105
      %p406 = pneg %p129
      %p407 = pneg %p126
      %p408 = pneg %p150
      %p409 = pneg %p147
      %p410 = pneg %p171
      %p411 = pneg %p168
      %p412 = pneg %p192
      %p413 = pneg %p189
      %p414 = pneg %p213
      %p415 = pneg %p210
      %p416 = pneg %p234
      %p417 = pneg %p231
      %p418 = pneg %p255
      %p419 = pneg %p252
      %p420 = pneg %p276
      %p421 = pneg %p273
      %p422 = pneg %p297
      %p423 = pneg %p294
      %p424 = pneg %p323
      %p425 = pneg %p320
      %p426 = scmp.lt.s32.totalorder %s24, 1
      %s427 = scalar_select %p426, %s24, 1
      %s428 = smul.addr %s427, 8
      %s429 = smul.addr %s428, 8
      %s430 = scalar_lea.vmem %s13, %s429
      %p431 = scmp.lt.s32.totalorder %s24, 1
      %s432 = scalar_select %p431, %s24, 1
      %s433 = smul.addr %s432, 8
      %s434 = smul.addr %s433, 8
      %s435 = scalar_lea.vmem %s0, %s434
      %p436 = scmp.lt.s32.totalorder %s24, 1
      %s437 = scalar_select %p436, %s24, 1
      %s438 = smul.addr %s437, 8
      %s439 = smul.addr %s438, 8
      %s440 = scalar_lea.vmem %s13, %s439
      %v442 = vld [vmem:[%s435] sm:$0xff]
      %v443 = vld [vmem:[%s435 + $0x8] sm:$0xff]
      %v444 = vld [vmem:[%s435 + $0x10] sm:$0xff]
      %v445 = vld [vmem:[%s435 + $0x18] sm:$0xff]
      %v446 = vld [vmem:[%s435 + $0x20] sm:$0xff]
      %v447 = vld [vmem:[%s435 + $0x28] sm:$0xff]
      %v448 = vld [vmem:[%s435 + $0x30] sm:$0xff]
      %v449 = vld [vmem:[%s435 + $0x38] sm:$0xff]
      %v450 = vpack.c.bf16 %v443, %v442
      %v451 = vpack.c.bf16 %v445, %v444
      %v452 = vpack.c.bf16 %v447, %v446
      %v453 = vpack.c.bf16 %v449, %v448
      %v454 = vld [vmem:[%s1] sm:$0xf]
      %v455 = vld [vmem:[%s1 + $0x4] sm:$0xf]
      %v456 = vld [vmem:[%s1 + $0x8] sm:$0xf]
      %v457 = vld [vmem:[%s1 + $0xc] sm:$0xf]
      %v458 = vld [vmem:[%s2] sm:$0x1]
      %v460 = vlaneseq
      %v461 = vshrl.u32 %v460, 7
      %v462 = vsub.s32 0, %v461
      %v463 = vrot.slane %v458, %v462
      %v469 = vunpack.c.l.b16 %v454
      %v470 = vunpack.c.l.b16 %v455
      %v471 = vunpack.c.l.b16 %v456
      %v472 = vunpack.c.l.b16 %v457
      %v473 = vpack.c.b16 %v470, %v469
      %v474 = vpack.c.b16 %v472, %v471
      %vm477 = vcmask 261120
      %v479 = vsel %vm477, %v450, 0
      %v482 = vsel %vm477, %v451, 0
      %v485 = vsel %vm477, %v452, 0
      %v488 = vsel %vm477, %v453, 0
      %490 = vmatprep.subr.bf16.mxu0 0
      %491 = vmatpush1.bf16.msra.mxu0 %v473
      %492 = vmatprep.subr.bf16.mxu0 0
      %493 = vmatpush1.bf16.msra.mxu0 %v474
      %494 = vmatprep.subr.bf16.mxu0 0
      %495 = vmatpush1.bf16.msra.mxu0 0
      %496 = vmatprep.subr.bf16.mxu0 0
      %497 = vmatpush1.bf16.msra.mxu0 0
      %498 = vmatprep.subr.bf16.mxu0 0
      %499 = vmatpush1.bf16.msra.mxu0 0
      %500 = vmatprep.subr.bf16.mxu0 0
      %501 = vmatpush1.bf16.msra.mxu0 0
      %502 = vmatprep.subr.bf16.mxu0 0
      %503 = vmatpush1.bf16.msra.mxu0 0
      %504 = vmatprep.subr.bf16.mxu0 0
      %505 = vmatpush1.bf16.msra.mxu0 0
      %506 = vmatprep.subr.bf16.mxu0 0
      %507 = vmatpush1.bf16.msra.mxu0 0
      %508 = vmatprep.subr.bf16.mxu0 0
      %509 = vmatpush1.bf16.msra.mxu0 0
      %510 = vmatprep.subr.bf16.mxu0 0
      %511 = vmatpush1.bf16.msra.mxu0 0
      %512 = vmatprep.subr.bf16.mxu0 0
      %513 = vmatpush1.bf16.msra.mxu0 0
      %514 = vmatprep.subr.bf16.mxu0 0
      %515 = vmatpush1.bf16.msra.mxu0 0
      %516 = vmatprep.subr.bf16.mxu0 0
      %517 = vmatpush1.bf16.msra.mxu0 0
      %518 = vmatprep.subr.bf16.mxu0 0
      %519 = vmatpush1.bf16.msra.mxu0 0
      %520 = vmatprep.subr.bf16.mxu0 0
      %521 = vmatpush1.bf16.msra.mxu0 0
      %522 = vmatprep.mubr.bf16.mxu0 0
      %523 = vmatmul.mubr.bf16.gmra.mrb[0].mxu0 %v479
      %v524 = vpop.f32.mrb[0].mxu0
      %v525 = vadd.f32 %v463, %v524
      %v526 = vpop.f32.mrb[0].mxu0
      %v527 = vpop.f32.mrb[0].mxu0
      %v528 = vadd.f32 %v463, %v527
      %v529 = vpop.f32.mrb[0].mxu0
      %530 = vmatprep.mubr.bf16.mxu0 0
      %531 = vmatmul.mubr.bf16.gmra.mrb[0].mxu0 %v482
      %v532 = vpop.f32.mrb[0].mxu0
      %v533 = vadd.f32 %v463, %v532
      %v534 = vpop.f32.mrb[0].mxu0
      %v535 = vpop.f32.mrb[0].mxu0
      %v536 = vadd.f32 %v463, %v535
      %v537 = vpop.f32.mrb[0].mxu0
      %538 = vmatprep.mubr.bf16.mxu0 0
      %539 = vmatmul.mubr.bf16.gmra.mrb[0].mxu0 %v485
      %v540 = vpop.f32.mrb[0].mxu0
      %v541 = vadd.f32 %v463, %v540
      %v542 = vpop.f32.mrb[0].mxu0
      %v543 = vpop.f32.mrb[0].mxu0
      %v544 = vadd.f32 %v463, %v543
      %v545 = vpop.f32.mrb[0].mxu0
      %546 = vmatprep.mubr.bf16.mxu0 0
      %547 = vmatmul.mubr.bf16.gmra.mrb[0].mxu0 %v488
      %v548 = vpop.f32.mrb[0].mxu0
      %v549 = vadd.f32 %v463, %v548
      %v550 = vpop.f32.mrb[0].mxu0
      %v551 = vpop.f32.mrb[0].mxu0
      %v552 = vadd.f32 %v463, %v551
      %v553 = vpop.f32.mrb[0].mxu0
      %554 = vdwg.mxu0
      %v555 = vld [vmem:[%s3] sm:$0xf]
      %v556 = vld [vmem:[%s3 + $0x4] sm:$0xf]
      %v557 = vld [vmem:[%s3 + $0x8] sm:$0xf]
      %v558 = vld [vmem:[%s3 + $0xc] sm:$0xf]
      %v559 = vld [vmem:[%s3 + $0x10] sm:$0xf]
      %v560 = vld [vmem:[%s3 + $0x14] sm:$0xf]
      %v561 = vld [vmem:[%s3 + $0x18] sm:$0xf]
      %v562 = vld [vmem:[%s3 + $0x1c] sm:$0xf]
      %v563 = vld [vmem:[%s3 + $0x20] sm:$0xf]
      %v564 = vld [vmem:[%s3 + $0x24] sm:$0xf]
      %v565 = vld [vmem:[%s4] sm:$0x1]
      %vm574 = vcmask 1041408
      %v575 = vrot.slane %v525, 6
      %v576 = vrot.slane %v528, 6
      %v577 = vsel %vm574, %v575, %v576
      %v578 = vrot.slane %v533, 6
      %v579 = vsel %vm574, %v576, %v578
      %v580 = vrot.slane %v536, 6
      %v581 = vsel %vm574, %v578, %v580
      %v582 = vrot.slane %v541, 6
      %v583 = vsel %vm574, %v580, %v582
      %v584 = vrot.slane %v544, 6
      %v585 = vsel %vm574, %v582, %v584
      %v586 = vrot.slane %v549, 6
      %v587 = vsel %vm574, %v584, %v586
      %v588 = vrot.slane %v552, 6
      %v589 = vsel %vm574, %v586, %v588
      %v598 = vsel %vm574, 0.0, %v575
      %vm599 = vcmask 1040384
      %v600 = vrot.slane %v525, 7
      %v601 = vrot.slane %v528, 7
      %v602 = vsel %vm599, %v600, %v601
      %v603 = vrot.slane %v533, 7
      %v604 = vsel %vm599, %v601, %v603
      %v605 = vrot.slane %v536, 7
      %v606 = vsel %vm599, %v603, %v605
      %v607 = vrot.slane %v541, 7
      %v608 = vsel %vm599, %v605, %v607
      %v609 = vrot.slane %v544, 7
      %v610 = vsel %vm599, %v607, %v609
      %v611 = vrot.slane %v549, 7
      %v612 = vsel %vm599, %v609, %v611
      %v613 = vrot.slane %v552, 7
      %v614 = vsel %vm599, %v611, %v613
      %v616 = vsel %vm599, 0.0, %v600
      %vm617 = vcmask 1046528
      %v618 = vrot.slane %v525, 1
      %v619 = vrot.slane %v528, 1
      %v620 = vsel %vm617, %v618, %v619
      %v621 = vrot.slane %v533, 1
      %v622 = vsel %vm617, %v619, %v621
      %v623 = vrot.slane %v536, 1
      %v624 = vsel %vm617, %v621, %v623
      %v625 = vrot.slane %v541, 1
      %v626 = vsel %vm617, %v623, %v625
      %v627 = vrot.slane %v544, 1
      %v628 = vsel %vm617, %v625, %v627
      %v629 = vrot.slane %v549, 1
      %v630 = vsel %vm617, %v627, %v629
      %v631 = vrot.slane %v552, 1
      %v632 = vsel %vm617, %v629, %v631
      %v634 = vsel %vm617, %v631, 0.0
      %vm635 = vcmask 1045504
      %v636 = vrot.slane %v525, 2
      %v637 = vrot.slane %v528, 2
      %v638 = vsel %vm635, %v636, %v637
      %v639 = vrot.slane %v533, 2
      %v640 = vsel %vm635, %v637, %v639
      %v641 = vrot.slane %v536, 2
      %v642 = vsel %vm635, %v639, %v641
      %v643 = vrot.slane %v541, 2
      %v644 = vsel %vm635, %v641, %v643
      %v645 = vrot.slane %v544, 2
      %v646 = vsel %vm635, %v643, %v645
      %v647 = vrot.slane %v549, 2
      %v648 = vsel %vm635, %v645, %v647
      %v649 = vrot.slane %v552, 2
      %v650 = vsel %vm635, %v647, %v649
      %v652 = vsel %vm635, %v649, 0.0
      %654 = vrot.lane.b32.xlu0 %v616, 16
      %v655 = vpop.permute.xlu0 %654
      %656 = vrot.lane.b32.xlu0 %v602, 16
      %v657 = vpop.permute.xlu0 %656
      %658 = vrot.lane.b32.xlu0 %v604, 16
      %v659 = vpop.permute.xlu0 %658
      %660 = vrot.lane.b32.xlu0 %v606, 16
      %v661 = vpop.permute.xlu0 %660
      %662 = vrot.lane.b32.xlu0 %v608, 16
      %v663 = vpop.permute.xlu0 %662
      %664 = vrot.lane.b32.xlu0 %v610, 16
      %v665 = vpop.permute.xlu0 %664
      %666 = vrot.lane.b32.xlu0 %v612, 16
      %v667 = vpop.permute.xlu0 %666
      %668 = vrot.lane.b32.xlu0 %v614, 16
      %v669 = vpop.permute.xlu0 %668
      %678 = vrot.lane.b32.xlu0 %v525, 32
      %v679 = vpop.permute.xlu0 %678
      %680 = vrot.lane.b32.xlu0 %v528, 32
      %v681 = vpop.permute.xlu0 %680
      %682 = vrot.lane.b32.xlu0 %v533, 32
      %v683 = vpop.permute.xlu0 %682
      %684 = vrot.lane.b32.xlu0 %v536, 32
      %v685 = vpop.permute.xlu0 %684
      %686 = vrot.lane.b32.xlu0 %v541, 32
      %v687 = vpop.permute.xlu0 %686
      %688 = vrot.lane.b32.xlu0 %v544, 32
      %v689 = vpop.permute.xlu0 %688
      %690 = vrot.lane.b32.xlu0 %v549, 32
      %v691 = vpop.permute.xlu0 %690
      %692 = vrot.lane.b32.xlu0 %v552, 32
      %v693 = vpop.permute.xlu0 %692
      %703 = vrot.lane.b32.xlu0 %v620, 48
      %v704 = vpop.permute.xlu0 %703
      %705 = vrot.lane.b32.xlu0 %v622, 48
      %v706 = vpop.permute.xlu0 %705
      %707 = vrot.lane.b32.xlu0 %v624, 48
      %v708 = vpop.permute.xlu0 %707
      %709 = vrot.lane.b32.xlu0 %v626, 48
      %v710 = vpop.permute.xlu0 %709
      %711 = vrot.lane.b32.xlu0 %v628, 48
      %v712 = vpop.permute.xlu0 %711
      %713 = vrot.lane.b32.xlu0 %v630, 48
      %v714 = vpop.permute.xlu0 %713
      %715 = vrot.lane.b32.xlu0 %v632, 48
      %v716 = vpop.permute.xlu0 %715
      %717 = vrot.lane.b32.xlu0 %v634, 48
      %v718 = vpop.permute.xlu0 %717
      %728 = vrot.lane.b32.xlu0 %v638, 64
      %v729 = vpop.permute.xlu0 %728
      %730 = vrot.lane.b32.xlu0 %v640, 64
      %v731 = vpop.permute.xlu0 %730
      %732 = vrot.lane.b32.xlu0 %v642, 64
      %v733 = vpop.permute.xlu0 %732
      %734 = vrot.lane.b32.xlu0 %v644, 64
      %v735 = vpop.permute.xlu0 %734
      %736 = vrot.lane.b32.xlu0 %v646, 64
      %v737 = vpop.permute.xlu0 %736
      %738 = vrot.lane.b32.xlu0 %v648, 64
      %v739 = vpop.permute.xlu0 %738
      %740 = vrot.lane.b32.xlu0 %v650, 64
      %v741 = vpop.permute.xlu0 %740
      %742 = vrot.lane.b32.xlu0 %v652, 64
      %v743 = vpop.permute.xlu0 %742
      %vm752 = vcmask 130048
      %v753 = vsel %vm752, %v598, %v655
      %v754 = vsel %vm752, %v577, %v657
      %v755 = vsel %vm752, %v579, %v659
      %v756 = vsel %vm752, %v581, %v661
      %v757 = vsel %vm752, %v583, %v663
      %v758 = vsel %vm752, %v585, %v665
      %v759 = vsel %vm752, %v587, %v667
      %v760 = vsel %vm752, %v589, %v669
      %v761 = vsel %vm477, %v753, %v679
      %v762 = vsel %vm477, %v754, %v681
      %v763 = vsel %vm477, %v755, %v683
      %v764 = vsel %vm477, %v756, %v685
      %v765 = vsel %vm477, %v757, %v687
      %v766 = vsel %vm477, %v758, %v689
      %v767 = vsel %vm477, %v759, %v691
      %v768 = vsel %vm477, %v760, %v693
      %vm769 = vcmask 392192
      %v770 = vsel %vm769, %v761, %v704
      %v771 = vsel %vm769, %v762, %v706
      %v772 = vsel %vm769, %v763, %v708
      %v773 = vsel %vm769, %v764, %v710
      %v774 = vsel %vm769, %v765, %v712
      %v775 = vsel %vm769, %v766, %v714
      %v776 = vsel %vm769, %v767, %v716
      %v777 = vsel %vm769, %v768, %v718
      %vm778 = vcmask 523264
      %v779 = vsel %vm778, %v770, %v729
      %v780 = vsel %vm778, %v771, %v731
      %v781 = vsel %vm778, %v772, %v733
      %v782 = vsel %vm778, %v773, %v735
      %v783 = vsel %vm778, %v774, %v737
      %v784 = vsel %vm778, %v775, %v739
      %v785 = vsel %vm778, %v776, %v741
      %v786 = vsel %vm778, %v777, %v743
      %v787 = vpack.c.bf16 %v780, %v779
      %v788 = vpack.c.bf16 %v782, %v781
      %v789 = vpack.c.bf16 %v784, %v783
      %v790 = vpack.c.bf16 %v786, %v785
      %v792 = vlaneseq
      %v793 = vshrl.u32 %v792, 7
      %v794 = vsub.s32 0, %v793
      %v795 = vrot.slane %v565, %v794
      %v807 = vunpack.c.l.b16 %v555
      %v808 = vunpack.c.l.b16 %v556
      %v809 = vunpack.c.l.b16 %v557
      %v810 = vunpack.c.l.b16 %v558
      %v811 = vunpack.c.l.b16 %v559
      %v812 = vunpack.c.l.b16 %v560
      %v813 = vunpack.c.l.b16 %v561
      %v814 = vunpack.c.l.b16 %v562
      %v815 = vunpack.c.l.b16 %v563
      %v816 = vunpack.c.l.b16 %v564
      %v817 = vpack.c.b16 %v808, %v807
      %v818 = vpack.c.b16 %v810, %v809
      %v819 = vpack.c.b16 %v812, %v811
      %v820 = vpack.c.b16 %v814, %v813
      %v821 = vpack.c.b16 %v816, %v815
      %vm827 = vcmask 654336
      %v829 = vsel %vm827, %v787, 0
      %v832 = vsel %vm827, %v788, 0
      %v835 = vsel %vm827, %v789, 0
      %v838 = vsel %vm827, %v790, 0
      %840 = vmatprep.subr.bf16.mxu0 0
      %841 = vmatpush1.bf16.msra.mxu0 %v817
      %842 = vmatprep.subr.bf16.mxu0 0
      %843 = vmatpush1.bf16.msra.mxu0 %v818
      %844 = vmatprep.subr.bf16.mxu0 0
      %845 = vmatpush1.bf16.msra.mxu0 %v819
      %846 = vmatprep.subr.bf16.mxu0 0
      %847 = vmatpush1.bf16.msra.mxu0 %v820
      %848 = vmatprep.subr.bf16.mxu0 0
      %849 = vmatpush1.bf16.msra.mxu0 %v821
      %850 = vmatprep.subr.bf16.mxu0 0
      %851 = vmatpush1.bf16.msra.mxu0 0
      %852 = vmatprep.subr.bf16.mxu0 0
      %853 = vmatpush1.bf16.msra.mxu0 0
      %854 = vmatprep.subr.bf16.mxu0 0
      %855 = vmatpush1.bf16.msra.mxu0 0
      %856 = vmatprep.subr.bf16.mxu0 0
      %857 = vmatpush1.bf16.msra.mxu0 0
      %858 = vmatprep.subr.bf16.mxu0 0
      %859 = vmatpush1.bf16.msra.mxu0 0
      %860 = vmatprep.subr.bf16.mxu0 0
      %861 = vmatpush1.bf16.msra.mxu0 0
      %862 = vmatprep.subr.bf16.mxu0 0
      %863 = vmatpush1.bf16.msra.mxu0 0
      %864 = vmatprep.subr.bf16.mxu0 0
      %865 = vmatpush1.bf16.msra.mxu0 0
      %866 = vmatprep.subr.bf16.mxu0 0
      %867 = vmatpush1.bf16.msra.mxu0 0
      %868 = vmatprep.subr.bf16.mxu0 0
      %869 = vmatpush1.bf16.msra.mxu0 0
      %870 = vmatprep.subr.bf16.mxu0 0
      %871 = vmatpush1.bf16.msra.mxu0 0
      %872 = vmatprep.mubr.bf16.mxu0 0
      %873 = vmatmul.mubr.bf16.gmra.mrb[0].mxu0 %v829
      %v874 = vpop.f32.mrb[0].mxu0
      %v875 = vadd.f32 %v795, %v874
      %v876 = vpop.f32.mrb[0].mxu0
      %v877 = vpop.f32.mrb[0].mxu0
      %v878 = vadd.f32 %v795, %v877
      %v879 = vpop.f32.mrb[0].mxu0
      %880 = vmatprep.mubr.bf16.mxu0 0
      %881 = vmatmul.mubr.bf16.gmra.mrb[0].mxu0 %v832
      %v882 = vpop.f32.mrb[0].mxu0
      %v883 = vadd.f32 %v795, %v882
      %v884 = vpop.f32.mrb[0].mxu0
      %v885 = vpop.f32.mrb[0].mxu0
      %v886 = vadd.f32 %v795, %v885
      %v887 = vpop.f32.mrb[0].mxu0
      %888 = vmatprep.mubr.bf16.mxu0 0
      %889 = vmatmul.mubr.bf16.gmra.mrb[0].mxu0 %v835
      %v890 = vpop.f32.mrb[0].mxu0
      %v891 = vadd.f32 %v795, %v890
      %v892 = vpop.f32.mrb[0].mxu0
      %v893 = vpop.f32.mrb[0].mxu0
      %v894 = vadd.f32 %v795, %v893
      %v895 = vpop.f32.mrb[0].mxu0
      %896 = vmatprep.mubr.bf16.mxu0 0
      %897 = vmatmul.mubr.bf16.gmra.mrb[0].mxu0 %v838
      %v898 = vpop.f32.mrb[0].mxu0
      %v899 = vadd.f32 %v795, %v898
      %v900 = vpop.f32.mrb[0].mxu0
      %v901 = vpop.f32.mrb[0].mxu0
      %v902 = vadd.f32 %v795, %v901
      %v903 = vpop.f32.mrb[0].mxu0
      %904 = vdwg.mxu0
      %v905 = vtanh.pop %v875
      %v906 = vtanh.pop %v878
      %v907 = vtanh.pop %v883
      %v908 = vtanh.pop %v886
      %v909 = vtanh.pop %v891
      %v910 = vtanh.pop %v894
      %v911 = vtanh.pop %v899
      %v912 = vtanh.pop %v902
      %v913 = vld [vmem:[%s5] sm:$0xf]
      %v914 = vld [vmem:[%s5 + $0x4] sm:$0xf]
      %v915 = vld [vmem:[%s5 + $0x8] sm:$0xf]
      %v916 = vld [vmem:[%s5 + $0xc] sm:$0xf]
      %v917 = vld [vmem:[%s5 + $0x10] sm:$0xf]
      %v918 = vld [vmem:[%s5 + $0x14] sm:$0xf]
      %v919 = vld [vmem:[%s5 + $0x18] sm:$0xf]
      %v920 = vld [vmem:[%s5 + $0x1c] sm:$0xf]
      %v921 = vld [vmem:[%s5 + $0x20] sm:$0xf]
      %v922 = vld [vmem:[%s5 + $0x24] sm:$0xf]
      %v923 = vld [vmem:[%s5 + $0x28] sm:$0xf]
      %v924 = vld [vmem:[%s5 + $0x2c] sm:$0xf]
      %v925 = vld [vmem:[%s5 + $0x30] sm:$0xf]
      %v926 = vld [vmem:[%s5 + $0x34] sm:$0xf]
      %v927 = vld [vmem:[%s5 + $0x38] sm:$0xf]
      %v928 = vld [vmem:[%s5 + $0x3c] sm:$0xf]
      %v929 = vld [vmem:[%s5 + $0x40] sm:$0xf]
      %v930 = vld [vmem:[%s5 + $0x44] sm:$0xf]
      %v931 = vld [vmem:[%s5 + $0x48] sm:$0xf]
      %v932 = vld [vmem:[%s5 + $0x4c] sm:$0xf]
      %v933 = vld [vmem:[%s6] sm:$0x1]
      %v942 = vrot.slane %v905, 6
      %v943 = vrot.slane %v906, 6
      %v944 = vsel %vm574, %v942, %v943
      %v945 = vrot.slane %v907, 6
      %v946 = vsel %vm574, %v943, %v945
      %v947 = vrot.slane %v908, 6
      %v948 = vsel %vm574, %v945, %v947
      %v949 = vrot.slane %v909, 6
      %v950 = vsel %vm574, %v947, %v949
      %v951 = vrot.slane %v910, 6
      %v952 = vsel %vm574, %v949, %v951
      %v953 = vrot.slane %v911, 6
      %v954 = vsel %vm574, %v951, %v953
      %v955 = vrot.slane %v912, 6
      %v956 = vsel %vm574, %v953, %v955
      %v965 = vsel %vm574, 0.0, %v942
      %v966 = vrot.slane %v905, 7
      %v967 = vrot.slane %v906, 7
      %v968 = vsel %vm599, %v966, %v967
      %v969 = vrot.slane %v907, 7
      %v970 = vsel %vm599, %v967, %v969
      %v971 = vrot.slane %v908, 7
      %v972 = vsel %vm599, %v969, %v971
      %v973 = vrot.slane %v909, 7
      %v974 = vsel %vm599, %v971, %v973
      %v975 = vrot.slane %v910, 7
      %v976 = vsel %vm599, %v973, %v975
      %v977 = vrot.slane %v911, 7
      %v978 = vsel %vm599, %v975, %v977
      %v979 = vrot.slane %v912, 7
      %v980 = vsel %vm599, %v977, %v979
      %v982 = vsel %vm599, 0.0, %v966
      %v983 = vrot.slane %v905, 1
      %v984 = vrot.slane %v906, 1
      %v985 = vsel %vm617, %v983, %v984
      %v986 = vrot.slane %v907, 1
      %v987 = vsel %vm617, %v984, %v986
      %v988 = vrot.slane %v908, 1
      %v989 = vsel %vm617, %v986, %v988
      %v990 = vrot.slane %v909, 1
      %v991 = vsel %vm617, %v988, %v990
      %v992 = vrot.slane %v910, 1
      %v993 = vsel %vm617, %v990, %v992
      %v994 = vrot.slane %v911, 1
      %v995 = vsel %vm617, %v992, %v994
      %v996 = vrot.slane %v912, 1
      %v997 = vsel %vm617, %v994, %v996
      %v999 = vsel %vm617, %v996, 0.0
      %v1000 = vrot.slane %v905, 2
      %v1001 = vrot.slane %v906, 2
      %v1002 = vsel %vm635, %v1000, %v1001
      %v1003 = vrot.slane %v907, 2
      %v1004 = vsel %vm635, %v1001, %v1003
      %v1005 = vrot.slane %v908, 2
      %v1006 = vsel %vm635, %v1003, %v1005
      %v1007 = vrot.slane %v909, 2
      %v1008 = vsel %vm635, %v1005, %v1007
      %v1009 = vrot.slane %v910, 2
      %v1010 = vsel %vm635, %v1007, %v1009
      %v1011 = vrot.slane %v911, 2
      %v1012 = vsel %vm635, %v1009, %v1011
      %v1013 = vrot.slane %v912, 2
      %v1014 = vsel %vm635, %v1011, %v1013
      %v1023 = vsel %vm635, %v1013, 0.0
      %1025 = vrot.lane.b32.xlu0 %v982, 32
      %v1026 = vpop.permute.xlu0 %1025
      %1027 = vrot.lane.b32.xlu0 %v968, 32
      %v1028 = vpop.permute.xlu0 %1027
      %1029 = vrot.lane.b32.xlu0 %v970, 32
      %v1030 = vpop.permute.xlu0 %1029
      %1031 = vrot.lane.b32.xlu0 %v972, 32
      %v1032 = vpop.permute.xlu0 %1031
      %1033 = vrot.lane.b32.xlu0 %v974, 32
      %v1034 = vpop.permute.xlu0 %1033
      %1035 = vrot.lane.b32.xlu0 %v976, 32
      %v1036 = vpop.permute.xlu0 %1035
      %1037 = vrot.lane.b32.xlu0 %v978, 32
      %v1038 = vpop.permute.xlu0 %1037
      %1039 = vrot.lane.b32.xlu0 %v980, 32
      %v1040 = vpop.permute.xlu0 %1039
      %1049 = vrot.lane.b32.xlu0 %v905, 64
      %v1050 = vpop.permute.xlu0 %1049
      %1051 = vrot.lane.b32.xlu0 %v906, 64
      %v1052 = vpop.permute.xlu0 %1051
      %1053 = vrot.lane.b32.xlu0 %v907, 64
      %v1054 = vpop.permute.xlu0 %1053
      %1055 = vrot.lane.b32.xlu0 %v908, 64
      %v1056 = vpop.permute.xlu0 %1055
      %1057 = vrot.lane.b32.xlu0 %v909, 64
      %v1058 = vpop.permute.xlu0 %1057
      %1059 = vrot.lane.b32.xlu0 %v910, 64
      %v1060 = vpop.permute.xlu0 %1059
      %1061 = vrot.lane.b32.xlu0 %v911, 64
      %v1062 = vpop.permute.xlu0 %1061
      %1063 = vrot.lane.b32.xlu0 %v912, 64
      %v1064 = vpop.permute.xlu0 %1063
      %1074 = vrot.lane.b32.xlu0 %v985, 96
      %v1075 = vpop.permute.xlu0 %1074
      %1076 = vrot.lane.b32.xlu0 %v987, 96
      %v1077 = vpop.permute.xlu0 %1076
      %1078 = vrot.lane.b32.xlu0 %v989, 96
      %v1079 = vpop.permute.xlu0 %1078
      %1080 = vrot.lane.b32.xlu0 %v991, 96
      %v1081 = vpop.permute.xlu0 %1080
      %1082 = vrot.lane.b32.xlu0 %v993, 96
      %v1083 = vpop.permute.xlu0 %1082
      %1084 = vrot.lane.b32.xlu0 %v995, 96
      %v1085 = vpop.permute.xlu0 %1084
      %1086 = vrot.lane.b32.xlu0 %v997, 96
      %v1087 = vpop.permute.xlu0 %1086
      %1088 = vrot.lane.b32.xlu0 %v999, 96
      %v1089 = vpop.permute.xlu0 %1088
      %v1098 = vsel %vm477, %v965, %v1026
      %v1099 = vsel %vm477, %v944, %v1028
      %v1100 = vsel %vm477, %v946, %v1030
      %v1101 = vsel %vm477, %v948, %v1032
      %v1102 = vsel %vm477, %v950, %v1034
      %v1103 = vsel %vm477, %v952, %v1036
      %v1104 = vsel %vm477, %v954, %v1038
      %v1105 = vsel %vm477, %v956, %v1040
      %v1106 = vsel %vm778, %v1098, %v1050
      %v1107 = vsel %vm778, %v1099, %v1052
      %v1108 = vsel %vm778, %v1100, %v1054
      %v1109 = vsel %vm778, %v1101, %v1056
      %v1110 = vsel %vm778, %v1102, %v1058
      %v1111 = vsel %vm778, %v1103, %v1060
      %v1112 = vsel %vm778, %v1104, %v1062
      %v1113 = vsel %vm778, %v1105, %v1064
      %vm1114 = vcmask 785408
      %v1115 = vsel %vm1114, %v1106, %v1075
      %v1116 = vsel %vm1114, %v1107, %v1077
      %v1117 = vsel %vm1114, %v1108, %v1079
      %v1118 = vsel %vm1114, %v1109, %v1081
      %v1119 = vsel %vm1114, %v1110, %v1083
      %v1120 = vsel %vm1114, %v1111, %v1085
      %v1121 = vsel %vm1114, %v1112, %v1087
      %v1122 = vsel %vm1114, %v1113, %v1089
      %v1123 = vpack.c.bf16 %v1116, %v1115
      %v1124 = vpack.c.bf16 %v1004, %v1002
      %v1125 = vpack.c.bf16 %v1118, %v1117
      %v1126 = vpack.c.bf16 %v1008, %v1006
      %v1127 = vpack.c.bf16 %v1120, %v1119
      %v1128 = vpack.c.bf16 %v1012, %v1010
      %v1129 = vpack.c.bf16 %v1122, %v1121
      %v1130 = vpack.c.bf16 %v1023, %v1014
      %v1132 = vlaneseq
      %v1133 = vshrl.u32 %v1132, 7
      %v1134 = vsub.s32 0, %v1133
      %v1135 = vrot.slane %v933, %v1134
      %v1157 = vunpack.c.l.b16 %v913
      %v1158 = vunpack.c.l.b16 %v914
      %v1159 = vunpack.c.l.b16 %v915
      %v1160 = vunpack.c.l.b16 %v916
      %v1161 = vunpack.c.l.b16 %v917
      %v1162 = vunpack.c.l.b16 %v918
      %v1163 = vunpack.c.l.b16 %v919
      %v1164 = vunpack.c.l.b16 %v920
      %v1165 = vunpack.c.l.b16 %v921
      %v1166 = vunpack.c.l.b16 %v922
      %v1167 = vunpack.c.l.b16 %v923
      %v1168 = vunpack.c.l.b16 %v924
      %v1169 = vunpack.c.l.b16 %v925
      %v1170 = vunpack.c.l.b16 %v926
      %v1171 = vunpack.c.l.b16 %v927
      %v1172 = vunpack.c.l.b16 %v928
      %v1173 = vunpack.c.l.b16 %v929
      %v1174 = vunpack.c.l.b16 %v930
      %v1175 = vunpack.c.l.b16 %v931
      %v1176 = vunpack.c.l.b16 %v932
      %v1177 = vpack.c.b16 %v1158, %v1157
      %v1178 = vpack.c.b16 %v1160, %v1159
      %v1179 = vpack.c.b16 %v1162, %v1161
      %v1180 = vpack.c.b16 %v1164, %v1163
      %v1181 = vpack.c.b16 %v1166, %v1165
      %v1182 = vpack.c.b16 %v1168, %v1167
      %v1183 = vpack.c.b16 %v1170, %v1169
      %v1184 = vpack.c.b16 %v1172, %v1171
      %v1185 = vpack.c.b16 %v1174, %v1173
      %v1186 = vpack.c.b16 %v1176, %v1175
      %v1198 = vsel %vm477, %v1124, 0
      %v1201 = vsel %vm477, %v1126, 0
      %v1204 = vsel %vm477, %v1128, 0
      %v1207 = vsel %vm477, %v1130, 0
      %1209 = vmatprep.subr.bf16.mxu0 0
      %1210 = vmatpush1.bf16.msra.mxu0 %v1177
      %1211 = vmatprep.subr.bf16.mxu0 0
      %1212 = vmatpush1.bf16.msra.mxu0 %v1178
      %1213 = vmatprep.subr.bf16.mxu0 0
      %1214 = vmatpush1.bf16.msra.mxu0 %v1179
      %1215 = vmatprep.subr.bf16.mxu0 0
      %1216 = vmatpush1.bf16.msra.mxu0 %v1180
      %1217 = vmatprep.subr.bf16.mxu0 0
      %1218 = vmatpush1.bf16.msra.mxu0 %v1181
      %1219 = vmatprep.subr.bf16.mxu0 0
      %1220 = vmatpush1.bf16.msra.mxu0 %v1182
      %1221 = vmatprep.subr.bf16.mxu0 0
      %1222 = vmatpush1.bf16.msra.mxu0 %v1183
      %1223 = vmatprep.subr.bf16.mxu0 0
      %1224 = vmatpush1.bf16.msra.mxu0 %v1184
      %1225 = vmatprep.subr.bf16.mxu0 0
      %1226 = vmatpush1.bf16.msra.mxu0 %v1185
      %1227 = vmatprep.subr.bf16.mxu0 0
      %1228 = vmatpush1.bf16.msra.mxu0 %v1186
      %1229 = vmatprep.subr.bf16.mxu0 0
      %1230 = vmatpush1.bf16.msra.mxu0 0
      %1231 = vmatprep.subr.bf16.mxu0 0
      %1232 = vmatpush1.bf16.msra.mxu0 0
      %1233 = vmatprep.subr.bf16.mxu0 0
      %1234 = vmatpush1.bf16.msra.mxu0 0
      %1235 = vmatprep.subr.bf16.mxu0 0
      %1236 = vmatpush1.bf16.msra.mxu0 0
      %1237 = vmatprep.subr.bf16.mxu0 0
      %1238 = vmatpush1.bf16.msra.mxu0 0
      %1239 = vmatprep.subr.bf16.mxu0 0
      %1240 = vmatpush1.bf16.msra.mxu0 0
      %1241 = vmatprep.mubr.bf16.mxu0 %v1198
      %1242 = vmatmul.mubr.bf16.gmra.mrb[0].mxu0 %v1123
      %v1243 = vpop.f32.mrb[0].mxu0
      %v1244 = vadd.f32 %v1135, %v1243
      %v1245 = vpop.f32.mrb[0].mxu0
      %v1246 = vpop.f32.mrb[0].mxu0
      %v1247 = vadd.f32 %v1135, %v1246
      %v1248 = vpop.f32.mrb[0].mxu0
      %1249 = vmatprep.mubr.bf16.mxu0 %v1201
      %1250 = vmatmul.mubr.bf16.gmra.mrb[0].mxu0 %v1125
      %v1251 = vpop.f32.mrb[0].mxu0
      %v1252 = vadd.f32 %v1135, %v1251
      %v1253 = vpop.f32.mrb[0].mxu0
      %v1254 = vpop.f32.mrb[0].mxu0
      %v1255 = vadd.f32 %v1135, %v1254
      %v1256 = vpop.f32.mrb[0].mxu0
      %1257 = vmatprep.mubr.bf16.mxu0 %v1204
      %1258 = vmatmul.mubr.bf16.gmra.mrb[0].mxu0 %v1127
      %v1259 = vpop.f32.mrb[0].mxu0
      %v1260 = vadd.f32 %v1135, %v1259
      %v1261 = vpop.f32.mrb[0].mxu0
      %v1262 = vpop.f32.mrb[0].mxu0
      %v1263 = vadd.f32 %v1135, %v1262
      %v1264 = vpop.f32.mrb[0].mxu0
      %1265 = vmatprep.mubr.bf16.mxu0 %v1207
      %1266 = vmatmul.mubr.bf16.gmra.mrb[0].mxu0 %v1129
      %v1267 = vpop.f32.mrb[0].mxu0
      %v1268 = vadd.f32 %v1135, %v1267
      %v1269 = vpop.f32.mrb[0].mxu0
      %v1270 = vpop.f32.mrb[0].mxu0
      %v1271 = vadd.f32 %v1135, %v1270
      %v1272 = vpop.f32.mrb[0].mxu0
      %1273 = vdwg.mxu0
      %v1274 = vtanh.pop %v1244
      %v1275 = vtanh.pop %v1247
      %v1276 = vtanh.pop %v1252
      %v1277 = vtanh.pop %v1255
      %v1278 = vtanh.pop %v1260
      %v1279 = vtanh.pop %v1263
      %v1280 = vtanh.pop %v1268
      %v1281 = vtanh.pop %v1271
      %v1282 = vld [vmem:[%s7] sm:$0xf]
      %v1283 = vld [vmem:[%s7 + $0x4] sm:$0xf]
      %v1284 = vld [vmem:[%s7 + $0x8] sm:$0xf]
      %v1285 = vld [vmem:[%s7 + $0xc] sm:$0xf]
      %v1286 = vld [vmem:[%s7 + $0x10] sm:$0xf]
      %v1287 = vld [vmem:[%s7 + $0x14] sm:$0xf]
      %v1288 = vld [vmem:[%s7 + $0x18] sm:$0xf]
      %v1289 = vld [vmem:[%s7 + $0x1c] sm:$0xf]
      %v1290 = vld [vmem:[%s7 + $0x20] sm:$0xf]
      %v1291 = vld [vmem:[%s7 + $0x24] sm:$0xf]
      %v1292 = vld [vmem:[%s7 + $0x28] sm:$0xf]
      %v1293 = vld [vmem:[%s7 + $0x2c] sm:$0xf]
      %v1294 = vld [vmem:[%s7 + $0x30] sm:$0xf]
      %v1295 = vld [vmem:[%s7 + $0x34] sm:$0xf]
      %v1296 = vld [vmem:[%s7 + $0x38] sm:$0xf]
      %v1297 = vld [vmem:[%s7 + $0x3c] sm:$0xf]
      %v1298 = vld [vmem:[%s7 + $0x40] sm:$0xf]
      %v1299 = vld [vmem:[%s7 + $0x44] sm:$0xf]
      %v1300 = vld [vmem:[%s7 + $0x48] sm:$0xf]
      %v1301 = vld [vmem:[%s7 + $0x4c] sm:$0xf]
      %v1302 = vld [vmem:[%s8] sm:$0x1]
      %v1311 = vrot.slane %v1274, 6
      %v1312 = vrot.slane %v1275, 6
      %v1313 = vsel %vm574, %v1311, %v1312
      %v1314 = vrot.slane %v1276, 6
      %v1315 = vsel %vm574, %v1312, %v1314
      %v1316 = vrot.slane %v1277, 6
      %v1317 = vsel %vm574, %v1314, %v1316
      %v1318 = vrot.slane %v1278, 6
      %v1319 = vsel %vm574, %v1316, %v1318
      %v1320 = vrot.slane %v1279, 6
      %v1321 = vsel %vm574, %v1318, %v1320
      %v1322 = vrot.slane %v1280, 6
      %v1323 = vsel %vm574, %v1320, %v1322
      %v1324 = vrot.slane %v1281, 6
      %v1325 = vsel %vm574, %v1322, %v1324
      %v1334 = vsel %vm574, 0.0, %v1311
      %v1335 = vrot.slane %v1274, 7
      %v1336 = vrot.slane %v1275, 7
      %v1337 = vsel %vm599, %v1335, %v1336
      %v1338 = vrot.slane %v1276, 7
      %v1339 = vsel %vm599, %v1336, %v1338
      %v1340 = vrot.slane %v1277, 7
      %v1341 = vsel %vm599, %v1338, %v1340
      %v1342 = vrot.slane %v1278, 7
      %v1343 = vsel %vm599, %v1340, %v1342
      %v1344 = vrot.slane %v1279, 7
      %v1345 = vsel %vm599, %v1342, %v1344
      %v1346 = vrot.slane %v1280, 7
      %v1347 = vsel %vm599, %v1344, %v1346
      %v1348 = vrot.slane %v1281, 7
      %v1349 = vsel %vm599, %v1346, %v1348
      %v1351 = vsel %vm599, 0.0, %v1335
      %v1352 = vrot.slane %v1274, 1
      %v1353 = vrot.slane %v1275, 1
      %v1354 = vsel %vm617, %v1352, %v1353
      %v1355 = vrot.slane %v1276, 1
      %v1356 = vsel %vm617, %v1353, %v1355
      %v1357 = vrot.slane %v1277, 1
      %v1358 = vsel %vm617, %v1355, %v1357
      %v1359 = vrot.slane %v1278, 1
      %v1360 = vsel %vm617, %v1357, %v1359
      %v1361 = vrot.slane %v1279, 1
      %v1362 = vsel %vm617, %v1359, %v1361
      %v1363 = vrot.slane %v1280, 1
      %v1364 = vsel %vm617, %v1361, %v1363
      %v1365 = vrot.slane %v1281, 1
      %v1366 = vsel %vm617, %v1363, %v1365
      %v1368 = vsel %vm617, %v1365, 0.0
      %v1369 = vrot.slane %v1274, 2
      %v1370 = vrot.slane %v1275, 2
      %v1371 = vsel %vm635, %v1369, %v1370
      %v1372 = vrot.slane %v1276, 2
      %v1373 = vsel %vm635, %v1370, %v1372
      %v1374 = vrot.slane %v1277, 2
      %v1375 = vsel %vm635, %v1372, %v1374
      %v1376 = vrot.slane %v1278, 2
      %v1377 = vsel %vm635, %v1374, %v1376
      %v1378 = vrot.slane %v1279, 2
      %v1379 = vsel %vm635, %v1376, %v1378
      %v1380 = vrot.slane %v1280, 2
      %v1381 = vsel %vm635, %v1378, %v1380
      %v1382 = vrot.slane %v1281, 2
      %v1383 = vsel %vm635, %v1380, %v1382
      %v1392 = vsel %vm635, %v1382, 0.0
      %1394 = vrot.lane.b32.xlu0 %v1351, 32
      %v1395 = vpop.permute.xlu0 %1394
      %1396 = vrot.lane.b32.xlu0 %v1337, 32
      %v1397 = vpop.permute.xlu0 %1396
      %1398 = vrot.lane.b32.xlu0 %v1339, 32
      %v1399 = vpop.permute.xlu0 %1398
      %1400 = vrot.lane.b32.xlu0 %v1341, 32
      %v1401 = vpop.permute.xlu0 %1400
      %1402 = vrot.lane.b32.xlu0 %v1343, 32
      %v1403 = vpop.permute.xlu0 %1402
      %1404 = vrot.lane.b32.xlu0 %v1345, 32
      %v1405 = vpop.permute.xlu0 %1404
      %1406 = vrot.lane.b32.xlu0 %v1347, 32
      %v1407 = vpop.permute.xlu0 %1406
      %1408 = vrot.lane.b32.xlu0 %v1349, 32
      %v1409 = vpop.permute.xlu0 %1408
      %1418 = vrot.lane.b32.xlu0 %v1274, 64
      %v1419 = vpop.permute.xlu0 %1418
      %1420 = vrot.lane.b32.xlu0 %v1275, 64
      %v1421 = vpop.permute.xlu0 %1420
      %1422 = vrot.lane.b32.xlu0 %v1276, 64
      %v1423 = vpop.permute.xlu0 %1422
      %1424 = vrot.lane.b32.xlu0 %v1277, 64
      %v1425 = vpop.permute.xlu0 %1424
      %1426 = vrot.lane.b32.xlu0 %v1278, 64
      %v1427 = vpop.permute.xlu0 %1426
      %1428 = vrot.lane.b32.xlu0 %v1279, 64
      %v1429 = vpop.permute.xlu0 %1428
      %1430 = vrot.lane.b32.xlu0 %v1280, 64
      %v1431 = vpop.permute.xlu0 %1430
      %1432 = vrot.lane.b32.xlu0 %v1281, 64
      %v1433 = vpop.permute.xlu0 %1432
      %1443 = vrot.lane.b32.xlu0 %v1354, 96
      %v1444 = vpop.permute.xlu0 %1443
      %1445 = vrot.lane.b32.xlu0 %v1356, 96
      %v1446 = vpop.permute.xlu0 %1445
      %1447 = vrot.lane.b32.xlu0 %v1358, 96
      %v1448 = vpop.permute.xlu0 %1447
      %1449 = vrot.lane.b32.xlu0 %v1360, 96
      %v1450 = vpop.permute.xlu0 %1449
      %1451 = vrot.lane.b32.xlu0 %v1362, 96
      %v1452 = vpop.permute.xlu0 %1451
      %1453 = vrot.lane.b32.xlu0 %v1364, 96
      %v1454 = vpop.permute.xlu0 %1453
      %1455 = vrot.lane.b32.xlu0 %v1366, 96
      %v1456 = vpop.permute.xlu0 %1455
      %1457 = vrot.lane.b32.xlu0 %v1368, 96
      %v1458 = vpop.permute.xlu0 %1457
      %v1467 = vsel %vm477, %v1334, %v1395
      %v1468 = vsel %vm477, %v1313, %v1397
      %v1469 = vsel %vm477, %v1315, %v1399
      %v1470 = vsel %vm477, %v1317, %v1401
      %v1471 = vsel %vm477, %v1319, %v1403
      %v1472 = vsel %vm477, %v1321, %v1405
      %v1473 = vsel %vm477, %v1323, %v1407
      %v1474 = vsel %vm477, %v1325, %v1409
      %v1475 = vsel %vm778, %v1467, %v1419
      %v1476 = vsel %vm778, %v1468, %v1421
      %v1477 = vsel %vm778, %v1469, %v1423
      %v1478 = vsel %vm778, %v1470, %v1425
      %v1479 = vsel %vm778, %v1471, %v1427
      %v1480 = vsel %vm778, %v1472, %v1429
      %v1481 = vsel %vm778, %v1473, %v1431
      %v1482 = vsel %vm778, %v1474, %v1433
      %v1483 = vsel %vm1114, %v1475, %v1444
      %v1484 = vsel %vm1114, %v1476, %v1446
      %v1485 = vsel %vm1114, %v1477, %v1448
      %v1486 = vsel %vm1114, %v1478, %v1450
      %v1487 = vsel %vm1114, %v1479, %v1452
      %v1488 = vsel %vm1114, %v1480, %v1454
      %v1489 = vsel %vm1114, %v1481, %v1456
      %v1490 = vsel %vm1114, %v1482, %v1458
      %v1491 = vpack.c.bf16 %v1484, %v1483
      %v1492 = vpack.c.bf16 %v1373, %v1371
      %v1493 = vpack.c.bf16 %v1486, %v1485
      %v1494 = vpack.c.bf16 %v1377, %v1375
      %v1495 = vpack.c.bf16 %v1488, %v1487
      %v1496 = vpack.c.bf16 %v1381, %v1379
      %v1497 = vpack.c.bf16 %v1490, %v1489
      %v1498 = vpack.c.bf16 %v1392, %v1383
      %v1500 = vlaneseq
      %v1501 = vshrl.u32 %v1500, 7
      %v1502 = vsub.s32 0, %v1501
      %v1503 = vrot.slane %v1302, %v1502
      %v1525 = vunpack.c.l.b16 %v1282
      %v1526 = vunpack.c.l.b16 %v1283
      %v1527 = vunpack.c.l.b16 %v1284
      %v1528 = vunpack.c.l.b16 %v1285
      %v1529 = vunpack.c.l.b16 %v1286
      %v1530 = vunpack.c.l.b16 %v1287
      %v1531 = vunpack.c.l.b16 %v1288
      %v1532 = vunpack.c.l.b16 %v1289
      %v1533 = vunpack.c.l.b16 %v1290
      %v1534 = vunpack.c.l.b16 %v1291
      %v1535 = vunpack.c.l.b16 %v1292
      %v1536 = vunpack.c.l.b16 %v1293
      %v1537 = vunpack.c.l.b16 %v1294
      %v1538 = vunpack.c.l.b16 %v1295
      %v1539 = vunpack.c.l.b16 %v1296
      %v1540 = vunpack.c.l.b16 %v1297
      %v1541 = vunpack.c.l.b16 %v1298
      %v1542 = vunpack.c.l.b16 %v1299
      %v1543 = vunpack.c.l.b16 %v1300
      %v1544 = vunpack.c.l.b16 %v1301
      %v1545 = vpack.c.b16 %v1526, %v1525
      %v1546 = vpack.c.b16 %v1528, %v1527
      %v1547 = vpack.c.b16 %v1530, %v1529
      %v1548 = vpack.c.b16 %v1532, %v1531
      %v1549 = vpack.c.b16 %v1534, %v1533
      %v1550 = vpack.c.b16 %v1536, %v1535
      %v1551 = vpack.c.b16 %v1538, %v1537
      %v1552 = vpack.c.b16 %v1540, %v1539
      %v1553 = vpack.c.b16 %v1542, %v1541
      %v1554 = vpack.c.b16 %v1544, %v1543
      %v1566 = vsel %vm477, %v1492, 0
      %v1569 = vsel %vm477, %v1494, 0
      %v1572 = vsel %vm477, %v1496, 0
      %v1575 = vsel %vm477, %v1498, 0
      %1577 = vmatprep.subr.bf16.mxu0 0
      %1578 = vmatpush1.bf16.msra.mxu0 %v1545
      %1579 = vmatprep.subr.bf16.mxu0 0
      %1580 = vmatpush1.bf16.msra.mxu0 %v1546
      %1581 = vmatprep.subr.bf16.mxu0 0
      %1582 = vmatpush1.bf16.msra.mxu0 %v1547
      %1583 = vmatprep.subr.bf16.mxu0 0
      %1584 = vmatpush1.bf16.msra.mxu0 %v1548
      %1585 = vmatprep.subr.bf16.mxu0 0
      %1586 = vmatpush1.bf16.msra.mxu0 %v1549
      %1587 = vmatprep.subr.bf16.mxu0 0
      %1588 = vmatpush1.bf16.msra.mxu0 %v1550
      %1589 = vmatprep.subr.bf16.mxu0 0
      %1590 = vmatpush1.bf16.msra.mxu0 %v1551
      %1591 = vmatprep.subr.bf16.mxu0 0
      %1592 = vmatpush1.bf16.msra.mxu0 %v1552
      %1593 = vmatprep.subr.bf16.mxu0 0
      %1594 = vmatpush1.bf16.msra.mxu0 %v1553
      %1595 = vmatprep.subr.bf16.mxu0 0
      %1596 = vmatpush1.bf16.msra.mxu0 %v1554
      %1597 = vmatprep.subr.bf16.mxu0 0
      %1598 = vmatpush1.bf16.msra.mxu0 0
      %1599 = vmatprep.subr.bf16.mxu0 0
      %1600 = vmatpush1.bf16.msra.mxu0 0
      %1601 = vmatprep.subr.bf16.mxu0 0
      %1602 = vmatpush1.bf16.msra.mxu0 0
      %1603 = vmatprep.subr.bf16.mxu0 0
      %1604 = vmatpush1.bf16.msra.mxu0 0
      %1605 = vmatprep.subr.bf16.mxu0 0
      %1606 = vmatpush1.bf16.msra.mxu0 0
      %1607 = vmatprep.subr.bf16.mxu0 0
      %1608 = vmatpush1.bf16.msra.mxu0 0
      %1609 = vmatprep.mubr.bf16.mxu0 %v1566
      %1610 = vmatmul.mubr.bf16.gmra.mrb[0].mxu0 %v1491
      %v1611 = vpop.f32.mrb[0].mxu0
      %v1612 = vadd.f32 %v1503, %v1611
      %v1613 = vpop.f32.mrb[0].mxu0
      %v1614 = vpop.f32.mrb[0].mxu0
      %v1615 = vadd.f32 %v1503, %v1614
      %v1616 = vpop.f32.mrb[0].mxu0
      %1617 = vmatprep.mubr.bf16.mxu0 %v1569
      %1618 = vmatmul.mubr.bf16.gmra.mrb[0].mxu0 %v1493
      %v1619 = vpop.f32.mrb[0].mxu0
      %v1620 = vadd.f32 %v1503, %v1619
      %v1621 = vpop.f32.mrb[0].mxu0
      %v1622 = vpop.f32.mrb[0].mxu0
      %v1623 = vadd.f32 %v1503, %v1622
      %v1624 = vpop.f32.mrb[0].mxu0
      %1625 = vmatprep.mubr.bf16.mxu0 %v1572
      %1626 = vmatmul.mubr.bf16.gmra.mrb[0].mxu0 %v1495
      %v1627 = vpop.f32.mrb[0].mxu0
      %v1628 = vadd.f32 %v1503, %v1627
      %v1629 = vpop.f32.mrb[0].mxu0
      %v1630 = vpop.f32.mrb[0].mxu0
      %v1631 = vadd.f32 %v1503, %v1630
      %v1632 = vpop.f32.mrb[0].mxu0
      %1633 = vmatprep.mubr.bf16.mxu0 %v1575
      %1634 = vmatmul.mubr.bf16.gmra.mrb[0].mxu0 %v1497
      %v1635 = vpop.f32.mrb[0].mxu0
      %v1636 = vadd.f32 %v1503, %v1635
      %v1637 = vpop.f32.mrb[0].mxu0
      %v1638 = vpop.f32.mrb[0].mxu0
      %v1639 = vadd.f32 %v1503, %v1638
      %v1640 = vpop.f32.mrb[0].mxu0
      %1641 = vdwg.mxu0
      %v1642 = vtanh.pop %v1612
      %v1643 = vtanh.pop %v1615
      %v1644 = vtanh.pop %v1620
      %v1645 = vtanh.pop %v1623
      %v1646 = vtanh.pop %v1628
      %v1647 = vtanh.pop %v1631
      %v1648 = vtanh.pop %v1636
      %v1649 = vtanh.pop %v1639
      %v1650 = vld [vmem:[%s9] sm:$0xf]
      %v1651 = vld [vmem:[%s9 + $0x4] sm:$0xf]
      %v1652 = vld [vmem:[%s9 + $0x8] sm:$0xf]
      %v1653 = vld [vmem:[%s9 + $0xc] sm:$0xf]
      %v1654 = vld [vmem:[%s9 + $0x10] sm:$0xf]
      %v1655 = vld [vmem:[%s9 + $0x14] sm:$0xf]
      %v1656 = vld [vmem:[%s9 + $0x18] sm:$0xf]
      %v1657 = vld [vmem:[%s9 + $0x1c] sm:$0xf]
      %v1658 = vld [vmem:[%s9 + $0x20] sm:$0xf]
      %v1659 = vld [vmem:[%s9 + $0x24] sm:$0xf]
      %v1660 = vld [vmem:[%s9 + $0x28] sm:$0xf]
      %v1661 = vld [vmem:[%s9 + $0x2c] sm:$0xf]
      %v1662 = vld [vmem:[%s9 + $0x30] sm:$0xf]
      %v1663 = vld [vmem:[%s9 + $0x34] sm:$0xf]
      %v1664 = vld [vmem:[%s9 + $0x38] sm:$0xf]
      %v1665 = vld [vmem:[%s9 + $0x3c] sm:$0xf]
      %v1666 = vld [vmem:[%s9 + $0x40] sm:$0xf]
      %v1667 = vld [vmem:[%s9 + $0x44] sm:$0xf]
      %v1668 = vld [vmem:[%s9 + $0x48] sm:$0xf]
      %v1669 = vld [vmem:[%s9 + $0x4c] sm:$0xf]
      %v1670 = vld [vmem:[%s10] sm:$0x1]
      %v1679 = vrot.slane %v1642, 6
      %v1680 = vrot.slane %v1643, 6
      %v1681 = vsel %vm574, %v1679, %v1680
      %v1682 = vrot.slane %v1644, 6
      %v1683 = vsel %vm574, %v1680, %v1682
      %v1684 = vrot.slane %v1645, 6
      %v1685 = vsel %vm574, %v1682, %v1684
      %v1686 = vrot.slane %v1646, 6
      %v1687 = vsel %vm574, %v1684, %v1686
      %v1688 = vrot.slane %v1647, 6
      %v1689 = vsel %vm574, %v1686, %v1688
      %v1690 = vrot.slane %v1648, 6
      %v1691 = vsel %vm574, %v1688, %v1690
      %v1692 = vrot.slane %v1649, 6
      %v1693 = vsel %vm574, %v1690, %v1692
      %v1702 = vsel %vm574, 0.0, %v1679
      %v1703 = vrot.slane %v1642, 7
      %v1704 = vrot.slane %v1643, 7
      %v1705 = vsel %vm599, %v1703, %v1704
      %v1706 = vrot.slane %v1644, 7
      %v1707 = vsel %vm599, %v1704, %v1706
      %v1708 = vrot.slane %v1645, 7
      %v1709 = vsel %vm599, %v1706, %v1708
      %v1710 = vrot.slane %v1646, 7
      %v1711 = vsel %vm599, %v1708, %v1710
      %v1712 = vrot.slane %v1647, 7
      %v1713 = vsel %vm599, %v1710, %v1712
      %v1714 = vrot.slane %v1648, 7
      %v1715 = vsel %vm599, %v1712, %v1714
      %v1716 = vrot.slane %v1649, 7
      %v1717 = vsel %vm599, %v1714, %v1716
      %v1719 = vsel %vm599, 0.0, %v1703
      %v1720 = vrot.slane %v1642, 1
      %v1721 = vrot.slane %v1643, 1
      %v1722 = vsel %vm617, %v1720, %v1721
      %v1723 = vrot.slane %v1644, 1
      %v1724 = vsel %vm617, %v1721, %v1723
      %v1725 = vrot.slane %v1645, 1
      %v1726 = vsel %vm617, %v1723, %v1725
      %v1727 = vrot.slane %v1646, 1
      %v1728 = vsel %vm617, %v1725, %v1727
      %v1729 = vrot.slane %v1647, 1
      %v1730 = vsel %vm617, %v1727, %v1729
      %v1731 = vrot.slane %v1648, 1
      %v1732 = vsel %vm617, %v1729, %v1731
      %v1733 = vrot.slane %v1649, 1
      %v1734 = vsel %vm617, %v1731, %v1733
      %v1736 = vsel %vm617, %v1733, 0.0
      %v1737 = vrot.slane %v1642, 2
      %v1738 = vrot.slane %v1643, 2
      %v1739 = vsel %vm635, %v1737, %v1738
      %v1740 = vrot.slane %v1644, 2
      %v1741 = vsel %vm635, %v1738, %v1740
      %v1742 = vrot.slane %v1645, 2
      %v1743 = vsel %vm635, %v1740, %v1742
      %v1744 = vrot.slane %v1646, 2
      %v1745 = vsel %vm635, %v1742, %v1744
      %v1746 = vrot.slane %v1647, 2
      %v1747 = vsel %vm635, %v1744, %v1746
      %v1748 = vrot.slane %v1648, 2
      %v1749 = vsel %vm635, %v1746, %v1748
      %v1750 = vrot.slane %v1649, 2
      %v1751 = vsel %vm635, %v1748, %v1750
      %v1760 = vsel %vm635, %v1750, 0.0
      %1762 = vrot.lane.b32.xlu0 %v1719, 32
      %v1763 = vpop.permute.xlu0 %1762
      %1764 = vrot.lane.b32.xlu0 %v1705, 32
      %v1765 = vpop.permute.xlu0 %1764
      %1766 = vrot.lane.b32.xlu0 %v1707, 32
      %v1767 = vpop.permute.xlu0 %1766
      %1768 = vrot.lane.b32.xlu0 %v1709, 32
      %v1769 = vpop.permute.xlu0 %1768
      %1770 = vrot.lane.b32.xlu0 %v1711, 32
      %v1771 = vpop.permute.xlu0 %1770
      %1772 = vrot.lane.b32.xlu0 %v1713, 32
      %v1773 = vpop.permute.xlu0 %1772
      %1774 = vrot.lane.b32.xlu0 %v1715, 32
      %v1775 = vpop.permute.xlu0 %1774
      %1776 = vrot.lane.b32.xlu0 %v1717, 32
      %v1777 = vpop.permute.xlu0 %1776
      %1786 = vrot.lane.b32.xlu0 %v1642, 64
      %v1787 = vpop.permute.xlu0 %1786
      %1788 = vrot.lane.b32.xlu0 %v1643, 64
      %v1789 = vpop.permute.xlu0 %1788
      %1790 = vrot.lane.b32.xlu0 %v1644, 64
      %v1791 = vpop.permute.xlu0 %1790
      %1792 = vrot.lane.b32.xlu0 %v1645, 64
      %v1793 = vpop.permute.xlu0 %1792
      %1794 = vrot.lane.b32.xlu0 %v1646, 64
      %v1795 = vpop.permute.xlu0 %1794
      %1796 = vrot.lane.b32.xlu0 %v1647, 64
      %v1797 = vpop.permute.xlu0 %1796
      %1798 = vrot.lane.b32.xlu0 %v1648, 64
      %v1799 = vpop.permute.xlu0 %1798
      %1800 = vrot.lane.b32.xlu0 %v1649, 64
      %v1801 = vpop.permute.xlu0 %1800
      %1811 = vrot.lane.b32.xlu0 %v1722, 96
      %v1812 = vpop.permute.xlu0 %1811
      %1813 = vrot.lane.b32.xlu0 %v1724, 96
      %v1814 = vpop.permute.xlu0 %1813
      %1815 = vrot.lane.b32.xlu0 %v1726, 96
      %v1816 = vpop.permute.xlu0 %1815
      %1817 = vrot.lane.b32.xlu0 %v1728, 96
      %v1818 = vpop.permute.xlu0 %1817
      %1819 = vrot.lane.b32.xlu0 %v1730, 96
      %v1820 = vpop.permute.xlu0 %1819
      %1821 = vrot.lane.b32.xlu0 %v1732, 96
      %v1822 = vpop.permute.xlu0 %1821
      %1823 = vrot.lane.b32.xlu0 %v1734, 96
      %v1824 = vpop.permute.xlu0 %1823
      %1825 = vrot.lane.b32.xlu0 %v1736, 96
      %v1826 = vpop.permute.xlu0 %1825
      %v1835 = vsel %vm477, %v1702, %v1763
      %v1836 = vsel %vm477, %v1681, %v1765
      %v1837 = vsel %vm477, %v1683, %v1767
      %v1838 = vsel %vm477, %v1685, %v1769
      %v1839 = vsel %vm477, %v1687, %v1771
      %v1840 = vsel %vm477, %v1689, %v1773
      %v1841 = vsel %vm477, %v1691, %v1775
      %v1842 = vsel %vm477, %v1693, %v1777
      %v1843 = vsel %vm778, %v1835, %v1787
      %v1844 = vsel %vm778, %v1836, %v1789
      %v1845 = vsel %vm778, %v1837, %v1791
      %v1846 = vsel %vm778, %v1838, %v1793
      %v1847 = vsel %vm778, %v1839, %v1795
      %v1848 = vsel %vm778, %v1840, %v1797
      %v1849 = vsel %vm778, %v1841, %v1799
      %v1850 = vsel %vm778, %v1842, %v1801
      %v1851 = vsel %vm1114, %v1843, %v1812
      %v1852 = vsel %vm1114, %v1844, %v1814
      %v1853 = vsel %vm1114, %v1845, %v1816
      %v1854 = vsel %vm1114, %v1846, %v1818
      %v1855 = vsel %vm1114, %v1847, %v1820
      %v1856 = vsel %vm1114, %v1848, %v1822
      %v1857 = vsel %vm1114, %v1849, %v1824
      %v1858 = vsel %vm1114, %v1850, %v1826
      %v1859 = vpack.c.bf16 %v1852, %v1851
      %v1860 = vpack.c.bf16 %v1741, %v1739
      %v1861 = vpack.c.bf16 %v1854, %v1853
      %v1862 = vpack.c.bf16 %v1745, %v1743
      %v1863 = vpack.c.bf16 %v1856, %v1855
      %v1864 = vpack.c.bf16 %v1749, %v1747
      %v1865 = vpack.c.bf16 %v1858, %v1857
      %v1866 = vpack.c.bf16 %v1760, %v1751
      %v1868 = vlaneseq
      %v1869 = vshrl.u32 %v1868, 7
      %v1870 = vsub.s32 0, %v1869
      %v1871 = vrot.slane %v1670, %v1870
      %v1893 = vunpack.c.l.b16 %v1650
      %v1894 = vunpack.c.l.b16 %v1651
      %v1895 = vunpack.c.l.b16 %v1652
      %v1896 = vunpack.c.l.b16 %v1653
      %v1897 = vunpack.c.l.b16 %v1654
      %v1898 = vunpack.c.l.b16 %v1655
      %v1899 = vunpack.c.l.b16 %v1656
      %v1900 = vunpack.c.l.b16 %v1657
      %v1901 = vunpack.c.l.b16 %v1658
      %v1902 = vunpack.c.l.b16 %v1659
      %v1903 = vunpack.c.l.b16 %v1660
      %v1904 = vunpack.c.l.b16 %v1661
      %v1905 = vunpack.c.l.b16 %v1662
      %v1906 = vunpack.c.l.b16 %v1663
      %v1907 = vunpack.c.l.b16 %v1664
      %v1908 = vunpack.c.l.b16 %v1665
      %v1909 = vunpack.c.l.b16 %v1666
      %v1910 = vunpack.c.l.b16 %v1667
      %v1911 = vunpack.c.l.b16 %v1668
      %v1912 = vunpack.c.l.b16 %v1669
      %v1913 = vpack.c.b16 %v1894, %v1893
      %v1914 = vpack.c.b16 %v1896, %v1895
      %v1915 = vpack.c.b16 %v1898, %v1897
      %v1916 = vpack.c.b16 %v1900, %v1899
      %v1917 = vpack.c.b16 %v1902, %v1901
      %v1918 = vpack.c.b16 %v1904, %v1903
      %v1919 = vpack.c.b16 %v1906, %v1905
      %v1920 = vpack.c.b16 %v1908, %v1907
      %v1921 = vpack.c.b16 %v1910, %v1909
      %v1922 = vpack.c.b16 %v1912, %v1911
      %v1934 = vsel %vm477, %v1860, 0
      %v1937 = vsel %vm477, %v1862, 0
      %v1940 = vsel %vm477, %v1864, 0
      %v1943 = vsel %vm477, %v1866, 0
      %1945 = vmatprep.subr.bf16.mxu0 0
      %1946 = vmatpush1.bf16.msra.mxu0 %v1913
      %1947 = vmatprep.subr.bf16.mxu0 0
      %1948 = vmatpush1.bf16.msra.mxu0 %v1914
      %1949 = vmatprep.subr.bf16.mxu0 0
      %1950 = vmatpush1.bf16.msra.mxu0 %v1915
      %1951 = vmatprep.subr.bf16.mxu0 0
      %1952 = vmatpush1.bf16.msra.mxu0 %v1916
      %1953 = vmatprep.subr.bf16.mxu0 0
      %1954 = vmatpush1.bf16.msra.mxu0 %v1917
      %1955 = vmatprep.subr.bf16.mxu0 0
      %1956 = vmatpush1.bf16.msra.mxu0 %v1918
      %1957 = vmatprep.subr.bf16.mxu0 0
      %1958 = vmatpush1.bf16.msra.mxu0 %v1919
      %1959 = vmatprep.subr.bf16.mxu0 0
      %1960 = vmatpush1.bf16.msra.mxu0 %v1920
      %1961 = vmatprep.subr.bf16.mxu0 0
      %1962 = vmatpush1.bf16.msra.mxu0 %v1921
      %1963 = vmatprep.subr.bf16.mxu0 0
      %1964 = vmatpush1.bf16.msra.mxu0 %v1922
      %1965 = vmatprep.subr.bf16.mxu0 0
      %1966 = vmatpush1.bf16.msra.mxu0 0
      %1967 = vmatprep.subr.bf16.mxu0 0
      %1968 = vmatpush1.bf16.msra.mxu0 0
      %1969 = vmatprep.subr.bf16.mxu0 0
      %1970 = vmatpush1.bf16.msra.mxu0 0
      %1971 = vmatprep.subr.bf16.mxu0 0
      %1972 = vmatpush1.bf16.msra.mxu0 0
      %1973 = vmatprep.subr.bf16.mxu0 0
      %1974 = vmatpush1.bf16.msra.mxu0 0
      %1975 = vmatprep.subr.bf16.mxu0 0
      %1976 = vmatpush1.bf16.msra.mxu0 0
      %1977 = vmatprep.mubr.bf16.mxu0 %v1934
      %1978 = vmatmul.mubr.bf16.gmra.mrb[0].mxu0 %v1859
      %v1979 = vpop.f32.mrb[0].mxu0
      %v1980 = vadd.f32 %v1871, %v1979
      %v1981 = vpop.f32.mrb[0].mxu0
      %v1982 = vpop.f32.mrb[0].mxu0
      %v1983 = vadd.f32 %v1871, %v1982
      %v1984 = vpop.f32.mrb[0].mxu0
      %1985 = vmatprep.mubr.bf16.mxu0 %v1937
      %1986 = vmatmul.mubr.bf16.gmra.mrb[0].mxu0 %v1861
      %v1987 = vpop.f32.mrb[0].mxu0
      %v1988 = vadd.f32 %v1871, %v1987
      %v1989 = vpop.f32.mrb[0].mxu0
      %v1990 = vpop.f32.mrb[0].mxu0
      %v1991 = vadd.f32 %v1871, %v1990
      %v1992 = vpop.f32.mrb[0].mxu0
      %1993 = vmatprep.mubr.bf16.mxu0 %v1940
      %1994 = vmatmul.mubr.bf16.gmra.mrb[0].mxu0 %v1863
      %v1995 = vpop.f32.mrb[0].mxu0
      %v1996 = vadd.f32 %v1871, %v1995
      %v1997 = vpop.f32.mrb[0].mxu0
      %v1998 = vpop.f32.mrb[0].mxu0
      %v1999 = vadd.f32 %v1871, %v1998
      %v2000 = vpop.f32.mrb[0].mxu0
      %2001 = vmatprep.mubr.bf16.mxu0 %v1943
      %2002 = vmatmul.mubr.bf16.gmra.mrb[0].mxu0 %v1865
      %v2003 = vpop.f32.mrb[0].mxu0
      %v2004 = vadd.f32 %v1871, %v2003
      %v2005 = vpop.f32.mrb[0].mxu0
      %v2006 = vpop.f32.mrb[0].mxu0
      %v2007 = vadd.f32 %v1871, %v2006
      %v2008 = vpop.f32.mrb[0].mxu0
      %2009 = vdwg.mxu0
      %v2010 = vtanh.pop %v1980
      %v2011 = vtanh.pop %v1983
      %v2012 = vtanh.pop %v1988
      %v2013 = vtanh.pop %v1991
      %v2014 = vtanh.pop %v1996
      %v2015 = vtanh.pop %v1999
      %v2016 = vtanh.pop %v2004
      %v2017 = vtanh.pop %v2007
      %v2018 = vld [vmem:[%s11] sm:$0xf]
      %v2019 = vld [vmem:[%s11 + $0x4] sm:$0xf]
      %v2020 = vld [vmem:[%s11 + $0x8] sm:$0xf]
      %v2021 = vld [vmem:[%s11 + $0xc] sm:$0xf]
      %v2022 = vld [vmem:[%s11 + $0x10] sm:$0xf]
      %v2023 = vld [vmem:[%s11 + $0x14] sm:$0xf]
      %v2024 = vld [vmem:[%s11 + $0x18] sm:$0xf]
      %v2025 = vld [vmem:[%s11 + $0x1c] sm:$0xf]
      %v2026 = vld [vmem:[%s11 + $0x20] sm:$0xf]
      %v2027 = vld [vmem:[%s11 + $0x24] sm:$0xf]
      %v2028 = vld [vmem:[%s11 + $0x28] sm:$0xf]
      %v2029 = vld [vmem:[%s11 + $0x2c] sm:$0xf]
      %v2030 = vld [vmem:[%s11 + $0x30] sm:$0xf]
      %v2031 = vld [vmem:[%s11 + $0x34] sm:$0xf]
      %v2032 = vld [vmem:[%s11 + $0x38] sm:$0xf]
      %v2033 = vld [vmem:[%s11 + $0x3c] sm:$0xf]
      %v2034 = vld [vmem:[%s11 + $0x40] sm:$0xf]
      %v2035 = vld [vmem:[%s11 + $0x44] sm:$0xf]
      %v2036 = vld [vmem:[%s11 + $0x48] sm:$0xf]
      %v2037 = vld [vmem:[%s11 + $0x4c] sm:$0xf]
      %v2038 = vld [vmem:[%s12] sm:$0x1]
      %v2047 = vrot.slane %v2010, 6
      %v2048 = vrot.slane %v2011, 6
      %v2049 = vsel %vm574, %v2047, %v2048
      %v2050 = vrot.slane %v2012, 6
      %v2051 = vsel %vm574, %v2048, %v2050
      %v2052 = vrot.slane %v2013, 6
      %v2053 = vsel %vm574, %v2050, %v2052
      %v2054 = vrot.slane %v2014, 6
      %v2055 = vsel %vm574, %v2052, %v2054
      %v2056 = vrot.slane %v2015, 6
      %v2057 = vsel %vm574, %v2054, %v2056
      %v2058 = vrot.slane %v2016, 6
      %v2059 = vsel %vm574, %v2056, %v2058
      %v2060 = vrot.slane %v2017, 6
      %v2061 = vsel %vm574, %v2058, %v2060
      %v2070 = vsel %vm574, 0.0, %v2047
      %v2071 = vrot.slane %v2010, 7
      %v2072 = vrot.slane %v2011, 7
      %v2073 = vsel %vm599, %v2071, %v2072
      %v2074 = vrot.slane %v2012, 7
      %v2075 = vsel %vm599, %v2072, %v2074
      %v2076 = vrot.slane %v2013, 7
      %v2077 = vsel %vm599, %v2074, %v2076
      %v2078 = vrot.slane %v2014, 7
      %v2079 = vsel %vm599, %v2076, %v2078
      %v2080 = vrot.slane %v2015, 7
      %v2081 = vsel %vm599, %v2078, %v2080
      %v2082 = vrot.slane %v2016, 7
      %v2083 = vsel %vm599, %v2080, %v2082
      %v2084 = vrot.slane %v2017, 7
      %v2085 = vsel %vm599, %v2082, %v2084
      %v2087 = vsel %vm599, 0.0, %v2071
      %v2088 = vrot.slane %v2010, 1
      %v2089 = vrot.slane %v2011, 1
      %v2090 = vsel %vm617, %v2088, %v2089
      %v2091 = vrot.slane %v2012, 1
      %v2092 = vsel %vm617, %v2089, %v2091
      %v2093 = vrot.slane %v2013, 1
      %v2094 = vsel %vm617, %v2091, %v2093
      %v2095 = vrot.slane %v2014, 1
      %v2096 = vsel %vm617, %v2093, %v2095
      %v2097 = vrot.slane %v2015, 1
      %v2098 = vsel %vm617, %v2095, %v2097
      %v2099 = vrot.slane %v2016, 1
      %v2100 = vsel %vm617, %v2097, %v2099
      %v2101 = vrot.slane %v2017, 1
      %v2102 = vsel %vm617, %v2099, %v2101
      %v2104 = vsel %vm617, %v2101, 0.0
      %v2105 = vrot.slane %v2010, 2
      %v2106 = vrot.slane %v2011, 2
      %v2107 = vsel %vm635, %v2105, %v2106
      %v2108 = vrot.slane %v2012, 2
      %v2109 = vsel %vm635, %v2106, %v2108
      %v2110 = vrot.slane %v2013, 2
      %v2111 = vsel %vm635, %v2108, %v2110
      %v2112 = vrot.slane %v2014, 2
      %v2113 = vsel %vm635, %v2110, %v2112
      %v2114 = vrot.slane %v2015, 2
      %v2115 = vsel %vm635, %v2112, %v2114
      %v2116 = vrot.slane %v2016, 2
      %v2117 = vsel %vm635, %v2114, %v2116
      %v2118 = vrot.slane %v2017, 2
      %v2119 = vsel %vm635, %v2116, %v2118
      %v2128 = vsel %vm635, %v2118, 0.0
      %2130 = vrot.lane.b32.xlu0 %v2087, 32
      %v2131 = vpop.permute.xlu0 %2130
      %2132 = vrot.lane.b32.xlu0 %v2073, 32
      %v2133 = vpop.permute.xlu0 %2132
      %2134 = vrot.lane.b32.xlu0 %v2075, 32
      %v2135 = vpop.permute.xlu0 %2134
      %2136 = vrot.lane.b32.xlu0 %v2077, 32
      %v2137 = vpop.permute.xlu0 %2136
      %2138 = vrot.lane.b32.xlu0 %v2079, 32
      %v2139 = vpop.permute.xlu0 %2138
      %2140 = vrot.lane.b32.xlu0 %v2081, 32
      %v2141 = vpop.permute.xlu0 %2140
      %2142 = vrot.lane.b32.xlu0 %v2083, 32
      %v2143 = vpop.permute.xlu0 %2142
      %2144 = vrot.lane.b32.xlu0 %v2085, 32
      %v2145 = vpop.permute.xlu0 %2144
      %2154 = vrot.lane.b32.xlu0 %v2010, 64
      %v2155 = vpop.permute.xlu0 %2154
      %2156 = vrot.lane.b32.xlu0 %v2011, 64
      %v2157 = vpop.permute.xlu0 %2156
      %2158 = vrot.lane.b32.xlu0 %v2012, 64
      %v2159 = vpop.permute.xlu0 %2158
      %2160 = vrot.lane.b32.xlu0 %v2013, 64
      %v2161 = vpop.permute.xlu0 %2160
      %2162 = vrot.lane.b32.xlu0 %v2014, 64
      %v2163 = vpop.permute.xlu0 %2162
      %2164 = vrot.lane.b32.xlu0 %v2015, 64
      %v2165 = vpop.permute.xlu0 %2164
      %2166 = vrot.lane.b32.xlu0 %v2016, 64
      %v2167 = vpop.permute.xlu0 %2166
      %2168 = vrot.lane.b32.xlu0 %v2017, 64
      %v2169 = vpop.permute.xlu0 %2168
      %2179 = vrot.lane.b32.xlu0 %v2090, 96
      %v2180 = vpop.permute.xlu0 %2179
      %2181 = vrot.lane.b32.xlu0 %v2092, 96
      %v2182 = vpop.permute.xlu0 %2181
      %2183 = vrot.lane.b32.xlu0 %v2094, 96
      %v2184 = vpop.permute.xlu0 %2183
      %2185 = vrot.lane.b32.xlu0 %v2096, 96
      %v2186 = vpop.permute.xlu0 %2185
      %2187 = vrot.lane.b32.xlu0 %v2098, 96
      %v2188 = vpop.permute.xlu0 %2187
      %2189 = vrot.lane.b32.xlu0 %v2100, 96
      %v2190 = vpop.permute.xlu0 %2189
      %2191 = vrot.lane.b32.xlu0 %v2102, 96
      %v2192 = vpop.permute.xlu0 %2191
      %2193 = vrot.lane.b32.xlu0 %v2104, 96
      %v2194 = vpop.permute.xlu0 %2193
      %v2203 = vsel %vm477, %v2070, %v2131
      %v2204 = vsel %vm477, %v2049, %v2133
      %v2205 = vsel %vm477, %v2051, %v2135
      %v2206 = vsel %vm477, %v2053, %v2137
      %v2207 = vsel %vm477, %v2055, %v2139
      %v2208 = vsel %vm477, %v2057, %v2141
      %v2209 = vsel %vm477, %v2059, %v2143
      %v2210 = vsel %vm477, %v2061, %v2145
      %v2211 = vsel %vm778, %v2203, %v2155
      %v2212 = vsel %vm778, %v2204, %v2157
      %v2213 = vsel %vm778, %v2205, %v2159
      %v2214 = vsel %vm778, %v2206, %v2161
      %v2215 = vsel %vm778, %v2207, %v2163
      %v2216 = vsel %vm778, %v2208, %v2165
      %v2217 = vsel %vm778, %v2209, %v2167
      %v2218 = vsel %vm778, %v2210, %v2169
      %v2219 = vsel %vm1114, %v2211, %v2180
      %v2220 = vsel %vm1114, %v2212, %v2182
      %v2221 = vsel %vm1114, %v2213, %v2184
      %v2222 = vsel %vm1114, %v2214, %v2186
      %v2223 = vsel %vm1114, %v2215, %v2188
      %v2224 = vsel %vm1114, %v2216, %v2190
      %v2225 = vsel %vm1114, %v2217, %v2192
      %v2226 = vsel %vm1114, %v2218, %v2194
      %v2227 = vpack.c.bf16 %v2220, %v2219
      %v2228 = vpack.c.bf16 %v2109, %v2107
      %v2229 = vpack.c.bf16 %v2222, %v2221
      %v2230 = vpack.c.bf16 %v2113, %v2111
      %v2231 = vpack.c.bf16 %v2224, %v2223
      %v2232 = vpack.c.bf16 %v2117, %v2115
      %v2233 = vpack.c.bf16 %v2226, %v2225
      %v2234 = vpack.c.bf16 %v2128, %v2119
      %v2236 = vlaneseq
      %v2237 = vshrl.u32 %v2236, 7
      %v2238 = vsub.s32 0, %v2237
      %v2239 = vrot.slane %v2038, %v2238
      %v2261 = vunpack.c.l.b16 %v2018
      %v2262 = vunpack.c.l.b16 %v2019
      %v2263 = vunpack.c.l.b16 %v2020
      %v2264 = vunpack.c.l.b16 %v2021
      %v2265 = vunpack.c.l.b16 %v2022
      %v2266 = vunpack.c.l.b16 %v2023
      %v2267 = vunpack.c.l.b16 %v2024
      %v2268 = vunpack.c.l.b16 %v2025
      %v2269 = vunpack.c.l.b16 %v2026
      %v2270 = vunpack.c.l.b16 %v2027
      %v2271 = vunpack.c.l.b16 %v2028
      %v2272 = vunpack.c.l.b16 %v2029
      %v2273 = vunpack.c.l.b16 %v2030
      %v2274 = vunpack.c.l.b16 %v2031
      %v2275 = vunpack.c.l.b16 %v2032
      %v2276 = vunpack.c.l.b16 %v2033
      %v2277 = vunpack.c.l.b16 %v2034
      %v2278 = vunpack.c.l.b16 %v2035
      %v2279 = vunpack.c.l.b16 %v2036
      %v2280 = vunpack.c.l.b16 %v2037
      %v2281 = vpack.c.b16 %v2262, %v2261
      %v2282 = vpack.c.b16 %v2264, %v2263
      %v2283 = vpack.c.b16 %v2266, %v2265
      %v2284 = vpack.c.b16 %v2268, %v2267
      %v2285 = vpack.c.b16 %v2270, %v2269
      %v2286 = vpack.c.b16 %v2272, %v2271
      %v2287 = vpack.c.b16 %v2274, %v2273
      %v2288 = vpack.c.b16 %v2276, %v2275
      %v2289 = vpack.c.b16 %v2278, %v2277
      %v2290 = vpack.c.b16 %v2280, %v2279
      %v2302 = vsel %vm477, %v2228, 0
      %v2305 = vsel %vm477, %v2230, 0
      %v2308 = vsel %vm477, %v2232, 0
      %v2311 = vsel %vm477, %v2234, 0
      %2313 = vmatprep.subr.bf16.mxu0 0
      %2314 = vmatpush1.bf16.msra.mxu0 %v2281
      %2315 = vmatprep.subr.bf16.mxu0 0
      %2316 = vmatpush1.bf16.msra.mxu0 %v2282
      %2317 = vmatprep.subr.bf16.mxu0 0
      %2318 = vmatpush1.bf16.msra.mxu0 %v2283
      %2319 = vmatprep.subr.bf16.mxu0 0
      %2320 = vmatpush1.bf16.msra.mxu0 %v2284
      %2321 = vmatprep.subr.bf16.mxu0 0
      %2322 = vmatpush1.bf16.msra.mxu0 %v2285
      %2323 = vmatprep.subr.bf16.mxu0 0
      %2324 = vmatpush1.bf16.msra.mxu0 %v2286
      %2325 = vmatprep.subr.bf16.mxu0 0
      %2326 = vmatpush1.bf16.msra.mxu0 %v2287
      %2327 = vmatprep.subr.bf16.mxu0 0
      %2328 = vmatpush1.bf16.msra.mxu0 %v2288
      %2329 = vmatprep.subr.bf16.mxu0 0
      %2330 = vmatpush1.bf16.msra.mxu0 %v2289
      %2331 = vmatprep.subr.bf16.mxu0 0
      %2332 = vmatpush1.bf16.msra.mxu0 %v2290
      %2333 = vmatprep.subr.bf16.mxu0 0
      %2334 = vmatpush1.bf16.msra.mxu0 0
      %2335 = vmatprep.subr.bf16.mxu0 0
      %2336 = vmatpush1.bf16.msra.mxu0 0
      %2337 = vmatprep.subr.bf16.mxu0 0
      %2338 = vmatpush1.bf16.msra.mxu0 0
      %2339 = vmatprep.subr.bf16.mxu0 0
      %2340 = vmatpush1.bf16.msra.mxu0 0
      %2341 = vmatprep.subr.bf16.mxu0 0
      %2342 = vmatpush1.bf16.msra.mxu0 0
      %2343 = vmatprep.subr.bf16.mxu0 0
      %2344 = vmatpush1.bf16.msra.mxu0 0
      %2345 = vmatprep.mubr.bf16.mxu0 %v2302
      %2346 = vmatmul.mubr.bf16.gmra.mrb[0].mxu0 %v2227
      %v2347 = vpop.f32.mrb[0].mxu0
      %v2348 = vadd.f32 %v2239, %v2347
      %v2349 = vpop.f32.mrb[0].mxu0
      %v2350 = vpop.f32.mrb[0].mxu0
      %v2351 = vadd.f32 %v2239, %v2350
      %v2352 = vpop.f32.mrb[0].mxu0
      %2353 = vmatprep.mubr.bf16.mxu0 %v2305
      %2354 = vmatmul.mubr.bf16.gmra.mrb[0].mxu0 %v2229
      %v2355 = vpop.f32.mrb[0].mxu0
      %v2356 = vadd.f32 %v2239, %v2355
      %v2357 = vpop.f32.mrb[0].mxu0
      %v2358 = vpop.f32.mrb[0].mxu0
      %v2359 = vadd.f32 %v2239, %v2358
      %v2360 = vpop.f32.mrb[0].mxu0
      %2361 = vmatprep.mubr.bf16.mxu0 %v2308
      %2362 = vmatmul.mubr.bf16.gmra.mrb[0].mxu0 %v2231
      %v2363 = vpop.f32.mrb[0].mxu0
      %v2364 = vadd.f32 %v2239, %v2363
      %v2365 = vpop.f32.mrb[0].mxu0
      %v2366 = vpop.f32.mrb[0].mxu0
      %v2367 = vadd.f32 %v2239, %v2366
      %v2368 = vpop.f32.mrb[0].mxu0
      %2369 = vmatprep.mubr.bf16.mxu0 %v2311
      %2370 = vmatmul.mubr.bf16.gmra.mrb[0].mxu0 %v2233
      %v2371 = vpop.f32.mrb[0].mxu0
      %v2372 = vadd.f32 %v2239, %v2371
      %v2373 = vpop.f32.mrb[0].mxu0
      %v2374 = vpop.f32.mrb[0].mxu0
      %v2375 = vadd.f32 %v2239, %v2374
      %v2376 = vpop.f32.mrb[0].mxu0
      %2377 = vdwg.mxu0
      %v2378 = vadd.f32 %v2348, %v525
      %v2379 = vadd.f32 %v2351, %v528
      %v2380 = vadd.f32 %v2356, %v533
      %v2381 = vadd.f32 %v2359, %v536
      %v2382 = vadd.f32 %v2364, %v541
      %v2383 = vadd.f32 %v2367, %v544
      %v2384 = vadd.f32 %v2372, %v549
      %v2385 = vadd.f32 %v2375, %v552
      %2386 = vst.msk [vmem:[%s440] sm:$0xff] %vm752, %v2378
      %2387 = vst.msk [vmem:[%s440 + $0x8] sm:$0xff] %vm752, %v2379
      %2388 = vst.msk [vmem:[%s440 + $0x10] sm:$0xff] %vm752, %v2380
      %2389 = vst.msk [vmem:[%s440 + $0x18] sm:$0xff] %vm752, %v2381
      %2390 = vst.msk [vmem:[%s440 + $0x20] sm:$0xff] %vm752, %v2382
      %2391 = vst.msk [vmem:[%s440 + $0x28] sm:$0xff] %vm752, %v2383
      %2392 = vst.msk [vmem:[%s440 + $0x30] sm:$0xff] %vm752, %v2384
      %2393 = vst.msk [vmem:[%s440 + $0x38] sm:$0xff] %vm752, %v2385
      %p2394 = scmp.lt.s32.totalorder %s24, 1
      %s2395 = scalar_select %p2394, %s24, 1
      %s2396 = smul.addr %s2395, 8
      %s2397 = smul.addr %s2396, 8
      %s2398 = scalar_lea.vmem %s13, %s2397
      // Predicated region
      $region73: #{fastspeech2_forward.13} parent=71 // pred_check
        %p2399 = pneg %p320
      $region74: #{fastspeech2_forward.13} parent=71 // pred_check_branch
        %2401 = sbr.rel (%p2399) target = $region76
      $region75: #{fastspeech2_forward.13} parent=71 // pred_region
        _
      $region76: #{fastspeech2_forward.13} parent=71 // pred_fallthru
        _
    $region72: #{fastspeech2_forward.13} parent=5 // pred_fallthru
      _
    %p2402 = scmp.le.s32.totalorder 2, %s19
    // Predicated region
    $region77: #{fastspeech2_forward.13} parent=5 // pred_check
      %p2403 = pneg %p2402
    $region78: #{fastspeech2_forward.13} parent=5 // pred_check_branch
      %2405 = sbr.rel (%p2403) target = $region80
    $region79: #{fastspeech2_forward.13} parent=5 // pred_region
      %s2406 = ssub.s32 %s19, 2
      // Predicated region
      $region81: #{fastspeech2_forward.13} parent=79 // pred_check
        %p2407 = pneg %p326
      $region82: #{fastspeech2_forward.13} parent=79 // pred_check_branch
        %2409 = sbr.rel (%p2407) target = $region84
      $region83: #{fastspeech2_forward.13} parent=79 // pred_region
        %p2410 = scmp.lt.s32.totalorder %s25, 1
        %s2411 = scalar_select %p2410, %s25, 1
        %s2412 = smul.addr %s2411, 8
        %s2413 = smul.addr %s2412, 8
        %s2414 = scalar_lea.vmem %s13, %s2413
      $region84: #{fastspeech2_forward.13} parent=79 // pred_fallthru
        _
    $region80: #{fastspeech2_forward.13} parent=5 // pred_fallthru
      _
  $region6: #{fastspeech2_forward.13} parent=0 // loop_footer
    %s23 = sadd.s32 1, %s19
  $region7: #{fastspeech2_forward.13} parent=0 // loop_footer_branch
    %18 = sbr.rel target = $region3
  $region8: #{fastspeech2_forward.13} parent=0 // loop_exit
    _

// kernel: fastspeech2_forward.11
$region0: #{fastspeech2_forward.11}
  #allocation0 [shape = 'u32[]', space=smem, size = 0x4, offset = 0x4, fixed_abs, tag = 'smem constant byte address 0x4 - core index']
  #allocation1 [shape = 'u32[144,128]{1,0:T(1,128)}', space=vmem, size = 0x12000, scoped, tag = 'internal scratch']
  #allocation2 [shape = 's32[1]{0}', space=sflag, size = 0x4, scoped, tag = 'scoped memory for fastspeech2_forward.11']
  #allocation3 [shape = 'u8[512]{0}', space=smem, size = 0x200, scoped, tag = 'prefetched SMEM operand 0']
  %s0 = inlined_call_operand.vmem [shape: s32[2], index: 0, kind: input, shape index: {}]
  %s1 = inlined_call_operand.vmem [shape: f32[2,64,32], index: 1, kind: input, shape index: {}]
  %s2 = inlined_call_operand.vmem [shape: bf16[32,96], index: 2, kind: input, shape index: {}]
  %s3 = inlined_call_operand.vmem [shape: f32[1,96], index: 3, kind: input, shape index: {}]
  %s4 = inlined_call_operand.vmem [shape: bf16[32,32], index: 4, kind: input, shape index: {}]
  %s5 = inlined_call_operand.vmem [shape: f32[1,32], index: 5, kind: input, shape index: {}]
  %s6 = inlined_call_operand.vmem [shape: f32[1,32], index: 6, kind: input, shape index: {}]
  %s7 = inlined_call_operand.vmem [shape: f32[1,32], index: 7, kind: input, shape index: {}]
  %s8 = inlined_call_operand.vmem [shape: bf16[288,64], index: 8, kind: input, shape index: {}]
  %s9 = inlined_call_operand.vmem [shape: f32[1,64], index: 9, kind: input, shape index: {}]
  %s10 = inlined_call_operand.vmem [shape: bf16[64,32], index: 10, kind: input, shape index: {}]
  %s11 = inlined_call_operand.vmem [shape: f32[1,32], index: 11, kind: input, shape index: {}]
  %s12 = inlined_call_operand.vmem [shape: f32[1,32], index: 12, kind: input, shape index: {}]
  %s13 = inlined_call_operand.vmem [shape: f32[1,32], index: 13, kind: input, shape index: {}]
  %s14 = inlined_call_operand.vmem [shape: f32[2,64,32], index: 14, kind: output, shape index: {}]
  %s15 = sld [smem:[#allocation0]]
  $region85: #{fastspeech2_forward.11} parent=0
    _
  %s17 = ssub.s32 1, %s15
  %s18 = scalar_select 0, %s17, %s15
  %s19 = sshll.u32 %s0, 4
  %s20 = int_to_ptr.vmem [resolvable:$true] %s19
  %22 = dma.vmem_to_smem %s20, 16, [#allocation3], [#allocation2]
  %23 = dma.done [#allocation2], 16
  %24 = sfence
  loop: start=0, step=1, limit=4
  $region2: #{fastspeech2_forward.11} parent=0 // loop_pre_header
    _
  $region3: #{fastspeech2_forward.11} parent=0 // loop_header
    %s26 = sphi 0, %s30
    %p27 = scmp.ge.s32.totalorder %s26, 4
    %s36 = sphi 0, %s38
    %s39 = sphi 0, %s36
    %s40 = sphi 0, %s39
    %s56 = sphi 0, %s40
    %s60 = sphi 0, %s60
    %s62 = sphi 0, %s60
    %s63 = sphi 0, %s62
    %s77 = sphi 0, %s63
    %s81 = sphi 0, %s81
    %s83 = sphi 0, %s81
    %s84 = sphi 0, %s83
    %s98 = sphi 0, %s84
    %s102 = sphi 0, %s102
    %s104 = sphi 0, %s102
    %s105 = sphi 0, %s104
    %s119 = sphi 0, %s105
    %s123 = sphi 0, %s123
    %s125 = sphi 0, %s123
    %s126 = sphi 0, %s125
    %s140 = sphi 0, %s126
    %s144 = sphi 0, %s144
    %s146 = sphi 0, %s144
    %s147 = sphi 0, %s146
    %s161 = sphi 0, %s147
    %s165 = sphi 0, %s165
    %s167 = sphi 0, %s165
    %s168 = sphi 0, %s167
    %s182 = sphi 0, %s168
    %s186 = sphi 0, %s186
    %s188 = sphi 0, %s186
    %s189 = sphi 0, %s188
    %s203 = sphi 0, %s189
    %s207 = sphi 0, %s207
    %s209 = sphi 0, %s207
    %s210 = sphi 0, %s209
    %s224 = sphi 0, %s210
    %s228 = sphi 0, %s228
    %s230 = sphi 0, %s228
    %s231 = sphi 0, %s230
    %s245 = sphi 0, %s231
    %s249 = sphi 0, %s249
    %s251 = sphi 0, %s249
    %s252 = sphi 0, %s251
    %s266 = sphi 0, %s252
    %s270 = sphi 0, %s270
    %s272 = sphi 0, %s270
    %s273 = sphi 0, %s272
    %s287 = sphi 0, %s273
    %s291 = sphi 0, %s291
    %s293 = sphi 0, %s291
    %s294 = sphi 0, %s293
    %s308 = sphi 0, %s294
    %s314 = sphi 0, %s316
    %s317 = sphi 0, %s314
    %s318 = sphi 0, %s317
    %s334 = sphi 0, %s318
  $region4: #{fastspeech2_forward.11} parent=0 // loop_header_branch
    %29 = sbr.rel (%p27) target = $region8
  $region5: #{fastspeech2_forward.11} parent=0 // loop_body
    %s31 = ssub.s32 %s26, 1
    %s32 = ssub.s32 %s26, 2
    %s33 = sadd.s32 %s26, 1
    %s34 = ssub.s32 %s26, %s33
    %p35 = scmp.eq.s32.totalorder %s34, 0
    %s37 = sadd.s32 %s36, 1
    %s38 = scalar_select %p35, %s36, %s37
    %p41 = pneg %p35
    %p42 = scmp.eq.s32.totalorder %s26, 1
    %p43 = por %p41, %p42
    %p44 = scmp.ne.s32.totalorder %s36, %s39
    %p45 = scmp.eq.s32.totalorder %s26, 0
    %p46 = por %p44, %p45
    %p47 = scmp.ne.s32.totalorder %s36, %s39
    %p48 = scmp.eq.s32.totalorder %s31, 1
    %p49 = por %p47, %p48
    %p50 = scmp.ne.s32.totalorder %s39, %s40
    %p51 = scmp.eq.s32.totalorder %s31, 0
    %p52 = por %p50, %p51
    %p53 = scmp.ne.s32.totalorder %s39, %s40
    %p54 = scmp.eq.s32.totalorder %s32, 1
    %p55 = por %p53, %p54
    %p57 = scmp.ne.s32.totalorder %s40, %s56
    %p58 = scmp.eq.s32.totalorder %s32, 0
    %p59 = por %p57, %p58
    %s61 = sadd.s32 %s60, 1
    %p64 = scmp.eq.s32.totalorder %s26, 1
    %p65 = scmp.ne.s32.totalorder %s60, %s62
    %p66 = scmp.eq.s32.totalorder %s26, 0
    %p67 = por %p65, %p66
    %p68 = scmp.ne.s32.totalorder %s60, %s62
    %p69 = scmp.eq.s32.totalorder %s31, 1
    %p70 = por %p68, %p69
    %p71 = scmp.ne.s32.totalorder %s62, %s63
    %p72 = scmp.eq.s32.totalorder %s31, 0
    %p73 = por %p71, %p72
    %p74 = scmp.ne.s32.totalorder %s62, %s63
    %p75 = scmp.eq.s32.totalorder %s32, 1
    %p76 = por %p74, %p75
    %p78 = scmp.ne.s32.totalorder %s63, %s77
    %p79 = scmp.eq.s32.totalorder %s32, 0
    %p80 = por %p78, %p79
    %s82 = sadd.s32 %s81, 1
    %p85 = scmp.eq.s32.totalorder %s26, 1
    %p86 = scmp.ne.s32.totalorder %s81, %s83
    %p87 = scmp.eq.s32.totalorder %s26, 0
    %p88 = por %p86, %p87
    %p89 = scmp.ne.s32.totalorder %s81, %s83
    %p90 = scmp.eq.s32.totalorder %s31, 1
    %p91 = por %p89, %p90
    %p92 = scmp.ne.s32.totalorder %s83, %s84
    %p93 = scmp.eq.s32.totalorder %s31, 0
    %p94 = por %p92, %p93
    %p95 = scmp.ne.s32.totalorder %s83, %s84
    %p96 = scmp.eq.s32.totalorder %s32, 1
    %p97 = por %p95, %p96
    %p99 = scmp.ne.s32.totalorder %s84, %s98
    %p100 = scmp.eq.s32.totalorder %s32, 0
    %p101 = por %p99, %p100
    %s103 = sadd.s32 %s102, 1
    %p106 = scmp.eq.s32.totalorder %s26, 1
    %p107 = scmp.ne.s32.totalorder %s102, %s104
    %p108 = scmp.eq.s32.totalorder %s26, 0
    %p109 = por %p107, %p108
    %p110 = scmp.ne.s32.totalorder %s102, %s104
    %p111 = scmp.eq.s32.totalorder %s31, 1
    %p112 = por %p110, %p111
    %p113 = scmp.ne.s32.totalorder %s104, %s105
    %p114 = scmp.eq.s32.totalorder %s31, 0
    %p115 = por %p113, %p114
    %p116 = scmp.ne.s32.totalorder %s104, %s105
    %p117 = scmp.eq.s32.totalorder %s32, 1
    %p118 = por %p116, %p117
    %p120 = scmp.ne.s32.totalorder %s105, %s119
    %p121 = scmp.eq.s32.totalorder %s32, 0
    %p122 = por %p120, %p121
    %s124 = sadd.s32 %s123, 1
    %p127 = scmp.eq.s32.totalorder %s26, 1
    %p128 = scmp.ne.s32.totalorder %s123, %s125
    %p129 = scmp.eq.s32.totalorder %s26, 0
    %p130 = por %p128, %p129
    %p131 = scmp.ne.s32.totalorder %s123, %s125
    %p132 = scmp.eq.s32.totalorder %s31, 1
    %p133 = por %p131, %p132
    %p134 = scmp.ne.s32.totalorder %s125, %s126
    %p135 = scmp.eq.s32.totalorder %s31, 0
    %p136 = por %p134, %p135
    %p137 = scmp.ne.s32.totalorder %s125, %s126
    %p138 = scmp.eq.s32.totalorder %s32, 1
    %p139 = por %p137, %p138
    %p141 = scmp.ne.s32.totalorder %s126, %s140
    %p142 = scmp.eq.s32.totalorder %s32, 0
    %p143 = por %p141, %p142
    %s145 = sadd.s32 %s144, 1
    %p148 = scmp.eq.s32.totalorder %s26, 1
    %p149 = scmp.ne.s32.totalorder %s144, %s146
    %p150 = scmp.eq.s32.totalorder %s26, 0
    %p151 = por %p149, %p150
    %p152 = scmp.ne.s32.totalorder %s144, %s146
    %p153 = scmp.eq.s32.totalorder %s31, 1
    %p154 = por %p152, %p153
    %p155 = scmp.ne.s32.totalorder %s146, %s147
    %p156 = scmp.eq.s32.totalorder %s31, 0
    %p157 = por %p155, %p156
    %p158 = scmp.ne.s32.totalorder %s146, %s147
    %p159 = scmp.eq.s32.totalorder %s32, 1
    %p160 = por %p158, %p159
    %p162 = scmp.ne.s32.totalorder %s147, %s161
    %p163 = scmp.eq.s32.totalorder %s32, 0
    %p164 = por %p162, %p163
    %s166 = sadd.s32 %s165, 1
    %p169 = scmp.eq.s32.totalorder %s26, 1
    %p170 = scmp.ne.s32.totalorder %s165, %s167
    %p171 = scmp.eq.s32.totalorder %s26, 0
    %p172 = por %p170, %p171
    %p173 = scmp.ne.s32.totalorder %s165, %s167
    %p174 = scmp.eq.s32.totalorder %s31, 1
    %p175 = por %p173, %p174
    %p176 = scmp.ne.s32.totalorder %s167, %s168
    %p177 = scmp.eq.s32.totalorder %s31, 0
    %p178 = por %p176, %p177
    %p179 = scmp.ne.s32.totalorder %s167, %s168
    %p180 = scmp.eq.s32.totalorder %s32, 1
    %p181 = por %p179, %p180
    %p183 = scmp.ne.s32.totalorder %s168, %s182
    %p184 = scmp.eq.s32.totalorder %s32, 0
    %p185 = por %p183, %p184
    %s187 = sadd.s32 %s186, 1
    %p190 = scmp.eq.s32.totalorder %s26, 1
    %p191 = scmp.ne.s32.totalorder %s186, %s188
    %p192 = scmp.eq.s32.totalorder %s26, 0
    %p193 = por %p191, %p192
    %p194 = scmp.ne.s32.totalorder %s186, %s188
    %p195 = scmp.eq.s32.totalorder %s31, 1
    %p196 = por %p194, %p195
    %p197 = scmp.ne.s32.totalorder %s188, %s189
    %p198 = scmp.eq.s32.totalorder %s31, 0
    %p199 = por %p197, %p198
    %p200 = scmp.ne.s32.totalorder %s188, %s189
    %p201 = scmp.eq.s32.totalorder %s32, 1
    %p202 = por %p200, %p201
    %p204 = scmp.ne.s32.totalorder %s189, %s203
    %p205 = scmp.eq.s32.totalorder %s32, 0
    %p206 = por %p204, %p205
    %s208 = sadd.s32 %s207, 1
    %p211 = scmp.eq.s32.totalorder %s26, 1
    %p212 = scmp.ne.s32.totalorder %s207, %s209
    %p213 = scmp.eq.s32.totalorder %s26, 0
    %p214 = por %p212, %p213
    %p215 = scmp.ne.s32.totalorder %s207, %s209
    %p216 = scmp.eq.s32.totalorder %s31, 1
    %p217 = por %p215, %p216
    %p218 = scmp.ne.s32.totalorder %s209, %s210
    %p219 = scmp.eq.s32.totalorder %s31, 0
    %p220 = por %p218, %p219
    %p221 = scmp.ne.s32.totalorder %s209, %s210
    %p222 = scmp.eq.s32.totalorder %s32, 1
    %p223 = por %p221, %p222
    %p225 = scmp.ne.s32.totalorder %s210, %s224
    %p226 = scmp.eq.s32.totalorder %s32, 0
    %p227 = por %p225, %p226
    %s229 = sadd.s32 %s228, 1
    %p232 = scmp.eq.s32.totalorder %s26, 1
    %p233 = scmp.ne.s32.totalorder %s228, %s230
    %p234 = scmp.eq.s32.totalorder %s26, 0
    %p235 = por %p233, %p234
    %p236 = scmp.ne.s32.totalorder %s228, %s230
    %p237 = scmp.eq.s32.totalorder %s31, 1
    %p238 = por %p236, %p237
    %p239 = scmp.ne.s32.totalorder %s230, %s231
    %p240 = scmp.eq.s32.totalorder %s31, 0
    %p241 = por %p239, %p240
    %p242 = scmp.ne.s32.totalorder %s230, %s231
    %p243 = scmp.eq.s32.totalorder %s32, 1
    %p244 = por %p242, %p243
    %p246 = scmp.ne.s32.totalorder %s231, %s245
    %p247 = scmp.eq.s32.totalorder %s32, 0
    %p248 = por %p246, %p247
    %s250 = sadd.s32 %s249, 1
    %p253 = scmp.eq.s32.totalorder %s26, 1
    %p254 = scmp.ne.s32.totalorder %s249, %s251
    %p255 = scmp.eq.s32.totalorder %s26, 0
    %p256 = por %p254, %p255
    %p257 = scmp.ne.s32.totalorder %s249, %s251
    %p258 = scmp.eq.s32.totalorder %s31, 1
    %p259 = por %p257, %p258
    %p260 = scmp.ne.s32.totalorder %s251, %s252
    %p261 = scmp.eq.s32.totalorder %s31, 0
    %p262 = por %p260, %p261
    %p263 = scmp.ne.s32.totalorder %s251, %s252
    %p264 = scmp.eq.s32.totalorder %s32, 1
    %p265 = por %p263, %p264
    %p267 = scmp.ne.s32.totalorder %s252, %s266
    %p268 = scmp.eq.s32.totalorder %s32, 0
    %p269 = por %p267, %p268
    %s271 = sadd.s32 %s270, 1
    %p274 = scmp.eq.s32.totalorder %s26, 1
    %p275 = scmp.ne.s32.totalorder %s270, %s272
    %p276 = scmp.eq.s32.totalorder %s26, 0
    %p277 = por %p275, %p276
    %p278 = scmp.ne.s32.totalorder %s270, %s272
    %p279 = scmp.eq.s32.totalorder %s31, 1
    %p280 = por %p278, %p279
    %p281 = scmp.ne.s32.totalorder %s272, %s273
    %p282 = scmp.eq.s32.totalorder %s31, 0
    %p283 = por %p281, %p282
    %p284 = scmp.ne.s32.totalorder %s272, %s273
    %p285 = scmp.eq.s32.totalorder %s32, 1
    %p286 = por %p284, %p285
    %p288 = scmp.ne.s32.totalorder %s273, %s287
    %p289 = scmp.eq.s32.totalorder %s32, 0
    %p290 = por %p288, %p289
    %s292 = sadd.s32 %s291, 1
    %p295 = scmp.eq.s32.totalorder %s26, 1
    %p296 = scmp.ne.s32.totalorder %s291, %s293
    %p297 = scmp.eq.s32.totalorder %s26, 0
    %p298 = por %p296, %p297
    %p299 = scmp.ne.s32.totalorder %s291, %s293
    %p300 = scmp.eq.s32.totalorder %s31, 1
    %p301 = por %p299, %p300
    %p302 = scmp.ne.s32.totalorder %s293, %s294
    %p303 = scmp.eq.s32.totalorder %s31, 0
    %p304 = por %p302, %p303
    %p305 = scmp.ne.s32.totalorder %s293, %s294
    %p306 = scmp.eq.s32.totalorder %s32, 1
    %p307 = por %p305, %p306
    %p309 = scmp.ne.s32.totalorder %s294, %s308
    %p310 = scmp.eq.s32.totalorder %s32, 0
    %p311 = por %p309, %p310
    %s312 = ssub.s32 %s26, %s33
    %p313 = scmp.eq.s32.totalorder %s312, 0
    %s315 = sadd.s32 %s314, 1
    %s316 = scalar_select %p313, %s314, %s315
    %p319 = pneg %p313
    %p320 = scmp.eq.s32.totalorder %s26, 1
    %p321 = por %p319, %p320
    %p322 = scmp.ne.s32.totalorder %s314, %s317
    %p323 = scmp.eq.s32.totalorder %s26, 0
    %p324 = por %p322, %p323
    %p325 = scmp.ne.s32.totalorder %s314, %s317
    %p326 = scmp.eq.s32.totalorder %s31, 1
    %p327 = por %p325, %p326
    %p328 = scmp.ne.s32.totalorder %s317, %s318
    %p329 = scmp.eq.s32.totalorder %s31, 0
    %p330 = por %p328, %p329
    %p331 = scmp.ne.s32.totalorder %s317, %s318
    %p332 = scmp.eq.s32.totalorder %s32, 1
    %p333 = por %p331, %p332
    %p335 = scmp.ne.s32.totalorder %s318, %s334
    %p336 = scmp.eq.s32.totalorder %s32, 0
    %p337 = por %p335, %p336
    %p338 = scmp.le.s32.totalorder 1, %s26
    %p339 = scmp.lt.s32.totalorder %s26, 3
    %p340 = pnand %p338, %p339
    %p341 = pneg %p340
    // Predicated region
    $region9: #{fastspeech2_forward.11} parent=5 // pred_check
      _
    $region10: #{fastspeech2_forward.11} parent=5 // pred_check_branch
      %343 = sbr.rel (%p340) target = $region12
    $region11: #{fastspeech2_forward.11} parent=5 // pred_region
      %s344 = ssub.s32 %s26, 1
      // Predicated region
      $region13: #{fastspeech2_forward.11} parent=11 // pred_check
        %p345 = pneg %p73
      $region14: #{fastspeech2_forward.11} parent=11 // pred_check_branch
        %347 = sbr.rel (%p345) target = $region16
      $region15: #{fastspeech2_forward.11} parent=11 // pred_region
        _
      $region16: #{fastspeech2_forward.11} parent=11 // pred_fallthru
        _
      // Predicated region
      $region17: #{fastspeech2_forward.11} parent=11 // pred_check
        %p348 = pneg %p94
      $region18: #{fastspeech2_forward.11} parent=11 // pred_check_branch
        %350 = sbr.rel (%p348) target = $region20
      $region19: #{fastspeech2_forward.11} parent=11 // pred_region
        _
      $region20: #{fastspeech2_forward.11} parent=11 // pred_fallthru
        _
      // Predicated region
      $region21: #{fastspeech2_forward.11} parent=11 // pred_check
        %p351 = pneg %p115
      $region22: #{fastspeech2_forward.11} parent=11 // pred_check_branch
        %353 = sbr.rel (%p351) target = $region24
      $region23: #{fastspeech2_forward.11} parent=11 // pred_region
        _
      $region24: #{fastspeech2_forward.11} parent=11 // pred_fallthru
        _
      // Predicated region
      $region25: #{fastspeech2_forward.11} parent=11 // pred_check
        %p354 = pneg %p136
      $region26: #{fastspeech2_forward.11} parent=11 // pred_check_branch
        %356 = sbr.rel (%p354) target = $region28
      $region27: #{fastspeech2_forward.11} parent=11 // pred_region
        _
      $region28: #{fastspeech2_forward.11} parent=11 // pred_fallthru
        _
      // Predicated region
      $region29: #{fastspeech2_forward.11} parent=11 // pred_check
        %p357 = pneg %p157
      $region30: #{fastspeech2_forward.11} parent=11 // pred_check_branch
        %359 = sbr.rel (%p357) target = $region32
      $region31: #{fastspeech2_forward.11} parent=11 // pred_region
        _
      $region32: #{fastspeech2_forward.11} parent=11 // pred_fallthru
        _
      // Predicated region
      $region33: #{fastspeech2_forward.11} parent=11 // pred_check
        %p360 = pneg %p178
      $region34: #{fastspeech2_forward.11} parent=11 // pred_check_branch
        %362 = sbr.rel (%p360) target = $region36
      $region35: #{fastspeech2_forward.11} parent=11 // pred_region
        _
      $region36: #{fastspeech2_forward.11} parent=11 // pred_fallthru
        _
      // Predicated region
      $region37: #{fastspeech2_forward.11} parent=11 // pred_check
        %p363 = pneg %p199
      $region38: #{fastspeech2_forward.11} parent=11 // pred_check_branch
        %365 = sbr.rel (%p363) target = $region40
      $region39: #{fastspeech2_forward.11} parent=11 // pred_region
        _
      $region40: #{fastspeech2_forward.11} parent=11 // pred_fallthru
        _
      // Predicated region
      $region41: #{fastspeech2_forward.11} parent=11 // pred_check
        %p366 = pneg %p220
      $region42: #{fastspeech2_forward.11} parent=11 // pred_check_branch
        %368 = sbr.rel (%p366) target = $region44
      $region43: #{fastspeech2_forward.11} parent=11 // pred_region
        _
      $region44: #{fastspeech2_forward.11} parent=11 // pred_fallthru
        _
      // Predicated region
      $region45: #{fastspeech2_forward.11} parent=11 // pred_check
        %p369 = pneg %p241
      $region46: #{fastspeech2_forward.11} parent=11 // pred_check_branch
        %371 = sbr.rel (%p369) target = $region48
      $region47: #{fastspeech2_forward.11} parent=11 // pred_region
        _
      $region48: #{fastspeech2_forward.11} parent=11 // pred_fallthru
        _
      // Predicated region
      $region49: #{fastspeech2_forward.11} parent=11 // pred_check
        %p372 = pneg %p262
      $region50: #{fastspeech2_forward.11} parent=11 // pred_check_branch
        %374 = sbr.rel (%p372) target = $region52
      $region51: #{fastspeech2_forward.11} parent=11 // pred_region
        _
      $region52: #{fastspeech2_forward.11} parent=11 // pred_fallthru
        _
      // Predicated region
      $region53: #{fastspeech2_forward.11} parent=11 // pred_check
        %p375 = pneg %p283
      $region54: #{fastspeech2_forward.11} parent=11 // pred_check_branch
        %377 = sbr.rel (%p375) target = $region56
      $region55: #{fastspeech2_forward.11} parent=11 // pred_region
        _
      $region56: #{fastspeech2_forward.11} parent=11 // pred_fallthru
        _
      // Predicated region
      $region57: #{fastspeech2_forward.11} parent=11 // pred_check
        %p378 = pneg %p304
      $region58: #{fastspeech2_forward.11} parent=11 // pred_check_branch
        %380 = sbr.rel (%p378) target = $region60
      $region59: #{fastspeech2_forward.11} parent=11 // pred_region
        _
      $region60: #{fastspeech2_forward.11} parent=11 // pred_fallthru
        _
    $region12: #{fastspeech2_forward.11} parent=5 // pred_fallthru
      _
    %p381 = scmp.lt.s32.totalorder %s26, 2
    // Predicated region
    $region61: #{fastspeech2_forward.11} parent=5 // pred_check
      %p382 = pneg %p381
    $region62: #{fastspeech2_forward.11} parent=5 // pred_check_branch
      %384 = sbr.rel (%p382) target = $region64
    $region63: #{fastspeech2_forward.11} parent=5 // pred_region
      // Predicated region
      $region65: #{fastspeech2_forward.11} parent=63 // pred_check
        %p385 = pneg %p46
      $region66: #{fastspeech2_forward.11} parent=63 // pred_check_branch
        %387 = sbr.rel (%p385) target = $region68
      $region67: #{fastspeech2_forward.11} parent=63 // pred_region
        %p388 = scmp.lt.s32.totalorder %s26, 1
        %s389 = scalar_select %p388, %s26, 1
        %s390 = smul.addr %s389, 8
        %s391 = smul.addr %s390, 8
        %s392 = scalar_lea.vmem %s1, %s391
      $region68: #{fastspeech2_forward.11} parent=63 // pred_fallthru
        _
    $region64: #{fastspeech2_forward.11} parent=5 // pred_fallthru
      _
    %p393 = scmp.le.s32.totalorder 1, %s26
    %p394 = scmp.lt.s32.totalorder %s26, 3
    %p395 = pnand %p393, %p394
    %p396 = pneg %p395
    // Predicated region
    $region69: #{fastspeech2_forward.11} parent=5 // pred_check
      _
    $region70: #{fastspeech2_forward.11} parent=5 // pred_check_branch
      %398 = sbr.rel (%p395) target = $region72
    $region71: #{fastspeech2_forward.11} parent=5 // pred_region
      %s399 = ssub.s32 %s26, 1
      %p400 = scmp.lt.s32.totalorder %s31, 1
      %s401 = scalar_select %p400, %s31, 1
      %s402 = smul.addr %s401, 8
      %s403 = smul.addr %s402, 8
      %s404 = scalar_lea.vmem %s1, %s403
      %p405 = pneg %p52
      %p406 = pneg %p49
      %p407 = pneg %p73
      %p408 = pneg %p70
      %p409 = pneg %p94
      %p410 = pneg %p91
      %p411 = pneg %p115
      %p412 = pneg %p112
      %p413 = pneg %p136
      %p414 = pneg %p133
      %p415 = pneg %p157
      %p416 = pneg %p154
      %p417 = pneg %p178
      %p418 = pneg %p175
      %p419 = pneg %p199
      %p420 = pneg %p196
      %p421 = pneg %p220
      %p422 = pneg %p217
      %p423 = pneg %p241
      %p424 = pneg %p238
      %p425 = pneg %p262
      %p426 = pneg %p259
      %p427 = pneg %p283
      %p428 = pneg %p280
      %p429 = pneg %p304
      %p430 = pneg %p301
      %p431 = pneg %p330
      %p432 = pneg %p327
      %p433 = scmp.lt.s32.totalorder %s31, 1
      %s434 = scalar_select %p433, %s31, 1
      %s435 = smul.addr %s434, 8
      %s436 = smul.addr %s435, 8
      %s437 = scalar_lea.vmem %s14, %s436
      %p438 = scmp.lt.s32.totalorder %s31, 1
      %s439 = scalar_select %p438, %s31, 1
      %s440 = smul.addr %s439, 8
      %s441 = smul.addr %s440, 8
      %s442 = scalar_lea.vmem %s1, %s441
      %p443 = scmp.lt.s32.totalorder %s31, 1
      %s444 = scalar_select %p443, %s31, 1
      %s445 = smul.addr %s444, 8
      %s446 = smul.addr %s445, 8
      %s447 = scalar_lea.vmem %s14, %s446
      %s449 = sld [smem:[#allocation3 + %s31]]
      %v450 = vld [vmem:[%s442] sm:$0xff]
      %v451 = vld [vmem:[%s442 + $0x8] sm:$0xff]
      %v452 = vld [vmem:[%s442 + $0x10] sm:$0xff]
      %v453 = vld [vmem:[%s442 + $0x18] sm:$0xff]
      %v454 = vld [vmem:[%s442 + $0x20] sm:$0xff]
      %v455 = vld [vmem:[%s442 + $0x28] sm:$0xff]
      %v456 = vld [vmem:[%s442 + $0x30] sm:$0xff]
      %v457 = vld [vmem:[%s442 + $0x38] sm:$0xff]
      %v458 = vlaneseq
      %v459 = vshrl.u32 %v458, 7
      %v460 = vadd.s32 %v459, 8
      %v461 = vadd.s32 %v459, 16
      %v462 = vadd.s32 %v459, 24
      %v463 = vadd.s32 %v459, 32
      %v464 = vadd.s32 %v459, 40
      %v465 = vadd.s32 %v459, 48
      %v466 = vadd.s32 %v459, 56
      %v467 = vstv %s449
      %vm468 = vcmp.ge.s32.totalorder %v459, %v467
      %vm469 = vcmp.ge.s32.totalorder %v460, %v467
      %vm470 = vcmp.ge.s32.totalorder %v461, %v467
      %vm471 = vcmp.ge.s32.totalorder %v462, %v467
      %vm472 = vcmp.ge.s32.totalorder %v463, %v467
      %vm473 = vcmp.ge.s32.totalorder %v464, %v467
      %vm474 = vcmp.ge.s32.totalorder %v465, %v467
      %vm475 = vcmp.ge.s32.totalorder %v466, %v467
      %v476 = vpack.c.bf16 %v451, %v450
      %v477 = vpack.c.bf16 %v453, %v452
      %v478 = vpack.c.bf16 %v455, %v454
      %v479 = vpack.c.bf16 %v457, %v456
      %v480 = vld [vmem:[%s2] sm:$0xf]
      %v481 = vld [vmem:[%s2 + $0x4] sm:$0xf]
      %v482 = vld [vmem:[%s2 + $0x8] sm:$0xf]
      %v483 = vld [vmem:[%s2 + $0xc] sm:$0xf]
      %v484 = vld [vmem:[%s3] sm:$0x1]
      %v486 = vlaneseq
      %v487 = vshrl.u32 %v486, 7
      %v488 = vsub.s32 0, %v487
      %v489 = vrot.slane %v484, %v488
      %v495 = vunpack.c.l.b16 %v480
      %v496 = vunpack.c.l.b16 %v481
      %v497 = vunpack.c.l.b16 %v482
      %v498 = vunpack.c.l.b16 %v483
      %v499 = vpack.c.b16 %v496, %v495
      %v500 = vpack.c.b16 %v498, %v497
      %vm503 = vcmask 261120
      %v505 = vsel %vm503, %v476, 0
      %v508 = vsel %vm503, %v477, 0
      %v511 = vsel %vm503, %v478, 0
      %v514 = vsel %vm503, %v479, 0
      %516 = vmatprep.subr.bf16.mxu0 0
      %517 = vmatpush1.bf16.msra.mxu0 %v499
      %518 = vmatprep.subr.bf16.mxu0 0
      %519 = vmatpush1.bf16.msra.mxu0 %v500
      %520 = vmatprep.subr.bf16.mxu0 0
      %521 = vmatpush1.bf16.msra.mxu0 0
      %522 = vmatprep.subr.bf16.mxu0 0
      %523 = vmatpush1.bf16.msra.mxu0 0
      %524 = vmatprep.subr.bf16.mxu0 0
      %525 = vmatpush1.bf16.msra.mxu0 0
      %526 = vmatprep.subr.bf16.mxu0 0
      %527 = vmatpush1.bf16.msra.mxu0 0
      %528 = vmatprep.subr.bf16.mxu0 0
      %529 = vmatpush1.bf16.msra.mxu0 0
      %530 = vmatprep.subr.bf16.mxu0 0
      %531 = vmatpush1.bf16.msra.mxu0 0
      %532 = vmatprep.subr.bf16.mxu0 0
      %533 = vmatpush1.bf16.msra.mxu0 0
      %534 = vmatprep.subr.bf16.mxu0 0
      %535 = vmatpush1.bf16.msra.mxu0 0
      %536 = vmatprep.subr.bf16.mxu0 0
      %537 = vmatpush1.bf16.msra.mxu0 0
      %538 = vmatprep.subr.bf16.mxu0 0
      %539 = vmatpush1.bf16.msra.mxu0 0
      %540 = vmatprep.subr.bf16.mxu0 0
      %541 = vmatpush1.bf16.msra.mxu0 0
      %542 = vmatprep.subr.bf16.mxu0 0
      %543 = vmatpush1.bf16.msra.mxu0 0
      %544 = vmatprep.subr.bf16.mxu0 0
      %545 = vmatpush1.bf16.msra.mxu0 0
      %546 = vmatprep.subr.bf16.mxu0 0
      %547 = vmatpush1.bf16.msra.mxu0 0
      %548 = vmatprep.mubr.bf16.mxu0 0
      %549 = vmatmul.mubr.bf16.gmra.mrb[0].mxu0 %v505
      %v550 = vpop.f32.mrb[0].mxu0
      %v551 = vadd.f32 %v489, %v550
      %v552 = vpop.f32.mrb[0].mxu0
      %v553 = vpop.f32.mrb[0].mxu0
      %v554 = vadd.f32 %v489, %v553
      %v555 = vpop.f32.mrb[0].mxu0
      %556 = vmatprep.mubr.bf16.mxu0 0
      %557 = vmatmul.mubr.bf16.gmra.mrb[0].mxu0 %v508
      %v558 = vpop.f32.mrb[0].mxu0
      %v559 = vadd.f32 %v489, %v558
      %v560 = vpop.f32.mrb[0].mxu0
      %v561 = vpop.f32.mrb[0].mxu0
      %v562 = vadd.f32 %v489, %v561
      %v563 = vpop.f32.mrb[0].mxu0
      %564 = vmatprep.mubr.bf16.mxu0 0
      %565 = vmatmul.mubr.bf16.gmra.mrb[0].mxu0 %v511
      %v566 = vpop.f32.mrb[0].mxu0
      %v567 = vadd.f32 %v489, %v566
      %v568 = vpop.f32.mrb[0].mxu0
      %v569 = vpop.f32.mrb[0].mxu0
      %v570 = vadd.f32 %v489, %v569
      %v571 = vpop.f32.mrb[0].mxu0
      %572 = vmatprep.mubr.bf16.mxu0 0
      %573 = vmatmul.mubr.bf16.gmra.mrb[0].mxu0 %v514
      %v574 = vpop.f32.mrb[0].mxu0
      %v575 = vadd.f32 %v489, %v574
      %v576 = vpop.f32.mrb[0].mxu0
      %v577 = vpop.f32.mrb[0].mxu0
      %v578 = vadd.f32 %v489, %v577
      %v579 = vpop.f32.mrb[0].mxu0
      %580 = vdwg.mxu0
      %v581 = vlaneseq
      %v582 = vand.u32 %v581, 127
      %vm583 = vcmp.ge.s32.totalorder %v582, %v467
      %v584 = vsel %vm583, 1, 0
      %v585 = vcvt.s32.f32 %v584
      %v586 = vpack.c.bf16 %v554, %v551
      %v587 = vpack.c.bf16 %v562, %v559
      %v588 = vpack.c.bf16 %v570, %v567
      %v589 = vpack.c.bf16 %v578, %v575
      %594 = vrot.lane.b32.xlu0 %v586, 96
      %v595 = vpop.permute.xlu0 %594
      %596 = vrot.lane.b32.xlu0 %v587, 96
      %v597 = vpop.permute.xlu0 %596
      %598 = vrot.lane.b32.xlu0 %v588, 96
      %v599 = vpop.permute.xlu0 %598
      %600 = vrot.lane.b32.xlu0 %v589, 96
      %v601 = vpop.permute.xlu0 %600
      %vm602 = vcmask 130048
      %v604 = vsel %vm602, %v586, 0
      %v607 = vsel %vm602, %v587, 0
      %v610 = vsel %vm602, %v588, 0
      %v613 = vsel %vm602, %v589, 0
      %v616 = vsel %vm602, %v595, 0
      %v619 = vsel %vm602, %v597, 0
      %v622 = vsel %vm602, %v599, 0
      %v625 = vsel %vm602, %v601, 0
      %627 = vmatprep.subr.bf16.mxu0 0
      %628 = vmatpush1.bf16.xpose.msra.mxu0 %v616
      %629 = vmatprep.subr.bf16.mxu0 0
      %630 = vmatpush1.bf16.xpose.msra.mxu0 %v619
      %631 = vmatprep.subr.bf16.mxu0 0
      %632 = vmatpush1.bf16.xpose.msra.mxu0 %v622
      %633 = vmatprep.subr.bf16.mxu0 0
      %634 = vmatpush1.bf16.xpose.msra.mxu0 %v625
      %635 = vmatprep.subr.bf16.mxu0 0
      %636 = vmatpush1.bf16.xpose.msra.mxu0 0
      %637 = vmatprep.subr.bf16.mxu0 0
      %638 = vmatpush1.bf16.xpose.msra.mxu0 0
      %639 = vmatprep.subr.bf16.mxu0 0
      %640 = vmatpush1.bf16.xpose.msra.mxu0 0
      %641 = vmatprep.subr.bf16.mxu0 0
      %642 = vmatpush1.bf16.xpose.msra.mxu0 0
      %643 = vmatprep.subr.bf16.mxu0 0
      %644 = vmatpush1.bf16.xpose.msra.mxu0 0
      %645 = vmatprep.subr.bf16.mxu0 0
      %646 = vmatpush1.bf16.xpose.msra.mxu0 0
      %647 = vmatprep.subr.bf16.mxu0 0
      %648 = vmatpush1.bf16.xpose.msra.mxu0 0
      %649 = vmatprep.subr.bf16.mxu0 0
      %650 = vmatpush1.bf16.xpose.msra.mxu0 0
      %651 = vmatprep.subr.bf16.mxu0 0
      %652 = vmatpush1.bf16.xpose.msra.mxu0 0
      %653 = vmatprep.subr.bf16.mxu0 0
      %654 = vmatpush1.bf16.xpose.msra.mxu0 0
      %655 = vmatprep.subr.bf16.mxu0 0
      %656 = vmatpush1.bf16.xpose.msra.mxu0 0
      %657 = vmatprep.subr.bf16.mxu0 0
      %658 = vmatpush1.bf16.xpose.msra.mxu0 0
      %659 = vmatprep.mubr.bf16.mxu0 0
      %660 = vmatmul.mubr.bf16.gmra.mrb[0].mxu0 %v604
      %v661 = vpop.f32.mrb[0].mxu0
      %v662 = vadd.f32 0.0, %v661
      %v663 = vpop.f32.mrb[0].mxu0
      %v664 = vpop.f32.mrb[0].mxu0
      %v665 = vadd.f32 0.0, %v664
      %v666 = vpop.f32.mrb[0].mxu0
      %667 = vmatprep.mubr.bf16.mxu0 0
      %668 = vmatmul.mubr.bf16.gmra.mrb[0].mxu0 %v607
      %v669 = vpop.f32.mrb[0].mxu0
      %v670 = vadd.f32 0.0, %v669
      %v671 = vpop.f32.mrb[0].mxu0
      %v672 = vpop.f32.mrb[0].mxu0
      %v673 = vadd.f32 0.0, %v672
      %v674 = vpop.f32.mrb[0].mxu0
      %675 = vmatprep.mubr.bf16.mxu0 0
      %676 = vmatmul.mubr.bf16.gmra.mrb[0].mxu0 %v610
      %v677 = vpop.f32.mrb[0].mxu0
      %v678 = vadd.f32 0.0, %v677
      %v679 = vpop.f32.mrb[0].mxu0
      %v680 = vpop.f32.mrb[0].mxu0
      %v681 = vadd.f32 0.0, %v680
      %v682 = vpop.f32.mrb[0].mxu0
      %683 = vmatprep.mubr.bf16.mxu0 0
      %684 = vmatmul.mubr.bf16.gmra.mrb[0].mxu0 %v613
      %v685 = vpop.f32.mrb[0].mxu0
      %v686 = vadd.f32 0.0, %v685
      %v687 = vpop.f32.mrb[0].mxu0
      %v688 = vpop.f32.mrb[0].mxu0
      %v689 = vadd.f32 0.0, %v688
      %v690 = vpop.f32.mrb[0].mxu0
      %691 = vdwg.mxu0
      %v692 = vmul.f32 %v662, 0.25
      %v693 = vmul.f32 %v665, 0.25
      %v694 = vmul.f32 %v670, 0.25
      %v695 = vmul.f32 %v673, 0.25
      %v696 = vmul.f32 %v678, 0.25
      %v697 = vmul.f32 %v681, 0.25
      %v698 = vmul.f32 %v686, 0.25
      %v699 = vmul.f32 %v689, 0.25
      %v700 = vmul.f32 %v585, 1e+09
      %v701 = vsub.f32 %v692, %v700
      %v702 = vsub.f32 %v693, %v700
      %v703 = vsub.f32 %v694, %v700
      %v704 = vsub.f32 %v695, %v700
      %v705 = vsub.f32 %v696, %v700
      %v706 = vsub.f32 %v697, %v700
      %v707 = vsub.f32 %v698, %v700
      %v708 = vsub.f32 %v699, %v700
      %vm709 = vcmask 523264
      %v710 = vsel %vm709, %v701, -inf
      %711 = vmax.xlane.f32.xlu0 %v710
      %v712 = vpop.xlane.xlu0 %711
      %v713 = vsel %vm709, %v702, -inf
      %714 = vmax.xlane.f32.xlu0 %v713
      %v715 = vpop.xlane.xlu0 %714
      %v716 = vsel %vm709, %v703, -inf
      %717 = vmax.xlane.f32.xlu0 %v716
      %v718 = vpop.xlane.xlu0 %717
      %v719 = vsel %vm709, %v704, -inf
      %720 = vmax.xlane.f32.xlu0 %v719
      %v721 = vpop.xlane.xlu0 %720
      %v722 = vsel %vm709, %v705, -inf
      %723 = vmax.xlane.f32.xlu0 %v722
      %v724 = vpop.xlane.xlu0 %723
      %v725 = vsel %vm709, %v706, -inf
      %726 = vmax.xlane.f32.xlu0 %v725
      %v727 = vpop.xlane.xlu0 %726
      %v728 = vsel %vm709, %v707, -inf
      %729 = vmax.xlane.f32.xlu0 %v728
      %v730 = vpop.xlane.xlu0 %729
      %v731 = vsel %vm709, %v708, -inf
      %732 = vmax.xlane.f32.xlu0 %v731
      %v733 = vpop.xlane.xlu0 %732
      %v734 = vsub.f32 %v701, %v712
      %v735 = vsub.f32 %v702, %v715
      %v736 = vsub.f32 %v703, %v718
      %v737 = vsub.f32 %v704, %v721
      %v738 = vsub.f32 %v705, %v724
      %v739 = vsub.f32 %v706, %v727
      %v740 = vsub.f32 %v707, %v730
      %v741 = vsub.f32 %v708, %v733
      %v742 = vmul.f32 %v734, 1.442695
      %v743 = vpow.pop %v742
      %v744 = vmul.f32 %v735, 1.442695
      %v745 = vpow.pop %v744
      %v746 = vmul.f32 %v736, 1.442695
      %v747 = vpow.pop %v746
      %v748 = vmul.f32 %v737, 1.442695
      %v749 = vpow.pop %v748
      %v750 = vmul.f32 %v738, 1.442695
      %v751 = vpow.pop %v750
      %v752 = vmul.f32 %v739, 1.442695
      %v753 = vpow.pop %v752
      %v754 = vmul.f32 %v740, 1.442695
      %v755 = vpow.pop %v754
      %v756 = vmul.f32 %v741, 1.442695
      %v757 = vpow.pop %v756
      %v758 = vsel %vm709, %v743, 0.0
      %759 = vadd.xlane.f32.xlu0 %v758
      %v760 = vpop.xlane.xlu0 %759
      %v761 = vsel %vm709, %v745, 0.0
      %762 = vadd.xlane.f32.xlu0 %v761
      %v763 = vpop.xlane.xlu0 %762
      %v764 = vsel %vm709, %v747, 0.0
      %765 = vadd.xlane.f32.xlu0 %v764
      %v766 = vpop.xlane.xlu0 %765
      %v767 = vsel %vm709, %v749, 0.0
      %768 = vadd.xlane.f32.xlu0 %v767
      %v769 = vpop.xlane.xlu0 %768
      %v770 = vsel %vm709, %v751, 0.0
      %771 = vadd.xlane.f32.xlu0 %v770
      %v772 = vpop.xlane.xlu0 %771
      %v773 = vsel %vm709, %v753, 0.0
      %774 = vadd.xlane.f32.xlu0 %v773
      %v775 = vpop.xlane.xlu0 %774
      %v776 = vsel %vm709, %v755, 0.0
      %777 = vadd.xlane.f32.xlu0 %v776
      %v778 = vpop.xlane.xlu0 %777
      %v779 = vsel %vm709, %v757, 0.0
      %780 = vadd.xlane.f32.xlu0 %v779
      %v781 = vpop.xlane.xlu0 %780
      %v782 = vrcp.pop %v760
      %v783 = vrcp.pop %v763
      %v784 = vrcp.pop %v766
      %v785 = vrcp.pop %v769
      %v786 = vrcp.pop %v772
      %v787 = vrcp.pop %v775
      %v788 = vrcp.pop %v778
      %v789 = vrcp.pop %v781
      %v790 = vmul.f32 %v743, %v782
      %v791 = vmul.f32 %v745, %v783
      %v792 = vmul.f32 %v747, %v784
      %v793 = vmul.f32 %v749, %v785
      %v794 = vmul.f32 %v751, %v786
      %v795 = vmul.f32 %v753, %v787
      %v796 = vmul.f32 %v755, %v788
      %v797 = vmul.f32 %v757, %v789
      %v798 = vpack.c.bf16 %v791, %v790
      %v799 = vpack.c.bf16 %v793, %v792
      %v800 = vpack.c.bf16 %v795, %v794
      %v801 = vpack.c.bf16 %v797, %v796
      %802 = vrot.lane.b32.xlu0 %v586, 64
      %v803 = vpop.permute.xlu0 %802
      %804 = vrot.lane.b32.xlu0 %v587, 64
      %v805 = vpop.permute.xlu0 %804
      %806 = vrot.lane.b32.xlu0 %v588, 64
      %v807 = vpop.permute.xlu0 %806
      %808 = vrot.lane.b32.xlu0 %v589, 64
      %v809 = vpop.permute.xlu0 %808
      %v815 = vsel %vm709, %v798, 0
      %v818 = vsel %vm709, %v799, 0
      %v821 = vsel %vm709, %v800, 0
      %v824 = vsel %vm709, %v801, 0
      %826 = vmatprep.subr.bf16.mxu0 0
      %827 = vmatpush1.bf16.msra.mxu0 %v803
      %828 = vmatprep.subr.bf16.mxu0 0
      %829 = vmatpush1.bf16.msra.mxu0 %v805
      %830 = vmatprep.subr.bf16.mxu0 0
      %831 = vmatpush1.bf16.msra.mxu0 %v807
      %832 = vmatprep.subr.bf16.mxu0 0
      %833 = vmatpush1.bf16.msra.mxu0 %v809
      %834 = vmatprep.subr.bf16.mxu0 0
      %835 = vmatpush1.bf16.msra.mxu0 0
      %836 = vmatprep.subr.bf16.mxu0 0
      %837 = vmatpush1.bf16.msra.mxu0 0
      %838 = vmatprep.subr.bf16.mxu0 0
      %839 = vmatpush1.bf16.msra.mxu0 0
      %840 = vmatprep.subr.bf16.mxu0 0
      %841 = vmatpush1.bf16.msra.mxu0 0
      %842 = vmatprep.subr.bf16.mxu0 0
      %843 = vmatpush1.bf16.msra.mxu0 0
      %844 = vmatprep.subr.bf16.mxu0 0
      %845 = vmatpush1.bf16.msra.mxu0 0
      %846 = vmatprep.subr.bf16.mxu0 0
      %847 = vmatpush1.bf16.msra.mxu0 0
      %848 = vmatprep.subr.bf16.mxu0 0
      %849 = vmatpush1.bf16.msra.mxu0 0
      %850 = vmatprep.subr.bf16.mxu0 0
      %851 = vmatpush1.bf16.msra.mxu0 0
      %852 = vmatprep.subr.bf16.mxu0 0
      %853 = vmatpush1.bf16.msra.mxu0 0
      %854 = vmatprep.subr.bf16.mxu0 0
      %855 = vmatpush1.bf16.msra.mxu0 0
      %856 = vmatprep.subr.bf16.mxu0 0
      %857 = vmatpush1.bf16.msra.mxu0 0
      %858 = vmatprep.mubr.bf16.mxu0 0
      %859 = vmatmul.mubr.bf16.gmra.mrb[0].mxu0 %v815
      %v860 = vpop.f32.mrb[0].mxu0
      %v861 = vadd.f32 0.0, %v860
      %v862 = vpop.f32.mrb[0].mxu0
      %v863 = vpop.f32.mrb[0].mxu0
      %v864 = vadd.f32 0.0, %v863
      %v865 = vpop.f32.mrb[0].mxu0
      %866 = vmatprep.mubr.bf16.mxu0 0
      %867 = vmatmul.mubr.bf16.gmra.mrb[0].mxu0 %v818
      %v868 = vpop.f32.mrb[0].mxu0
      %v869 = vadd.f32 0.0, %v868
      %v870 = vpop.f32.mrb[0].mxu0
      %v871 = vpop.f32.mrb[0].mxu0
      %v872 = vadd.f32 0.0, %v871
      %v873 = vpop.f32.mrb[0].mxu0
      %874 = vmatprep.mubr.bf16.mxu0 0
      %875 = vmatmul.mubr.bf16.gmra.mrb[0].mxu0 %v821
      %v876 = vpop.f32.mrb[0].mxu0
      %v877 = vadd.f32 0.0, %v876
      %v878 = vpop.f32.mrb[0].mxu0
      %v879 = vpop.f32.mrb[0].mxu0
      %v880 = vadd.f32 0.0, %v879
      %v881 = vpop.f32.mrb[0].mxu0
      %882 = vmatprep.mubr.bf16.mxu0 0
      %883 = vmatmul.mubr.bf16.gmra.mrb[0].mxu0 %v824
      %v884 = vpop.f32.mrb[0].mxu0
      %v885 = vadd.f32 0.0, %v884
      %v886 = vpop.f32.mrb[0].mxu0
      %v887 = vpop.f32.mrb[0].mxu0
      %v888 = vadd.f32 0.0, %v887
      %v889 = vpop.f32.mrb[0].mxu0
      %890 = vdwg.mxu0
      %891 = vrot.lane.b32.xlu0 %v586, 112
      %v892 = vpop.permute.xlu0 %891
      %893 = vrot.lane.b32.xlu0 %v587, 112
      %v894 = vpop.permute.xlu0 %893
      %895 = vrot.lane.b32.xlu0 %v588, 112
      %v896 = vpop.permute.xlu0 %895
      %897 = vrot.lane.b32.xlu0 %v589, 112
      %v898 = vpop.permute.xlu0 %897
      %899 = vrot.lane.b32.xlu0 %v586, 80
      %v900 = vpop.permute.xlu0 %899
      %901 = vrot.lane.b32.xlu0 %v587, 80
      %v902 = vpop.permute.xlu0 %901
      %903 = vrot.lane.b32.xlu0 %v588, 80
      %v904 = vpop.permute.xlu0 %903
      %905 = vrot.lane.b32.xlu0 %v589, 80
      %v906 = vpop.permute.xlu0 %905
      %v908 = vsel %vm602, %v892, 0
      %v911 = vsel %vm602, %v894, 0
      %v914 = vsel %vm602, %v896, 0
      %v917 = vsel %vm602, %v898, 0
      %v920 = vsel %vm602, %v900, 0
      %v923 = vsel %vm602, %v902, 0
      %v926 = vsel %vm602, %v904, 0
      %v929 = vsel %vm602, %v906, 0
      %931 = vmatprep.subr.bf16.mxu0 0
      %932 = vmatpush1.bf16.xpose.msra.mxu0 %v920
      %933 = vmatprep.subr.bf16.mxu0 0
      %934 = vmatpush1.bf16.xpose.msra.mxu0 %v923
      %935 = vmatprep.subr.bf16.mxu0 0
      %936 = vmatpush1.bf16.xpose.msra.mxu0 %v926
      %937 = vmatprep.subr.bf16.mxu0 0
      %938 = vmatpush1.bf16.xpose.msra.mxu0 %v929
      %939 = vmatprep.subr.bf16.mxu0 0
      %940 = vmatpush1.bf16.xpose.msra.mxu0 0
      %941 = vmatprep.subr.bf16.mxu0 0
      %942 = vmatpush1.bf16.xpose.msra.mxu0 0
      %943 = vmatprep.subr.bf16.mxu0 0
      %944 = vmatpush1.bf16.xpose.msra.mxu0 0
      %945 = vmatprep.subr.bf16.mxu0 0
      %946 = vmatpush1.bf16.xpose.msra.mxu0 0
      %947 = vmatprep.subr.bf16.mxu0 0
      %948 = vmatpush1.bf16.xpose.msra.mxu0 0
      %949 = vmatprep.subr.bf16.mxu0 0
      %950 = vmatpush1.bf16.xpose.msra.mxu0 0
      %951 = vmatprep.subr.bf16.mxu0 0
      %952 = vmatpush1.bf16.xpose.msra.mxu0 0
      %953 = vmatprep.subr.bf16.mxu0 0
      %954 = vmatpush1.bf16.xpose.msra.mxu0 0
      %955 = vmatprep.subr.bf16.mxu0 0
      %956 = vmatpush1.bf16.xpose.msra.mxu0 0
      %957 = vmatprep.subr.bf16.mxu0 0
      %958 = vmatpush1.bf16.xpose.msra.mxu0 0
      %959 = vmatprep.subr.bf16.mxu0 0
      %960 = vmatpush1.bf16.xpose.msra.mxu0 0
      %961 = vmatprep.subr.bf16.mxu0 0
      %962 = vmatpush1.bf16.xpose.msra.mxu0 0
      %963 = vmatprep.mubr.bf16.mxu0 0
      %964 = vmatmul.mubr.bf16.gmra.mrb[0].mxu0 %v908
      %v965 = vpop.f32.mrb[0].mxu0
      %v966 = vadd.f32 0.0, %v965
      %v967 = vpop.f32.mrb[0].mxu0
      %v968 = vpop.f32.mrb[0].mxu0
      %v969 = vadd.f32 0.0, %v968
      %v970 = vpop.f32.mrb[0].mxu0
      %971 = vmatprep.mubr.bf16.mxu0 0
      %972 = vmatmul.mubr.bf16.gmra.mrb[0].mxu0 %v911
      %v973 = vpop.f32.mrb[0].mxu0
      %v974 = vadd.f32 0.0, %v973
      %v975 = vpop.f32.mrb[0].mxu0
      %v976 = vpop.f32.mrb[0].mxu0
      %v977 = vadd.f32 0.0, %v976
      %v978 = vpop.f32.mrb[0].mxu0
      %979 = vmatprep.mubr.bf16.mxu0 0
      %980 = vmatmul.mubr.bf16.gmra.mrb[0].mxu0 %v914
      %v981 = vpop.f32.mrb[0].mxu0
      %v982 = vadd.f32 0.0, %v981
      %v983 = vpop.f32.mrb[0].mxu0
      %v984 = vpop.f32.mrb[0].mxu0
      %v985 = vadd.f32 0.0, %v984
      %v986 = vpop.f32.mrb[0].mxu0
      %987 = vmatprep.mubr.bf16.mxu0 0
      %988 = vmatmul.mubr.bf16.gmra.mrb[0].mxu0 %v917
      %v989 = vpop.f32.mrb[0].mxu0
      %v990 = vadd.f32 0.0, %v989
      %v991 = vpop.f32.mrb[0].mxu0
      %v992 = vpop.f32.mrb[0].mxu0
      %v993 = vadd.f32 0.0, %v992
      %v994 = vpop.f32.mrb[0].mxu0
      %995 = vdwg.mxu0
      %v996 = vmul.f32 %v966, 0.25
      %v997 = vmul.f32 %v969, 0.25
      %v998 = vmul.f32 %v974, 0.25
      %v999 = vmul.f32 %v977, 0.25
      %v1000 = vmul.f32 %v982, 0.25
      %v1001 = vmul.f32 %v985, 0.25
      %v1002 = vmul.f32 %v990, 0.25
      %v1003 = vmul.f32 %v993, 0.25
      %v1004 = vsub.f32 %v996, %v700
      %v1005 = vsub.f32 %v997, %v700
      %v1006 = vsub.f32 %v998, %v700
      %v1007 = vsub.f32 %v999, %v700
      %v1008 = vsub.f32 %v1000, %v700
      %v1009 = vsub.f32 %v1001, %v700
      %v1010 = vsub.f32 %v1002, %v700
      %v1011 = vsub.f32 %v1003, %v700
      %v1012 = vsel %vm709, %v1004, -inf
      %1013 = vmax.xlane.f32.xlu0 %v1012
      %v1014 = vpop.xlane.xlu0 %1013
      %v1015 = vsel %vm709, %v1005, -inf
      %1016 = vmax.xlane.f32.xlu0 %v1015
      %v1017 = vpop.xlane.xlu0 %1016
      %v1018 = vsel %vm709, %v1006, -inf
      %1019 = vmax.xlane.f32.xlu0 %v1018
      %v1020 = vpop.xlane.xlu0 %1019
      %v1021 = vsel %vm709, %v1007, -inf
      %1022 = vmax.xlane.f32.xlu0 %v1021
      %v1023 = vpop.xlane.xlu0 %1022
      %v1024 = vsel %vm709, %v1008, -inf
      %1025 = vmax.xlane.f32.xlu0 %v1024
      %v1026 = vpop.xlane.xlu0 %1025
      %v1027 = vsel %vm709, %v1009, -inf
      %1028 = vmax.xlane.f32.xlu0 %v1027
      %v1029 = vpop.xlane.xlu0 %1028
      %v1030 = vsel %vm709, %v1010, -inf
      %1031 = vmax.xlane.f32.xlu0 %v1030
      %v1032 = vpop.xlane.xlu0 %1031
      %v1033 = vsel %vm709, %v1011, -inf
      %1034 = vmax.xlane.f32.xlu0 %v1033
      %v1035 = vpop.xlane.xlu0 %1034
      %v1036 = vsub.f32 %v1004, %v1014
      %v1037 = vsub.f32 %v1005, %v1017
      %v1038 = vsub.f32 %v1006, %v1020
      %v1039 = vsub.f32 %v1007, %v1023
      %v1040 = vsub.f32 %v1008, %v1026
      %v1041 = vsub.f32 %v1009, %v1029
      %v1042 = vsub.f32 %v1010, %v1032
      %v1043 = vsub.f32 %v1011, %v1035
      %v1044 = vmul.f32 %v1036, 1.442695
      %v1045 = vpow.pop %v1044
      %v1046 = vmul.f32 %v1037, 1.442695
      %v1047 = vpow.pop %v1046
      %v1048 = vmul.f32 %v1038, 1.442695
      %v1049 = vpow.pop %v1048
      %v1050 = vmul.f32 %v1039, 1.442695
      %v1051 = vpow.pop %v1050
      %v1052 = vmul.f32 %v1040, 1.442695
      %v1053 = vpow.pop %v1052
      %v1054 = vmul.f32 %v1041, 1.442695
      %v1055 = vpow.pop %v1054
      %v1056 = vmul.f32 %v1042, 1.442695
      %v1057 = vpow.pop %v1056
      %v1058 = vmul.f32 %v1043, 1.442695
      %v1059 = vpow.pop %v1058
      %v1060 = vsel %vm709, %v1045, 0.0
      %1061 = vadd.xlane.f32.xlu0 %v1060
      %v1062 = vpop.xlane.xlu0 %1061
      %v1063 = vsel %vm709, %v1047, 0.0
      %1064 = vadd.xlane.f32.xlu0 %v1063
      %v1065 = vpop.xlane.xlu0 %1064
      %v1066 = vsel %vm709, %v1049, 0.0
      %1067 = vadd.xlane.f32.xlu0 %v1066
      %v1068 = vpop.xlane.xlu0 %1067
      %v1069 = vsel %vm709, %v1051, 0.0
      %1070 = vadd.xlane.f32.xlu0 %v1069
      %v1071 = vpop.xlane.xlu0 %1070
      %v1072 = vsel %vm709, %v1053, 0.0
      %1073 = vadd.xlane.f32.xlu0 %v1072
      %v1074 = vpop.xlane.xlu0 %1073
      %v1075 = vsel %vm709, %v1055, 0.0
      %1076 = vadd.xlane.f32.xlu0 %v1075
      %v1077 = vpop.xlane.xlu0 %1076
      %v1078 = vsel %vm709, %v1057, 0.0
      %1079 = vadd.xlane.f32.xlu0 %v1078
      %v1080 = vpop.xlane.xlu0 %1079
      %v1081 = vsel %vm709, %v1059, 0.0
      %1082 = vadd.xlane.f32.xlu0 %v1081
      %v1083 = vpop.xlane.xlu0 %1082
      %v1084 = vrcp.pop %v1062
      %v1085 = vrcp.pop %v1065
      %v1086 = vrcp.pop %v1068
      %v1087 = vrcp.pop %v1071
      %v1088 = vrcp.pop %v1074
      %v1089 = vrcp.pop %v1077
      %v1090 = vrcp.pop %v1080
      %v1091 = vrcp.pop %v1083
      %v1092 = vmul.f32 %v1045, %v1084
      %v1093 = vmul.f32 %v1047, %v1085
      %v1094 = vmul.f32 %v1049, %v1086
      %v1095 = vmul.f32 %v1051, %v1087
      %v1096 = vmul.f32 %v1053, %v1088
      %v1097 = vmul.f32 %v1055, %v1089
      %v1098 = vmul.f32 %v1057, %v1090
      %v1099 = vmul.f32 %v1059, %v1091
      %v1100 = vpack.c.bf16 %v1093, %v1092
      %v1101 = vpack.c.bf16 %v1095, %v1094
      %v1102 = vpack.c.bf16 %v1097, %v1096
      %v1103 = vpack.c.bf16 %v1099, %v1098
      %1104 = vrot.lane.b32.xlu0 %v586, 48
      %v1105 = vpop.permute.xlu0 %1104
      %1106 = vrot.lane.b32.xlu0 %v587, 48
      %v1107 = vpop.permute.xlu0 %1106
      %1108 = vrot.lane.b32.xlu0 %v588, 48
      %v1109 = vpop.permute.xlu0 %1108
      %1110 = vrot.lane.b32.xlu0 %v589, 48
      %v1111 = vpop.permute.xlu0 %1110
      %v1117 = vsel %vm709, %v1100, 0
      %v1120 = vsel %vm709, %v1101, 0
      %v1123 = vsel %vm709, %v1102, 0
      %v1126 = vsel %vm709, %v1103, 0
      %1128 = vmatprep.subr.bf16.mxu0 0
      %1129 = vmatpush1.bf16.msra.mxu0 %v1105
      %1130 = vmatprep.subr.bf16.mxu0 0
      %1131 = vmatpush1.bf16.msra.mxu0 %v1107
      %1132 = vmatprep.subr.bf16.mxu0 0
      %1133 = vmatpush1.bf16.msra.mxu0 %v1109
      %1134 = vmatprep.subr.bf16.mxu0 0
      %1135 = vmatpush1.bf16.msra.mxu0 %v1111
      %1136 = vmatprep.subr.bf16.mxu0 0
      %1137 = vmatpush1.bf16.msra.mxu0 0
      %1138 = vmatprep.subr.bf16.mxu0 0
      %1139 = vmatpush1.bf16.msra.mxu0 0
      %1140 = vmatprep.subr.bf16.mxu0 0
      %1141 = vmatpush1.bf16.msra.mxu0 0
      %1142 = vmatprep.subr.bf16.mxu0 0
      %1143 = vmatpush1.bf16.msra.mxu0 0
      %1144 = vmatprep.subr.bf16.mxu0 0
      %1145 = vmatpush1.bf16.msra.mxu0 0
      %1146 = vmatprep.subr.bf16.mxu0 0
      %1147 = vmatpush1.bf16.msra.mxu0 0
      %1148 = vmatprep.subr.bf16.mxu0 0
      %1149 = vmatpush1.bf16.msra.mxu0 0
      %1150 = vmatprep.subr.bf16.mxu0 0
      %1151 = vmatpush1.bf16.msra.mxu0 0
      %1152 = vmatprep.subr.bf16.mxu0 0
      %1153 = vmatpush1.bf16.msra.mxu0 0
      %1154 = vmatprep.subr.bf16.mxu0 0
      %1155 = vmatpush1.bf16.msra.mxu0 0
      %1156 = vmatprep.subr.bf16.mxu0 0
      %1157 = vmatpush1.bf16.msra.mxu0 0
      %1158 = vmatprep.subr.bf16.mxu0 0
      %1159 = vmatpush1.bf16.msra.mxu0 0
      %1160 = vmatprep.mubr.bf16.mxu0 0
      %1161 = vmatmul.mubr.bf16.gmra.mrb[0].mxu0 %v1117
      %v1162 = vpop.f32.mrb[0].mxu0
      %v1163 = vadd.f32 0.0, %v1162
      %v1164 = vpop.f32.mrb[0].mxu0
      %v1165 = vpop.f32.mrb[0].mxu0
      %v1166 = vadd.f32 0.0, %v1165
      %v1167 = vpop.f32.mrb[0].mxu0
      %1168 = vmatprep.mubr.bf16.mxu0 0
      %1169 = vmatmul.mubr.bf16.gmra.mrb[0].mxu0 %v1120
      %v1170 = vpop.f32.mrb[0].mxu0
      %v1171 = vadd.f32 0.0, %v1170
      %v1172 = vpop.f32.mrb[0].mxu0
      %v1173 = vpop.f32.mrb[0].mxu0
      %v1174 = vadd.f32 0.0, %v1173
      %v1175 = vpop.f32.mrb[0].mxu0
      %1176 = vmatprep.mubr.bf16.mxu0 0
      %1177 = vmatmul.mubr.bf16.gmra.mrb[0].mxu0 %v1123
      %v1178 = vpop.f32.mrb[0].mxu0
      %v1179 = vadd.f32 0.0, %v1178
      %v1180 = vpop.f32.mrb[0].mxu0
      %v1181 = vpop.f32.mrb[0].mxu0
      %v1182 = vadd.f32 0.0, %v1181
      %v1183 = vpop.f32.mrb[0].mxu0
      %1184 = vmatprep.mubr.bf16.mxu0 0
      %1185 = vmatmul.mubr.bf16.gmra.mrb[0].mxu0 %v1126
      %v1186 = vpop.f32.mrb[0].mxu0
      %v1187 = vadd.f32 0.0, %v1186
      %v1188 = vpop.f32.mrb[0].mxu0
      %v1189 = vpop.f32.mrb[0].mxu0
      %v1190 = vadd.f32 0.0, %v1189
      %v1191 = vpop.f32.mrb[0].mxu0
      %1192 = vdwg.mxu0
      %1201 = vrot.lane.b32.xlu0 %v1163, 16
      %v1202 = vpop.permute.xlu0 %1201
      %1203 = vrot.lane.b32.xlu0 %v1166, 16
      %v1204 = vpop.permute.xlu0 %1203
      %1205 = vrot.lane.b32.xlu0 %v1171, 16
      %v1206 = vpop.permute.xlu0 %1205
      %1207 = vrot.lane.b32.xlu0 %v1174, 16
      %v1208 = vpop.permute.xlu0 %1207
      %1209 = vrot.lane.b32.xlu0 %v1179, 16
      %v1210 = vpop.permute.xlu0 %1209
      %1211 = vrot.lane.b32.xlu0 %v1182, 16
      %v1212 = vpop.permute.xlu0 %1211
      %1213 = vrot.lane.b32.xlu0 %v1187, 16
      %v1214 = vpop.permute.xlu0 %1213
      %1215 = vrot.lane.b32.xlu0 %v1190, 16
      %v1216 = vpop.permute.xlu0 %1215
      %v1225 = vsel %vm602, %v861, %v1202
      %v1226 = vsel %vm602, %v864, %v1204
      %v1227 = vsel %vm602, %v869, %v1206
      %v1228 = vsel %vm602, %v872, %v1208
      %v1229 = vsel %vm602, %v877, %v1210
      %v1230 = vsel %vm602, %v880, %v1212
      %v1231 = vsel %vm602, %v885, %v1214
      %v1232 = vsel %vm602, %v888, %v1216
      %v1233 = vpack.c.bf16 %v1226, %v1225
      %v1234 = vpack.c.bf16 %v1228, %v1227
      %v1235 = vpack.c.bf16 %v1230, %v1229
      %v1236 = vpack.c.bf16 %v1232, %v1231
      %v1237 = vld [vmem:[%s4] sm:$0xf]
      %v1238 = vld [vmem:[%s4 + $0x4] sm:$0xf]
      %v1239 = vld [vmem:[%s4 + $0x8] sm:$0xf]
      %v1240 = vld [vmem:[%s4 + $0xc] sm:$0xf]
      %v1241 = vld [vmem:[%s5] sm:$0x1]
      %v1243 = vlaneseq
      %v1244 = vshrl.u32 %v1243, 7
      %v1245 = vsub.s32 0, %v1244
      %v1246 = vrot.slane %v1241, %v1245
      %v1252 = vunpack.c.l.b16 %v1237
      %v1253 = vunpack.c.l.b16 %v1238
      %v1254 = vunpack.c.l.b16 %v1239
      %v1255 = vunpack.c.l.b16 %v1240
      %v1256 = vpack.c.b16 %v1253, %v1252
      %v1257 = vpack.c.b16 %v1255, %v1254
      %v1261 = vsel %vm503, %v1233, 0
      %v1264 = vsel %vm503, %v1234, 0
      %v1267 = vsel %vm503, %v1235, 0
      %v1270 = vsel %vm503, %v1236, 0
      %1272 = vmatprep.subr.bf16.mxu0 0
      %1273 = vmatpush1.bf16.msra.mxu0 %v1256
      %1274 = vmatprep.subr.bf16.mxu0 0
      %1275 = vmatpush1.bf16.msra.mxu0 %v1257
      %1276 = vmatprep.subr.bf16.mxu0 0
      %1277 = vmatpush1.bf16.msra.mxu0 0
      %1278 = vmatprep.subr.bf16.mxu0 0
      %1279 = vmatpush1.bf16.msra.mxu0 0
      %1280 = vmatprep.subr.bf16.mxu0 0
      %1281 = vmatpush1.bf16.msra.mxu0 0
      %1282 = vmatprep.subr.bf16.mxu0 0
      %1283 = vmatpush1.bf16.msra.mxu0 0
      %1284 = vmatprep.subr.bf16.mxu0 0
      %1285 = vmatpush1.bf16.msra.mxu0 0
      %1286 = vmatprep.subr.bf16.mxu0 0
      %1287 = vmatpush1.bf16.msra.mxu0 0
      %1288 = vmatprep.subr.bf16.mxu0 0
      %1289 = vmatpush1.bf16.msra.mxu0 0
      %1290 = vmatprep.subr.bf16.mxu0 0
      %1291 = vmatpush1.bf16.msra.mxu0 0
      %1292 = vmatprep.subr.bf16.mxu0 0
      %1293 = vmatpush1.bf16.msra.mxu0 0
      %1294 = vmatprep.subr.bf16.mxu0 0
      %1295 = vmatpush1.bf16.msra.mxu0 0
      %1296 = vmatprep.subr.bf16.mxu0 0
      %1297 = vmatpush1.bf16.msra.mxu0 0
      %1298 = vmatprep.subr.bf16.mxu0 0
      %1299 = vmatpush1.bf16.msra.mxu0 0
      %1300 = vmatprep.subr.bf16.mxu0 0
      %1301 = vmatpush1.bf16.msra.mxu0 0
      %1302 = vmatprep.subr.bf16.mxu0 0
      %1303 = vmatpush1.bf16.msra.mxu0 0
      %1304 = vmatprep.mubr.bf16.mxu0 0
      %1305 = vmatmul.mubr.bf16.gmra.mrb[0].mxu0 %v1261
      %v1306 = vpop.f32.mrb[0].mxu0
      %v1307 = vadd.f32 %v1246, %v1306
      %v1308 = vpop.f32.mrb[0].mxu0
      %v1309 = vpop.f32.mrb[0].mxu0
      %v1310 = vadd.f32 %v1246, %v1309
      %v1311 = vpop.f32.mrb[0].mxu0
      %1312 = vmatprep.mubr.bf16.mxu0 0
      %1313 = vmatmul.mubr.bf16.gmra.mrb[0].mxu0 %v1264
      %v1314 = vpop.f32.mrb[0].mxu0
      %v1315 = vadd.f32 %v1246, %v1314
      %v1316 = vpop.f32.mrb[0].mxu0
      %v1317 = vpop.f32.mrb[0].mxu0
      %v1318 = vadd.f32 %v1246, %v1317
      %v1319 = vpop.f32.mrb[0].mxu0
      %1320 = vmatprep.mubr.bf16.mxu0 0
      %1321 = vmatmul.mubr.bf16.gmra.mrb[0].mxu0 %v1267
      %v1322 = vpop.f32.mrb[0].mxu0
      %v1323 = vadd.f32 %v1246, %v1322
      %v1324 = vpop.f32.mrb[0].mxu0
      %v1325 = vpop.f32.mrb[0].mxu0
      %v1326 = vadd.f32 %v1246, %v1325
      %v1327 = vpop.f32.mrb[0].mxu0
      %1328 = vmatprep.mubr.bf16.mxu0 0
      %1329 = vmatmul.mubr.bf16.gmra.mrb[0].mxu0 %v1270
      %v1330 = vpop.f32.mrb[0].mxu0
      %v1331 = vadd.f32 %v1246, %v1330
      %v1332 = vpop.f32.mrb[0].mxu0
      %v1333 = vpop.f32.mrb[0].mxu0
      %v1334 = vadd.f32 %v1246, %v1333
      %v1335 = vpop.f32.mrb[0].mxu0
      %1336 = vdwg.mxu0
      %v1337 = vadd.f32 %v1307, %v450
      %v1338 = vadd.f32 %v1310, %v451
      %v1339 = vadd.f32 %v1315, %v452
      %v1340 = vadd.f32 %v1318, %v453
      %v1341 = vadd.f32 %v1323, %v454
      %v1342 = vadd.f32 %v1326, %v455
      %v1343 = vadd.f32 %v1331, %v456
      %v1344 = vadd.f32 %v1334, %v457
      %v1345 = vld [vmem:[%s6] sm:$0x1]
      %v1346 = vld [vmem:[%s7] sm:$0x1]
      %v1347 = vsel %vm503, %v1337, 0.0
      %1348 = vadd.xlane.f32.xlu0 %v1347
      %v1349 = vpop.xlane.xlu0 %1348
      %v1350 = vsel %vm503, %v1338, 0.0
      %1351 = vadd.xlane.f32.xlu0 %v1350
      %v1352 = vpop.xlane.xlu0 %1351
      %v1353 = vsel %vm503, %v1339, 0.0
      %1354 = vadd.xlane.f32.xlu0 %v1353
      %v1355 = vpop.xlane.xlu0 %1354
      %v1356 = vsel %vm503, %v1340, 0.0
      %1357 = vadd.xlane.f32.xlu0 %v1356
      %v1358 = vpop.xlane.xlu0 %1357
      %v1359 = vsel %vm503, %v1341, 0.0
      %1360 = vadd.xlane.f32.xlu0 %v1359
      %v1361 = vpop.xlane.xlu0 %1360
      %v1362 = vsel %vm503, %v1342, 0.0
      %1363 = vadd.xlane.f32.xlu0 %v1362
      %v1364 = vpop.xlane.xlu0 %1363
      %v1365 = vsel %vm503, %v1343, 0.0
      %1366 = vadd.xlane.f32.xlu0 %v1365
      %v1367 = vpop.xlane.xlu0 %1366
      %v1368 = vsel %vm503, %v1344, 0.0
      %1369 = vadd.xlane.f32.xlu0 %v1368
      %v1370 = vpop.xlane.xlu0 %1369
      %v1371 = vrcp.pop 32.0
      %v1372 = vmul.f32 %v1349, %v1371
      %v1373 = vmul.f32 %v1352, %v1371
      %v1374 = vmul.f32 %v1355, %v1371
      %v1375 = vmul.f32 %v1358, %v1371
      %v1376 = vmul.f32 %v1361, %v1371
      %v1377 = vmul.f32 %v1364, %v1371
      %v1378 = vmul.f32 %v1367, %v1371
      %v1379 = vmul.f32 %v1370, %v1371
      %v1380 = vsub.f32 %v1337, %v1372
      %v1381 = vsub.f32 %v1338, %v1373
      %v1382 = vsub.f32 %v1339, %v1374
      %v1383 = vsub.f32 %v1340, %v1375
      %v1384 = vsub.f32 %v1341, %v1376
      %v1385 = vsub.f32 %v1342, %v1377
      %v1386 = vsub.f32 %v1343, %v1378
      %v1387 = vsub.f32 %v1344, %v1379
      %v1388 = vmul.f32 %v1380, %v1380
      %v1389 = vmul.f32 %v1381, %v1381
      %v1390 = vmul.f32 %v1382, %v1382
      %v1391 = vmul.f32 %v1383, %v1383
      %v1392 = vmul.f32 %v1384, %v1384
      %v1393 = vmul.f32 %v1385, %v1385
      %v1394 = vmul.f32 %v1386, %v1386
      %v1395 = vmul.f32 %v1387, %v1387
      %v1396 = vsel %vm503, %v1388, 0.0
      %1397 = vadd.xlane.f32.xlu0 %v1396
      %v1398 = vpop.xlane.xlu0 %1397
      %v1399 = vsel %vm503, %v1389, 0.0
      %1400 = vadd.xlane.f32.xlu0 %v1399
      %v1401 = vpop.xlane.xlu0 %1400
      %v1402 = vsel %vm503, %v1390, 0.0
      %1403 = vadd.xlane.f32.xlu0 %v1402
      %v1404 = vpop.xlane.xlu0 %1403
      %v1405 = vsel %vm503, %v1391, 0.0
      %1406 = vadd.xlane.f32.xlu0 %v1405
      %v1407 = vpop.xlane.xlu0 %1406
      %v1408 = vsel %vm503, %v1392, 0.0
      %1409 = vadd.xlane.f32.xlu0 %v1408
      %v1410 = vpop.xlane.xlu0 %1409
      %v1411 = vsel %vm503, %v1393, 0.0
      %1412 = vadd.xlane.f32.xlu0 %v1411
      %v1413 = vpop.xlane.xlu0 %1412
      %v1414 = vsel %vm503, %v1394, 0.0
      %1415 = vadd.xlane.f32.xlu0 %v1414
      %v1416 = vpop.xlane.xlu0 %1415
      %v1417 = vsel %vm503, %v1395, 0.0
      %1418 = vadd.xlane.f32.xlu0 %v1417
      %v1419 = vpop.xlane.xlu0 %1418
      %v1420 = vmul.f32 %v1398, %v1371
      %v1421 = vmul.f32 %v1401, %v1371
      %v1422 = vmul.f32 %v1404, %v1371
      %v1423 = vmul.f32 %v1407, %v1371
      %v1424 = vmul.f32 %v1410, %v1371
      %v1425 = vmul.f32 %v1413, %v1371
      %v1426 = vmul.f32 %v1416, %v1371
      %v1427 = vmul.f32 %v1419, %v1371
      %v1428 = vadd.f32 %v1420, 1e-05
      %v1429 = vadd.f32 %v1421, 1e-05
      %v1430 = vadd.f32 %v1422, 1e-05
      %v1431 = vadd.f32 %v1423, 1e-05
      %v1432 = vadd.f32 %v1424, 1e-05
      %v1433 = vadd.f32 %v1425, 1e-05
      %v1434 = vadd.f32 %v1426, 1e-05
      %v1435 = vadd.f32 %v1427, 1e-05
      %v1436 = vrsqrt.pop %v1428
      %v1437 = vrsqrt.pop %v1429
      %v1438 = vrsqrt.pop %v1430
      %v1439 = vrsqrt.pop %v1431
      %v1440 = vrsqrt.pop %v1432
      %v1441 = vrsqrt.pop %v1433
      %v1442 = vrsqrt.pop %v1434
      %v1443 = vrsqrt.pop %v1435
      %v1444 = vmul.f32 %v1380, %v1436
      %v1445 = vmul.f32 %v1381, %v1437
      %v1446 = vmul.f32 %v1382, %v1438
      %v1447 = vmul.f32 %v1383, %v1439
      %v1448 = vmul.f32 %v1384, %v1440
      %v1449 = vmul.f32 %v1385, %v1441
      %v1450 = vmul.f32 %v1386, %v1442
      %v1451 = vmul.f32 %v1387, %v1443
      %v1453 = vlaneseq
      %v1454 = vshrl.u32 %v1453, 7
      %v1455 = vsub.s32 0, %v1454
      %v1456 = vrot.slane %v1345, %v1455
      %v1458 = vmul.f32 %v1444, %v1456
      %v1459 = vmul.f32 %v1445, %v1456
      %v1460 = vmul.f32 %v1446, %v1456
      %v1461 = vmul.f32 %v1447, %v1456
      %v1462 = vmul.f32 %v1448, %v1456
      %v1463 = vmul.f32 %v1449, %v1456
      %v1464 = vmul.f32 %v1450, %v1456
      %v1465 = vmul.f32 %v1451, %v1456
      %v1467 = vlaneseq
      %v1468 = vshrl.u32 %v1467, 7
      %v1469 = vsub.s32 0, %v1468
      %v1470 = vrot.slane %v1346, %v1469
      %v1472 = vadd.f32 %v1458, %v1470
      %v1473 = vadd.f32 %v1459, %v1470
      %v1474 = vadd.f32 %v1460, %v1470
      %v1475 = vadd.f32 %v1461, %v1470
      %v1476 = vadd.f32 %v1462, %v1470
      %v1477 = vadd.f32 %v1463, %v1470
      %v1478 = vadd.f32 %v1464, %v1470
      %v1479 = vadd.f32 %v1465, %v1470
      %v1480 = vsel %vm468, 1, 0
      %v1481 = vsel %vm469, 1, 0
      %v1482 = vsel %vm470, 1, 0
      %v1483 = vsel %vm471, 1, 0
      %v1484 = vsel %vm472, 1, 0
      %v1485 = vsel %vm473, 1, 0
      %v1486 = vsel %vm474, 1, 0
      %v1487 = vsel %vm475, 1, 0
      %vm1488 = vcmp.eq.s32.totalorder %v1480, 1
      %vm1489 = vcmp.eq.s32.totalorder %v1481, 1
      %vm1490 = vcmp.eq.s32.totalorder %v1482, 1
      %vm1491 = vcmp.eq.s32.totalorder %v1483, 1
      %vm1492 = vcmp.eq.s32.totalorder %v1484, 1
      %vm1493 = vcmp.eq.s32.totalorder %v1485, 1
      %vm1494 = vcmp.eq.s32.totalorder %v1486, 1
      %vm1495 = vcmp.eq.s32.totalorder %v1487, 1
      %v1496 = vsel %vm1488, 0.0, %v1472
      %v1497 = vsel %vm1489, 0.0, %v1473
      %v1498 = vsel %vm1490, 0.0, %v1474
      %v1499 = vsel %vm1491, 0.0, %v1475
      %v1500 = vsel %vm1492, 0.0, %v1476
      %v1501 = vsel %vm1493, 0.0, %v1477
      %v1502 = vsel %vm1494, 0.0, %v1478
      %v1503 = vsel %vm1495, 0.0, %v1479
      %vm1512 = vcmask 1043456
      %v1513 = vrot.slane %v1496, 4
      %v1514 = vrot.slane %v1497, 4
      %v1515 = vsel %vm1512, %v1513, %v1514
      %v1516 = vrot.slane %v1498, 4
      %v1517 = vsel %vm1512, %v1514, %v1516
      %v1518 = vrot.slane %v1499, 4
      %v1519 = vsel %vm1512, %v1516, %v1518
      %v1520 = vrot.slane %v1500, 4
      %v1521 = vsel %vm1512, %v1518, %v1520
      %v1522 = vrot.slane %v1501, 4
      %v1523 = vsel %vm1512, %v1520, %v1522
      %v1524 = vrot.slane %v1502, 4
      %v1525 = vsel %vm1512, %v1522, %v1524
      %v1526 = vrot.slane %v1503, 4
      %v1527 = vsel %vm1512, %v1524, %v1526
      %v1536 = vsel %vm1512, 0.0, %v1513
      %vm1537 = vcmask 1042432
      %v1538 = vrot.slane %v1496, 5
      %v1539 = vrot.slane %v1497, 5
      %v1540 = vsel %vm1537, %v1538, %v1539
      %v1541 = vrot.slane %v1498, 5
      %v1542 = vsel %vm1537, %v1539, %v1541
      %v1543 = vrot.slane %v1499, 5
      %v1544 = vsel %vm1537, %v1541, %v1543
      %v1545 = vrot.slane %v1500, 5
      %v1546 = vsel %vm1537, %v1543, %v1545
      %v1547 = vrot.slane %v1501, 5
      %v1548 = vsel %vm1537, %v1545, %v1547
      %v1549 = vrot.slane %v1502, 5
      %v1550 = vsel %vm1537, %v1547, %v1549
      %v1551 = vrot.slane %v1503, 5
      %v1552 = vsel %vm1537, %v1549, %v1551
      %v1554 = vsel %vm1537, 0.0, %v1538
      %vm1555 = vcmask 1041408
      %v1556 = vrot.slane %v1496, 6
      %v1557 = vrot.slane %v1497, 6
      %v1558 = vsel %vm1555, %v1556, %v1557
      %v1559 = vrot.slane %v1498, 6
      %v1560 = vsel %vm1555, %v1557, %v1559
      %v1561 = vrot.slane %v1499, 6
      %v1562 = vsel %vm1555, %v1559, %v1561
      %v1563 = vrot.slane %v1500, 6
      %v1564 = vsel %vm1555, %v1561, %v1563
      %v1565 = vrot.slane %v1501, 6
      %v1566 = vsel %vm1555, %v1563, %v1565
      %v1567 = vrot.slane %v1502, 6
      %v1568 = vsel %vm1555, %v1565, %v1567
      %v1569 = vrot.slane %v1503, 6
      %v1570 = vsel %vm1555, %v1567, %v1569
      %v1572 = vsel %vm1555, 0.0, %v1556
      %vm1573 = vcmask 1040384
      %v1574 = vrot.slane %v1496, 7
      %v1575 = vrot.slane %v1497, 7
      %v1576 = vsel %vm1573, %v1574, %v1575
      %v1577 = vrot.slane %v1498, 7
      %v1578 = vsel %vm1573, %v1575, %v1577
      %v1579 = vrot.slane %v1499, 7
      %v1580 = vsel %vm1573, %v1577, %v1579
      %v1581 = vrot.slane %v1500, 7
      %v1582 = vsel %vm1573, %v1579, %v1581
      %v1583 = vrot.slane %v1501, 7
      %v1584 = vsel %vm1573, %v1581, %v1583
      %v1585 = vrot.slane %v1502, 7
      %v1586 = vsel %vm1573, %v1583, %v1585
      %v1587 = vrot.slane %v1503, 7
      %v1588 = vsel %vm1573, %v1585, %v1587
      %v1590 = vsel %vm1573, 0.0, %v1574
      %vm1591 = vcmask 1046528
      %v1592 = vrot.slane %v1496, 1
      %v1593 = vrot.slane %v1497, 1
      %v1594 = vsel %vm1591, %v1592, %v1593
      %v1595 = vrot.slane %v1498, 1
      %v1596 = vsel %vm1591, %v1593, %v1595
      %v1597 = vrot.slane %v1499, 1
      %v1598 = vsel %vm1591, %v1595, %v1597
      %v1599 = vrot.slane %v1500, 1
      %v1600 = vsel %vm1591, %v1597, %v1599
      %v1601 = vrot.slane %v1501, 1
      %v1602 = vsel %vm1591, %v1599, %v1601
      %v1603 = vrot.slane %v1502, 1
      %v1604 = vsel %vm1591, %v1601, %v1603
      %v1605 = vrot.slane %v1503, 1
      %v1606 = vsel %vm1591, %v1603, %v1605
      %v1608 = vsel %vm1591, %v1605, 0.0
      %vm1609 = vcmask 1045504
      %v1610 = vrot.slane %v1496, 2
      %v1611 = vrot.slane %v1497, 2
      %v1612 = vsel %vm1609, %v1610, %v1611
      %v1613 = vrot.slane %v1498, 2
      %v1614 = vsel %vm1609, %v1611, %v1613
      %v1615 = vrot.slane %v1499, 2
      %v1616 = vsel %vm1609, %v1613, %v1615
      %v1617 = vrot.slane %v1500, 2
      %v1618 = vsel %vm1609, %v1615, %v1617
      %v1619 = vrot.slane %v1501, 2
      %v1620 = vsel %vm1609, %v1617, %v1619
      %v1621 = vrot.slane %v1502, 2
      %v1622 = vsel %vm1609, %v1619, %v1621
      %v1623 = vrot.slane %v1503, 2
      %v1624 = vsel %vm1609, %v1621, %v1623
      %v1626 = vsel %vm1609, %v1623, 0.0
      %vm1627 = vcmask 1044480
      %v1628 = vrot.slane %v1496, 3
      %v1629 = vrot.slane %v1497, 3
      %v1630 = vsel %vm1627, %v1628, %v1629
      %v1631 = vrot.slane %v1498, 3
      %v1632 = vsel %vm1627, %v1629, %v1631
      %v1633 = vrot.slane %v1499, 3
      %v1634 = vsel %vm1627, %v1631, %v1633
      %v1635 = vrot.slane %v1500, 3
      %v1636 = vsel %vm1627, %v1633, %v1635
      %v1637 = vrot.slane %v1501, 3
      %v1638 = vsel %vm1627, %v1635, %v1637
      %v1639 = vrot.slane %v1502, 3
      %v1640 = vsel %vm1627, %v1637, %v1639
      %v1641 = vrot.slane %v1503, 3
      %v1642 = vsel %vm1627, %v1639, %v1641
      %v1644 = vsel %vm1627, %v1641, 0.0
      %v1646 = vsel %vm1512, %v1526, 0.0
      %1648 = vrot.lane.b32.xlu0 %v1554, 32
      %v1649 = vpop.permute.xlu0 %1648
      %1650 = vrot.lane.b32.xlu0 %v1540, 32
      %v1651 = vpop.permute.xlu0 %1650
      %1652 = vrot.lane.b32.xlu0 %v1542, 32
      %v1653 = vpop.permute.xlu0 %1652
      %1654 = vrot.lane.b32.xlu0 %v1544, 32
      %v1655 = vpop.permute.xlu0 %1654
      %1656 = vrot.lane.b32.xlu0 %v1546, 32
      %v1657 = vpop.permute.xlu0 %1656
      %1658 = vrot.lane.b32.xlu0 %v1548, 32
      %v1659 = vpop.permute.xlu0 %1658
      %1660 = vrot.lane.b32.xlu0 %v1550, 32
      %v1661 = vpop.permute.xlu0 %1660
      %1662 = vrot.lane.b32.xlu0 %v1552, 32
      %v1663 = vpop.permute.xlu0 %1662
      %1673 = vrot.lane.b32.xlu0 %v1572, 64
      %v1674 = vpop.permute.xlu0 %1673
      %1675 = vrot.lane.b32.xlu0 %v1558, 64
      %v1676 = vpop.permute.xlu0 %1675
      %1677 = vrot.lane.b32.xlu0 %v1560, 64
      %v1678 = vpop.permute.xlu0 %1677
      %1679 = vrot.lane.b32.xlu0 %v1562, 64
      %v1680 = vpop.permute.xlu0 %1679
      %1681 = vrot.lane.b32.xlu0 %v1564, 64
      %v1682 = vpop.permute.xlu0 %1681
      %1683 = vrot.lane.b32.xlu0 %v1566, 64
      %v1684 = vpop.permute.xlu0 %1683
      %1685 = vrot.lane.b32.xlu0 %v1568, 64
      %v1686 = vpop.permute.xlu0 %1685
      %1687 = vrot.lane.b32.xlu0 %v1570, 64
      %v1688 = vpop.permute.xlu0 %1687
      %1698 = vrot.lane.b32.xlu0 %v1590, 96
      %v1699 = vpop.permute.xlu0 %1698
      %1700 = vrot.lane.b32.xlu0 %v1576, 96
      %v1701 = vpop.permute.xlu0 %1700
      %1702 = vrot.lane.b32.xlu0 %v1578, 96
      %v1703 = vpop.permute.xlu0 %1702
      %1704 = vrot.lane.b32.xlu0 %v1580, 96
      %v1705 = vpop.permute.xlu0 %1704
      %1706 = vrot.lane.b32.xlu0 %v1582, 96
      %v1707 = vpop.permute.xlu0 %1706
      %1708 = vrot.lane.b32.xlu0 %v1584, 96
      %v1709 = vpop.permute.xlu0 %1708
      %1710 = vrot.lane.b32.xlu0 %v1586, 96
      %v1711 = vpop.permute.xlu0 %1710
      %1712 = vrot.lane.b32.xlu0 %v1588, 96
      %v1713 = vpop.permute.xlu0 %1712
      %1723 = vrot.lane.b32.xlu0 %v1594, 32
      %v1724 = vpop.permute.xlu0 %1723
      %1725 = vrot.lane.b32.xlu0 %v1596, 32
      %v1726 = vpop.permute.xlu0 %1725
      %1727 = vrot.lane.b32.xlu0 %v1598, 32
      %v1728 = vpop.permute.xlu0 %1727
      %1729 = vrot.lane.b32.xlu0 %v1600, 32
      %v1730 = vpop.permute.xlu0 %1729
      %1731 = vrot.lane.b32.xlu0 %v1602, 32
      %v1732 = vpop.permute.xlu0 %1731
      %1733 = vrot.lane.b32.xlu0 %v1604, 32
      %v1734 = vpop.permute.xlu0 %1733
      %1735 = vrot.lane.b32.xlu0 %v1606, 32
      %v1736 = vpop.permute.xlu0 %1735
      %1737 = vrot.lane.b32.xlu0 %v1608, 32
      %v1738 = vpop.permute.xlu0 %1737
      %1748 = vrot.lane.b32.xlu0 %v1612, 64
      %v1749 = vpop.permute.xlu0 %1748
      %1750 = vrot.lane.b32.xlu0 %v1614, 64
      %v1751 = vpop.permute.xlu0 %1750
      %1752 = vrot.lane.b32.xlu0 %v1616, 64
      %v1753 = vpop.permute.xlu0 %1752
      %1754 = vrot.lane.b32.xlu0 %v1618, 64
      %v1755 = vpop.permute.xlu0 %1754
      %1756 = vrot.lane.b32.xlu0 %v1620, 64
      %v1757 = vpop.permute.xlu0 %1756
      %1758 = vrot.lane.b32.xlu0 %v1622, 64
      %v1759 = vpop.permute.xlu0 %1758
      %1760 = vrot.lane.b32.xlu0 %v1624, 64
      %v1761 = vpop.permute.xlu0 %1760
      %1762 = vrot.lane.b32.xlu0 %v1626, 64
      %v1763 = vpop.permute.xlu0 %1762
      %1773 = vrot.lane.b32.xlu0 %v1630, 96
      %v1774 = vpop.permute.xlu0 %1773
      %1775 = vrot.lane.b32.xlu0 %v1632, 96
      %v1776 = vpop.permute.xlu0 %1775
      %1777 = vrot.lane.b32.xlu0 %v1634, 96
      %v1778 = vpop.permute.xlu0 %1777
      %1779 = vrot.lane.b32.xlu0 %v1636, 96
      %v1780 = vpop.permute.xlu0 %1779
      %1781 = vrot.lane.b32.xlu0 %v1638, 96
      %v1782 = vpop.permute.xlu0 %1781
      %1783 = vrot.lane.b32.xlu0 %v1640, 96
      %v1784 = vpop.permute.xlu0 %1783
      %1785 = vrot.lane.b32.xlu0 %v1642, 96
      %v1786 = vpop.permute.xlu0 %1785
      %1787 = vrot.lane.b32.xlu0 %v1644, 96
      %v1788 = vpop.permute.xlu0 %1787
      %v1797 = vsel %vm503, %v1536, %v1649
      %v1798 = vsel %vm503, %v1515, %v1651
      %v1799 = vsel %vm503, %v1517, %v1653
      %v1800 = vsel %vm503, %v1519, %v1655
      %v1801 = vsel %vm503, %v1521, %v1657
      %v1802 = vsel %vm503, %v1523, %v1659
      %v1803 = vsel %vm503, %v1525, %v1661
      %v1804 = vsel %vm503, %v1527, %v1663
      %v1805 = vsel %vm709, %v1797, %v1674
      %v1806 = vsel %vm709, %v1798, %v1676
      %v1807 = vsel %vm709, %v1799, %v1678
      %v1808 = vsel %vm709, %v1800, %v1680
      %v1809 = vsel %vm709, %v1801, %v1682
      %v1810 = vsel %vm709, %v1802, %v1684
      %v1811 = vsel %vm709, %v1803, %v1686
      %v1812 = vsel %vm709, %v1804, %v1688
      %vm1813 = vcmask 785408
      %v1814 = vsel %vm1813, %v1805, %v1699
      %v1815 = vsel %vm1813, %v1806, %v1701
      %v1816 = vsel %vm1813, %v1807, %v1703
      %v1817 = vsel %vm1813, %v1808, %v1705
      %v1818 = vsel %vm1813, %v1809, %v1707
      %v1819 = vsel %vm1813, %v1810, %v1709
      %v1820 = vsel %vm1813, %v1811, %v1711
      %v1821 = vsel %vm1813, %v1812, %v1713
      %v1822 = vsel %vm503, %v1496, %v1724
      %v1823 = vsel %vm503, %v1497, %v1726
      %v1824 = vsel %vm503, %v1498, %v1728
      %v1825 = vsel %vm503, %v1499, %v1730
      %v1826 = vsel %vm503, %v1500, %v1732
      %v1827 = vsel %vm503, %v1501, %v1734
      %v1828 = vsel %vm503, %v1502, %v1736
      %v1829 = vsel %vm503, %v1503, %v1738
      %v1830 = vsel %vm709, %v1822, %v1749
      %v1831 = vsel %vm709, %v1823, %v1751
      %v1832 = vsel %vm709, %v1824, %v1753
      %v1833 = vsel %vm709, %v1825, %v1755
      %v1834 = vsel %vm709, %v1826, %v1757
      %v1835 = vsel %vm709, %v1827, %v1759
      %v1836 = vsel %vm709, %v1828, %v1761
      %v1837 = vsel %vm709, %v1829, %v1763
      %v1838 = vsel %vm1813, %v1830, %v1774
      %v1839 = vsel %vm1813, %v1831, %v1776
      %v1840 = vsel %vm1813, %v1832, %v1778
      %v1841 = vsel %vm1813, %v1833, %v1780
      %v1842 = vsel %vm1813, %v1834, %v1782
      %v1843 = vsel %vm1813, %v1835, %v1784
      %v1844 = vsel %vm1813, %v1836, %v1786
      %v1845 = vsel %vm1813, %v1837, %v1788
      %v1846 = vpack.c.bf16 %v1815, %v1814
      %v1847 = vpack.c.bf16 %v1839, %v1838
      %v1848 = vpack.c.bf16 %v1517, %v1515
      %v1849 = vpack.c.bf16 %v1817, %v1816
      %v1850 = vpack.c.bf16 %v1841, %v1840
      %v1851 = vpack.c.bf16 %v1521, %v1519
      %v1852 = vpack.c.bf16 %v1819, %v1818
      %v1853 = vpack.c.bf16 %v1843, %v1842
      %v1854 = vpack.c.bf16 %v1525, %v1523
      %v1855 = vpack.c.bf16 %v1821, %v1820
      %v1856 = vpack.c.bf16 %v1845, %v1844
      %v1857 = vpack.c.bf16 %v1646, %v1527
      %v1858 = vld [vmem:[%s8] sm:$0xf]
      %v1859 = vld [vmem:[%s8 + $0x4] sm:$0xf]
      %v1860 = vld [vmem:[%s8 + $0x8] sm:$0xf]
      %v1861 = vld [vmem:[%s8 + $0xc] sm:$0xf]
      %v1862 = vld [vmem:[%s8 + $0x10] sm:$0xf]
      %v1863 = vld [vmem:[%s8 + $0x14] sm:$0xf]
      %v1864 = vld [vmem:[%s8 + $0x18] sm:$0xf]
      %v1865 = vld [vmem:[%s8 + $0x1c] sm:$0xf]
      %v1866 = vld [vmem:[%s8 + $0x20] sm:$0xf]
      %v1867 = vld [vmem:[%s8 + $0x24] sm:$0xf]
      %v1868 = vld [vmem:[%s8 + $0x28] sm:$0xf]
      %v1869 = vld [vmem:[%s8 + $0x2c] sm:$0xf]
      %v1870 = vld [vmem:[%s8 + $0x30] sm:$0xf]
      %v1871 = vld [vmem:[%s8 + $0x34] sm:$0xf]
      %v1872 = vld [vmem:[%s8 + $0x38] sm:$0xf]
      %v1873 = vld [vmem:[%s8 + $0x3c] sm:$0xf]
      %v1874 = vld [vmem:[%s8 + $0x40] sm:$0xf]
      %v1875 = vld [vmem:[%s8 + $0x44] sm:$0xf]
      %v1876 = vld [vmem:[%s8 + $0x48] sm:$0xf]
      %v1877 = vld [vmem:[%s8 + $0x4c] sm:$0xf]
      %v1878 = vld [vmem:[%s8 + $0x50] sm:$0xf]
      %v1879 = vld [vmem:[%s8 + $0x54] sm:$0xf]
      %v1880 = vld [vmem:[%s8 + $0x58] sm:$0xf]
      %v1881 = vld [vmem:[%s8 + $0x5c] sm:$0xf]
      %v1882 = vld [vmem:[%s8 + $0x60] sm:$0xf]
      %v1883 = vld [vmem:[%s8 + $0x64] sm:$0xf]
      %v1884 = vld [vmem:[%s8 + $0x68] sm:$0xf]
      %v1885 = vld [vmem:[%s8 + $0x6c] sm:$0xf]
      %v1886 = vld [vmem:[%s8 + $0x70] sm:$0xf]
      %v1887 = vld [vmem:[%s8 + $0x74] sm:$0xf]
      %v1888 = vld [vmem:[%s8 + $0x78] sm:$0xf]
      %v1889 = vld [vmem:[%s8 + $0x7c] sm:$0xf]
      %v1890 = vld [vmem:[%s8 + $0x80] sm:$0xf]
      %v1891 = vld [vmem:[%s8 + $0x84] sm:$0xf]
      %v1892 = vld [vmem:[%s8 + $0x88] sm:$0xf]
      %v1893 = vld [vmem:[%s8 + $0x8c] sm:$0xf]
      %v1894 = vld [vmem:[%s9] sm:$0x1]
      %v1896 = vlaneseq
      %v1897 = vshrl.u32 %v1896, 7
      %v1898 = vsub.s32 0, %v1897
      %v1899 = vrot.slane %v1894, %v1898
      %v1937 = vunpack.c.l.b16 %v1858
      %v1938 = vunpack.c.l.b16 %v1859
      %v1939 = vunpack.c.l.b16 %v1860
      %v1940 = vunpack.c.l.b16 %v1861
      %v1941 = vunpack.c.l.b16 %v1862
      %v1942 = vunpack.c.l.b16 %v1863
      %v1943 = vunpack.c.l.b16 %v1864
      %v1944 = vunpack.c.l.b16 %v1865
      %v1945 = vunpack.c.l.b16 %v1866
      %v1946 = vunpack.c.l.b16 %v1867
      %v1947 = vunpack.c.l.b16 %v1868
      %v1948 = vunpack.c.l.b16 %v1869
      %v1949 = vunpack.c.l.b16 %v1870
      %v1950 = vunpack.c.l.b16 %v1871
      %v1951 = vunpack.c.l.b16 %v1872
      %v1952 = vunpack.c.l.b16 %v1873
      %v1953 = vunpack.c.l.b16 %v1874
      %v1954 = vunpack.c.l.b16 %v1875
      %v1955 = vunpack.c.l.b16 %v1876
      %v1956 = vunpack.c.l.b16 %v1877
      %v1957 = vunpack.c.l.b16 %v1878
      %v1958 = vunpack.c.l.b16 %v1879
      %v1959 = vunpack.c.l.b16 %v1880
      %v1960 = vunpack.c.l.b16 %v1881
      %v1961 = vunpack.c.l.b16 %v1882
      %v1962 = vunpack.c.l.b16 %v1883
      %v1963 = vunpack.c.l.b16 %v1884
      %v1964 = vunpack.c.l.b16 %v1885
      %v1965 = vunpack.c.l.b16 %v1886
      %v1966 = vunpack.c.l.b16 %v1887
      %v1967 = vunpack.c.l.b16 %v1888
      %v1968 = vunpack.c.l.b16 %v1889
      %v1969 = vunpack.c.l.b16 %v1890
      %v1970 = vunpack.c.l.b16 %v1891
      %v1971 = vunpack.c.l.b16 %v1892
      %v1972 = vunpack.c.l.b16 %v1893
      %v1973 = vpack.c.b16 %v1938, %v1937
      %v1974 = vpack.c.b16 %v1940, %v1939
      %v1975 = vpack.c.b16 %v1942, %v1941
      %v1976 = vpack.c.b16 %v1944, %v1943
      %v1977 = vpack.c.b16 %v1946, %v1945
      %v1978 = vpack.c.b16 %v1948, %v1947
      %v1979 = vpack.c.b16 %v1950, %v1949
      %v1980 = vpack.c.b16 %v1952, %v1951
      %v1981 = vpack.c.b16 %v1954, %v1953
      %v1982 = vpack.c.b16 %v1956, %v1955
      %v1983 = vpack.c.b16 %v1958, %v1957
      %v1984 = vpack.c.b16 %v1960, %v1959
      %v1985 = vpack.c.b16 %v1962, %v1961
      %v1986 = vpack.c.b16 %v1964, %v1963
      %v1987 = vpack.c.b16 %v1966, %v1965
      %v1988 = vpack.c.b16 %v1968, %v1967
      %v1989 = vpack.c.b16 %v1970, %v1969
      %v1990 = vpack.c.b16 %v1972, %v1971
      %v2010 = vsel %vm503, %v1848, 0
      %v2013 = vsel %vm503, %v1851, 0
      %v2016 = vsel %vm503, %v1854, 0
      %v2019 = vsel %vm503, %v1857, 0
      %2021 = vmatprep.subr.bf16.mxu0 0
      %2022 = vmatpush1.bf16.msra.mxu0 %v1973
      %2023 = vmatprep.subr.bf16.mxu0 0
      %2024 = vmatpush1.bf16.msra.mxu0 %v1974
      %2025 = vmatprep.subr.bf16.mxu0 0
      %2026 = vmatpush1.bf16.msra.mxu0 %v1975
      %2027 = vmatprep.subr.bf16.mxu0 0
      %2028 = vmatpush1.bf16.msra.mxu0 %v1976
      %2029 = vmatprep.subr.bf16.mxu0 0
      %2030 = vmatpush1.bf16.msra.mxu0 %v1977
      %2031 = vmatprep.subr.bf16.mxu0 0
      %2032 = vmatpush1.bf16.msra.mxu0 %v1978
      %2033 = vmatprep.subr.bf16.mxu0 0
      %2034 = vmatpush1.bf16.msra.mxu0 %v1979
      %2035 = vmatprep.subr.bf16.mxu0 0
      %2036 = vmatpush1.bf16.msra.mxu0 %v1980
      %2037 = vmatprep.subr.bf16.mxu0 0
      %2038 = vmatpush1.bf16.msra.mxu0 %v1981
      %2039 = vmatprep.subr.bf16.mxu0 0
      %2040 = vmatpush1.bf16.msra.mxu0 %v1982
      %2041 = vmatprep.subr.bf16.mxu0 0
      %2042 = vmatpush1.bf16.msra.mxu0 %v1983
      %2043 = vmatprep.subr.bf16.mxu0 0
      %2044 = vmatpush1.bf16.msra.mxu0 %v1984
      %2045 = vmatprep.subr.bf16.mxu0 0
      %2046 = vmatpush1.bf16.msra.mxu0 %v1985
      %2047 = vmatprep.subr.bf16.mxu0 0
      %2048 = vmatpush1.bf16.msra.mxu0 %v1986
      %2049 = vmatprep.subr.bf16.mxu0 0
      %2050 = vmatpush1.bf16.msra.mxu0 %v1987
      %2051 = vmatprep.subr.bf16.mxu0 0
      %2052 = vmatpush1.bf16.msra.mxu0 %v1988
      %2053 = vmatprep.mubr.bf16.mxu0 %v1847
      %2054 = vmatmul.mubr.bf16.gmra.mrb[0].mxu0 %v1846
      %v2055 = vpop.f32.mrb[0].mxu0
      %v2056 = vadd.f32 %v1899, %v2055
      %v2057 = vpop.f32.mrb[0].mxu0
      %v2058 = vpop.f32.mrb[0].mxu0
      %v2059 = vadd.f32 %v1899, %v2058
      %v2060 = vpop.f32.mrb[0].mxu0
      %2061 = vmatprep.mubr.bf16.mxu0 %v1850
      %2062 = vmatmul.mubr.bf16.gmra.mrb[0].mxu0 %v1849
      %v2063 = vpop.f32.mrb[0].mxu0
      %v2064 = vadd.f32 %v1899, %v2063
      %v2065 = vpop.f32.mrb[0].mxu0
      %v2066 = vpop.f32.mrb[0].mxu0
      %v2067 = vadd.f32 %v1899, %v2066
      %v2068 = vpop.f32.mrb[0].mxu0
      %2069 = vmatprep.mubr.bf16.mxu0 %v1853
      %2070 = vmatmul.mubr.bf16.gmra.mrb[0].mxu0 %v1852
      %v2071 = vpop.f32.mrb[0].mxu0
      %v2072 = vadd.f32 %v1899, %v2071
      %v2073 = vpop.f32.mrb[0].mxu0
      %v2074 = vpop.f32.mrb[0].mxu0
      %v2075 = vadd.f32 %v1899, %v2074
      %v2076 = vpop.f32.mrb[0].mxu0
      %2077 = vmatprep.mubr.bf16.mxu0 %v1856
      %2078 = vmatmul.mubr.bf16.gmra.mrb[0].mxu0 %v1855
      %v2079 = vpop.f32.mrb[0].mxu0
      %v2080 = vadd.f32 %v1899, %v2079
      %v2081 = vpop.f32.mrb[0].mxu0
      %v2082 = vpop.f32.mrb[0].mxu0
      %v2083 = vadd.f32 %v1899, %v2082
      %v2084 = vpop.f32.mrb[0].mxu0
      %2085 = vdwg.mxu0
      %2086 = vmatprep.subr.bf16.mxu0 0
      %2087 = vmatpush1.bf16.msra.mxu0 %v1989
      %2088 = vmatprep.subr.bf16.mxu0 0
      %2089 = vmatpush1.bf16.msra.mxu0 %v1990
      %2090 = vmatprep.subr.bf16.mxu0 0
      %2091 = vmatpush1.bf16.msra.mxu0 0
      %2092 = vmatprep.subr.bf16.mxu0 0
      %2093 = vmatpush1.bf16.msra.mxu0 0
      %2094 = vmatprep.subr.bf16.mxu0 0
      %2095 = vmatpush1.bf16.msra.mxu0 0
      %2096 = vmatprep.subr.bf16.mxu0 0
      %2097 = vmatpush1.bf16.msra.mxu0 0
      %2098 = vmatprep.subr.bf16.mxu0 0
      %2099 = vmatpush1.bf16.msra.mxu0 0
      %2100 = vmatprep.subr.bf16.mxu0 0
      %2101 = vmatpush1.bf16.msra.mxu0 0
      %2102 = vmatprep.subr.bf16.mxu0 0
      %2103 = vmatpush1.bf16.msra.mxu0 0
      %2104 = vmatprep.subr.bf16.mxu0 0
      %2105 = vmatpush1.bf16.msra.mxu0 0
      %2106 = vmatprep.subr.bf16.mxu0 0
      %2107 = vmatpush1.bf16.msra.mxu0 0
      %2108 = vmatprep.subr.bf16.mxu0 0
      %2109 = vmatpush1.bf16.msra.mxu0 0
      %2110 = vmatprep.subr.bf16.mxu0 0
      %2111 = vmatpush1.bf16.msra.mxu0 0
      %2112 = vmatprep.subr.bf16.mxu0 0
      %2113 = vmatpush1.bf16.msra.mxu0 0
      %2114 = vmatprep.subr.bf16.mxu0 0
      %2115 = vmatpush1.bf16.msra.mxu0 0
      %2116 = vmatprep.subr.bf16.mxu0 0
      %2117 = vmatpush1.bf16.msra.mxu0 0
      %2118 = vmatprep.mubr.bf16.mxu0 0
      %2119 = vmatmul.mubr.bf16.gmra.mrb[0].mxu0 %v2010
      %v2120 = vpop.f32.mrb[0].mxu0
      %v2121 = vadd.f32 %v2056, %v2120
      %v2122 = vpop.f32.mrb[0].mxu0
      %v2123 = vpop.f32.mrb[0].mxu0
      %v2124 = vadd.f32 %v2059, %v2123
      %v2125 = vpop.f32.mrb[0].mxu0
      %2126 = vmatprep.mubr.bf16.mxu0 0
      %2127 = vmatmul.mubr.bf16.gmra.mrb[0].mxu0 %v2013
      %v2128 = vpop.f32.mrb[0].mxu0
      %v2129 = vadd.f32 %v2064, %v2128
      %v2130 = vpop.f32.mrb[0].mxu0
      %v2131 = vpop.f32.mrb[0].mxu0
      %v2132 = vadd.f32 %v2067, %v2131
      %v2133 = vpop.f32.mrb[0].mxu0
      %2134 = vmatprep.mubr.bf16.mxu0 0
      %2135 = vmatmul.mubr.bf16.gmra.mrb[0].mxu0 %v2016
      %v2136 = vpop.f32.mrb[0].mxu0
      %v2137 = vadd.f32 %v2072, %v2136
      %v2138 = vpop.f32.mrb[0].mxu0
      %v2139 = vpop.f32.mrb[0].mxu0
      %v2140 = vadd.f32 %v2075, %v2139
      %v2141 = vpop.f32.mrb[0].mxu0
      %2142 = vmatprep.mubr.bf16.mxu0 0
      %2143 = vmatmul.mubr.bf16.gmra.mrb[0].mxu0 %v2019
      %v2144 = vpop.f32.mrb[0].mxu0
      %v2145 = vadd.f32 %v2080, %v2144
      %v2146 = vpop.f32.mrb[0].mxu0
      %v2147 = vpop.f32.mrb[0].mxu0
      %v2148 = vadd.f32 %v2083, %v2147
      %v2149 = vpop.f32.mrb[0].mxu0
      %2150 = vdwg.mxu0
      %v2151 = vmax.f32 %v2121, 0.0
      %v2152 = vmax.f32 %v2124, 0.0
      %v2153 = vmax.f32 %v2129, 0.0
      %v2154 = vmax.f32 %v2132, 0.0
      %v2155 = vmax.f32 %v2137, 0.0
      %v2156 = vmax.f32 %v2140, 0.0
      %v2157 = vmax.f32 %v2145, 0.0
      %v2158 = vmax.f32 %v2148, 0.0
      %v2159 = vpack.c.bf16 %v2152, %v2151
      %v2160 = vpack.c.bf16 %v2154, %v2153
      %v2161 = vpack.c.bf16 %v2156, %v2155
      %v2162 = vpack.c.bf16 %v2158, %v2157
      %v2163 = vld [vmem:[%s10] sm:$0xf]
      %v2164 = vld [vmem:[%s10 + $0x4] sm:$0xf]
      %v2165 = vld [vmem:[%s10 + $0x8] sm:$0xf]
      %v2166 = vld [vmem:[%s10 + $0xc] sm:$0xf]
      %v2167 = vld [vmem:[%s10 + $0x10] sm:$0xf]
      %v2168 = vld [vmem:[%s10 + $0x14] sm:$0xf]
      %v2169 = vld [vmem:[%s10 + $0x18] sm:$0xf]
      %v2170 = vld [vmem:[%s10 + $0x1c] sm:$0xf]
      %v2171 = vld [vmem:[%s11] sm:$0x1]
      %v2173 = vlaneseq
      %v2174 = vshrl.u32 %v2173, 7
      %v2175 = vsub.s32 0, %v2174
      %v2176 = vrot.slane %v2171, %v2175
      %v2186 = vunpack.c.l.b16 %v2163
      %v2187 = vunpack.c.l.b16 %v2164
      %v2188 = vunpack.c.l.b16 %v2165
      %v2189 = vunpack.c.l.b16 %v2166
      %v2190 = vunpack.c.l.b16 %v2167
      %v2191 = vunpack.c.l.b16 %v2168
      %v2192 = vunpack.c.l.b16 %v2169
      %v2193 = vunpack.c.l.b16 %v2170
      %v2194 = vpack.c.b16 %v2187, %v2186
      %v2195 = vpack.c.b16 %v2189, %v2188
      %v2196 = vpack.c.b16 %v2191, %v2190
      %v2197 = vpack.c.b16 %v2193, %v2192
      %v2203 = vsel %vm709, %v2159, 0
      %v2206 = vsel %vm709, %v2160, 0
      %v2209 = vsel %vm709, %v2161, 0
      %v2212 = vsel %vm709, %v2162, 0
      %2214 = vmatprep.subr.bf16.mxu0 0
      %2215 = vmatpush1.bf16.msra.mxu0 %v2194
      %2216 = vmatprep.subr.bf16.mxu0 0
      %2217 = vmatpush1.bf16.msra.mxu0 %v2195
      %2218 = vmatprep.subr.bf16.mxu0 0
      %2219 = vmatpush1.bf16.msra.mxu0 %v2196
      %2220 = vmatprep.subr.bf16.mxu0 0
      %2221 = vmatpush1.bf16.msra.mxu0 %v2197
      %2222 = vmatprep.subr.bf16.mxu0 0
      %2223 = vmatpush1.bf16.msra.mxu0 0
      %2224 = vmatprep.subr.bf16.mxu0 0
      %2225 = vmatpush1.bf16.msra.mxu0 0
      %2226 = vmatprep.subr.bf16.mxu0 0
      %2227 = vmatpush1.bf16.msra.mxu0 0
      %2228 = vmatprep.subr.bf16.mxu0 0
      %2229 = vmatpush1.bf16.msra.mxu0 0
      %2230 = vmatprep.subr.bf16.mxu0 0
      %2231 = vmatpush1.bf16.msra.mxu0 0
      %2232 = vmatprep.subr.bf16.mxu0 0
      %2233 = vmatpush1.bf16.msra.mxu0 0
      %2234 = vmatprep.subr.bf16.mxu0 0
      %2235 = vmatpush1.bf16.msra.mxu0 0
      %2236 = vmatprep.subr.bf16.mxu0 0
      %2237 = vmatpush1.bf16.msra.mxu0 0
      %2238 = vmatprep.subr.bf16.mxu0 0
      %2239 = vmatpush1.bf16.msra.mxu0 0
      %2240 = vmatprep.subr.bf16.mxu0 0
      %2241 = vmatpush1.bf16.msra.mxu0 0
      %2242 = vmatprep.subr.bf16.mxu0 0
      %2243 = vmatpush1.bf16.msra.mxu0 0
      %2244 = vmatprep.subr.bf16.mxu0 0
      %2245 = vmatpush1.bf16.msra.mxu0 0
      %2246 = vmatprep.mubr.bf16.mxu0 0
      %2247 = vmatmul.mubr.bf16.gmra.mrb[0].mxu0 %v2203
      %v2248 = vpop.f32.mrb[0].mxu0
      %v2249 = vadd.f32 %v2176, %v2248
      %v2250 = vpop.f32.mrb[0].mxu0
      %v2251 = vpop.f32.mrb[0].mxu0
      %v2252 = vadd.f32 %v2176, %v2251
      %v2253 = vpop.f32.mrb[0].mxu0
      %2254 = vmatprep.mubr.bf16.mxu0 0
      %2255 = vmatmul.mubr.bf16.gmra.mrb[0].mxu0 %v2206
      %v2256 = vpop.f32.mrb[0].mxu0
      %v2257 = vadd.f32 %v2176, %v2256
      %v2258 = vpop.f32.mrb[0].mxu0
      %v2259 = vpop.f32.mrb[0].mxu0
      %v2260 = vadd.f32 %v2176, %v2259
      %v2261 = vpop.f32.mrb[0].mxu0
      %2262 = vmatprep.mubr.bf16.mxu0 0
      %2263 = vmatmul.mubr.bf16.gmra.mrb[0].mxu0 %v2209
      %v2264 = vpop.f32.mrb[0].mxu0
      %v2265 = vadd.f32 %v2176, %v2264
      %v2266 = vpop.f32.mrb[0].mxu0
      %v2267 = vpop.f32.mrb[0].mxu0
      %v2268 = vadd.f32 %v2176, %v2267
      %v2269 = vpop.f32.mrb[0].mxu0
      %2270 = vmatprep.mubr.bf16.mxu0 0
      %2271 = vmatmul.mubr.bf16.gmra.mrb[0].mxu0 %v2212
      %v2272 = vpop.f32.mrb[0].mxu0
      %v2273 = vadd.f32 %v2176, %v2272
      %v2274 = vpop.f32.mrb[0].mxu0
      %v2275 = vpop.f32.mrb[0].mxu0
      %v2276 = vadd.f32 %v2176, %v2275
      %v2277 = vpop.f32.mrb[0].mxu0
      %2278 = vdwg.mxu0
      %v2279 = vadd.f32 %v2249, %v1496
      %v2280 = vadd.f32 %v2252, %v1497
      %v2281 = vadd.f32 %v2257, %v1498
      %v2282 = vadd.f32 %v2260, %v1499
      %v2283 = vadd.f32 %v2265, %v1500
      %v2284 = vadd.f32 %v2268, %v1501
      %v2285 = vadd.f32 %v2273, %v1502
      %v2286 = vadd.f32 %v2276, %v1503
      %v2287 = vld [vmem:[%s12] sm:$0x1]
      %v2288 = vld [vmem:[%s13] sm:$0x1]
      %v2289 = vsel %vm503, %v2279, 0.0
      %2290 = vadd.xlane.f32.xlu0 %v2289
      %v2291 = vpop.xlane.xlu0 %2290
      %v2292 = vsel %vm503, %v2280, 0.0
      %2293 = vadd.xlane.f32.xlu0 %v2292
      %v2294 = vpop.xlane.xlu0 %2293
      %v2295 = vsel %vm503, %v2281, 0.0
      %2296 = vadd.xlane.f32.xlu0 %v2295
      %v2297 = vpop.xlane.xlu0 %2296
      %v2298 = vsel %vm503, %v2282, 0.0
      %2299 = vadd.xlane.f32.xlu0 %v2298
      %v2300 = vpop.xlane.xlu0 %2299
      %v2301 = vsel %vm503, %v2283, 0.0
      %2302 = vadd.xlane.f32.xlu0 %v2301
      %v2303 = vpop.xlane.xlu0 %2302
      %v2304 = vsel %vm503, %v2284, 0.0
      %2305 = vadd.xlane.f32.xlu0 %v2304
      %v2306 = vpop.xlane.xlu0 %2305
      %v2307 = vsel %vm503, %v2285, 0.0
      %2308 = vadd.xlane.f32.xlu0 %v2307
      %v2309 = vpop.xlane.xlu0 %2308
      %v2310 = vsel %vm503, %v2286, 0.0
      %2311 = vadd.xlane.f32.xlu0 %v2310
      %v2312 = vpop.xlane.xlu0 %2311
      %v2313 = vmul.f32 %v2291, %v1371
      %v2314 = vmul.f32 %v2294, %v1371
      %v2315 = vmul.f32 %v2297, %v1371
      %v2316 = vmul.f32 %v2300, %v1371
      %v2317 = vmul.f32 %v2303, %v1371
      %v2318 = vmul.f32 %v2306, %v1371
      %v2319 = vmul.f32 %v2309, %v1371
      %v2320 = vmul.f32 %v2312, %v1371
      %v2321 = vsub.f32 %v2279, %v2313
      %v2322 = vsub.f32 %v2280, %v2314
      %v2323 = vsub.f32 %v2281, %v2315
      %v2324 = vsub.f32 %v2282, %v2316
      %v2325 = vsub.f32 %v2283, %v2317
      %v2326 = vsub.f32 %v2284, %v2318
      %v2327 = vsub.f32 %v2285, %v2319
      %v2328 = vsub.f32 %v2286, %v2320
      %v2329 = vmul.f32 %v2321, %v2321
      %v2330 = vmul.f32 %v2322, %v2322
      %v2331 = vmul.f32 %v2323, %v2323
      %v2332 = vmul.f32 %v2324, %v2324
      %v2333 = vmul.f32 %v2325, %v2325
      %v2334 = vmul.f32 %v2326, %v2326
      %v2335 = vmul.f32 %v2327, %v2327
      %v2336 = vmul.f32 %v2328, %v2328
      %v2337 = vsel %vm503, %v2329, 0.0
      %2338 = vadd.xlane.f32.xlu0 %v2337
      %v2339 = vpop.xlane.xlu0 %2338
      %v2340 = vsel %vm503, %v2330, 0.0
      %2341 = vadd.xlane.f32.xlu0 %v2340
      %v2342 = vpop.xlane.xlu0 %2341
      %v2343 = vsel %vm503, %v2331, 0.0
      %2344 = vadd.xlane.f32.xlu0 %v2343
      %v2345 = vpop.xlane.xlu0 %2344
      %v2346 = vsel %vm503, %v2332, 0.0
      %2347 = vadd.xlane.f32.xlu0 %v2346
      %v2348 = vpop.xlane.xlu0 %2347
      %v2349 = vsel %vm503, %v2333, 0.0
      %2350 = vadd.xlane.f32.xlu0 %v2349
      %v2351 = vpop.xlane.xlu0 %2350
      %v2352 = vsel %vm503, %v2334, 0.0
      %2353 = vadd.xlane.f32.xlu0 %v2352
      %v2354 = vpop.xlane.xlu0 %2353
      %v2355 = vsel %vm503, %v2335, 0.0
      %2356 = vadd.xlane.f32.xlu0 %v2355
      %v2357 = vpop.xlane.xlu0 %2356
      %v2358 = vsel %vm503, %v2336, 0.0
      %2359 = vadd.xlane.f32.xlu0 %v2358
      %v2360 = vpop.xlane.xlu0 %2359
      %v2361 = vmul.f32 %v2339, %v1371
      %v2362 = vmul.f32 %v2342, %v1371
      %v2363 = vmul.f32 %v2345, %v1371
      %v2364 = vmul.f32 %v2348, %v1371
      %v2365 = vmul.f32 %v2351, %v1371
      %v2366 = vmul.f32 %v2354, %v1371
      %v2367 = vmul.f32 %v2357, %v1371
      %v2368 = vmul.f32 %v2360, %v1371
      %v2369 = vadd.f32 %v2361, 1e-05
      %v2370 = vadd.f32 %v2362, 1e-05
      %v2371 = vadd.f32 %v2363, 1e-05
      %v2372 = vadd.f32 %v2364, 1e-05
      %v2373 = vadd.f32 %v2365, 1e-05
      %v2374 = vadd.f32 %v2366, 1e-05
      %v2375 = vadd.f32 %v2367, 1e-05
      %v2376 = vadd.f32 %v2368, 1e-05
      %v2377 = vrsqrt.pop %v2369
      %v2378 = vrsqrt.pop %v2370
      %v2379 = vrsqrt.pop %v2371
      %v2380 = vrsqrt.pop %v2372
      %v2381 = vrsqrt.pop %v2373
      %v2382 = vrsqrt.pop %v2374
      %v2383 = vrsqrt.pop %v2375
      %v2384 = vrsqrt.pop %v2376
      %v2385 = vmul.f32 %v2321, %v2377
      %v2386 = vmul.f32 %v2322, %v2378
      %v2387 = vmul.f32 %v2323, %v2379
      %v2388 = vmul.f32 %v2324, %v2380
      %v2389 = vmul.f32 %v2325, %v2381
      %v2390 = vmul.f32 %v2326, %v2382
      %v2391 = vmul.f32 %v2327, %v2383
      %v2392 = vmul.f32 %v2328, %v2384
      %v2394 = vlaneseq
      %v2395 = vshrl.u32 %v2394, 7
      %v2396 = vsub.s32 0, %v2395
      %v2397 = vrot.slane %v2287, %v2396
      %v2399 = vmul.f32 %v2385, %v2397
      %v2400 = vmul.f32 %v2386, %v2397
      %v2401 = vmul.f32 %v2387, %v2397
      %v2402 = vmul.f32 %v2388, %v2397
      %v2403 = vmul.f32 %v2389, %v2397
      %v2404 = vmul.f32 %v2390, %v2397
      %v2405 = vmul.f32 %v2391, %v2397
      %v2406 = vmul.f32 %v2392, %v2397
      %v2408 = vlaneseq
      %v2409 = vshrl.u32 %v2408, 7
      %v2410 = vsub.s32 0, %v2409
      %v2411 = vrot.slane %v2288, %v2410
      %v2413 = vadd.f32 %v2399, %v2411
      %v2414 = vadd.f32 %v2400, %v2411
      %v2415 = vadd.f32 %v2401, %v2411
      %v2416 = vadd.f32 %v2402, %v2411
      %v2417 = vadd.f32 %v2403, %v2411
      %v2418 = vadd.f32 %v2404, %v2411
      %v2419 = vadd.f32 %v2405, %v2411
      %v2420 = vadd.f32 %v2406, %v2411
      %v2421 = vsel %vm1488, 0.0, %v2413
      %v2422 = vsel %vm1489, 0.0, %v2414
      %v2423 = vsel %vm1490, 0.0, %v2415
      %v2424 = vsel %vm1491, 0.0, %v2416
      %v2425 = vsel %vm1492, 0.0, %v2417
      %v2426 = vsel %vm1493, 0.0, %v2418
      %v2427 = vsel %vm1494, 0.0, %v2419
      %v2428 = vsel %vm1495, 0.0, %v2420
      %2429 = vst.msk [vmem:[%s447] sm:$0xff] %vm503, %v2421
      %2430 = vst.msk [vmem:[%s447 + $0x8] sm:$0xff] %vm503, %v2422
      %2431 = vst.msk [vmem:[%s447 + $0x10] sm:$0xff] %vm503, %v2423
      %2432 = vst.msk [vmem:[%s447 + $0x18] sm:$0xff] %vm503, %v2424
      %2433 = vst.msk [vmem:[%s447 + $0x20] sm:$0xff] %vm503, %v2425
      %2434 = vst.msk [vmem:[%s447 + $0x28] sm:$0xff] %vm503, %v2426
      %2435 = vst.msk [vmem:[%s447 + $0x30] sm:$0xff] %vm503, %v2427
      %2436 = vst.msk [vmem:[%s447 + $0x38] sm:$0xff] %vm503, %v2428
      %p2437 = scmp.lt.s32.totalorder %s31, 1
      %s2438 = scalar_select %p2437, %s31, 1
      %s2439 = smul.addr %s2438, 8
      %s2440 = smul.addr %s2439, 8
      %s2441 = scalar_lea.vmem %s14, %s2440
      // Predicated region
      $region73: #{fastspeech2_forward.11} parent=71 // pred_check
        %p2442 = pneg %p327
      $region74: #{fastspeech2_forward.11} parent=71 // pred_check_branch
        %2444 = sbr.rel (%p2442) target = $region76
      $region75: #{fastspeech2_forward.11} parent=71 // pred_region
        _
      $region76: #{fastspeech2_forward.11} parent=71 // pred_fallthru
        _
    $region72: #{fastspeech2_forward.11} parent=5 // pred_fallthru
      _
    %p2445 = scmp.le.s32.totalorder 2, %s26
    // Predicated region
    $region77: #{fastspeech2_forward.11} parent=5 // pred_check
      %p2446 = pneg %p2445
    $region78: #{fastspeech2_forward.11} parent=5 // pred_check_branch
      %2448 = sbr.rel (%p2446) target = $region80
    $region79: #{fastspeech2_forward.11} parent=5 // pred_region
      %s2449 = ssub.s32 %s26, 2
      // Predicated region
      $region81: #{fastspeech2_forward.11} parent=79 // pred_check
        %p2450 = pneg %p333
      $region82: #{fastspeech2_forward.11} parent=79 // pred_check_branch
        %2452 = sbr.rel (%p2450) target = $region84
      $region83: #{fastspeech2_forward.11} parent=79 // pred_region
        %p2453 = scmp.lt.s32.totalorder %s32, 1
        %s2454 = scalar_select %p2453, %s32, 1
        %s2455 = smul.addr %s2454, 8
        %s2456 = smul.addr %s2455, 8
        %s2457 = scalar_lea.vmem %s14, %s2456
      $region84: #{fastspeech2_forward.11} parent=79 // pred_fallthru
        _
    $region80: #{fastspeech2_forward.11} parent=5 // pred_fallthru
      _
  $region6: #{fastspeech2_forward.11} parent=0 // loop_footer
    %s30 = sadd.s32 1, %s26
  $region7: #{fastspeech2_forward.11} parent=0 // loop_footer_branch
    %25 = sbr.rel target = $region3
  $region8: #{fastspeech2_forward.11} parent=0 // loop_exit
    _

</llo_original>
